<compile_context>
chip_gen: v7x
topology: tpu7x:2x2x1
jax: 0.10.0
libtpu: 0.0.40
codegen_flags: <defaults>
</compile_context>

<pallas_src>
import functools

import jax
import jax.numpy as jnp
from jax.experimental import pallas as pl
from jax.experimental.pallas import tpu as pltpu

RGB_FEAT = 1280
DEPTH_FEAT = 640
CLS_FEAT = RGB_FEAT + DEPTH_FEAT  # 1920


def _sigmoid(x):
    # tanh-form sigmoid: numerically stable, lowers to the EUP tanh unit.
    return 0.5 * (jnp.tanh(0.5 * x) + 1.0)


# ----------------------------------------------------------------------------
# Kernel 1: fused 1x1-conv (VPU rank-1 FMAs) + ReLU + GAP + FC/sigmoid head.
# ----------------------------------------------------------------------------
def conv_gap_head_kernel(x_ref, wt_ref, cb_ref, hw_ref, hb_ref,
                         gap_ref, p_ref, acc_ref, *, inv_hw):
    # x_ref:   (1, Cin, THW)  bf16 pixel tile (pixels lane-dense)
    # wt_ref:  (Cout, Cin)    f32 1x1-conv weight, pre-transposed
    # cb_ref:  (Cout, 1)      f32 conv bias (column)
    # hw_ref:  (Cout, 1)      f32 branch-head weight (column)
    # hb_ref:  (1, 1)         f32 branch-head bias
    # gap_ref: (1, Cout, 1)   f32 GAP feature for this batch element
    # p_ref:   (1, 1, 1)      f32 sigmoid head output for this batch element
    # acc_ref: (Cout, 1)      f32 running pixel-sum accumulator (VMEM scratch)
    j = pl.program_id(1)

    @pl.when(j == 0)
    def _init():
        acc_ref[...] = jnp.zeros_like(acc_ref)

    x = x_ref[0].astype(jnp.float32)        # (Cin, THW), f32 accumulate
    wt = wt_ref[...]                        # (Cout, Cin)
    cin = x.shape[0]

    # 1x1 conv as Cin rank-1 VPU FMAs: (Cout,1) * (1,THW) -> (Cout,THW).
    h = wt[:, 0:1] * x[0:1, :]
    for c in range(1, cin):                 # Cin is 1 or 3 (static)
        h = h + wt[:, c:c + 1] * x[c:c + 1, :]
    h = jnp.maximum(h + cb_ref[...], 0.0)   # bias + ReLU

    # Partial GAP: sum over the pixel (lane) axis of this tile only.
    acc_ref[...] += jnp.sum(h, axis=1, keepdims=True)

    @pl.when(j == pl.num_programs(1) - 1)
    def _finalize():
        gap_col = acc_ref[...] * inv_hw                               # (Cout, 1)
        gap_ref[0] = gap_col
        logit = jnp.sum(gap_col * hw_ref[...], axis=0, keepdims=True) + hb_ref[...]
        p_ref[0] = _sigmoid(logit)


def _choose_hw_tile(hw, cout, act_budget_bytes=2 * 1024 * 1024):
    """Largest pixel tile such that the (Cout, THW) f32 activation ~fits 2 MiB."""
    target = max(128, (act_budget_bytes // (4 * cout)) // 128 * 128)
    if hw <= target:
        return hw
    for t in range(target, 127, -128):
        if hw % t == 0:
            return t
    # TODO(synk): pad-and-mask ragged HW instead of falling back to one big tile.
    return hw


def conv_gap_head(x, conv_wt, conv_b, head_w, head_b):
    """x: (B, Cin, HW) bf16 -> (gap (B, Cout) f32, p (B, 1) f32)."""
    B, cin, hw = x.shape
    cout = conv_wt.shape[0]
    thw = _choose_hw_tile(hw, cout)
    n_tiles = hw // thw

    kernel = functools.partial(conv_gap_head_kernel, inv_hw=1.0 / float(hw))
    gap, p = pl.pallas_call(
        kernel,
        out_shape=(
            jax.ShapeDtypeStruct((B, cout, 1), jnp.float32),
            jax.ShapeDtypeStruct((B, 1, 1), jnp.float32),
        ),
        grid_spec=pltpu.PrefetchScalarGridSpec(
            num_scalar_prefetch=0,
            grid=(B, n_tiles),
            in_specs=[
                pl.BlockSpec((1, cin, thw), lambda b, j: (b, 0, j)),
                pl.BlockSpec((cout, cin), lambda b, j: (0, 0)),
                pl.BlockSpec((cout, 1), lambda b, j: (0, 0)),
                pl.BlockSpec((cout, 1), lambda b, j: (0, 0)),
                pl.BlockSpec((1, 1), lambda b, j: (0, 0)),
            ],
            out_specs=(
                pl.BlockSpec((1, cout, 1), lambda b, j: (b, 0, 0)),
                pl.BlockSpec((1, 1, 1), lambda b, j: (b, 0, 0)),
            ),
            scratch_shapes=[pltpu.VMEM((cout, 1), jnp.float32)],
        ),
        compiler_params=pltpu.CompilerParams(
            dimension_semantics=("parallel", "arbitrary")),
    )(x, conv_wt, conv_b, head_w, head_b)
    return gap.reshape(B, cout), p.reshape(B, 1)


# ----------------------------------------------------------------------------
# Kernel 2: classifier Linear(1920, 1) + Sigmoid (VPU mul + lane reduce).
# ----------------------------------------------------------------------------
def classifier_kernel(x_ref, w_ref, b_ref, o_ref):
    # x: (B, F) f32, w: (1, F) f32, b: (1, 1) f32 -> o: (B, 1) f32
    logits = jnp.sum(x_ref[...] * w_ref[...], axis=-1, keepdims=True) + b_ref[...]
    o_ref[...] = _sigmoid(logits)


def classifier(x, w_row, b):
    B = x.shape[0]
    return pl.pallas_call(
        classifier_kernel,
        out_shape=jax.ShapeDtypeStruct((B, 1), jnp.float32),
    )(x, w_row, b)


# ----------------------------------------------------------------------------
# Parameters (stored directly in kernel-friendly layouts) + forward.
# ----------------------------------------------------------------------------
def init_params(key):
    ks = jax.random.split(key, 8)
    s = 0.05
    return {
        # RGB_net: 1x1 conv (3 -> 1280), weight pre-transposed (Cout, Cin)
        "rgb_conv_wt": s * jax.random.normal(ks[0], (RGB_FEAT, 3), jnp.float32),
        "rgb_conv_b":  s * jax.random.normal(ks[1], (RGB_FEAT, 1), jnp.float32),
        "rgb_head_w":  s * jax.random.normal(ks[2], (RGB_FEAT, 1), jnp.float32),
        "rgb_head_b":  jnp.zeros((1, 1), jnp.float32),
        # Depth_net: 1x1 conv (1 -> 640)
        "d_conv_wt":   s * jax.random.normal(ks[3], (DEPTH_FEAT, 1), jnp.float32),
        "d_conv_b":    s * jax.random.normal(ks[4], (DEPTH_FEAT, 1), jnp.float32),
        "d_head_w":    s * jax.random.normal(ks[5], (DEPTH_FEAT, 1), jnp.float32),
        "d_head_b":    jnp.zeros((1, 1), jnp.float32),
        # classifier: Linear(1920, 1) + Sigmoid, weight stored as (1, 1920) row
        "cls_w":       s * jax.random.normal(ks[6], (1, CLS_FEAT), jnp.float32),
        "cls_b":       s * jax.random.normal(ks[7], (1, 1), jnp.float32),
    }


@jax.jit
def rgbd_forward(params, x_rgb, x_d):
    """
    Args:
        x_rgb: [B, 3, W, W] float32 (NCHW)
        x_d:   [B, 3, W, W] float32 (NCHW)
    Returns:
        (gap [B,1920], r [B,1], p [B,1], q [B,1])
    """
    B, C, H, W = x_rgb.shape
    hw = H * W
    # Depth branch uses only channel 0 (per the PyTorch module).
    x_d0 = x_d[:, 0:1, :, :]
    # Keep NCHW order: reshape only (no transpose / HBM round-trip) and ship
    # the pixels as bf16 (halves HBM->VMEM bytes); kernel upcasts to f32.
    x_rgb_p = x_rgb.astype(jnp.bfloat16).reshape(B, C, hw)
    x_d_p = x_d0.astype(jnp.bfloat16).reshape(B, 1, hw)

    gap_rgb, p = conv_gap_head(x_rgb_p, params["rgb_conv_wt"], params["rgb_conv_b"],
                               params["rgb_head_w"], params["rgb_head_b"])
    gap_d, q = conv_gap_head(x_d_p, params["d_conv_wt"], params["d_conv_b"],
                             params["d_head_w"], params["d_head_b"])

    gap = jnp.concatenate([gap_rgb, gap_d], axis=1)          # (B, 1920)
    r = classifier(gap, params["cls_w"], params["cls_b"])    # (B, 1)
    return gap, r, p, q


# ----------------------------------------------------------------------------
# Pure-jnp reference (same bf16 input quantization) for a numeric sanity check.
# ----------------------------------------------------------------------------
def _reference_forward(params, x_rgb, x_d):
    B, C, H, W = x_rgb.shape
    hw = H * W
    xr = x_rgb.astype(jnp.bfloat16).astype(jnp.float32).reshape(B, C, hw)
    xd = x_d[:, 0:1].astype(jnp.bfloat16).astype(jnp.float32).reshape(B, 1, hw)

    def branch(x, wt, cb, hww, hb):
        h = jnp.einsum("oc,bcp->bop", wt, x, precision=jax.lax.Precision.HIGHEST)
        h = jnp.maximum(h + cb[None], 0.0)
        gap = jnp.mean(h, axis=2)                                    # (B, Cout)
        p = jax.nn.sigmoid(jnp.sum(gap * hww[:, 0][None, :], axis=1,
                                   keepdims=True) + hb)              # (B, 1)
        return gap, p

    gr, p = branch(xr, params["rgb_conv_wt"], params["rgb_conv_b"],
                   params["rgb_head_w"], params["rgb_head_b"])
    gd, q = branch(xd, params["d_conv_wt"], params["d_conv_b"],
                   params["d_head_w"], params["d_head_b"])
    gap = jnp.concatenate([gr, gd], axis=1)
    r = jax.nn.sigmoid(jnp.sum(gap * params["cls_w"], axis=1,
                               keepdims=True) + params["cls_b"])
    return gap, r, p, q


if __name__ == "__main__":
    key = jax.random.PRNGKey(0)
    k_param, k_rgb, k_d = jax.random.split(key, 3)

    B, Wimg = 2, 16
    x_rgb = jax.random.normal(k_rgb, (B, 3, Wimg, Wimg), jnp.float32)
    x_d = jax.random.normal(k_d, (B, 3, Wimg, Wimg), jnp.float32)

    params = init_params(k_param)

    gap, r, p, q = rgbd_forward(params, x_rgb, x_d)
    jax.block_until_ready((gap, r, p, q))

    assert gap.shape == (B, CLS_FEAT)
    assert r.shape == (B, 1) and p.shape == (B, 1) and q.shape == (B, 1)

    ref = _reference_forward(params, x_rgb, x_d)
    for got, want, name in zip((gap, r, p, q), ref, ("gap", "r", "p", "q")):
        assert got.shape == want.shape, name
        assert bool(jnp.allclose(got, want, rtol=5e-3, atol=5e-4)), name

    print("KERNEL_OK")
</pallas_src>

<mosaic_0001>
module attributes {stable_mosaic.version = 11 : i64} {
  func.func @conv_gap_head_kernel(%arg0: i32, %arg1: i32, %arg2: memref<1x3x256xbf16, #tpu.memory_space<vmem>>, %arg3: memref<1280x3xf32, #tpu.memory_space<vmem>>, %arg4: memref<1280x1xf32, #tpu.memory_space<vmem>>, %arg5: memref<1280x1xf32, #tpu.memory_space<vmem>>, %arg6: memref<1x1xf32, #tpu.memory_space<vmem>>, %arg7: memref<1x1280x1xf32, #tpu.memory_space<vmem>>, %arg8: memref<1x1x1xf32, #tpu.memory_space<vmem>>, %arg9: memref<1280x1xf32, #tpu.memory_space<vmem>>) attributes {dimension_semantics = [#tpu.dimension_semantics<parallel>, #tpu.dimension_semantics<arbitrary>], iteration_bounds = array<i64: 2, 1>, scalar_prefetch = 0 : i64, scratch_operands = 1 : i64, tpu.core_type = #tpu.core_type<tc>, window_params = [{transform_indices = @transform_0, window_bounds = array<i64: 1, 3, 256>}, {pipeline_mode = #tpu.pipeline_mode<synchronous>, transform_indices = @transform_1, window_bounds = array<i64: 1280, 3>}, {pipeline_mode = #tpu.pipeline_mode<synchronous>, transform_indices = @transform_2, window_bounds = array<i64: 1280, 1>}, {pipeline_mode = #tpu.pipeline_mode<synchronous>, transform_indices = @transform_3, window_bounds = array<i64: 1280, 1>}, {pipeline_mode = #tpu.pipeline_mode<synchronous>, transform_indices = @transform_4, window_bounds = array<i64: 1, 1>}, {transform_indices = @transform_5, window_bounds = array<i64: 1, 1280, 1>}, {transform_indices = @transform_6, window_bounds = array<i64: 1, 1, 1>}]} {
    %c0_i32 = arith.constant 0 : i32
    %0 = arith.cmpi eq, %arg1, %c0_i32 : i32
    %1 = arith.extui %0 : i1 to i32
    %c0_i32_0 = arith.constant 0 : i32
    %2 = arith.cmpi ne, %1, %c0_i32_0 : i32
    scf.if %2 {
      %cst_14 = arith.constant 0.000000e+00 : f32
      %37 = vector.broadcast %cst_14 : f32 to vector<1280x1xf32>
      %c0_15 = arith.constant 0 : index
      %c0_16 = arith.constant 0 : index
      %38 = vector.load %arg9[%c0_15, %c0_16] : memref<1280x1xf32, #tpu.memory_space<vmem>>, vector<1280x1xf32>
      tpu.vector_store %arg9[%c0_15, %c0_16], %37 {strides = array<i32>} : memref<1280x1xf32, #tpu.memory_space<vmem>>, vector<1280x1xf32>,
    } else {
    }
    %c0 = arith.constant 0 : index
    %c0_1 = arith.constant 0 : index
    %c0_2 = arith.constant 0 : index
    %3 = vector.load %arg2[%c0, %c0_1, %c0_2] : memref<1x3x256xbf16, #tpu.memory_space<vmem>>, vector<1x3x256xbf16>
    %4 = vector.shape_cast %3 : vector<1x3x256xbf16> to vector<3x256xbf16>
    %5 = arith.extf %4 : vector<3x256xbf16> to vector<3x256xf32>
    %c0_3 = arith.constant 0 : index
    %c0_4 = arith.constant 0 : index
    %6 = vector.load %arg3[%c0_3, %c0_4] : memref<1280x3xf32, #tpu.memory_space<vmem>>, vector<1280x3xf32>
    %7 = vector.extract_strided_slice %6 {offsets = [0, 0], sizes = [1280, 1], strides = [1, 1]} : vector<1280x3xf32> to vector<1280x1xf32>
    %8 = vector.extract_strided_slice %5 {offsets = [0, 0], sizes = [1, 256], strides = [1, 1]} : vector<3x256xf32> to vector<1x256xf32>
    %9 = vector.broadcast %7 : vector<1280x1xf32> to vector<1280x256xf32>
    %10 = vector.broadcast %8 : vector<1x256xf32> to vector<1280x256xf32>
    %11 = arith.mulf %9, %10 : vector<1280x256xf32>
    %12 = vector.extract_strided_slice %6 {offsets = [0, 1], sizes = [1280, 1], strides = [1, 1]} : vector<1280x3xf32> to vector<1280x1xf32>
    %13 = vector.extract_strided_slice %5 {offsets = [1, 0], sizes = [1, 256], strides = [1, 1]} : vector<3x256xf32> to vector<1x256xf32>
    %14 = vector.broadcast %12 : vector<1280x1xf32> to vector<1280x256xf32>
    %15 = vector.broadcast %13 : vector<1x256xf32> to vector<1280x256xf32>
    %16 = arith.mulf %14, %15 : vector<1280x256xf32>
    %17 = arith.addf %11, %16 : vector<1280x256xf32>
    %18 = vector.extract_strided_slice %6 {offsets = [0, 2], sizes = [1280, 1], strides = [1, 1]} : vector<1280x3xf32> to vector<1280x1xf32>
    %19 = vector.extract_strided_slice %5 {offsets = [2, 0], sizes = [1, 256], strides = [1, 1]} : vector<3x256xf32> to vector<1x256xf32>
    %20 = vector.broadcast %18 : vector<1280x1xf32> to vector<1280x256xf32>
    %21 = vector.broadcast %19 : vector<1x256xf32> to vector<1280x256xf32>
    %22 = arith.mulf %20, %21 : vector<1280x256xf32>
    %23 = arith.addf %17, %22 : vector<1280x256xf32>
    %c0_5 = arith.constant 0 : index
    %c0_6 = arith.constant 0 : index
    %24 = vector.load %arg4[%c0_5, %c0_6] : memref<1280x1xf32, #tpu.memory_space<vmem>>, vector<1280x1xf32>
    %25 = vector.broadcast %24 : vector<1280x1xf32> to vector<1280x256xf32>
    %26 = arith.addf %23, %25 : vector<1280x256xf32>
    %cst = arith.constant 0.000000e+00 : f32
    %27 = vector.broadcast %cst : f32 to vector<1280x256xf32>
    %28 = arith.maximumf %26, %27 : vector<1280x256xf32>
    %c0_7 = arith.constant 0 : index
    %c0_8 = arith.constant 0 : index
    %29 = vector.load %arg9[%c0_7, %c0_8] : memref<1280x1xf32, #tpu.memory_space<vmem>>, vector<1280x1xf32>
    %cst_9 = arith.constant dense<0.000000e+00> : vector<1280xf32>
    %30 = vector.multi_reduction <add>, %28, %cst_9 [1] : vector<1280x256xf32> to vector<1280xf32>
    %31 = vector.shape_cast %30 : vector<1280xf32> to vector<1280x1xf32>
    %32 = arith.addf %29, %31 : vector<1280x1xf32>
    %c0_10 = arith.constant 0 : index
    %c0_11 = arith.constant 0 : index
    %33 = vector.load %arg9[%c0_10, %c0_11] : memref<1280x1xf32, #tpu.memory_space<vmem>>, vector<1280x1xf32>
    tpu.vector_store %arg9[%c0_10, %c0_11], %32 {strides = array<i32>} : memref<1280x1xf32, #tpu.memory_space<vmem>>, vector<1280x1xf32>,
    %c0_i32_12 = arith.constant 0 : i32
    %34 = arith.cmpi eq, %arg1, %c0_i32_12 : i32
    %35 = arith.extui %34 : i1 to i32
    %c0_i32_13 = arith.constant 0 : i32
    %36 = arith.cmpi ne, %35, %c0_i32_13 : i32
    scf.if %36 {
      %c0_14 = arith.constant 0 : index
      %c0_15 = arith.constant 0 : index
      %37 = vector.load %arg9[%c0_14, %c0_15] : memref<1280x1xf32, #tpu.memory_space<vmem>>, vector<1280x1xf32>
      %cst_16 = arith.constant 3.906250e-03 : f32
      %38 = vector.broadcast %cst_16 : f32 to vector<1280x1xf32>
      %39 = arith.mulf %37, %38 : vector<1280x1xf32>
      %c0_17 = arith.constant 0 : index
      %c0_18 = arith.constant 0 : index
      %c0_19 = arith.constant 0 : index
      %40 = vector.load %arg7[%c0_17, %c0_18, %c0_19] : memref<1x1280x1xf32, #tpu.memory_space<vmem>>, vector<1x1280x1xf32>
      %41 = vector.shape_cast %40 : vector<1x1280x1xf32> to vector<1280x1xf32>
      %42 = vector.shape_cast %39 : vector<1280x1xf32> to vector<1x1280x1xf32>
      tpu.vector_store %arg7[%c0_17, %c0_18, %c0_19], %42 {strides = array<i32>} : memref<1x1280x1xf32, #tpu.memory_space<vmem>>, vector<1x1280x1xf32>,
      %c0_20 = arith.constant 0 : index
      %c0_21 = arith.constant 0 : index
      %43 = vector.load %arg5[%c0_20, %c0_21] : memref<1280x1xf32, #tpu.memory_space<vmem>>, vector<1280x1xf32>
      %44 = arith.mulf %39, %43 : vector<1280x1xf32>
      %cst_22 = arith.constant dense<0.000000e+00> : vector<1xf32>
      %45 = vector.multi_reduction <add>, %44, %cst_22 [0] : vector<1280x1xf32> to vector<1xf32>
      %46 = vector.shape_cast %45 : vector<1xf32> to vector<1x1xf32>
      %c0_23 = arith.constant 0 : index
      %c0_24 = arith.constant 0 : index
      %47 = vector.load %arg6[%c0_23, %c0_24] : memref<1x1xf32, #tpu.memory_space<vmem>>, vector<1x1xf32>
      %48 = arith.addf %46, %47 : vector<1x1xf32>
      %cst_25 = arith.constant 5.000000e-01 : f32
      %49 = vector.broadcast %cst_25 : f32 to vector<1x1xf32>
      %50 = arith.mulf %49, %48 : vector<1x1xf32>
      %51 = math.tanh %50 : vector<1x1xf32>
      %cst_26 = arith.constant 1.000000e+00 : f32
      %52 = vector.broadcast %cst_26 : f32 to vector<1x1xf32>
      %53 = arith.addf %51, %52 : vector<1x1xf32>
      %cst_27 = arith.constant 5.000000e-01 : f32
      %54 = vector.broadcast %cst_27 : f32 to vector<1x1xf32>
      %55 = arith.mulf %54, %53 : vector<1x1xf32>
      %c0_28 = arith.constant 0 : index
      %c0_29 = arith.constant 0 : index
      %c0_30 = arith.constant 0 : index
      %56 = vector.load %arg8[%c0_28, %c0_29, %c0_30] : memref<1x1x1xf32, #tpu.memory_space<vmem>>, vector<1x1x1xf32>
      %57 = vector.shape_cast %56 : vector<1x1x1xf32> to vector<1x1xf32>
      %58 = vector.shape_cast %55 : vector<1x1xf32> to vector<1x1x1xf32>
      tpu.vector_store %arg8[%c0_28, %c0_29, %c0_30], %58 {strides = array<i32>} : memref<1x1x1xf32, #tpu.memory_space<vmem>>, vector<1x1x1xf32>,
    } else {
    }
    return
  }
  func.func @transform_0(%arg0: i32, %arg1: i32) -> (i32, i32, i32) {
    %c0_i32 = arith.constant 0 : i32
    %c0_i32_0 = arith.constant 0 : i32
    return %arg0, %c0_i32, %arg1 : i32, i32, i32
  }
  func.func @transform_1(%arg0: i32, %arg1: i32) -> (i32, i32) {
    %c0_i32 = arith.constant 0 : i32
    %c0_i32_0 = arith.constant 0 : i32
    %c0_i32_1 = arith.constant 0 : i32
    return %c0_i32, %c0_i32_0 : i32, i32
  }
  func.func @transform_2(%arg0: i32, %arg1: i32) -> (i32, i32) {
    %c0_i32 = arith.constant 0 : i32
    %c0_i32_0 = arith.constant 0 : i32
    %c0_i32_1 = arith.constant 0 : i32
    return %c0_i32, %c0_i32_0 : i32, i32
  }
  func.func @transform_3(%arg0: i32, %arg1: i32) -> (i32, i32) {
    %c0_i32 = arith.constant 0 : i32
    %c0_i32_0 = arith.constant 0 : i32
    %c0_i32_1 = arith.constant 0 : i32
    return %c0_i32, %c0_i32_0 : i32, i32
  }
  func.func @transform_4(%arg0: i32, %arg1: i32) -> (i32, i32) {
    %c0_i32 = arith.constant 0 : i32
    %c0_i32_0 = arith.constant 0 : i32
    %c0_i32_1 = arith.constant 0 : i32
    return %c0_i32, %c0_i32_0 : i32, i32
  }
  func.func @transform_5(%arg0: i32, %arg1: i32) -> (i32, i32, i32) {
    %c0_i32 = arith.constant 0 : i32
    %c0_i32_0 = arith.constant 0 : i32
    %c0_i32_1 = arith.constant 0 : i32
    return %arg0, %c0_i32, %c0_i32_0 : i32, i32, i32
  }
  func.func @transform_6(%arg0: i32, %arg1: i32) -> (i32, i32, i32) {
    %c0_i32 = arith.constant 0 : i32
    %c0_i32_0 = arith.constant 0 : i32
    %c0_i32_1 = arith.constant 0 : i32
    return %arg0, %c0_i32, %c0_i32_0 : i32, i32, i32
  }
}

module attributes {stable_mosaic.version = 11 : i64} {
  func.func @conv_gap_head_kernel(%arg0: i32, %arg1: i32, %arg2: memref<1x1x256xbf16, #tpu.memory_space<vmem>>, %arg3: memref<640x1xf32, #tpu.memory_space<vmem>>, %arg4: memref<640x1xf32, #tpu.memory_space<vmem>>, %arg5: memref<640x1xf32, #tpu.memory_space<vmem>>, %arg6: memref<1x1xf32, #tpu.memory_space<vmem>>, %arg7: memref<1x640x1xf32, #tpu.memory_space<vmem>>, %arg8: memref<1x1x1xf32, #tpu.memory_space<vmem>>, %arg9: memref<640x1xf32, #tpu.memory_space<vmem>>) attributes {dimension_semantics = [#tpu.dimension_semantics<parallel>, #tpu.dimension_semantics<arbitrary>], iteration_bounds = array<i64: 2, 1>, scalar_prefetch = 0 : i64, scratch_operands = 1 : i64, tpu.core_type = #tpu.core_type<tc>, window_params = [{transform_indices = @transform_0, window_bounds = array<i64: 1, 1, 256>}, {pipeline_mode = #tpu.pipeline_mode<synchronous>, transform_indices = @transform_1, window_bounds = array<i64: 640, 1>}, {pipeline_mode = #tpu.pipeline_mode<synchronous>, transform_indices = @transform_2, window_bounds = array<i64: 640, 1>}, {pipeline_mode = #tpu.pipeline_mode<synchronous>, transform_indices = @transform_3, window_bounds = array<i64: 640, 1>}, {pipeline_mode = #tpu.pipeline_mode<synchronous>, transform_indices = @transform_4, window_bounds = array<i64: 1, 1>}, {transform_indices = @transform_5, window_bounds = array<i64: 1, 640, 1>}, {transform_indices = @transform_6, window_bounds = array<i64: 1, 1, 1>}]} {
    %c0_i32 = arith.constant 0 : i32
    %0 = arith.cmpi eq, %arg1, %c0_i32 : i32
    %1 = arith.extui %0 : i1 to i32
    %c0_i32_0 = arith.constant 0 : i32
    %2 = arith.cmpi ne, %1, %c0_i32_0 : i32
    scf.if %2 {
      %cst_14 = arith.constant 0.000000e+00 : f32
      %23 = vector.broadcast %cst_14 : f32 to vector<640x1xf32>
      %c0_15 = arith.constant 0 : index
      %c0_16 = arith.constant 0 : index
      %24 = vector.load %arg9[%c0_15, %c0_16] : memref<640x1xf32, #tpu.memory_space<vmem>>, vector<640x1xf32>
      tpu.vector_store %arg9[%c0_15, %c0_16], %23 {strides = array<i32>} : memref<640x1xf32, #tpu.memory_space<vmem>>, vector<640x1xf32>,
    } else {
    }
    %c0 = arith.constant 0 : index
    %c0_1 = arith.constant 0 : index
    %c0_2 = arith.constant 0 : index
    %3 = vector.load %arg2[%c0, %c0_1, %c0_2] : memref<1x1x256xbf16, #tpu.memory_space<vmem>>, vector<1x1x256xbf16>
    %4 = vector.shape_cast %3 : vector<1x1x256xbf16> to vector<1x256xbf16>
    %5 = arith.extf %4 : vector<1x256xbf16> to vector<1x256xf32>
    %c0_3 = arith.constant 0 : index
    %c0_4 = arith.constant 0 : index
    %6 = vector.load %arg3[%c0_3, %c0_4] : memref<640x1xf32, #tpu.memory_space<vmem>>, vector<640x1xf32>
    %7 = vector.broadcast %6 : vector<640x1xf32> to vector<640x256xf32>
    %8 = vector.broadcast %5 : vector<1x256xf32> to vector<640x256xf32>
    %9 = arith.mulf %7, %8 : vector<640x256xf32>
    %c0_5 = arith.constant 0 : index
    %c0_6 = arith.constant 0 : index
    %10 = vector.load %arg4[%c0_5, %c0_6] : memref<640x1xf32, #tpu.memory_space<vmem>>, vector<640x1xf32>
    %11 = vector.broadcast %10 : vector<640x1xf32> to vector<640x256xf32>
    %12 = arith.addf %9, %11 : vector<640x256xf32>
    %cst = arith.constant 0.000000e+00 : f32
    %13 = vector.broadcast %cst : f32 to vector<640x256xf32>
    %14 = arith.maximumf %12, %13 : vector<640x256xf32>
    %c0_7 = arith.constant 0 : index
    %c0_8 = arith.constant 0 : index
    %15 = vector.load %arg9[%c0_7, %c0_8] : memref<640x1xf32, #tpu.memory_space<vmem>>, vector<640x1xf32>
    %cst_9 = arith.constant dense<0.000000e+00> : vector<640xf32>
    %16 = vector.multi_reduction <add>, %14, %cst_9 [1] : vector<640x256xf32> to vector<640xf32>
    %17 = vector.shape_cast %16 : vector<640xf32> to vector<640x1xf32>
    %18 = arith.addf %15, %17 : vector<640x1xf32>
    %c0_10 = arith.constant 0 : index
    %c0_11 = arith.constant 0 : index
    %19 = vector.load %arg9[%c0_10, %c0_11] : memref<640x1xf32, #tpu.memory_space<vmem>>, vector<640x1xf32>
    tpu.vector_store %arg9[%c0_10, %c0_11], %18 {strides = array<i32>} : memref<640x1xf32, #tpu.memory_space<vmem>>, vector<640x1xf32>,
    %c0_i32_12 = arith.constant 0 : i32
    %20 = arith.cmpi eq, %arg1, %c0_i32_12 : i32
    %21 = arith.extui %20 : i1 to i32
    %c0_i32_13 = arith.constant 0 : i32
    %22 = arith.cmpi ne, %21, %c0_i32_13 : i32
    scf.if %22 {
      %c0_14 = arith.constant 0 : index
      %c0_15 = arith.constant 0 : index
      %23 = vector.load %arg9[%c0_14, %c0_15] : memref<640x1xf32, #tpu.memory_space<vmem>>, vector<640x1xf32>
      %cst_16 = arith.constant 3.906250e-03 : f32
      %24 = vector.broadcast %cst_16 : f32 to vector<640x1xf32>
      %25 = arith.mulf %23, %24 : vector<640x1xf32>
      %c0_17 = arith.constant 0 : index
      %c0_18 = arith.constant 0 : index
      %c0_19 = arith.constant 0 : index
      %26 = vector.load %arg7[%c0_17, %c0_18, %c0_19] : memref<1x640x1xf32, #tpu.memory_space<vmem>>, vector<1x640x1xf32>
      %27 = vector.shape_cast %26 : vector<1x640x1xf32> to vector<640x1xf32>
      %28 = vector.shape_cast %25 : vector<640x1xf32> to vector<1x640x1xf32>
      tpu.vector_store %arg7[%c0_17, %c0_18, %c0_19], %28 {strides = array<i32>} : memref<1x640x1xf32, #tpu.memory_space<vmem>>, vector<1x640x1xf32>,
      %c0_20 = arith.constant 0 : index
      %c0_21 = arith.constant 0 : index
      %29 = vector.load %arg5[%c0_20, %c0_21] : memref<640x1xf32, #tpu.memory_space<vmem>>, vector<640x1xf32>
      %30 = arith.mulf %25, %29 : vector<640x1xf32>
      %cst_22 = arith.constant dense<0.000000e+00> : vector<1xf32>
      %31 = vector.multi_reduction <add>, %30, %cst_22 [0] : vector<640x1xf32> to vector<1xf32>
      %32 = vector.shape_cast %31 : vector<1xf32> to vector<1x1xf32>
      %c0_23 = arith.constant 0 : index
      %c0_24 = arith.constant 0 : index
      %33 = vector.load %arg6[%c0_23, %c0_24] : memref<1x1xf32, #tpu.memory_space<vmem>>, vector<1x1xf32>
      %34 = arith.addf %32, %33 : vector<1x1xf32>
      %cst_25 = arith.constant 5.000000e-01 : f32
      %35 = vector.broadcast %cst_25 : f32 to vector<1x1xf32>
      %36 = arith.mulf %35, %34 : vector<1x1xf32>
      %37 = math.tanh %36 : vector<1x1xf32>
      %cst_26 = arith.constant 1.000000e+00 : f32
      %38 = vector.broadcast %cst_26 : f32 to vector<1x1xf32>
      %39 = arith.addf %37, %38 : vector<1x1xf32>
      %cst_27 = arith.constant 5.000000e-01 : f32
      %40 = vector.broadcast %cst_27 : f32 to vector<1x1xf32>
      %41 = arith.mulf %40, %39 : vector<1x1xf32>
      %c0_28 = arith.constant 0 : index
      %c0_29 = arith.constant 0 : index
      %c0_30 = arith.constant 0 : index
      %42 = vector.load %arg8[%c0_28, %c0_29, %c0_30] : memref<1x1x1xf32, #tpu.memory_space<vmem>>, vector<1x1x1xf32>
      %43 = vector.shape_cast %42 : vector<1x1x1xf32> to vector<1x1xf32>
      %44 = vector.shape_cast %41 : vector<1x1xf32> to vector<1x1x1xf32>
      tpu.vector_store %arg8[%c0_28, %c0_29, %c0_30], %44 {strides = array<i32>} : memref<1x1x1xf32, #tpu.memory_space<vmem>>, vector<1x1x1xf32>,
    } else {
    }
    return
  }
  func.func @transform_0(%arg0: i32, %arg1: i32) -> (i32, i32, i32) {
    %c0_i32 = arith.constant 0 : i32
    %c0_i32_0 = arith.constant 0 : i32
    return %arg0, %c0_i32, %arg1 : i32, i32, i32
  }
  func.func @transform_1(%arg0: i32, %arg1: i32) -> (i32, i32) {
    %c0_i32 = arith.constant 0 : i32
    %c0_i32_0 = arith.constant 0 : i32
    %c0_i32_1 = arith.constant 0 : i32
    return %c0_i32, %c0_i32_0 : i32, i32
  }
  func.func @transform_2(%arg0: i32, %arg1: i32) -> (i32, i32) {
    %c0_i32 = arith.constant 0 : i32
    %c0_i32_0 = arith.constant 0 : i32
    %c0_i32_1 = arith.constant 0 : i32
    return %c0_i32, %c0_i32_0 : i32, i32
  }
  func.func @transform_3(%arg0: i32, %arg1: i32) -> (i32, i32) {
    %c0_i32 = arith.constant 0 : i32
    %c0_i32_0 = arith.constant 0 : i32
    %c0_i32_1 = arith.constant 0 : i32
    return %c0_i32, %c0_i32_0 : i32, i32
  }
  func.func @transform_4(%arg0: i32, %arg1: i32) -> (i32, i32) {
    %c0_i32 = arith.constant 0 : i32
    %c0_i32_0 = arith.constant 0 : i32
    %c0_i32_1 = arith.constant 0 : i32
    return %c0_i32, %c0_i32_0 : i32, i32
  }
  func.func @transform_5(%arg0: i32, %arg1: i32) -> (i32, i32, i32) {
    %c0_i32 = arith.constant 0 : i32
    %c0_i32_0 = arith.constant 0 : i32
    %c0_i32_1 = arith.constant 0 : i32
    return %arg0, %c0_i32, %c0_i32_0 : i32, i32, i32
  }
  func.func @transform_6(%arg0: i32, %arg1: i32) -> (i32, i32, i32) {
    %c0_i32 = arith.constant 0 : i32
    %c0_i32_0 = arith.constant 0 : i32
    %c0_i32_1 = arith.constant 0 : i32
    return %arg0, %c0_i32, %c0_i32_0 : i32, i32, i32
  }
}

module attributes {stable_mosaic.version = 11 : i64} {
  func.func @classifier_kernel(%arg0: memref<2x1920xf32, #tpu.memory_space<vmem>>, %arg1: memref<1x1920xf32, #tpu.memory_space<vmem>>, %arg2: memref<1x1xf32, #tpu.memory_space<vmem>>, %arg3: memref<2x1xf32, #tpu.memory_space<vmem>>) attributes {dimension_semantics = [], scalar_prefetch = 0 : i64, scratch_operands = 0 : i64, tpu.core_type = #tpu.core_type<tc>} {
    %c0 = arith.constant 0 : index
    %c0_0 = arith.constant 0 : index
    %0 = vector.load %arg0[%c0, %c0_0] : memref<2x1920xf32, #tpu.memory_space<vmem>>, vector<2x1920xf32>
    %c0_1 = arith.constant 0 : index
    %c0_2 = arith.constant 0 : index
    %1 = vector.load %arg1[%c0_1, %c0_2] : memref<1x1920xf32, #tpu.memory_space<vmem>>, vector<1x1920xf32>
    %2 = vector.broadcast %1 : vector<1x1920xf32> to vector<2x1920xf32>
    %3 = arith.mulf %0, %2 : vector<2x1920xf32>
    %cst = arith.constant dense<0.000000e+00> : vector<2xf32>
    %4 = vector.multi_reduction <add>, %3, %cst [1] : vector<2x1920xf32> to vector<2xf32>
    %5 = vector.shape_cast %4 : vector<2xf32> to vector<2x1xf32>
    %c0_3 = arith.constant 0 : index
    %c0_4 = arith.constant 0 : index
    %6 = vector.load %arg2[%c0_3, %c0_4] : memref<1x1xf32, #tpu.memory_space<vmem>>, vector<1x1xf32>
    %7 = vector.broadcast %6 : vector<1x1xf32> to vector<2x1xf32>
    %8 = arith.addf %5, %7 : vector<2x1xf32>
    %cst_5 = arith.constant 5.000000e-01 : f32
    %9 = vector.broadcast %cst_5 : f32 to vector<2x1xf32>
    %10 = arith.mulf %9, %8 : vector<2x1xf32>
    %11 = math.tanh %10 : vector<2x1xf32>
    %cst_6 = arith.constant 1.000000e+00 : f32
    %12 = vector.broadcast %cst_6 : f32 to vector<2x1xf32>
    %13 = arith.addf %11, %12 : vector<2x1xf32>
    %cst_7 = arith.constant 5.000000e-01 : f32
    %14 = vector.broadcast %cst_7 : f32 to vector<2x1xf32>
    %15 = arith.mulf %14, %13 : vector<2x1xf32>
    %c0_8 = arith.constant 0 : index
    %c0_9 = arith.constant 0 : index
    %16 = vector.load %arg3[%c0_8, %c0_9] : memref<2x1xf32, #tpu.memory_space<vmem>>, vector<2x1xf32>
    tpu.vector_store %arg3[%c0_8, %c0_9], %15 {strides = array<i32>} : memref<2x1xf32, #tpu.memory_space<vmem>>, vector<2x1xf32>,
    return
  }
}

</mosaic_0001>

<llo_original>
// kernel: rgbd_forward.5
$region0: #{rgbd_forward.5}
  #allocation0 [shape = 'u32[]', space=smem, size = 0x4, offset = 0x4, fixed_abs, tag = 'smem constant byte address 0x4 - core index']
  #allocation1 [shape = 'u32[144,128]{1,0:T(1,128)}', space=vmem, size = 0x12000, scoped, tag = 'internal scratch']
  #allocation2 [shape = 'f32[1,1]{1,0:T(1,128)S(1)}', space=vmem, size = 0x200, scoped, tag = 'scoped memory for rgbd_forward.5']
  %s0 = inlined_call_operand.vmem [shape: f32[2,1920], index: 0, kind: input, shape index: {}]
  %s1 = inlined_call_operand.vmem [shape: f32[1,1920], index: 1, kind: input, shape index: {}]
  %s2 = inlined_call_operand.<no memory space> [shape: f32[1,1], index: 2, kind: input, shape index: {}]
  %s3 = inlined_call_operand.vmem [shape: f32[2,1], index: 3, kind: output, shape index: {}]
  %s4 = sld [smem:[#allocation0]]
  $region22: #{rgbd_forward.5} parent=0
    _
  %s6 = ssub.s32 1, %s4
  %s7 = scalar_select 0, %s6, %s4
  %v8 = vstv %s2
  %9 = vst [vmem:[#allocation2] sm:$0x1] %v8
  // Predicated region
  $region2: #{rgbd_forward.5} parent=0 // pred_check
    _
  $region3: #{rgbd_forward.5} parent=0 // pred_check_branch
    %11 = sbr.rel (0) target = $region5
  $region4: #{rgbd_forward.5} parent=0 // pred_region
    _
  $region5: #{rgbd_forward.5} parent=0 // pred_fallthru
    _
  // Predicated region
  $region6: #{rgbd_forward.5} parent=0 // pred_check
    _
  $region7: #{rgbd_forward.5} parent=0 // pred_check_branch
    %13 = sbr.rel (0) target = $region9
  $region8: #{rgbd_forward.5} parent=0 // pred_region
    _
  $region9: #{rgbd_forward.5} parent=0 // pred_fallthru
    _
  // Predicated region
  $region10: #{rgbd_forward.5} parent=0 // pred_check
    _
  $region11: #{rgbd_forward.5} parent=0 // pred_check_branch
    %15 = sbr.rel (0) target = $region13
  $region12: #{rgbd_forward.5} parent=0 // pred_region
    _
  $region13: #{rgbd_forward.5} parent=0 // pred_fallthru
    _
  %v16 = vld [vmem:[%s0] sm:$0xff]
  %v17 = vld [vmem:[%s0 + $0x8] sm:$0xff]
  %v18 = vld [vmem:[%s0 + $0x10] sm:$0xff]
  %v19 = vld [vmem:[%s0 + $0x18] sm:$0x3f]
  %v20 = vld [vmem:[%s1] sm:$0xff]
  %v21 = vld [vmem:[%s1 + $0x8] sm:$0xff]
  %v24 = vlaneseq
  %v25 = vshrl.u32 %v24, 7
  %v26 = vsub.s32 0, %v25
  %v27 = vrot.slane %v20, %v26
  %v28 = vlaneseq
  %v29 = vshrl.u32 %v28, 7
  %v30 = vsub.s32 1, %v29
  %v31 = vrot.slane %v20, %v30
  %v32 = vlaneseq
  %v33 = vshrl.u32 %v32, 7
  %v34 = vsub.s32 2, %v33
  %v35 = vrot.slane %v20, %v34
  %v36 = vlaneseq
  %v37 = vshrl.u32 %v36, 7
  %v38 = vsub.s32 3, %v37
  %v39 = vrot.slane %v20, %v38
  %v40 = vlaneseq
  %v41 = vshrl.u32 %v40, 7
  %v42 = vsub.s32 4, %v41
  %v43 = vrot.slane %v20, %v42
  %v44 = vlaneseq
  %v45 = vshrl.u32 %v44, 7
  %v46 = vsub.s32 5, %v45
  %v47 = vrot.slane %v20, %v46
  %v48 = vlaneseq
  %v49 = vshrl.u32 %v48, 7
  %v50 = vsub.s32 6, %v49
  %v51 = vrot.slane %v20, %v50
  %v52 = vlaneseq
  %v53 = vshrl.u32 %v52, 7
  %v54 = vsub.s32 7, %v53
  %v55 = vrot.slane %v20, %v54
  %v56 = vlaneseq
  %v57 = vshrl.u32 %v56, 7
  %v58 = vsub.s32 0, %v57
  %v59 = vrot.slane %v21, %v58
  %v60 = vlaneseq
  %v61 = vshrl.u32 %v60, 7
  %v62 = vsub.s32 1, %v61
  %v63 = vrot.slane %v21, %v62
  %v64 = vlaneseq
  %v65 = vshrl.u32 %v64, 7
  %v66 = vsub.s32 2, %v65
  %v67 = vrot.slane %v21, %v66
  %v68 = vlaneseq
  %v69 = vshrl.u32 %v68, 7
  %v70 = vsub.s32 3, %v69
  %v71 = vrot.slane %v21, %v70
  %v72 = vlaneseq
  %v73 = vshrl.u32 %v72, 7
  %v74 = vsub.s32 4, %v73
  %v75 = vrot.slane %v21, %v74
  %v76 = vlaneseq
  %v77 = vshrl.u32 %v76, 7
  %v78 = vsub.s32 5, %v77
  %v79 = vrot.slane %v21, %v78
  %v80 = vlaneseq
  %v81 = vshrl.u32 %v80, 7
  %v82 = vsub.s32 6, %v81
  %v83 = vrot.slane %v21, %v82
  %v84 = vcombine.low %v27, %v31
  %v85 = vcombine.low %v35, %v39
  %v87 = vunpack.c.l.s4 1983009808
  %v88 = vunpack.c.0.s8 %v87
  %v89 = vlaneseq
  %v90 = vshrl.u32 %v89, 7
  %v91 = vsub.s32 %v88, %v90
  %v92 = vrot.slane %v84, %v91
  %v94 = vunpack.c.l.s4 1983009808
  %v95 = vunpack.c.0.s8 %v94
  %v96 = vlaneseq
  %v97 = vshrl.u32 %v96, 7
  %v98 = vsub.s32 %v95, %v97
  %v99 = vrot.slane %v85, %v98
  %v100 = vcombine.low %v92, %v99
  %v101 = vcombine.low %v43, %v47
  %v102 = vcombine.low %v51, %v55
  %v104 = vunpack.c.l.s4 1983009808
  %v105 = vunpack.c.0.s8 %v104
  %v106 = vlaneseq
  %v107 = vshrl.u32 %v106, 7
  %v108 = vsub.s32 %v105, %v107
  %v109 = vrot.slane %v101, %v108
  %v111 = vunpack.c.l.s4 1983009808
  %v112 = vunpack.c.0.s8 %v111
  %v113 = vlaneseq
  %v114 = vshrl.u32 %v113, 7
  %v115 = vsub.s32 %v112, %v114
  %v116 = vrot.slane %v102, %v115
  %v117 = vcombine.low %v109, %v116
  %v118 = vcombine.low %v59, %v63
  %v119 = vcombine.low %v67, %v71
  %v121 = vunpack.c.l.s4 1983009808
  %v122 = vunpack.c.0.s8 %v121
  %v123 = vlaneseq
  %v124 = vshrl.u32 %v123, 7
  %v125 = vsub.s32 %v122, %v124
  %v126 = vrot.slane %v118, %v125
  %v128 = vunpack.c.l.s4 1983009808
  %v129 = vunpack.c.0.s8 %v128
  %v130 = vlaneseq
  %v131 = vshrl.u32 %v130, 7
  %v132 = vsub.s32 %v129, %v131
  %v133 = vrot.slane %v119, %v132
  %v134 = vcombine.low %v126, %v133
  %v135 = vcombine.low %v75, %v79
  %v137 = vunpack.c.l.s4 1983009808
  %v138 = vunpack.c.0.s8 %v137
  %v139 = vlaneseq
  %v140 = vshrl.u32 %v139, 7
  %v141 = vsub.s32 %v138, %v140
  %v142 = vrot.slane %v135, %v141
  %v144 = vunpack.c.l.s4 1983009808
  %v145 = vunpack.c.0.s8 %v144
  %v146 = vlaneseq
  %v147 = vshrl.u32 %v146, 7
  %v148 = vsub.s32 %v145, %v147
  %v149 = vrot.slane %v83, %v148
  %v150 = vcombine.low %v142, %v149
  %v155 = vmul.f32 %v16, %v100
  %v156 = vmul.f32 %v17, %v117
  %v157 = vmul.f32 %v18, %v134
  %v158 = vmul.f32 %v19, %v150
  %v163 = vcombine.high %v155, %v155
  %v165 = vunpack.c.l.s4 1983009808
  %v166 = vunpack.c.0.s8 %v165
  %v167 = vlaneseq
  %v168 = vshrl.u32 %v167, 7
  %v169 = vsub.s32 %v166, %v168
  %v170 = vrot.slane %v155, %v169
  %v172 = vunpack.c.l.s4 1983009808
  %v173 = vunpack.c.0.s8 %v172
  %v174 = vlaneseq
  %v175 = vshrl.u32 %v174, 7
  %v176 = vsub.s32 %v173, %v175
  %v177 = vrot.slane %v163, %v176
  %v178 = vcombine.high %v170, %v170
  %v179 = vcombine.high %v177, %v177
  %v180 = vcombine.high %v156, %v156
  %v182 = vunpack.c.l.s4 1983009808
  %v183 = vunpack.c.0.s8 %v182
  %v184 = vlaneseq
  %v185 = vshrl.u32 %v184, 7
  %v186 = vsub.s32 %v183, %v185
  %v187 = vrot.slane %v156, %v186
  %v189 = vunpack.c.l.s4 1983009808
  %v190 = vunpack.c.0.s8 %v189
  %v191 = vlaneseq
  %v192 = vshrl.u32 %v191, 7
  %v193 = vsub.s32 %v190, %v192
  %v194 = vrot.slane %v180, %v193
  %v195 = vcombine.high %v187, %v187
  %v196 = vcombine.high %v194, %v194
  %v197 = vcombine.high %v157, %v157
  %v199 = vunpack.c.l.s4 1983009808
  %v200 = vunpack.c.0.s8 %v199
  %v201 = vlaneseq
  %v202 = vshrl.u32 %v201, 7
  %v203 = vsub.s32 %v200, %v202
  %v204 = vrot.slane %v157, %v203
  %v206 = vunpack.c.l.s4 1983009808
  %v207 = vunpack.c.0.s8 %v206
  %v208 = vlaneseq
  %v209 = vshrl.u32 %v208, 7
  %v210 = vsub.s32 %v207, %v209
  %v211 = vrot.slane %v197, %v210
  %v212 = vcombine.high %v204, %v204
  %v213 = vcombine.high %v211, %v211
  %v214 = vcombine.high %v158, %v158
  %v216 = vunpack.c.l.s4 1983009808
  %v217 = vunpack.c.0.s8 %v216
  %v218 = vlaneseq
  %v219 = vshrl.u32 %v218, 7
  %v220 = vsub.s32 %v217, %v219
  %v221 = vrot.slane %v158, %v220
  %v223 = vunpack.c.l.s4 1983009808
  %v224 = vunpack.c.0.s8 %v223
  %v225 = vlaneseq
  %v226 = vshrl.u32 %v225, 7
  %v227 = vsub.s32 %v224, %v226
  %v228 = vrot.slane %v214, %v227
  %v229 = vcombine.high %v221, %v221
  %vm245 = vcmask 1041408
  %v246 = vsel %vm245, %v170, 0.0
  %v247 = vsel %vm245, %v178, 0.0
  %v248 = vadd.f32 %v246, %v247
  %v249 = vsel %vm245, %v177, 0.0
  %v250 = vadd.f32 %v248, %v249
  %v251 = vsel %vm245, %v179, 0.0
  %v252 = vadd.f32 %v250, %v251
  %v253 = vsel %vm245, %v187, 0.0
  %v254 = vadd.f32 %v252, %v253
  %v255 = vsel %vm245, %v195, 0.0
  %v256 = vadd.f32 %v254, %v255
  %v257 = vsel %vm245, %v194, 0.0
  %v258 = vadd.f32 %v256, %v257
  %v259 = vsel %vm245, %v196, 0.0
  %v260 = vadd.f32 %v258, %v259
  %v261 = vsel %vm245, %v204, 0.0
  %v262 = vadd.f32 %v260, %v261
  %v263 = vsel %vm245, %v212, 0.0
  %v264 = vadd.f32 %v262, %v263
  %v265 = vsel %vm245, %v211, 0.0
  %v266 = vadd.f32 %v264, %v265
  %v267 = vsel %vm245, %v213, 0.0
  %v268 = vadd.f32 %v266, %v267
  %v269 = vsel %vm245, %v221, 0.0
  %v270 = vadd.f32 %v268, %v269
  %v271 = vsel %vm245, %v229, 0.0
  %v272 = vadd.f32 %v270, %v271
  %v273 = vsel %vm245, %v228, 0.0
  %v274 = vadd.f32 %v272, %v273
  %275 = vadd.xlane.f32.xlu0 %v274
  %v276 = vpop.xlane.xlu0 %275
  %v277 = vld [vmem:[#allocation2] sm:$0x1]
  %v279 = vlaneseq
  %v280 = vshrl.u32 %v279, 7
  %v281 = vsub.s32 0, %v280
  %v282 = vrot.slane %v277, %v281
  %v284 = vadd.f32 %v276, %v282
  %v285 = vmul.f32 %v284, 0.5
  %v286 = vtanh.pop %v285
  %v287 = vadd.f32 %v286, 1.0
  %v288 = vmul.f32 %v287, 0.5
  %vm289 = vcmask 1024
  %290 = vst.msk [vmem:[%s3] sm:$0x3] %vm289, %v288
  // Predicated region
  $region14: #{rgbd_forward.5} parent=0 // pred_check
    _
  $region15: #{rgbd_forward.5} parent=0 // pred_check_branch
    %292 = sbr.rel (0) target = $region17
  $region16: #{rgbd_forward.5} parent=0 // pred_region
    _
  $region17: #{rgbd_forward.5} parent=0 // pred_fallthru
    _
  // Predicated region
  $region18: #{rgbd_forward.5} parent=0 // pred_check
    _
  $region19: #{rgbd_forward.5} parent=0 // pred_check_branch
    %294 = sbr.rel (0) target = $region21
  $region20: #{rgbd_forward.5} parent=0 // pred_region
    _
  $region21: #{rgbd_forward.5} parent=0 // pred_fallthru
    _

// kernel: rgbd_forward.4
$region0: #{rgbd_forward.4}
  #allocation0 [shape = 'u32[]', space=smem, size = 0x4, offset = 0x4, fixed_abs, tag = 'smem constant byte address 0x4 - core index']
  #allocation1 [shape = 'u32[144,128]{1,0:T(1,128)}', space=vmem, size = 0x12000, scoped, tag = 'internal scratch']
  #allocation2 [shape = 'f32[640,1]{1,0:T(8,128)}', space=vmem, size = 0x50000, scoped, tag = 'scratch operand']
  #allocation3 [shape = 'f32[1,1]{1,0:T(1,128)S(1)}', space=vmem, size = 0x200, scoped, tag = 'scoped memory for rgbd_forward.4']
  %s0 = inlined_call_operand.vmem [shape: bf16[2,1,256], index: 0, kind: input, shape index: {}]
  %s1 = inlined_call_operand.vmem [shape: f32[640,1], index: 1, kind: input, shape index: {}]
  %s2 = inlined_call_operand.vmem [shape: f32[640,1], index: 2, kind: input, shape index: {}]
  %s3 = inlined_call_operand.vmem [shape: f32[640,1], index: 3, kind: input, shape index: {}]
  %s4 = inlined_call_operand.<no memory space> [shape: f32[1,1], index: 4, kind: input, shape index: {}]
  %s5 = inlined_call_operand.vmem [shape: f32[2,640,1], index: 5, kind: output, shape index: {0}]
  %s6 = inlined_call_operand.vmem [shape: f32[2,1,1], index: 6, kind: output, shape index: {1}]
  %7 = xla_tuple %s5, %s6
  %s8 = sld [smem:[#allocation0]]
  $region69: #{rgbd_forward.4} parent=0
    _
  %s10 = ssub.s32 1, %s8
  %s11 = scalar_select 0, %s10, %s8
  %v12 = vstv %s4
  %13 = vst [vmem:[#allocation3] sm:$0x1] %v12
  loop: start=0, step=1, limit=4
  $region2: #{rgbd_forward.4} parent=0 // loop_pre_header
    _
  $region3: #{rgbd_forward.4} parent=0 // loop_header
    %s15 = sphi 0, %s19
    %p16 = scmp.ge.s32.totalorder %s15, 4
    %s22 = sphi 0, %s34
    %s23 = sphi 0, %s30
    %s24 = sphi 0, %s22
    %s25 = sphi 0, %s23
    %s26 = sphi 0, %s24
    %s27 = sphi 0, %s25
    %s39 = sphi 0, %s41
    %s42 = sphi 0, %s39
    %s43 = sphi 0, %s42
    %s59 = sphi 0, %s43
    %s63 = sphi 0, %s63
    %s65 = sphi 0, %s63
    %s66 = sphi 0, %s65
    %s80 = sphi 0, %s66
    %s84 = sphi 0, %s84
    %s86 = sphi 0, %s84
    %s87 = sphi 0, %s86
    %s101 = sphi 0, %s87
    %s105 = sphi 0, %s105
    %s107 = sphi 0, %s105
    %s108 = sphi 0, %s107
    %s122 = sphi 0, %s108
    %s126 = sphi 0, %s126
    %s128 = sphi 0, %s126
    %s129 = sphi 0, %s128
    %s143 = sphi 0, %s129
    %s149 = sphi 0, %s151
    %s152 = sphi 0, %s149
    %s153 = sphi 0, %s152
    %s169 = sphi 0, %s153
    %s175 = sphi 0, %s177
    %s178 = sphi 0, %s175
    %s179 = sphi 0, %s178
    %s195 = sphi 0, %s179
  $region4: #{rgbd_forward.4} parent=0 // loop_header_branch
    %18 = sbr.rel (%p16) target = $region8
  $region5: #{rgbd_forward.4} parent=0 // loop_body
    %s20 = ssub.s32 %s15, 1
    %s21 = ssub.s32 %s15, 2
    %s28 = sadd.s32 1, %s23
    %p29 = scmp.ge.s32.totalorder %s28, 1
    %s30 = scalar_select %p29, 0, %s28
    %s31 = sadd.s32 1, %s22
    %s32 = scalar_select %p29, %s31, %s22
    %p33 = scmp.ge.s32.totalorder %s32, 2
    %s34 = scalar_select %p33, 0, %s32
    %s35 = ssub.s32 %s22, %s34
    %s36 = ssub.s32 %s23, %s30
    %s37 = sor.u32 %s35, %s36
    %p38 = scmp.eq.s32.totalorder %s37, 0
    %s40 = sadd.s32 %s39, 1
    %s41 = scalar_select %p38, %s39, %s40
    %p44 = pneg %p38
    %p45 = scmp.eq.s32.totalorder %s15, 1
    %p46 = por %p44, %p45
    %p47 = scmp.ne.s32.totalorder %s39, %s42
    %p48 = scmp.eq.s32.totalorder %s15, 0
    %p49 = por %p47, %p48
    %p50 = scmp.ne.s32.totalorder %s39, %s42
    %p51 = scmp.eq.s32.totalorder %s20, 1
    %p52 = por %p50, %p51
    %p53 = scmp.ne.s32.totalorder %s42, %s43
    %p54 = scmp.eq.s32.totalorder %s20, 0
    %p55 = por %p53, %p54
    %p56 = scmp.ne.s32.totalorder %s42, %s43
    %p57 = scmp.eq.s32.totalorder %s21, 1
    %p58 = por %p56, %p57
    %p60 = scmp.ne.s32.totalorder %s43, %s59
    %p61 = scmp.eq.s32.totalorder %s21, 0
    %p62 = por %p60, %p61
    %s64 = sadd.s32 %s63, 1
    %p67 = scmp.eq.s32.totalorder %s15, 1
    %p68 = scmp.ne.s32.totalorder %s63, %s65
    %p69 = scmp.eq.s32.totalorder %s15, 0
    %p70 = por %p68, %p69
    %p71 = scmp.ne.s32.totalorder %s63, %s65
    %p72 = scmp.eq.s32.totalorder %s20, 1
    %p73 = por %p71, %p72
    %p74 = scmp.ne.s32.totalorder %s65, %s66
    %p75 = scmp.eq.s32.totalorder %s20, 0
    %p76 = por %p74, %p75
    %p77 = scmp.ne.s32.totalorder %s65, %s66
    %p78 = scmp.eq.s32.totalorder %s21, 1
    %p79 = por %p77, %p78
    %p81 = scmp.ne.s32.totalorder %s66, %s80
    %p82 = scmp.eq.s32.totalorder %s21, 0
    %p83 = por %p81, %p82
    %s85 = sadd.s32 %s84, 1
    %p88 = scmp.eq.s32.totalorder %s15, 1
    %p89 = scmp.ne.s32.totalorder %s84, %s86
    %p90 = scmp.eq.s32.totalorder %s15, 0
    %p91 = por %p89, %p90
    %p92 = scmp.ne.s32.totalorder %s84, %s86
    %p93 = scmp.eq.s32.totalorder %s20, 1
    %p94 = por %p92, %p93
    %p95 = scmp.ne.s32.totalorder %s86, %s87
    %p96 = scmp.eq.s32.totalorder %s20, 0
    %p97 = por %p95, %p96
    %p98 = scmp.ne.s32.totalorder %s86, %s87
    %p99 = scmp.eq.s32.totalorder %s21, 1
    %p100 = por %p98, %p99
    %p102 = scmp.ne.s32.totalorder %s87, %s101
    %p103 = scmp.eq.s32.totalorder %s21, 0
    %p104 = por %p102, %p103
    %s106 = sadd.s32 %s105, 1
    %p109 = scmp.eq.s32.totalorder %s15, 1
    %p110 = scmp.ne.s32.totalorder %s105, %s107
    %p111 = scmp.eq.s32.totalorder %s15, 0
    %p112 = por %p110, %p111
    %p113 = scmp.ne.s32.totalorder %s105, %s107
    %p114 = scmp.eq.s32.totalorder %s20, 1
    %p115 = por %p113, %p114
    %p116 = scmp.ne.s32.totalorder %s107, %s108
    %p117 = scmp.eq.s32.totalorder %s20, 0
    %p118 = por %p116, %p117
    %p119 = scmp.ne.s32.totalorder %s107, %s108
    %p120 = scmp.eq.s32.totalorder %s21, 1
    %p121 = por %p119, %p120
    %p123 = scmp.ne.s32.totalorder %s108, %s122
    %p124 = scmp.eq.s32.totalorder %s21, 0
    %p125 = por %p123, %p124
    %s127 = sadd.s32 %s126, 1
    %p130 = scmp.eq.s32.totalorder %s15, 1
    %p131 = scmp.ne.s32.totalorder %s126, %s128
    %p132 = scmp.eq.s32.totalorder %s15, 0
    %p133 = por %p131, %p132
    %p134 = scmp.ne.s32.totalorder %s126, %s128
    %p135 = scmp.eq.s32.totalorder %s20, 1
    %p136 = por %p134, %p135
    %p137 = scmp.ne.s32.totalorder %s128, %s129
    %p138 = scmp.eq.s32.totalorder %s20, 0
    %p139 = por %p137, %p138
    %p140 = scmp.ne.s32.totalorder %s128, %s129
    %p141 = scmp.eq.s32.totalorder %s21, 1
    %p142 = por %p140, %p141
    %p144 = scmp.ne.s32.totalorder %s129, %s143
    %p145 = scmp.eq.s32.totalorder %s21, 0
    %p146 = por %p144, %p145
    %s147 = ssub.s32 %s22, %s34
    %p148 = scmp.eq.s32.totalorder %s147, 0
    %s150 = sadd.s32 %s149, 1
    %s151 = scalar_select %p148, %s149, %s150
    %p154 = pneg %p148
    %p155 = scmp.eq.s32.totalorder %s15, 1
    %p156 = por %p154, %p155
    %p157 = scmp.ne.s32.totalorder %s149, %s152
    %p158 = scmp.eq.s32.totalorder %s15, 0
    %p159 = por %p157, %p158
    %p160 = scmp.ne.s32.totalorder %s149, %s152
    %p161 = scmp.eq.s32.totalorder %s20, 1
    %p162 = por %p160, %p161
    %p163 = scmp.ne.s32.totalorder %s152, %s153
    %p164 = scmp.eq.s32.totalorder %s20, 0
    %p165 = por %p163, %p164
    %p166 = scmp.ne.s32.totalorder %s152, %s153
    %p167 = scmp.eq.s32.totalorder %s21, 1
    %p168 = por %p166, %p167
    %p170 = scmp.ne.s32.totalorder %s153, %s169
    %p171 = scmp.eq.s32.totalorder %s21, 0
    %p172 = por %p170, %p171
    %s173 = ssub.s32 %s22, %s34
    %p174 = scmp.eq.s32.totalorder %s173, 0
    %s176 = sadd.s32 %s175, 1
    %s177 = scalar_select %p174, %s175, %s176
    %p180 = pneg %p174
    %p181 = scmp.eq.s32.totalorder %s15, 1
    %p182 = por %p180, %p181
    %p183 = scmp.ne.s32.totalorder %s175, %s178
    %p184 = scmp.eq.s32.totalorder %s15, 0
    %p185 = por %p183, %p184
    %p186 = scmp.ne.s32.totalorder %s175, %s178
    %p187 = scmp.eq.s32.totalorder %s20, 1
    %p188 = por %p186, %p187
    %p189 = scmp.ne.s32.totalorder %s178, %s179
    %p190 = scmp.eq.s32.totalorder %s20, 0
    %p191 = por %p189, %p190
    %p192 = scmp.ne.s32.totalorder %s178, %s179
    %p193 = scmp.eq.s32.totalorder %s21, 1
    %p194 = por %p192, %p193
    %p196 = scmp.ne.s32.totalorder %s179, %s195
    %p197 = scmp.eq.s32.totalorder %s21, 0
    %p198 = por %p196, %p197
    %p199 = scmp.le.s32.totalorder 1, %s15
    %p200 = scmp.lt.s32.totalorder %s15, 3
    %p201 = pnand %p199, %p200
    %p202 = pneg %p201
    // Predicated region
    $region9: #{rgbd_forward.4} parent=5 // pred_check
      _
    $region10: #{rgbd_forward.4} parent=5 // pred_check_branch
      %204 = sbr.rel (%p201) target = $region12
    $region11: #{rgbd_forward.4} parent=5 // pred_region
      %s205 = ssub.s32 %s15, 1
      // Predicated region
      $region13: #{rgbd_forward.4} parent=11 // pred_check
        %p206 = pneg %p76
      $region14: #{rgbd_forward.4} parent=11 // pred_check_branch
        %208 = sbr.rel (%p206) target = $region16
      $region15: #{rgbd_forward.4} parent=11 // pred_region
        _
      $region16: #{rgbd_forward.4} parent=11 // pred_fallthru
        _
      // Predicated region
      $region17: #{rgbd_forward.4} parent=11 // pred_check
        %p209 = pneg %p97
      $region18: #{rgbd_forward.4} parent=11 // pred_check_branch
        %211 = sbr.rel (%p209) target = $region20
      $region19: #{rgbd_forward.4} parent=11 // pred_region
        _
      $region20: #{rgbd_forward.4} parent=11 // pred_fallthru
        _
      // Predicated region
      $region21: #{rgbd_forward.4} parent=11 // pred_check
        %p212 = pneg %p118
      $region22: #{rgbd_forward.4} parent=11 // pred_check_branch
        %214 = sbr.rel (%p212) target = $region24
      $region23: #{rgbd_forward.4} parent=11 // pred_region
        _
      $region24: #{rgbd_forward.4} parent=11 // pred_fallthru
        _
      // Predicated region
      $region25: #{rgbd_forward.4} parent=11 // pred_check
        %p215 = pneg %p139
      $region26: #{rgbd_forward.4} parent=11 // pred_check_branch
        %217 = sbr.rel (%p215) target = $region28
      $region27: #{rgbd_forward.4} parent=11 // pred_region
        _
      $region28: #{rgbd_forward.4} parent=11 // pred_fallthru
        _
    $region12: #{rgbd_forward.4} parent=5 // pred_fallthru
      _
    %p218 = scmp.lt.s32.totalorder %s15, 2
    // Predicated region
    $region29: #{rgbd_forward.4} parent=5 // pred_check
      %p219 = pneg %p218
    $region30: #{rgbd_forward.4} parent=5 // pred_check_branch
      %221 = sbr.rel (%p219) target = $region32
    $region31: #{rgbd_forward.4} parent=5 // pred_region
      // Predicated region
      $region33: #{rgbd_forward.4} parent=31 // pred_check
        %p222 = pneg %p49
      $region34: #{rgbd_forward.4} parent=31 // pred_check_branch
        %224 = sbr.rel (%p222) target = $region36
      $region35: #{rgbd_forward.4} parent=31 // pred_region
        %s225 = smul.u32 2, %s23
        %p226 = scmp.lt.s32.totalorder %s22, 1
        %s227 = scalar_select %p226, %s22, 1
        %p228 = scmp.lt.s32.totalorder %s225, 1
        %s229 = scalar_select %p228, %s225, 1
        %s230 = smul.addr %s227, 2
        %s231 = sadd.s32 %s229, %s230
        %s232 = scalar_lea.vmem %s0, %s231
        %s233 = smul.u32 2, %s23
      $region36: #{rgbd_forward.4} parent=31 // pred_fallthru
        _
    $region32: #{rgbd_forward.4} parent=5 // pred_fallthru
      _
    %p234 = scmp.le.s32.totalorder 1, %s15
    %p235 = scmp.lt.s32.totalorder %s15, 3
    %p236 = pnand %p234, %p235
    %p237 = pneg %p236
    // Predicated region
    $region37: #{rgbd_forward.4} parent=5 // pred_check
      _
    $region38: #{rgbd_forward.4} parent=5 // pred_check_branch
      %239 = sbr.rel (%p236) target = $region40
    $region39: #{rgbd_forward.4} parent=5 // pred_region
      %s240 = ssub.s32 %s15, 1
      %s241 = smul.u32 2, %s25
      %p242 = scmp.lt.s32.totalorder %s24, 1
      %s243 = scalar_select %p242, %s24, 1
      %p244 = scmp.lt.s32.totalorder %s241, 1
      %s245 = scalar_select %p244, %s241, 1
      %s246 = smul.addr %s243, 2
      %s247 = sadd.s32 %s245, %s246
      %s248 = scalar_lea.vmem %s0, %s247
      %p249 = pneg %p55
      %p250 = pneg %p52
      %p251 = pneg %p76
      %p252 = pneg %p73
      %p253 = pneg %p97
      %p254 = pneg %p94
      %p255 = pneg %p118
      %p256 = pneg %p115
      %p257 = pneg %p139
      %p258 = pneg %p136
      %p259 = pneg %p165
      %p260 = pneg %p162
      %p261 = scmp.lt.s32.totalorder %s24, 1
      %s262 = scalar_select %p261, %s24, 1
      %s263 = smul.addr %s262, 80
      %s264 = smul.addr %s263, 8
      %s265 = scalar_lea.vmem %s5, %s264
      %p266 = pneg %p191
      %p267 = pneg %p188
      %p268 = scmp.lt.s32.totalorder %s24, 1
      %s269 = scalar_select %p268, %s24, 1
      %s270 = scalar_lea.vmem %s6, %s269
      %s271 = smul.u32 2, %s25
      %p272 = scmp.lt.s32.totalorder %s24, 1
      %s273 = scalar_select %p272, %s24, 1
      %p274 = scmp.lt.s32.totalorder %s271, 1
      %s275 = scalar_select %p274, %s271, 1
      %s276 = smul.addr %s273, 2
      %s277 = sadd.s32 %s275, %s276
      %s278 = scalar_lea.vmem %s0, %s277
      %s279 = smul.u32 2, %s25
      %p280 = scmp.lt.s32.totalorder %s24, 1
      %s281 = scalar_select %p280, %s24, 1
      %s282 = smul.addr %s281, 80
      %s283 = smul.addr %s282, 8
      %s284 = scalar_lea.vmem %s5, %s283
      %p285 = scmp.lt.s32.totalorder %s24, 1
      %s286 = scalar_select %p285, %s24, 1
      %s287 = scalar_lea.vmem %s6, %s286
      %p288 = scmp.eq.s32.totalorder %s25, 0
      // Predicated region
      $region41: #{rgbd_forward.4} parent=39 // pred_check
        %p289 = pneg %p288
      $region42: #{rgbd_forward.4} parent=39 // pred_check_branch
        %291 = sbr.rel (%p289) target = $region44
      $region43: #{rgbd_forward.4} parent=39 // pred_region
        %vm292 = vcmask 7168
        %293 = vst.msk [vmem:[#allocation2] sm:$0xff] %vm292, 0.0
        %294 = vst.msk [vmem:[#allocation2 + $0x8] sm:$0xff] %vm292, 0.0
        %295 = vst.msk [vmem:[#allocation2 + $0x10] sm:$0xff] %vm292, 0.0
        %296 = vst.msk [vmem:[#allocation2 + $0x18] sm:$0xff] %vm292, 0.0
        %297 = vst.msk [vmem:[#allocation2 + $0x20] sm:$0xff] %vm292, 0.0
        %298 = vst.msk [vmem:[#allocation2 + $0x28] sm:$0xff] %vm292, 0.0
        %299 = vst.msk [vmem:[#allocation2 + $0x30] sm:$0xff] %vm292, 0.0
        %300 = vst.msk [vmem:[#allocation2 + $0x38] sm:$0xff] %vm292, 0.0
        %301 = vst.msk [vmem:[#allocation2 + $0x40] sm:$0xff] %vm292, 0.0
        %302 = vst.msk [vmem:[#allocation2 + $0x48] sm:$0xff] %vm292, 0.0
        %303 = vst.msk [vmem:[#allocation2 + $0x50] sm:$0xff] %vm292, 0.0
        %304 = vst.msk [vmem:[#allocation2 + $0x58] sm:$0xff] %vm292, 0.0
        %305 = vst.msk [vmem:[#allocation2 + $0x60] sm:$0xff] %vm292, 0.0
        %306 = vst.msk [vmem:[#allocation2 + $0x68] sm:$0xff] %vm292, 0.0
        %307 = vst.msk [vmem:[#allocation2 + $0x70] sm:$0xff] %vm292, 0.0
        %308 = vst.msk [vmem:[#allocation2 + $0x78] sm:$0xff] %vm292, 0.0
        %309 = vst.msk [vmem:[#allocation2 + $0x80] sm:$0xff] %vm292, 0.0
        %310 = vst.msk [vmem:[#allocation2 + $0x88] sm:$0xff] %vm292, 0.0
        %311 = vst.msk [vmem:[#allocation2 + $0x90] sm:$0xff] %vm292, 0.0
        %312 = vst.msk [vmem:[#allocation2 + $0x98] sm:$0xff] %vm292, 0.0
        %313 = vst.msk [vmem:[#allocation2 + $0xa0] sm:$0xff] %vm292, 0.0
        %314 = vst.msk [vmem:[#allocation2 + $0xa8] sm:$0xff] %vm292, 0.0
        %315 = vst.msk [vmem:[#allocation2 + $0xb0] sm:$0xff] %vm292, 0.0
        %316 = vst.msk [vmem:[#allocation2 + $0xb8] sm:$0xff] %vm292, 0.0
        %317 = vst.msk [vmem:[#allocation2 + $0xc0] sm:$0xff] %vm292, 0.0
        %318 = vst.msk [vmem:[#allocation2 + $0xc8] sm:$0xff] %vm292, 0.0
        %319 = vst.msk [vmem:[#allocation2 + $0xd0] sm:$0xff] %vm292, 0.0
        %320 = vst.msk [vmem:[#allocation2 + $0xd8] sm:$0xff] %vm292, 0.0
        %321 = vst.msk [vmem:[#allocation2 + $0xe0] sm:$0xff] %vm292, 0.0
        %322 = vst.msk [vmem:[#allocation2 + $0xe8] sm:$0xff] %vm292, 0.0
        %323 = vst.msk [vmem:[#allocation2 + $0xf0] sm:$0xff] %vm292, 0.0
        %324 = vst.msk [vmem:[#allocation2 + $0xf8] sm:$0xff] %vm292, 0.0
        %325 = vst.msk [vmem:[#allocation2 + $0x100] sm:$0xff] %vm292, 0.0
        %326 = vst.msk [vmem:[#allocation2 + $0x108] sm:$0xff] %vm292, 0.0
        %327 = vst.msk [vmem:[#allocation2 + $0x110] sm:$0xff] %vm292, 0.0
        %328 = vst.msk [vmem:[#allocation2 + $0x118] sm:$0xff] %vm292, 0.0
        %329 = vst.msk [vmem:[#allocation2 + $0x120] sm:$0xff] %vm292, 0.0
        %330 = vst.msk [vmem:[#allocation2 + $0x128] sm:$0xff] %vm292, 0.0
        %331 = vst.msk [vmem:[#allocation2 + $0x130] sm:$0xff] %vm292, 0.0
        %332 = vst.msk [vmem:[#allocation2 + $0x138] sm:$0xff] %vm292, 0.0
        %333 = vst.msk [vmem:[#allocation2 + $0x140] sm:$0xff] %vm292, 0.0
        %334 = vst.msk [vmem:[#allocation2 + $0x148] sm:$0xff] %vm292, 0.0
        %335 = vst.msk [vmem:[#allocation2 + $0x150] sm:$0xff] %vm292, 0.0
        %336 = vst.msk [vmem:[#allocation2 + $0x158] sm:$0xff] %vm292, 0.0
        %337 = vst.msk [vmem:[#allocation2 + $0x160] sm:$0xff] %vm292, 0.0
        %338 = vst.msk [vmem:[#allocation2 + $0x168] sm:$0xff] %vm292, 0.0
        %339 = vst.msk [vmem:[#allocation2 + $0x170] sm:$0xff] %vm292, 0.0
        %340 = vst.msk [vmem:[#allocation2 + $0x178] sm:$0xff] %vm292, 0.0
        %341 = vst.msk [vmem:[#allocation2 + $0x180] sm:$0xff] %vm292, 0.0
        %342 = vst.msk [vmem:[#allocation2 + $0x188] sm:$0xff] %vm292, 0.0
        %343 = vst.msk [vmem:[#allocation2 + $0x190] sm:$0xff] %vm292, 0.0
        %344 = vst.msk [vmem:[#allocation2 + $0x198] sm:$0xff] %vm292, 0.0
        %345 = vst.msk [vmem:[#allocation2 + $0x1a0] sm:$0xff] %vm292, 0.0
        %346 = vst.msk [vmem:[#allocation2 + $0x1a8] sm:$0xff] %vm292, 0.0
        %347 = vst.msk [vmem:[#allocation2 + $0x1b0] sm:$0xff] %vm292, 0.0
        %348 = vst.msk [vmem:[#allocation2 + $0x1b8] sm:$0xff] %vm292, 0.0
        %349 = vst.msk [vmem:[#allocation2 + $0x1c0] sm:$0xff] %vm292, 0.0
        %350 = vst.msk [vmem:[#allocation2 + $0x1c8] sm:$0xff] %vm292, 0.0
        %351 = vst.msk [vmem:[#allocation2 + $0x1d0] sm:$0xff] %vm292, 0.0
        %352 = vst.msk [vmem:[#allocation2 + $0x1d8] sm:$0xff] %vm292, 0.0
        %353 = vst.msk [vmem:[#allocation2 + $0x1e0] sm:$0xff] %vm292, 0.0
        %354 = vst.msk [vmem:[#allocation2 + $0x1e8] sm:$0xff] %vm292, 0.0
        %355 = vst.msk [vmem:[#allocation2 + $0x1f0] sm:$0xff] %vm292, 0.0
        %356 = vst.msk [vmem:[#allocation2 + $0x1f8] sm:$0xff] %vm292, 0.0
        %357 = vst.msk [vmem:[#allocation2 + $0x200] sm:$0xff] %vm292, 0.0
        %358 = vst.msk [vmem:[#allocation2 + $0x208] sm:$0xff] %vm292, 0.0
        %359 = vst.msk [vmem:[#allocation2 + $0x210] sm:$0xff] %vm292, 0.0
        %360 = vst.msk [vmem:[#allocation2 + $0x218] sm:$0xff] %vm292, 0.0
        %361 = vst.msk [vmem:[#allocation2 + $0x220] sm:$0xff] %vm292, 0.0
        %362 = vst.msk [vmem:[#allocation2 + $0x228] sm:$0xff] %vm292, 0.0
        %363 = vst.msk [vmem:[#allocation2 + $0x230] sm:$0xff] %vm292, 0.0
        %364 = vst.msk [vmem:[#allocation2 + $0x238] sm:$0xff] %vm292, 0.0
        %365 = vst.msk [vmem:[#allocation2 + $0x240] sm:$0xff] %vm292, 0.0
        %366 = vst.msk [vmem:[#allocation2 + $0x248] sm:$0xff] %vm292, 0.0
        %367 = vst.msk [vmem:[#allocation2 + $0x250] sm:$0xff] %vm292, 0.0
        %368 = vst.msk [vmem:[#allocation2 + $0x258] sm:$0xff] %vm292, 0.0
        %369 = vst.msk [vmem:[#allocation2 + $0x260] sm:$0xff] %vm292, 0.0
        %370 = vst.msk [vmem:[#allocation2 + $0x268] sm:$0xff] %vm292, 0.0
        %371 = vst.msk [vmem:[#allocation2 + $0x270] sm:$0xff] %vm292, 0.0
        %372 = vst.msk [vmem:[#allocation2 + $0x278] sm:$0xff] %vm292, 0.0
      $region44: #{rgbd_forward.4} parent=39 // pred_fallthru
        _
      %v373 = vld [vmem:[%s278] sm:$0x3]
      %v374 = vunpack.c.l.bf16 %v373
      %v375 = vld [vmem:[%s1] sm:$0xff]
      %v376 = vld [vmem:[%s1 + $0x8] sm:$0xff]
      %v377 = vld [vmem:[%s1 + $0x10] sm:$0xff]
      %v378 = vld [vmem:[%s1 + $0x18] sm:$0xff]
      %v379 = vld [vmem:[%s1 + $0x20] sm:$0xff]
      %v380 = vld [vmem:[%s1 + $0x28] sm:$0xff]
      %v381 = vld [vmem:[%s1 + $0x30] sm:$0xff]
      %v382 = vld [vmem:[%s1 + $0x38] sm:$0xff]
      %v383 = vld [vmem:[%s1 + $0x40] sm:$0xff]
      %v384 = vld [vmem:[%s1 + $0x48] sm:$0xff]
      %v385 = vld [vmem:[%s1 + $0x50] sm:$0xff]
      %v386 = vld [vmem:[%s1 + $0x58] sm:$0xff]
      %v387 = vld [vmem:[%s1 + $0x60] sm:$0xff]
      %v388 = vld [vmem:[%s1 + $0x68] sm:$0xff]
      %v389 = vld [vmem:[%s1 + $0x70] sm:$0xff]
      %v390 = vld [vmem:[%s1 + $0x78] sm:$0xff]
      %v391 = vld [vmem:[%s1 + $0x80] sm:$0xff]
      %v392 = vld [vmem:[%s1 + $0x88] sm:$0xff]
      %v393 = vld [vmem:[%s1 + $0x90] sm:$0xff]
      %v394 = vld [vmem:[%s1 + $0x98] sm:$0xff]
      %v395 = vld [vmem:[%s1 + $0xa0] sm:$0xff]
      %v396 = vld [vmem:[%s1 + $0xa8] sm:$0xff]
      %v397 = vld [vmem:[%s1 + $0xb0] sm:$0xff]
      %v398 = vld [vmem:[%s1 + $0xb8] sm:$0xff]
      %v399 = vld [vmem:[%s1 + $0xc0] sm:$0xff]
      %v400 = vld [vmem:[%s1 + $0xc8] sm:$0xff]
      %v401 = vld [vmem:[%s1 + $0xd0] sm:$0xff]
      %v402 = vld [vmem:[%s1 + $0xd8] sm:$0xff]
      %v403 = vld [vmem:[%s1 + $0xe0] sm:$0xff]
      %v404 = vld [vmem:[%s1 + $0xe8] sm:$0xff]
      %v405 = vld [vmem:[%s1 + $0xf0] sm:$0xff]
      %v406 = vld [vmem:[%s1 + $0xf8] sm:$0xff]
      %v407 = vld [vmem:[%s1 + $0x100] sm:$0xff]
      %v408 = vld [vmem:[%s1 + $0x108] sm:$0xff]
      %v409 = vld [vmem:[%s1 + $0x110] sm:$0xff]
      %v410 = vld [vmem:[%s1 + $0x118] sm:$0xff]
      %v411 = vld [vmem:[%s1 + $0x120] sm:$0xff]
      %v412 = vld [vmem:[%s1 + $0x128] sm:$0xff]
      %v413 = vld [vmem:[%s1 + $0x130] sm:$0xff]
      %v414 = vld [vmem:[%s1 + $0x138] sm:$0xff]
      %v415 = vld [vmem:[%s1 + $0x140] sm:$0xff]
      %v416 = vld [vmem:[%s1 + $0x148] sm:$0xff]
      %v417 = vld [vmem:[%s1 + $0x150] sm:$0xff]
      %v418 = vld [vmem:[%s1 + $0x158] sm:$0xff]
      %v419 = vld [vmem:[%s1 + $0x160] sm:$0xff]
      %v420 = vld [vmem:[%s1 + $0x168] sm:$0xff]
      %v421 = vld [vmem:[%s1 + $0x170] sm:$0xff]
      %v422 = vld [vmem:[%s1 + $0x178] sm:$0xff]
      %v423 = vld [vmem:[%s1 + $0x180] sm:$0xff]
      %v424 = vld [vmem:[%s1 + $0x188] sm:$0xff]
      %v425 = vld [vmem:[%s1 + $0x190] sm:$0xff]
      %v426 = vld [vmem:[%s1 + $0x198] sm:$0xff]
      %v427 = vld [vmem:[%s1 + $0x1a0] sm:$0xff]
      %v428 = vld [vmem:[%s1 + $0x1a8] sm:$0xff]
      %v429 = vld [vmem:[%s1 + $0x1b0] sm:$0xff]
      %v430 = vld [vmem:[%s1 + $0x1b8] sm:$0xff]
      %v431 = vld [vmem:[%s1 + $0x1c0] sm:$0xff]
      %v432 = vld [vmem:[%s1 + $0x1c8] sm:$0xff]
      %v433 = vld [vmem:[%s1 + $0x1d0] sm:$0xff]
      %v434 = vld [vmem:[%s1 + $0x1d8] sm:$0xff]
      %v435 = vld [vmem:[%s1 + $0x1e0] sm:$0xff]
      %v436 = vld [vmem:[%s1 + $0x1e8] sm:$0xff]
      %v437 = vld [vmem:[%s1 + $0x1f0] sm:$0xff]
      %v438 = vld [vmem:[%s1 + $0x1f8] sm:$0xff]
      %v439 = vld [vmem:[%s1 + $0x200] sm:$0xff]
      %v440 = vld [vmem:[%s1 + $0x208] sm:$0xff]
      %v441 = vld [vmem:[%s1 + $0x210] sm:$0xff]
      %v442 = vld [vmem:[%s1 + $0x218] sm:$0xff]
      %v443 = vld [vmem:[%s1 + $0x220] sm:$0xff]
      %v444 = vld [vmem:[%s1 + $0x228] sm:$0xff]
      %v445 = vld [vmem:[%s1 + $0x230] sm:$0xff]
      %v446 = vld [vmem:[%s1 + $0x238] sm:$0xff]
      %v447 = vld [vmem:[%s1 + $0x240] sm:$0xff]
      %v448 = vld [vmem:[%s1 + $0x248] sm:$0xff]
      %v449 = vld [vmem:[%s1 + $0x250] sm:$0xff]
      %v450 = vld [vmem:[%s1 + $0x258] sm:$0xff]
      %v451 = vld [vmem:[%s1 + $0x260] sm:$0xff]
      %v452 = vld [vmem:[%s1 + $0x268] sm:$0xff]
      %v453 = vld [vmem:[%s1 + $0x270] sm:$0xff]
      %v454 = vld [vmem:[%s1 + $0x278] sm:$0xff]
      %456 = vset.pattern.permute.xlu0 0
      %457 = vperm.xlu0 %456, %v375
      %v458 = vpop.permute.xlu0 %457
      %461 = vset.pattern.permute.xlu0 0
      %462 = vperm.xlu0 %461, %v376
      %v463 = vpop.permute.xlu0 %462
      %466 = vset.pattern.permute.xlu0 0
      %467 = vperm.xlu0 %466, %v377
      %v468 = vpop.permute.xlu0 %467
      %471 = vset.pattern.permute.xlu0 0
      %472 = vperm.xlu0 %471, %v378
      %v473 = vpop.permute.xlu0 %472
      %476 = vset.pattern.permute.xlu0 0
      %477 = vperm.xlu0 %476, %v379
      %v478 = vpop.permute.xlu0 %477
      %481 = vset.pattern.permute.xlu0 0
      %482 = vperm.xlu0 %481, %v380
      %v483 = vpop.permute.xlu0 %482
      %486 = vset.pattern.permute.xlu0 0
      %487 = vperm.xlu0 %486, %v381
      %v488 = vpop.permute.xlu0 %487
      %491 = vset.pattern.permute.xlu0 0
      %492 = vperm.xlu0 %491, %v382
      %v493 = vpop.permute.xlu0 %492
      %496 = vset.pattern.permute.xlu0 0
      %497 = vperm.xlu0 %496, %v383
      %v498 = vpop.permute.xlu0 %497
      %501 = vset.pattern.permute.xlu0 0
      %502 = vperm.xlu0 %501, %v384
      %v503 = vpop.permute.xlu0 %502
      %506 = vset.pattern.permute.xlu0 0
      %507 = vperm.xlu0 %506, %v385
      %v508 = vpop.permute.xlu0 %507
      %511 = vset.pattern.permute.xlu0 0
      %512 = vperm.xlu0 %511, %v386
      %v513 = vpop.permute.xlu0 %512
      %516 = vset.pattern.permute.xlu0 0
      %517 = vperm.xlu0 %516, %v387
      %v518 = vpop.permute.xlu0 %517
      %521 = vset.pattern.permute.xlu0 0
      %522 = vperm.xlu0 %521, %v388
      %v523 = vpop.permute.xlu0 %522
      %526 = vset.pattern.permute.xlu0 0
      %527 = vperm.xlu0 %526, %v389
      %v528 = vpop.permute.xlu0 %527
      %531 = vset.pattern.permute.xlu0 0
      %532 = vperm.xlu0 %531, %v390
      %v533 = vpop.permute.xlu0 %532
      %536 = vset.pattern.permute.xlu0 0
      %537 = vperm.xlu0 %536, %v391
      %v538 = vpop.permute.xlu0 %537
      %541 = vset.pattern.permute.xlu0 0
      %542 = vperm.xlu0 %541, %v392
      %v543 = vpop.permute.xlu0 %542
      %546 = vset.pattern.permute.xlu0 0
      %547 = vperm.xlu0 %546, %v393
      %v548 = vpop.permute.xlu0 %547
      %551 = vset.pattern.permute.xlu0 0
      %552 = vperm.xlu0 %551, %v394
      %v553 = vpop.permute.xlu0 %552
      %556 = vset.pattern.permute.xlu0 0
      %557 = vperm.xlu0 %556, %v395
      %v558 = vpop.permute.xlu0 %557
      %561 = vset.pattern.permute.xlu0 0
      %562 = vperm.xlu0 %561, %v396
      %v563 = vpop.permute.xlu0 %562
      %566 = vset.pattern.permute.xlu0 0
      %567 = vperm.xlu0 %566, %v397
      %v568 = vpop.permute.xlu0 %567
      %571 = vset.pattern.permute.xlu0 0
      %572 = vperm.xlu0 %571, %v398
      %v573 = vpop.permute.xlu0 %572
      %576 = vset.pattern.permute.xlu0 0
      %577 = vperm.xlu0 %576, %v399
      %v578 = vpop.permute.xlu0 %577
      %581 = vset.pattern.permute.xlu0 0
      %582 = vperm.xlu0 %581, %v400
      %v583 = vpop.permute.xlu0 %582
      %586 = vset.pattern.permute.xlu0 0
      %587 = vperm.xlu0 %586, %v401
      %v588 = vpop.permute.xlu0 %587
      %591 = vset.pattern.permute.xlu0 0
      %592 = vperm.xlu0 %591, %v402
      %v593 = vpop.permute.xlu0 %592
      %596 = vset.pattern.permute.xlu0 0
      %597 = vperm.xlu0 %596, %v403
      %v598 = vpop.permute.xlu0 %597
      %601 = vset.pattern.permute.xlu0 0
      %602 = vperm.xlu0 %601, %v404
      %v603 = vpop.permute.xlu0 %602
      %606 = vset.pattern.permute.xlu0 0
      %607 = vperm.xlu0 %606, %v405
      %v608 = vpop.permute.xlu0 %607
      %611 = vset.pattern.permute.xlu0 0
      %612 = vperm.xlu0 %611, %v406
      %v613 = vpop.permute.xlu0 %612
      %616 = vset.pattern.permute.xlu0 0
      %617 = vperm.xlu0 %616, %v407
      %v618 = vpop.permute.xlu0 %617
      %621 = vset.pattern.permute.xlu0 0
      %622 = vperm.xlu0 %621, %v408
      %v623 = vpop.permute.xlu0 %622
      %626 = vset.pattern.permute.xlu0 0
      %627 = vperm.xlu0 %626, %v409
      %v628 = vpop.permute.xlu0 %627
      %631 = vset.pattern.permute.xlu0 0
      %632 = vperm.xlu0 %631, %v410
      %v633 = vpop.permute.xlu0 %632
      %636 = vset.pattern.permute.xlu0 0
      %637 = vperm.xlu0 %636, %v411
      %v638 = vpop.permute.xlu0 %637
      %641 = vset.pattern.permute.xlu0 0
      %642 = vperm.xlu0 %641, %v412
      %v643 = vpop.permute.xlu0 %642
      %646 = vset.pattern.permute.xlu0 0
      %647 = vperm.xlu0 %646, %v413
      %v648 = vpop.permute.xlu0 %647
      %651 = vset.pattern.permute.xlu0 0
      %652 = vperm.xlu0 %651, %v414
      %v653 = vpop.permute.xlu0 %652
      %656 = vset.pattern.permute.xlu0 0
      %657 = vperm.xlu0 %656, %v415
      %v658 = vpop.permute.xlu0 %657
      %661 = vset.pattern.permute.xlu0 0
      %662 = vperm.xlu0 %661, %v416
      %v663 = vpop.permute.xlu0 %662
      %666 = vset.pattern.permute.xlu0 0
      %667 = vperm.xlu0 %666, %v417
      %v668 = vpop.permute.xlu0 %667
      %671 = vset.pattern.permute.xlu0 0
      %672 = vperm.xlu0 %671, %v418
      %v673 = vpop.permute.xlu0 %672
      %676 = vset.pattern.permute.xlu0 0
      %677 = vperm.xlu0 %676, %v419
      %v678 = vpop.permute.xlu0 %677
      %681 = vset.pattern.permute.xlu0 0
      %682 = vperm.xlu0 %681, %v420
      %v683 = vpop.permute.xlu0 %682
      %686 = vset.pattern.permute.xlu0 0
      %687 = vperm.xlu0 %686, %v421
      %v688 = vpop.permute.xlu0 %687
      %691 = vset.pattern.permute.xlu0 0
      %692 = vperm.xlu0 %691, %v422
      %v693 = vpop.permute.xlu0 %692
      %696 = vset.pattern.permute.xlu0 0
      %697 = vperm.xlu0 %696, %v423
      %v698 = vpop.permute.xlu0 %697
      %701 = vset.pattern.permute.xlu0 0
      %702 = vperm.xlu0 %701, %v424
      %v703 = vpop.permute.xlu0 %702
      %706 = vset.pattern.permute.xlu0 0
      %707 = vperm.xlu0 %706, %v425
      %v708 = vpop.permute.xlu0 %707
      %711 = vset.pattern.permute.xlu0 0
      %712 = vperm.xlu0 %711, %v426
      %v713 = vpop.permute.xlu0 %712
      %716 = vset.pattern.permute.xlu0 0
      %717 = vperm.xlu0 %716, %v427
      %v718 = vpop.permute.xlu0 %717
      %721 = vset.pattern.permute.xlu0 0
      %722 = vperm.xlu0 %721, %v428
      %v723 = vpop.permute.xlu0 %722
      %726 = vset.pattern.permute.xlu0 0
      %727 = vperm.xlu0 %726, %v429
      %v728 = vpop.permute.xlu0 %727
      %731 = vset.pattern.permute.xlu0 0
      %732 = vperm.xlu0 %731, %v430
      %v733 = vpop.permute.xlu0 %732
      %736 = vset.pattern.permute.xlu0 0
      %737 = vperm.xlu0 %736, %v431
      %v738 = vpop.permute.xlu0 %737
      %741 = vset.pattern.permute.xlu0 0
      %742 = vperm.xlu0 %741, %v432
      %v743 = vpop.permute.xlu0 %742
      %746 = vset.pattern.permute.xlu0 0
      %747 = vperm.xlu0 %746, %v433
      %v748 = vpop.permute.xlu0 %747
      %751 = vset.pattern.permute.xlu0 0
      %752 = vperm.xlu0 %751, %v434
      %v753 = vpop.permute.xlu0 %752
      %756 = vset.pattern.permute.xlu0 0
      %757 = vperm.xlu0 %756, %v435
      %v758 = vpop.permute.xlu0 %757
      %761 = vset.pattern.permute.xlu0 0
      %762 = vperm.xlu0 %761, %v436
      %v763 = vpop.permute.xlu0 %762
      %766 = vset.pattern.permute.xlu0 0
      %767 = vperm.xlu0 %766, %v437
      %v768 = vpop.permute.xlu0 %767
      %771 = vset.pattern.permute.xlu0 0
      %772 = vperm.xlu0 %771, %v438
      %v773 = vpop.permute.xlu0 %772
      %776 = vset.pattern.permute.xlu0 0
      %777 = vperm.xlu0 %776, %v439
      %v778 = vpop.permute.xlu0 %777
      %781 = vset.pattern.permute.xlu0 0
      %782 = vperm.xlu0 %781, %v440
      %v783 = vpop.permute.xlu0 %782
      %786 = vset.pattern.permute.xlu0 0
      %787 = vperm.xlu0 %786, %v441
      %v788 = vpop.permute.xlu0 %787
      %791 = vset.pattern.permute.xlu0 0
      %792 = vperm.xlu0 %791, %v442
      %v793 = vpop.permute.xlu0 %792
      %796 = vset.pattern.permute.xlu0 0
      %797 = vperm.xlu0 %796, %v443
      %v798 = vpop.permute.xlu0 %797
      %801 = vset.pattern.permute.xlu0 0
      %802 = vperm.xlu0 %801, %v444
      %v803 = vpop.permute.xlu0 %802
      %806 = vset.pattern.permute.xlu0 0
      %807 = vperm.xlu0 %806, %v445
      %v808 = vpop.permute.xlu0 %807
      %811 = vset.pattern.permute.xlu0 0
      %812 = vperm.xlu0 %811, %v446
      %v813 = vpop.permute.xlu0 %812
      %816 = vset.pattern.permute.xlu0 0
      %817 = vperm.xlu0 %816, %v447
      %v818 = vpop.permute.xlu0 %817
      %821 = vset.pattern.permute.xlu0 0
      %822 = vperm.xlu0 %821, %v448
      %v823 = vpop.permute.xlu0 %822
      %826 = vset.pattern.permute.xlu0 0
      %827 = vperm.xlu0 %826, %v449
      %v828 = vpop.permute.xlu0 %827
      %831 = vset.pattern.permute.xlu0 0
      %832 = vperm.xlu0 %831, %v450
      %v833 = vpop.permute.xlu0 %832
      %836 = vset.pattern.permute.xlu0 0
      %837 = vperm.xlu0 %836, %v451
      %v838 = vpop.permute.xlu0 %837
      %841 = vset.pattern.permute.xlu0 0
      %842 = vperm.xlu0 %841, %v452
      %v843 = vpop.permute.xlu0 %842
      %846 = vset.pattern.permute.xlu0 0
      %847 = vperm.xlu0 %846, %v453
      %v848 = vpop.permute.xlu0 %847
      %851 = vset.pattern.permute.xlu0 0
      %852 = vperm.xlu0 %851, %v454
      %v853 = vpop.permute.xlu0 %852
      %v856 = vlaneseq
      %v857 = vshrl.u32 %v856, 7
      %v858 = vsub.s32 0, %v857
      %v859 = vrot.slane %v374, %v858
      %v860 = vlaneseq
      %v861 = vshrl.u32 %v860, 7
      %v862 = vsub.s32 2, %v861
      %v863 = vrot.slane %v374, %v862
      %v866 = vlaneseq
      %v867 = vshrl.u32 %v866, 7
      %v868 = vsub.s32 0, %v867
      %v869 = vrot.slane %v859, %v868
      %v870 = vlaneseq
      %v871 = vshrl.u32 %v870, 7
      %v872 = vsub.s32 0, %v871
      %v873 = vrot.slane %v863, %v872
      %v874 = vmul.f32 %v458, %v869
      %v875 = vmul.f32 %v458, %v873
      %v876 = vmul.f32 %v463, %v869
      %v877 = vmul.f32 %v463, %v873
      %v878 = vmul.f32 %v468, %v869
      %v879 = vmul.f32 %v468, %v873
      %v880 = vmul.f32 %v473, %v869
      %v881 = vmul.f32 %v473, %v873
      %v882 = vmul.f32 %v478, %v869
      %v883 = vmul.f32 %v478, %v873
      %v884 = vmul.f32 %v483, %v869
      %v885 = vmul.f32 %v483, %v873
      %v886 = vmul.f32 %v488, %v869
      %v887 = vmul.f32 %v488, %v873
      %v888 = vmul.f32 %v493, %v869
      %v889 = vmul.f32 %v493, %v873
      %v890 = vmul.f32 %v498, %v869
      %v891 = vmul.f32 %v498, %v873
      %v892 = vmul.f32 %v503, %v869
      %v893 = vmul.f32 %v503, %v873
      %v894 = vmul.f32 %v508, %v869
      %v895 = vmul.f32 %v508, %v873
      %v896 = vmul.f32 %v513, %v869
      %v897 = vmul.f32 %v513, %v873
      %v898 = vmul.f32 %v518, %v869
      %v899 = vmul.f32 %v518, %v873
      %v900 = vmul.f32 %v523, %v869
      %v901 = vmul.f32 %v523, %v873
      %v902 = vmul.f32 %v528, %v869
      %v903 = vmul.f32 %v528, %v873
      %v904 = vmul.f32 %v533, %v869
      %v905 = vmul.f32 %v533, %v873
      %v906 = vmul.f32 %v538, %v869
      %v907 = vmul.f32 %v538, %v873
      %v908 = vmul.f32 %v543, %v869
      %v909 = vmul.f32 %v543, %v873
      %v910 = vmul.f32 %v548, %v869
      %v911 = vmul.f32 %v548, %v873
      %v912 = vmul.f32 %v553, %v869
      %v913 = vmul.f32 %v553, %v873
      %v914 = vmul.f32 %v558, %v869
      %v915 = vmul.f32 %v558, %v873
      %v916 = vmul.f32 %v563, %v869
      %v917 = vmul.f32 %v563, %v873
      %v918 = vmul.f32 %v568, %v869
      %v919 = vmul.f32 %v568, %v873
      %v920 = vmul.f32 %v573, %v869
      %v921 = vmul.f32 %v573, %v873
      %v922 = vmul.f32 %v578, %v869
      %v923 = vmul.f32 %v578, %v873
      %v924 = vmul.f32 %v583, %v869
      %v925 = vmul.f32 %v583, %v873
      %v926 = vmul.f32 %v588, %v869
      %v927 = vmul.f32 %v588, %v873
      %v928 = vmul.f32 %v593, %v869
      %v929 = vmul.f32 %v593, %v873
      %v930 = vmul.f32 %v598, %v869
      %v931 = vmul.f32 %v598, %v873
      %v932 = vmul.f32 %v603, %v869
      %v933 = vmul.f32 %v603, %v873
      %v934 = vmul.f32 %v608, %v869
      %v935 = vmul.f32 %v608, %v873
      %v936 = vmul.f32 %v613, %v869
      %v937 = vmul.f32 %v613, %v873
      %v938 = vmul.f32 %v618, %v869
      %v939 = vmul.f32 %v618, %v873
      %v940 = vmul.f32 %v623, %v869
      %v941 = vmul.f32 %v623, %v873
      %v942 = vmul.f32 %v628, %v869
      %v943 = vmul.f32 %v628, %v873
      %v944 = vmul.f32 %v633, %v869
      %v945 = vmul.f32 %v633, %v873
      %v946 = vmul.f32 %v638, %v869
      %v947 = vmul.f32 %v638, %v873
      %v948 = vmul.f32 %v643, %v869
      %v949 = vmul.f32 %v643, %v873
      %v950 = vmul.f32 %v648, %v869
      %v951 = vmul.f32 %v648, %v873
      %v952 = vmul.f32 %v653, %v869
      %v953 = vmul.f32 %v653, %v873
      %v954 = vmul.f32 %v658, %v869
      %v955 = vmul.f32 %v658, %v873
      %v956 = vmul.f32 %v663, %v869
      %v957 = vmul.f32 %v663, %v873
      %v958 = vmul.f32 %v668, %v869
      %v959 = vmul.f32 %v668, %v873
      %v960 = vmul.f32 %v673, %v869
      %v961 = vmul.f32 %v673, %v873
      %v962 = vmul.f32 %v678, %v869
      %v963 = vmul.f32 %v678, %v873
      %v964 = vmul.f32 %v683, %v869
      %v965 = vmul.f32 %v683, %v873
      %v966 = vmul.f32 %v688, %v869
      %v967 = vmul.f32 %v688, %v873
      %v968 = vmul.f32 %v693, %v869
      %v969 = vmul.f32 %v693, %v873
      %v970 = vmul.f32 %v698, %v869
      %v971 = vmul.f32 %v698, %v873
      %v972 = vmul.f32 %v703, %v869
      %v973 = vmul.f32 %v703, %v873
      %v974 = vmul.f32 %v708, %v869
      %v975 = vmul.f32 %v708, %v873
      %v976 = vmul.f32 %v713, %v869
      %v977 = vmul.f32 %v713, %v873
      %v978 = vmul.f32 %v718, %v869
      %v979 = vmul.f32 %v718, %v873
      %v980 = vmul.f32 %v723, %v869
      %v981 = vmul.f32 %v723, %v873
      %v982 = vmul.f32 %v728, %v869
      %v983 = vmul.f32 %v728, %v873
      %v984 = vmul.f32 %v733, %v869
      %v985 = vmul.f32 %v733, %v873
      %v986 = vmul.f32 %v738, %v869
      %v987 = vmul.f32 %v738, %v873
      %v988 = vmul.f32 %v743, %v869
      %v989 = vmul.f32 %v743, %v873
      %v990 = vmul.f32 %v748, %v869
      %v991 = vmul.f32 %v748, %v873
      %v992 = vmul.f32 %v753, %v869
      %v993 = vmul.f32 %v753, %v873
      %v994 = vmul.f32 %v758, %v869
      %v995 = vmul.f32 %v758, %v873
      %v996 = vmul.f32 %v763, %v869
      %v997 = vmul.f32 %v763, %v873
      %v998 = vmul.f32 %v768, %v869
      %v999 = vmul.f32 %v768, %v873
      %v1000 = vmul.f32 %v773, %v869
      %v1001 = vmul.f32 %v773, %v873
      %v1002 = vmul.f32 %v778, %v869
      %v1003 = vmul.f32 %v778, %v873
      %v1004 = vmul.f32 %v783, %v869
      %v1005 = vmul.f32 %v783, %v873
      %v1006 = vmul.f32 %v788, %v869
      %v1007 = vmul.f32 %v788, %v873
      %v1008 = vmul.f32 %v793, %v869
      %v1009 = vmul.f32 %v793, %v873
      %v1010 = vmul.f32 %v798, %v869
      %v1011 = vmul.f32 %v798, %v873
      %v1012 = vmul.f32 %v803, %v869
      %v1013 = vmul.f32 %v803, %v873
      %v1014 = vmul.f32 %v808, %v869
      %v1015 = vmul.f32 %v808, %v873
      %v1016 = vmul.f32 %v813, %v869
      %v1017 = vmul.f32 %v813, %v873
      %v1018 = vmul.f32 %v818, %v869
      %v1019 = vmul.f32 %v818, %v873
      %v1020 = vmul.f32 %v823, %v869
      %v1021 = vmul.f32 %v823, %v873
      %v1022 = vmul.f32 %v828, %v869
      %v1023 = vmul.f32 %v828, %v873
      %v1024 = vmul.f32 %v833, %v869
      %v1025 = vmul.f32 %v833, %v873
      %v1026 = vmul.f32 %v838, %v869
      %v1027 = vmul.f32 %v838, %v873
      %v1028 = vmul.f32 %v843, %v869
      %v1029 = vmul.f32 %v843, %v873
      %v1030 = vmul.f32 %v848, %v869
      %v1031 = vmul.f32 %v848, %v873
      %v1032 = vmul.f32 %v853, %v869
      %v1033 = vmul.f32 %v853, %v873
      %v1034 = vld [vmem:[%s2] sm:$0xff]
      %v1035 = vld [vmem:[%s2 + $0x8] sm:$0xff]
      %v1036 = vld [vmem:[%s2 + $0x10] sm:$0xff]
      %v1037 = vld [vmem:[%s2 + $0x18] sm:$0xff]
      %v1038 = vld [vmem:[%s2 + $0x20] sm:$0xff]
      %v1039 = vld [vmem:[%s2 + $0x28] sm:$0xff]
      %v1040 = vld [vmem:[%s2 + $0x30] sm:$0xff]
      %v1041 = vld [vmem:[%s2 + $0x38] sm:$0xff]
      %v1042 = vld [vmem:[%s2 + $0x40] sm:$0xff]
      %v1043 = vld [vmem:[%s2 + $0x48] sm:$0xff]
      %v1044 = vld [vmem:[%s2 + $0x50] sm:$0xff]
      %v1045 = vld [vmem:[%s2 + $0x58] sm:$0xff]
      %v1046 = vld [vmem:[%s2 + $0x60] sm:$0xff]
      %v1047 = vld [vmem:[%s2 + $0x68] sm:$0xff]
      %v1048 = vld [vmem:[%s2 + $0x70] sm:$0xff]
      %v1049 = vld [vmem:[%s2 + $0x78] sm:$0xff]
      %v1050 = vld [vmem:[%s2 + $0x80] sm:$0xff]
      %v1051 = vld [vmem:[%s2 + $0x88] sm:$0xff]
      %v1052 = vld [vmem:[%s2 + $0x90] sm:$0xff]
      %v1053 = vld [vmem:[%s2 + $0x98] sm:$0xff]
      %v1054 = vld [vmem:[%s2 + $0xa0] sm:$0xff]
      %v1055 = vld [vmem:[%s2 + $0xa8] sm:$0xff]
      %v1056 = vld [vmem:[%s2 + $0xb0] sm:$0xff]
      %v1057 = vld [vmem:[%s2 + $0xb8] sm:$0xff]
      %v1058 = vld [vmem:[%s2 + $0xc0] sm:$0xff]
      %v1059 = vld [vmem:[%s2 + $0xc8] sm:$0xff]
      %v1060 = vld [vmem:[%s2 + $0xd0] sm:$0xff]
      %v1061 = vld [vmem:[%s2 + $0xd8] sm:$0xff]
      %v1062 = vld [vmem:[%s2 + $0xe0] sm:$0xff]
      %v1063 = vld [vmem:[%s2 + $0xe8] sm:$0xff]
      %v1064 = vld [vmem:[%s2 + $0xf0] sm:$0xff]
      %v1065 = vld [vmem:[%s2 + $0xf8] sm:$0xff]
      %v1066 = vld [vmem:[%s2 + $0x100] sm:$0xff]
      %v1067 = vld [vmem:[%s2 + $0x108] sm:$0xff]
      %v1068 = vld [vmem:[%s2 + $0x110] sm:$0xff]
      %v1069 = vld [vmem:[%s2 + $0x118] sm:$0xff]
      %v1070 = vld [vmem:[%s2 + $0x120] sm:$0xff]
      %v1071 = vld [vmem:[%s2 + $0x128] sm:$0xff]
      %v1072 = vld [vmem:[%s2 + $0x130] sm:$0xff]
      %v1073 = vld [vmem:[%s2 + $0x138] sm:$0xff]
      %v1074 = vld [vmem:[%s2 + $0x140] sm:$0xff]
      %v1075 = vld [vmem:[%s2 + $0x148] sm:$0xff]
      %v1076 = vld [vmem:[%s2 + $0x150] sm:$0xff]
      %v1077 = vld [vmem:[%s2 + $0x158] sm:$0xff]
      %v1078 = vld [vmem:[%s2 + $0x160] sm:$0xff]
      %v1079 = vld [vmem:[%s2 + $0x168] sm:$0xff]
      %v1080 = vld [vmem:[%s2 + $0x170] sm:$0xff]
      %v1081 = vld [vmem:[%s2 + $0x178] sm:$0xff]
      %v1082 = vld [vmem:[%s2 + $0x180] sm:$0xff]
      %v1083 = vld [vmem:[%s2 + $0x188] sm:$0xff]
      %v1084 = vld [vmem:[%s2 + $0x190] sm:$0xff]
      %v1085 = vld [vmem:[%s2 + $0x198] sm:$0xff]
      %v1086 = vld [vmem:[%s2 + $0x1a0] sm:$0xff]
      %v1087 = vld [vmem:[%s2 + $0x1a8] sm:$0xff]
      %v1088 = vld [vmem:[%s2 + $0x1b0] sm:$0xff]
      %v1089 = vld [vmem:[%s2 + $0x1b8] sm:$0xff]
      %v1090 = vld [vmem:[%s2 + $0x1c0] sm:$0xff]
      %v1091 = vld [vmem:[%s2 + $0x1c8] sm:$0xff]
      %v1092 = vld [vmem:[%s2 + $0x1d0] sm:$0xff]
      %v1093 = vld [vmem:[%s2 + $0x1d8] sm:$0xff]
      %v1094 = vld [vmem:[%s2 + $0x1e0] sm:$0xff]
      %v1095 = vld [vmem:[%s2 + $0x1e8] sm:$0xff]
      %v1096 = vld [vmem:[%s2 + $0x1f0] sm:$0xff]
      %v1097 = vld [vmem:[%s2 + $0x1f8] sm:$0xff]
      %v1098 = vld [vmem:[%s2 + $0x200] sm:$0xff]
      %v1099 = vld [vmem:[%s2 + $0x208] sm:$0xff]
      %v1100 = vld [vmem:[%s2 + $0x210] sm:$0xff]
      %v1101 = vld [vmem:[%s2 + $0x218] sm:$0xff]
      %v1102 = vld [vmem:[%s2 + $0x220] sm:$0xff]
      %v1103 = vld [vmem:[%s2 + $0x228] sm:$0xff]
      %v1104 = vld [vmem:[%s2 + $0x230] sm:$0xff]
      %v1105 = vld [vmem:[%s2 + $0x238] sm:$0xff]
      %v1106 = vld [vmem:[%s2 + $0x240] sm:$0xff]
      %v1107 = vld [vmem:[%s2 + $0x248] sm:$0xff]
      %v1108 = vld [vmem:[%s2 + $0x250] sm:$0xff]
      %v1109 = vld [vmem:[%s2 + $0x258] sm:$0xff]
      %v1110 = vld [vmem:[%s2 + $0x260] sm:$0xff]
      %v1111 = vld [vmem:[%s2 + $0x268] sm:$0xff]
      %v1112 = vld [vmem:[%s2 + $0x270] sm:$0xff]
      %v1113 = vld [vmem:[%s2 + $0x278] sm:$0xff]
      %1115 = vset.pattern.permute.xlu0 0
      %1116 = vperm.xlu0 %1115, %v1034
      %v1117 = vpop.permute.xlu0 %1116
      %1120 = vset.pattern.permute.xlu0 0
      %1121 = vperm.xlu0 %1120, %v1035
      %v1122 = vpop.permute.xlu0 %1121
      %1125 = vset.pattern.permute.xlu0 0
      %1126 = vperm.xlu0 %1125, %v1036
      %v1127 = vpop.permute.xlu0 %1126
      %1130 = vset.pattern.permute.xlu0 0
      %1131 = vperm.xlu0 %1130, %v1037
      %v1132 = vpop.permute.xlu0 %1131
      %1135 = vset.pattern.permute.xlu0 0
      %1136 = vperm.xlu0 %1135, %v1038
      %v1137 = vpop.permute.xlu0 %1136
      %1140 = vset.pattern.permute.xlu0 0
      %1141 = vperm.xlu0 %1140, %v1039
      %v1142 = vpop.permute.xlu0 %1141
      %1145 = vset.pattern.permute.xlu0 0
      %1146 = vperm.xlu0 %1145, %v1040
      %v1147 = vpop.permute.xlu0 %1146
      %1150 = vset.pattern.permute.xlu0 0
      %1151 = vperm.xlu0 %1150, %v1041
      %v1152 = vpop.permute.xlu0 %1151
      %1155 = vset.pattern.permute.xlu0 0
      %1156 = vperm.xlu0 %1155, %v1042
      %v1157 = vpop.permute.xlu0 %1156
      %1160 = vset.pattern.permute.xlu0 0
      %1161 = vperm.xlu0 %1160, %v1043
      %v1162 = vpop.permute.xlu0 %1161
      %1165 = vset.pattern.permute.xlu0 0
      %1166 = vperm.xlu0 %1165, %v1044
      %v1167 = vpop.permute.xlu0 %1166
      %1170 = vset.pattern.permute.xlu0 0
      %1171 = vperm.xlu0 %1170, %v1045
      %v1172 = vpop.permute.xlu0 %1171
      %1175 = vset.pattern.permute.xlu0 0
      %1176 = vperm.xlu0 %1175, %v1046
      %v1177 = vpop.permute.xlu0 %1176
      %1180 = vset.pattern.permute.xlu0 0
      %1181 = vperm.xlu0 %1180, %v1047
      %v1182 = vpop.permute.xlu0 %1181
      %1185 = vset.pattern.permute.xlu0 0
      %1186 = vperm.xlu0 %1185, %v1048
      %v1187 = vpop.permute.xlu0 %1186
      %1190 = vset.pattern.permute.xlu0 0
      %1191 = vperm.xlu0 %1190, %v1049
      %v1192 = vpop.permute.xlu0 %1191
      %1195 = vset.pattern.permute.xlu0 0
      %1196 = vperm.xlu0 %1195, %v1050
      %v1197 = vpop.permute.xlu0 %1196
      %1200 = vset.pattern.permute.xlu0 0
      %1201 = vperm.xlu0 %1200, %v1051
      %v1202 = vpop.permute.xlu0 %1201
      %1205 = vset.pattern.permute.xlu0 0
      %1206 = vperm.xlu0 %1205, %v1052
      %v1207 = vpop.permute.xlu0 %1206
      %1210 = vset.pattern.permute.xlu0 0
      %1211 = vperm.xlu0 %1210, %v1053
      %v1212 = vpop.permute.xlu0 %1211
      %1215 = vset.pattern.permute.xlu0 0
      %1216 = vperm.xlu0 %1215, %v1054
      %v1217 = vpop.permute.xlu0 %1216
      %1220 = vset.pattern.permute.xlu0 0
      %1221 = vperm.xlu0 %1220, %v1055
      %v1222 = vpop.permute.xlu0 %1221
      %1225 = vset.pattern.permute.xlu0 0
      %1226 = vperm.xlu0 %1225, %v1056
      %v1227 = vpop.permute.xlu0 %1226
      %1230 = vset.pattern.permute.xlu0 0
      %1231 = vperm.xlu0 %1230, %v1057
      %v1232 = vpop.permute.xlu0 %1231
      %1235 = vset.pattern.permute.xlu0 0
      %1236 = vperm.xlu0 %1235, %v1058
      %v1237 = vpop.permute.xlu0 %1236
      %1240 = vset.pattern.permute.xlu0 0
      %1241 = vperm.xlu0 %1240, %v1059
      %v1242 = vpop.permute.xlu0 %1241
      %1245 = vset.pattern.permute.xlu0 0
      %1246 = vperm.xlu0 %1245, %v1060
      %v1247 = vpop.permute.xlu0 %1246
      %1250 = vset.pattern.permute.xlu0 0
      %1251 = vperm.xlu0 %1250, %v1061
      %v1252 = vpop.permute.xlu0 %1251
      %1255 = vset.pattern.permute.xlu0 0
      %1256 = vperm.xlu0 %1255, %v1062
      %v1257 = vpop.permute.xlu0 %1256
      %1260 = vset.pattern.permute.xlu0 0
      %1261 = vperm.xlu0 %1260, %v1063
      %v1262 = vpop.permute.xlu0 %1261
      %1265 = vset.pattern.permute.xlu0 0
      %1266 = vperm.xlu0 %1265, %v1064
      %v1267 = vpop.permute.xlu0 %1266
      %1270 = vset.pattern.permute.xlu0 0
      %1271 = vperm.xlu0 %1270, %v1065
      %v1272 = vpop.permute.xlu0 %1271
      %1275 = vset.pattern.permute.xlu0 0
      %1276 = vperm.xlu0 %1275, %v1066
      %v1277 = vpop.permute.xlu0 %1276
      %1280 = vset.pattern.permute.xlu0 0
      %1281 = vperm.xlu0 %1280, %v1067
      %v1282 = vpop.permute.xlu0 %1281
      %1285 = vset.pattern.permute.xlu0 0
      %1286 = vperm.xlu0 %1285, %v1068
      %v1287 = vpop.permute.xlu0 %1286
      %1290 = vset.pattern.permute.xlu0 0
      %1291 = vperm.xlu0 %1290, %v1069
      %v1292 = vpop.permute.xlu0 %1291
      %1295 = vset.pattern.permute.xlu0 0
      %1296 = vperm.xlu0 %1295, %v1070
      %v1297 = vpop.permute.xlu0 %1296
      %1300 = vset.pattern.permute.xlu0 0
      %1301 = vperm.xlu0 %1300, %v1071
      %v1302 = vpop.permute.xlu0 %1301
      %1305 = vset.pattern.permute.xlu0 0
      %1306 = vperm.xlu0 %1305, %v1072
      %v1307 = vpop.permute.xlu0 %1306
      %1310 = vset.pattern.permute.xlu0 0
      %1311 = vperm.xlu0 %1310, %v1073
      %v1312 = vpop.permute.xlu0 %1311
      %1315 = vset.pattern.permute.xlu0 0
      %1316 = vperm.xlu0 %1315, %v1074
      %v1317 = vpop.permute.xlu0 %1316
      %1320 = vset.pattern.permute.xlu0 0
      %1321 = vperm.xlu0 %1320, %v1075
      %v1322 = vpop.permute.xlu0 %1321
      %1325 = vset.pattern.permute.xlu0 0
      %1326 = vperm.xlu0 %1325, %v1076
      %v1327 = vpop.permute.xlu0 %1326
      %1330 = vset.pattern.permute.xlu0 0
      %1331 = vperm.xlu0 %1330, %v1077
      %v1332 = vpop.permute.xlu0 %1331
      %1335 = vset.pattern.permute.xlu0 0
      %1336 = vperm.xlu0 %1335, %v1078
      %v1337 = vpop.permute.xlu0 %1336
      %1340 = vset.pattern.permute.xlu0 0
      %1341 = vperm.xlu0 %1340, %v1079
      %v1342 = vpop.permute.xlu0 %1341
      %1345 = vset.pattern.permute.xlu0 0
      %1346 = vperm.xlu0 %1345, %v1080
      %v1347 = vpop.permute.xlu0 %1346
      %1350 = vset.pattern.permute.xlu0 0
      %1351 = vperm.xlu0 %1350, %v1081
      %v1352 = vpop.permute.xlu0 %1351
      %1355 = vset.pattern.permute.xlu0 0
      %1356 = vperm.xlu0 %1355, %v1082
      %v1357 = vpop.permute.xlu0 %1356
      %1360 = vset.pattern.permute.xlu0 0
      %1361 = vperm.xlu0 %1360, %v1083
      %v1362 = vpop.permute.xlu0 %1361
      %1365 = vset.pattern.permute.xlu0 0
      %1366 = vperm.xlu0 %1365, %v1084
      %v1367 = vpop.permute.xlu0 %1366
      %1370 = vset.pattern.permute.xlu0 0
      %1371 = vperm.xlu0 %1370, %v1085
      %v1372 = vpop.permute.xlu0 %1371
      %1375 = vset.pattern.permute.xlu0 0
      %1376 = vperm.xlu0 %1375, %v1086
      %v1377 = vpop.permute.xlu0 %1376
      %1380 = vset.pattern.permute.xlu0 0
      %1381 = vperm.xlu0 %1380, %v1087
      %v1382 = vpop.permute.xlu0 %1381
      %1385 = vset.pattern.permute.xlu0 0
      %1386 = vperm.xlu0 %1385, %v1088
      %v1387 = vpop.permute.xlu0 %1386
      %1390 = vset.pattern.permute.xlu0 0
      %1391 = vperm.xlu0 %1390, %v1089
      %v1392 = vpop.permute.xlu0 %1391
      %1395 = vset.pattern.permute.xlu0 0
      %1396 = vperm.xlu0 %1395, %v1090
      %v1397 = vpop.permute.xlu0 %1396
      %1400 = vset.pattern.permute.xlu0 0
      %1401 = vperm.xlu0 %1400, %v1091
      %v1402 = vpop.permute.xlu0 %1401
      %1405 = vset.pattern.permute.xlu0 0
      %1406 = vperm.xlu0 %1405, %v1092
      %v1407 = vpop.permute.xlu0 %1406
      %1410 = vset.pattern.permute.xlu0 0
      %1411 = vperm.xlu0 %1410, %v1093
      %v1412 = vpop.permute.xlu0 %1411
      %1415 = vset.pattern.permute.xlu0 0
      %1416 = vperm.xlu0 %1415, %v1094
      %v1417 = vpop.permute.xlu0 %1416
      %1420 = vset.pattern.permute.xlu0 0
      %1421 = vperm.xlu0 %1420, %v1095
      %v1422 = vpop.permute.xlu0 %1421
      %1425 = vset.pattern.permute.xlu0 0
      %1426 = vperm.xlu0 %1425, %v1096
      %v1427 = vpop.permute.xlu0 %1426
      %1430 = vset.pattern.permute.xlu0 0
      %1431 = vperm.xlu0 %1430, %v1097
      %v1432 = vpop.permute.xlu0 %1431
      %1435 = vset.pattern.permute.xlu0 0
      %1436 = vperm.xlu0 %1435, %v1098
      %v1437 = vpop.permute.xlu0 %1436
      %1440 = vset.pattern.permute.xlu0 0
      %1441 = vperm.xlu0 %1440, %v1099
      %v1442 = vpop.permute.xlu0 %1441
      %1445 = vset.pattern.permute.xlu0 0
      %1446 = vperm.xlu0 %1445, %v1100
      %v1447 = vpop.permute.xlu0 %1446
      %1450 = vset.pattern.permute.xlu0 0
      %1451 = vperm.xlu0 %1450, %v1101
      %v1452 = vpop.permute.xlu0 %1451
      %1455 = vset.pattern.permute.xlu0 0
      %1456 = vperm.xlu0 %1455, %v1102
      %v1457 = vpop.permute.xlu0 %1456
      %1460 = vset.pattern.permute.xlu0 0
      %1461 = vperm.xlu0 %1460, %v1103
      %v1462 = vpop.permute.xlu0 %1461
      %1465 = vset.pattern.permute.xlu0 0
      %1466 = vperm.xlu0 %1465, %v1104
      %v1467 = vpop.permute.xlu0 %1466
      %1470 = vset.pattern.permute.xlu0 0
      %1471 = vperm.xlu0 %1470, %v1105
      %v1472 = vpop.permute.xlu0 %1471
      %1475 = vset.pattern.permute.xlu0 0
      %1476 = vperm.xlu0 %1475, %v1106
      %v1477 = vpop.permute.xlu0 %1476
      %1480 = vset.pattern.permute.xlu0 0
      %1481 = vperm.xlu0 %1480, %v1107
      %v1482 = vpop.permute.xlu0 %1481
      %1485 = vset.pattern.permute.xlu0 0
      %1486 = vperm.xlu0 %1485, %v1108
      %v1487 = vpop.permute.xlu0 %1486
      %1490 = vset.pattern.permute.xlu0 0
      %1491 = vperm.xlu0 %1490, %v1109
      %v1492 = vpop.permute.xlu0 %1491
      %1495 = vset.pattern.permute.xlu0 0
      %1496 = vperm.xlu0 %1495, %v1110
      %v1497 = vpop.permute.xlu0 %1496
      %1500 = vset.pattern.permute.xlu0 0
      %1501 = vperm.xlu0 %1500, %v1111
      %v1502 = vpop.permute.xlu0 %1501
      %1505 = vset.pattern.permute.xlu0 0
      %1506 = vperm.xlu0 %1505, %v1112
      %v1507 = vpop.permute.xlu0 %1506
      %1510 = vset.pattern.permute.xlu0 0
      %1511 = vperm.xlu0 %1510, %v1113
      %v1512 = vpop.permute.xlu0 %1511
      %v1514 = vadd.f32 %v874, %v1117
      %v1515 = vadd.f32 %v875, %v1117
      %v1516 = vadd.f32 %v876, %v1122
      %v1517 = vadd.f32 %v877, %v1122
      %v1518 = vadd.f32 %v878, %v1127
      %v1519 = vadd.f32 %v879, %v1127
      %v1520 = vadd.f32 %v880, %v1132
      %v1521 = vadd.f32 %v881, %v1132
      %v1522 = vadd.f32 %v882, %v1137
      %v1523 = vadd.f32 %v883, %v1137
      %v1524 = vadd.f32 %v884, %v1142
      %v1525 = vadd.f32 %v885, %v1142
      %v1526 = vadd.f32 %v886, %v1147
      %v1527 = vadd.f32 %v887, %v1147
      %v1528 = vadd.f32 %v888, %v1152
      %v1529 = vadd.f32 %v889, %v1152
      %v1530 = vadd.f32 %v890, %v1157
      %v1531 = vadd.f32 %v891, %v1157
      %v1532 = vadd.f32 %v892, %v1162
      %v1533 = vadd.f32 %v893, %v1162
      %v1534 = vadd.f32 %v894, %v1167
      %v1535 = vadd.f32 %v895, %v1167
      %v1536 = vadd.f32 %v896, %v1172
      %v1537 = vadd.f32 %v897, %v1172
      %v1538 = vadd.f32 %v898, %v1177
      %v1539 = vadd.f32 %v899, %v1177
      %v1540 = vadd.f32 %v900, %v1182
      %v1541 = vadd.f32 %v901, %v1182
      %v1542 = vadd.f32 %v902, %v1187
      %v1543 = vadd.f32 %v903, %v1187
      %v1544 = vadd.f32 %v904, %v1192
      %v1545 = vadd.f32 %v905, %v1192
      %v1546 = vadd.f32 %v906, %v1197
      %v1547 = vadd.f32 %v907, %v1197
      %v1548 = vadd.f32 %v908, %v1202
      %v1549 = vadd.f32 %v909, %v1202
      %v1550 = vadd.f32 %v910, %v1207
      %v1551 = vadd.f32 %v911, %v1207
      %v1552 = vadd.f32 %v912, %v1212
      %v1553 = vadd.f32 %v913, %v1212
      %v1554 = vadd.f32 %v914, %v1217
      %v1555 = vadd.f32 %v915, %v1217
      %v1556 = vadd.f32 %v916, %v1222
      %v1557 = vadd.f32 %v917, %v1222
      %v1558 = vadd.f32 %v918, %v1227
      %v1559 = vadd.f32 %v919, %v1227
      %v1560 = vadd.f32 %v920, %v1232
      %v1561 = vadd.f32 %v921, %v1232
      %v1562 = vadd.f32 %v922, %v1237
      %v1563 = vadd.f32 %v923, %v1237
      %v1564 = vadd.f32 %v924, %v1242
      %v1565 = vadd.f32 %v925, %v1242
      %v1566 = vadd.f32 %v926, %v1247
      %v1567 = vadd.f32 %v927, %v1247
      %v1568 = vadd.f32 %v928, %v1252
      %v1569 = vadd.f32 %v929, %v1252
      %v1570 = vadd.f32 %v930, %v1257
      %v1571 = vadd.f32 %v931, %v1257
      %v1572 = vadd.f32 %v932, %v1262
      %v1573 = vadd.f32 %v933, %v1262
      %v1574 = vadd.f32 %v934, %v1267
      %v1575 = vadd.f32 %v935, %v1267
      %v1576 = vadd.f32 %v936, %v1272
      %v1577 = vadd.f32 %v937, %v1272
      %v1578 = vadd.f32 %v938, %v1277
      %v1579 = vadd.f32 %v939, %v1277
      %v1580 = vadd.f32 %v940, %v1282
      %v1581 = vadd.f32 %v941, %v1282
      %v1582 = vadd.f32 %v942, %v1287
      %v1583 = vadd.f32 %v943, %v1287
      %v1584 = vadd.f32 %v944, %v1292
      %v1585 = vadd.f32 %v945, %v1292
      %v1586 = vadd.f32 %v946, %v1297
      %v1587 = vadd.f32 %v947, %v1297
      %v1588 = vadd.f32 %v948, %v1302
      %v1589 = vadd.f32 %v949, %v1302
      %v1590 = vadd.f32 %v950, %v1307
      %v1591 = vadd.f32 %v951, %v1307
      %v1592 = vadd.f32 %v952, %v1312
      %v1593 = vadd.f32 %v953, %v1312
      %v1594 = vadd.f32 %v954, %v1317
      %v1595 = vadd.f32 %v955, %v1317
      %v1596 = vadd.f32 %v956, %v1322
      %v1597 = vadd.f32 %v957, %v1322
      %v1598 = vadd.f32 %v958, %v1327
      %v1599 = vadd.f32 %v959, %v1327
      %v1600 = vadd.f32 %v960, %v1332
      %v1601 = vadd.f32 %v961, %v1332
      %v1602 = vadd.f32 %v962, %v1337
      %v1603 = vadd.f32 %v963, %v1337
      %v1604 = vadd.f32 %v964, %v1342
      %v1605 = vadd.f32 %v965, %v1342
      %v1606 = vadd.f32 %v966, %v1347
      %v1607 = vadd.f32 %v967, %v1347
      %v1608 = vadd.f32 %v968, %v1352
      %v1609 = vadd.f32 %v969, %v1352
      %v1610 = vadd.f32 %v970, %v1357
      %v1611 = vadd.f32 %v971, %v1357
      %v1612 = vadd.f32 %v972, %v1362
      %v1613 = vadd.f32 %v973, %v1362
      %v1614 = vadd.f32 %v974, %v1367
      %v1615 = vadd.f32 %v975, %v1367
      %v1616 = vadd.f32 %v976, %v1372
      %v1617 = vadd.f32 %v977, %v1372
      %v1618 = vadd.f32 %v978, %v1377
      %v1619 = vadd.f32 %v979, %v1377
      %v1620 = vadd.f32 %v980, %v1382
      %v1621 = vadd.f32 %v981, %v1382
      %v1622 = vadd.f32 %v982, %v1387
      %v1623 = vadd.f32 %v983, %v1387
      %v1624 = vadd.f32 %v984, %v1392
      %v1625 = vadd.f32 %v985, %v1392
      %v1626 = vadd.f32 %v986, %v1397
      %v1627 = vadd.f32 %v987, %v1397
      %v1628 = vadd.f32 %v988, %v1402
      %v1629 = vadd.f32 %v989, %v1402
      %v1630 = vadd.f32 %v990, %v1407
      %v1631 = vadd.f32 %v991, %v1407
      %v1632 = vadd.f32 %v992, %v1412
      %v1633 = vadd.f32 %v993, %v1412
      %v1634 = vadd.f32 %v994, %v1417
      %v1635 = vadd.f32 %v995, %v1417
      %v1636 = vadd.f32 %v996, %v1422
      %v1637 = vadd.f32 %v997, %v1422
      %v1638 = vadd.f32 %v998, %v1427
      %v1639 = vadd.f32 %v999, %v1427
      %v1640 = vadd.f32 %v1000, %v1432
      %v1641 = vadd.f32 %v1001, %v1432
      %v1642 = vadd.f32 %v1002, %v1437
      %v1643 = vadd.f32 %v1003, %v1437
      %v1644 = vadd.f32 %v1004, %v1442
      %v1645 = vadd.f32 %v1005, %v1442
      %v1646 = vadd.f32 %v1006, %v1447
      %v1647 = vadd.f32 %v1007, %v1447
      %v1648 = vadd.f32 %v1008, %v1452
      %v1649 = vadd.f32 %v1009, %v1452
      %v1650 = vadd.f32 %v1010, %v1457
      %v1651 = vadd.f32 %v1011, %v1457
      %v1652 = vadd.f32 %v1012, %v1462
      %v1653 = vadd.f32 %v1013, %v1462
      %v1654 = vadd.f32 %v1014, %v1467
      %v1655 = vadd.f32 %v1015, %v1467
      %v1656 = vadd.f32 %v1016, %v1472
      %v1657 = vadd.f32 %v1017, %v1472
      %v1658 = vadd.f32 %v1018, %v1477
      %v1659 = vadd.f32 %v1019, %v1477
      %v1660 = vadd.f32 %v1020, %v1482
      %v1661 = vadd.f32 %v1021, %v1482
      %v1662 = vadd.f32 %v1022, %v1487
      %v1663 = vadd.f32 %v1023, %v1487
      %v1664 = vadd.f32 %v1024, %v1492
      %v1665 = vadd.f32 %v1025, %v1492
      %v1666 = vadd.f32 %v1026, %v1497
      %v1667 = vadd.f32 %v1027, %v1497
      %v1668 = vadd.f32 %v1028, %v1502
      %v1669 = vadd.f32 %v1029, %v1502
      %v1670 = vadd.f32 %v1030, %v1507
      %v1671 = vadd.f32 %v1031, %v1507
      %v1672 = vadd.f32 %v1032, %v1512
      %v1673 = vadd.f32 %v1033, %v1512
      %v1674 = vmax.f32 %v1514, 0.0
      %v1675 = vmax.f32 %v1515, 0.0
      %v1676 = vmax.f32 %v1516, 0.0
      %v1677 = vmax.f32 %v1517, 0.0
      %v1678 = vmax.f32 %v1518, 0.0
      %v1679 = vmax.f32 %v1519, 0.0
      %v1680 = vmax.f32 %v1520, 0.0
      %v1681 = vmax.f32 %v1521, 0.0
      %v1682 = vmax.f32 %v1522, 0.0
      %v1683 = vmax.f32 %v1523, 0.0
      %v1684 = vmax.f32 %v1524, 0.0
      %v1685 = vmax.f32 %v1525, 0.0
      %v1686 = vmax.f32 %v1526, 0.0
      %v1687 = vmax.f32 %v1527, 0.0
      %v1688 = vmax.f32 %v1528, 0.0
      %v1689 = vmax.f32 %v1529, 0.0
      %v1690 = vmax.f32 %v1530, 0.0
      %v1691 = vmax.f32 %v1531, 0.0
      %v1692 = vmax.f32 %v1532, 0.0
      %v1693 = vmax.f32 %v1533, 0.0
      %v1694 = vmax.f32 %v1534, 0.0
      %v1695 = vmax.f32 %v1535, 0.0
      %v1696 = vmax.f32 %v1536, 0.0
      %v1697 = vmax.f32 %v1537, 0.0
      %v1698 = vmax.f32 %v1538, 0.0
      %v1699 = vmax.f32 %v1539, 0.0
      %v1700 = vmax.f32 %v1540, 0.0
      %v1701 = vmax.f32 %v1541, 0.0
      %v1702 = vmax.f32 %v1542, 0.0
      %v1703 = vmax.f32 %v1543, 0.0
      %v1704 = vmax.f32 %v1544, 0.0
      %v1705 = vmax.f32 %v1545, 0.0
      %v1706 = vmax.f32 %v1546, 0.0
      %v1707 = vmax.f32 %v1547, 0.0
      %v1708 = vmax.f32 %v1548, 0.0
      %v1709 = vmax.f32 %v1549, 0.0
      %v1710 = vmax.f32 %v1550, 0.0
      %v1711 = vmax.f32 %v1551, 0.0
      %v1712 = vmax.f32 %v1552, 0.0
      %v1713 = vmax.f32 %v1553, 0.0
      %v1714 = vmax.f32 %v1554, 0.0
      %v1715 = vmax.f32 %v1555, 0.0
      %v1716 = vmax.f32 %v1556, 0.0
      %v1717 = vmax.f32 %v1557, 0.0
      %v1718 = vmax.f32 %v1558, 0.0
      %v1719 = vmax.f32 %v1559, 0.0
      %v1720 = vmax.f32 %v1560, 0.0
      %v1721 = vmax.f32 %v1561, 0.0
      %v1722 = vmax.f32 %v1562, 0.0
      %v1723 = vmax.f32 %v1563, 0.0
      %v1724 = vmax.f32 %v1564, 0.0
      %v1725 = vmax.f32 %v1565, 0.0
      %v1726 = vmax.f32 %v1566, 0.0
      %v1727 = vmax.f32 %v1567, 0.0
      %v1728 = vmax.f32 %v1568, 0.0
      %v1729 = vmax.f32 %v1569, 0.0
      %v1730 = vmax.f32 %v1570, 0.0
      %v1731 = vmax.f32 %v1571, 0.0
      %v1732 = vmax.f32 %v1572, 0.0
      %v1733 = vmax.f32 %v1573, 0.0
      %v1734 = vmax.f32 %v1574, 0.0
      %v1735 = vmax.f32 %v1575, 0.0
      %v1736 = vmax.f32 %v1576, 0.0
      %v1737 = vmax.f32 %v1577, 0.0
      %v1738 = vmax.f32 %v1578, 0.0
      %v1739 = vmax.f32 %v1579, 0.0
      %v1740 = vmax.f32 %v1580, 0.0
      %v1741 = vmax.f32 %v1581, 0.0
      %v1742 = vmax.f32 %v1582, 0.0
      %v1743 = vmax.f32 %v1583, 0.0
      %v1744 = vmax.f32 %v1584, 0.0
      %v1745 = vmax.f32 %v1585, 0.0
      %v1746 = vmax.f32 %v1586, 0.0
      %v1747 = vmax.f32 %v1587, 0.0
      %v1748 = vmax.f32 %v1588, 0.0
      %v1749 = vmax.f32 %v1589, 0.0
      %v1750 = vmax.f32 %v1590, 0.0
      %v1751 = vmax.f32 %v1591, 0.0
      %v1752 = vmax.f32 %v1592, 0.0
      %v1753 = vmax.f32 %v1593, 0.0
      %v1754 = vmax.f32 %v1594, 0.0
      %v1755 = vmax.f32 %v1595, 0.0
      %v1756 = vmax.f32 %v1596, 0.0
      %v1757 = vmax.f32 %v1597, 0.0
      %v1758 = vmax.f32 %v1598, 0.0
      %v1759 = vmax.f32 %v1599, 0.0
      %v1760 = vmax.f32 %v1600, 0.0
      %v1761 = vmax.f32 %v1601, 0.0
      %v1762 = vmax.f32 %v1602, 0.0
      %v1763 = vmax.f32 %v1603, 0.0
      %v1764 = vmax.f32 %v1604, 0.0
      %v1765 = vmax.f32 %v1605, 0.0
      %v1766 = vmax.f32 %v1606, 0.0
      %v1767 = vmax.f32 %v1607, 0.0
      %v1768 = vmax.f32 %v1608, 0.0
      %v1769 = vmax.f32 %v1609, 0.0
      %v1770 = vmax.f32 %v1610, 0.0
      %v1771 = vmax.f32 %v1611, 0.0
      %v1772 = vmax.f32 %v1612, 0.0
      %v1773 = vmax.f32 %v1613, 0.0
      %v1774 = vmax.f32 %v1614, 0.0
      %v1775 = vmax.f32 %v1615, 0.0
      %v1776 = vmax.f32 %v1616, 0.0
      %v1777 = vmax.f32 %v1617, 0.0
      %v1778 = vmax.f32 %v1618, 0.0
      %v1779 = vmax.f32 %v1619, 0.0
      %v1780 = vmax.f32 %v1620, 0.0
      %v1781 = vmax.f32 %v1621, 0.0
      %v1782 = vmax.f32 %v1622, 0.0
      %v1783 = vmax.f32 %v1623, 0.0
      %v1784 = vmax.f32 %v1624, 0.0
      %v1785 = vmax.f32 %v1625, 0.0
      %v1786 = vmax.f32 %v1626, 0.0
      %v1787 = vmax.f32 %v1627, 0.0
      %v1788 = vmax.f32 %v1628, 0.0
      %v1789 = vmax.f32 %v1629, 0.0
      %v1790 = vmax.f32 %v1630, 0.0
      %v1791 = vmax.f32 %v1631, 0.0
      %v1792 = vmax.f32 %v1632, 0.0
      %v1793 = vmax.f32 %v1633, 0.0
      %v1794 = vmax.f32 %v1634, 0.0
      %v1795 = vmax.f32 %v1635, 0.0
      %v1796 = vmax.f32 %v1636, 0.0
      %v1797 = vmax.f32 %v1637, 0.0
      %v1798 = vmax.f32 %v1638, 0.0
      %v1799 = vmax.f32 %v1639, 0.0
      %v1800 = vmax.f32 %v1640, 0.0
      %v1801 = vmax.f32 %v1641, 0.0
      %v1802 = vmax.f32 %v1642, 0.0
      %v1803 = vmax.f32 %v1643, 0.0
      %v1804 = vmax.f32 %v1644, 0.0
      %v1805 = vmax.f32 %v1645, 0.0
      %v1806 = vmax.f32 %v1646, 0.0
      %v1807 = vmax.f32 %v1647, 0.0
      %v1808 = vmax.f32 %v1648, 0.0
      %v1809 = vmax.f32 %v1649, 0.0
      %v1810 = vmax.f32 %v1650, 0.0
      %v1811 = vmax.f32 %v1651, 0.0
      %v1812 = vmax.f32 %v1652, 0.0
      %v1813 = vmax.f32 %v1653, 0.0
      %v1814 = vmax.f32 %v1654, 0.0
      %v1815 = vmax.f32 %v1655, 0.0
      %v1816 = vmax.f32 %v1656, 0.0
      %v1817 = vmax.f32 %v1657, 0.0
      %v1818 = vmax.f32 %v1658, 0.0
      %v1819 = vmax.f32 %v1659, 0.0
      %v1820 = vmax.f32 %v1660, 0.0
      %v1821 = vmax.f32 %v1661, 0.0
      %v1822 = vmax.f32 %v1662, 0.0
      %v1823 = vmax.f32 %v1663, 0.0
      %v1824 = vmax.f32 %v1664, 0.0
      %v1825 = vmax.f32 %v1665, 0.0
      %v1826 = vmax.f32 %v1666, 0.0
      %v1827 = vmax.f32 %v1667, 0.0
      %v1828 = vmax.f32 %v1668, 0.0
      %v1829 = vmax.f32 %v1669, 0.0
      %v1830 = vmax.f32 %v1670, 0.0
      %v1831 = vmax.f32 %v1671, 0.0
      %v1832 = vmax.f32 %v1672, 0.0
      %v1833 = vmax.f32 %v1673, 0.0
      %v1834 = vld [vmem:[#allocation2] sm:$0xff]
      %v1835 = vld [vmem:[#allocation2 + $0x8] sm:$0xff]
      %v1836 = vld [vmem:[#allocation2 + $0x10] sm:$0xff]
      %v1837 = vld [vmem:[#allocation2 + $0x18] sm:$0xff]
      %v1838 = vld [vmem:[#allocation2 + $0x20] sm:$0xff]
      %v1839 = vld [vmem:[#allocation2 + $0x28] sm:$0xff]
      %v1840 = vld [vmem:[#allocation2 + $0x30] sm:$0xff]
      %v1841 = vld [vmem:[#allocation2 + $0x38] sm:$0xff]
      %v1842 = vld [vmem:[#allocation2 + $0x40] sm:$0xff]
      %v1843 = vld [vmem:[#allocation2 + $0x48] sm:$0xff]
      %v1844 = vld [vmem:[#allocation2 + $0x50] sm:$0xff]
      %v1845 = vld [vmem:[#allocation2 + $0x58] sm:$0xff]
      %v1846 = vld [vmem:[#allocation2 + $0x60] sm:$0xff]
      %v1847 = vld [vmem:[#allocation2 + $0x68] sm:$0xff]
      %v1848 = vld [vmem:[#allocation2 + $0x70] sm:$0xff]
      %v1849 = vld [vmem:[#allocation2 + $0x78] sm:$0xff]
      %v1850 = vld [vmem:[#allocation2 + $0x80] sm:$0xff]
      %v1851 = vld [vmem:[#allocation2 + $0x88] sm:$0xff]
      %v1852 = vld [vmem:[#allocation2 + $0x90] sm:$0xff]
      %v1853 = vld [vmem:[#allocation2 + $0x98] sm:$0xff]
      %v1854 = vld [vmem:[#allocation2 + $0xa0] sm:$0xff]
      %v1855 = vld [vmem:[#allocation2 + $0xa8] sm:$0xff]
      %v1856 = vld [vmem:[#allocation2 + $0xb0] sm:$0xff]
      %v1857 = vld [vmem:[#allocation2 + $0xb8] sm:$0xff]
      %v1858 = vld [vmem:[#allocation2 + $0xc0] sm:$0xff]
      %v1859 = vld [vmem:[#allocation2 + $0xc8] sm:$0xff]
      %v1860 = vld [vmem:[#allocation2 + $0xd0] sm:$0xff]
      %v1861 = vld [vmem:[#allocation2 + $0xd8] sm:$0xff]
      %v1862 = vld [vmem:[#allocation2 + $0xe0] sm:$0xff]
      %v1863 = vld [vmem:[#allocation2 + $0xe8] sm:$0xff]
      %v1864 = vld [vmem:[#allocation2 + $0xf0] sm:$0xff]
      %v1865 = vld [vmem:[#allocation2 + $0xf8] sm:$0xff]
      %v1866 = vld [vmem:[#allocation2 + $0x100] sm:$0xff]
      %v1867 = vld [vmem:[#allocation2 + $0x108] sm:$0xff]
      %v1868 = vld [vmem:[#allocation2 + $0x110] sm:$0xff]
      %v1869 = vld [vmem:[#allocation2 + $0x118] sm:$0xff]
      %v1870 = vld [vmem:[#allocation2 + $0x120] sm:$0xff]
      %v1871 = vld [vmem:[#allocation2 + $0x128] sm:$0xff]
      %v1872 = vld [vmem:[#allocation2 + $0x130] sm:$0xff]
      %v1873 = vld [vmem:[#allocation2 + $0x138] sm:$0xff]
      %v1874 = vld [vmem:[#allocation2 + $0x140] sm:$0xff]
      %v1875 = vld [vmem:[#allocation2 + $0x148] sm:$0xff]
      %v1876 = vld [vmem:[#allocation2 + $0x150] sm:$0xff]
      %v1877 = vld [vmem:[#allocation2 + $0x158] sm:$0xff]
      %v1878 = vld [vmem:[#allocation2 + $0x160] sm:$0xff]
      %v1879 = vld [vmem:[#allocation2 + $0x168] sm:$0xff]
      %v1880 = vld [vmem:[#allocation2 + $0x170] sm:$0xff]
      %v1881 = vld [vmem:[#allocation2 + $0x178] sm:$0xff]
      %v1882 = vld [vmem:[#allocation2 + $0x180] sm:$0xff]
      %v1883 = vld [vmem:[#allocation2 + $0x188] sm:$0xff]
      %v1884 = vld [vmem:[#allocation2 + $0x190] sm:$0xff]
      %v1885 = vld [vmem:[#allocation2 + $0x198] sm:$0xff]
      %v1886 = vld [vmem:[#allocation2 + $0x1a0] sm:$0xff]
      %v1887 = vld [vmem:[#allocation2 + $0x1a8] sm:$0xff]
      %v1888 = vld [vmem:[#allocation2 + $0x1b0] sm:$0xff]
      %v1889 = vld [vmem:[#allocation2 + $0x1b8] sm:$0xff]
      %v1890 = vld [vmem:[#allocation2 + $0x1c0] sm:$0xff]
      %v1891 = vld [vmem:[#allocation2 + $0x1c8] sm:$0xff]
      %v1892 = vld [vmem:[#allocation2 + $0x1d0] sm:$0xff]
      %v1893 = vld [vmem:[#allocation2 + $0x1d8] sm:$0xff]
      %v1894 = vld [vmem:[#allocation2 + $0x1e0] sm:$0xff]
      %v1895 = vld [vmem:[#allocation2 + $0x1e8] sm:$0xff]
      %v1896 = vld [vmem:[#allocation2 + $0x1f0] sm:$0xff]
      %v1897 = vld [vmem:[#allocation2 + $0x1f8] sm:$0xff]
      %v1898 = vld [vmem:[#allocation2 + $0x200] sm:$0xff]
      %v1899 = vld [vmem:[#allocation2 + $0x208] sm:$0xff]
      %v1900 = vld [vmem:[#allocation2 + $0x210] sm:$0xff]
      %v1901 = vld [vmem:[#allocation2 + $0x218] sm:$0xff]
      %v1902 = vld [vmem:[#allocation2 + $0x220] sm:$0xff]
      %v1903 = vld [vmem:[#allocation2 + $0x228] sm:$0xff]
      %v1904 = vld [vmem:[#allocation2 + $0x230] sm:$0xff]
      %v1905 = vld [vmem:[#allocation2 + $0x238] sm:$0xff]
      %v1906 = vld [vmem:[#allocation2 + $0x240] sm:$0xff]
      %v1907 = vld [vmem:[#allocation2 + $0x248] sm:$0xff]
      %v1908 = vld [vmem:[#allocation2 + $0x250] sm:$0xff]
      %v1909 = vld [vmem:[#allocation2 + $0x258] sm:$0xff]
      %v1910 = vld [vmem:[#allocation2 + $0x260] sm:$0xff]
      %v1911 = vld [vmem:[#allocation2 + $0x268] sm:$0xff]
      %v1912 = vld [vmem:[#allocation2 + $0x270] sm:$0xff]
      %v1913 = vld [vmem:[#allocation2 + $0x278] sm:$0xff]
      %v1914 = vadd.f32 %v1674, %v1675
      %1915 = vadd.xlane.f32.xlu0 %v1914
      %v1916 = vpop.xlane.xlu0 %1915
      %v1917 = vadd.f32 %v1676, %v1677
      %1918 = vadd.xlane.f32.xlu0 %v1917
      %v1919 = vpop.xlane.xlu0 %1918
      %v1920 = vadd.f32 %v1678, %v1679
      %1921 = vadd.xlane.f32.xlu0 %v1920
      %v1922 = vpop.xlane.xlu0 %1921
      %v1923 = vadd.f32 %v1680, %v1681
      %1924 = vadd.xlane.f32.xlu0 %v1923
      %v1925 = vpop.xlane.xlu0 %1924
      %v1926 = vadd.f32 %v1682, %v1683
      %1927 = vadd.xlane.f32.xlu0 %v1926
      %v1928 = vpop.xlane.xlu0 %1927
      %v1929 = vadd.f32 %v1684, %v1685
      %1930 = vadd.xlane.f32.xlu0 %v1929
      %v1931 = vpop.xlane.xlu0 %1930
      %v1932 = vadd.f32 %v1686, %v1687
      %1933 = vadd.xlane.f32.xlu0 %v1932
      %v1934 = vpop.xlane.xlu0 %1933
      %v1935 = vadd.f32 %v1688, %v1689
      %1936 = vadd.xlane.f32.xlu0 %v1935
      %v1937 = vpop.xlane.xlu0 %1936
      %v1938 = vadd.f32 %v1690, %v1691
      %1939 = vadd.xlane.f32.xlu0 %v1938
      %v1940 = vpop.xlane.xlu0 %1939
      %v1941 = vadd.f32 %v1692, %v1693
      %1942 = vadd.xlane.f32.xlu0 %v1941
      %v1943 = vpop.xlane.xlu0 %1942
      %v1944 = vadd.f32 %v1694, %v1695
      %1945 = vadd.xlane.f32.xlu0 %v1944
      %v1946 = vpop.xlane.xlu0 %1945
      %v1947 = vadd.f32 %v1696, %v1697
      %1948 = vadd.xlane.f32.xlu0 %v1947
      %v1949 = vpop.xlane.xlu0 %1948
      %v1950 = vadd.f32 %v1698, %v1699
      %1951 = vadd.xlane.f32.xlu0 %v1950
      %v1952 = vpop.xlane.xlu0 %1951
      %v1953 = vadd.f32 %v1700, %v1701
      %1954 = vadd.xlane.f32.xlu0 %v1953
      %v1955 = vpop.xlane.xlu0 %1954
      %v1956 = vadd.f32 %v1702, %v1703
      %1957 = vadd.xlane.f32.xlu0 %v1956
      %v1958 = vpop.xlane.xlu0 %1957
      %v1959 = vadd.f32 %v1704, %v1705
      %1960 = vadd.xlane.f32.xlu0 %v1959
      %v1961 = vpop.xlane.xlu0 %1960
      %v1962 = vadd.f32 %v1706, %v1707
      %1963 = vadd.xlane.f32.xlu0 %v1962
      %v1964 = vpop.xlane.xlu0 %1963
      %v1965 = vadd.f32 %v1708, %v1709
      %1966 = vadd.xlane.f32.xlu0 %v1965
      %v1967 = vpop.xlane.xlu0 %1966
      %v1968 = vadd.f32 %v1710, %v1711
      %1969 = vadd.xlane.f32.xlu0 %v1968
      %v1970 = vpop.xlane.xlu0 %1969
      %v1971 = vadd.f32 %v1712, %v1713
      %1972 = vadd.xlane.f32.xlu0 %v1971
      %v1973 = vpop.xlane.xlu0 %1972
      %v1974 = vadd.f32 %v1714, %v1715
      %1975 = vadd.xlane.f32.xlu0 %v1974
      %v1976 = vpop.xlane.xlu0 %1975
      %v1977 = vadd.f32 %v1716, %v1717
      %1978 = vadd.xlane.f32.xlu0 %v1977
      %v1979 = vpop.xlane.xlu0 %1978
      %v1980 = vadd.f32 %v1718, %v1719
      %1981 = vadd.xlane.f32.xlu0 %v1980
      %v1982 = vpop.xlane.xlu0 %1981
      %v1983 = vadd.f32 %v1720, %v1721
      %1984 = vadd.xlane.f32.xlu0 %v1983
      %v1985 = vpop.xlane.xlu0 %1984
      %v1986 = vadd.f32 %v1722, %v1723
      %1987 = vadd.xlane.f32.xlu0 %v1986
      %v1988 = vpop.xlane.xlu0 %1987
      %v1989 = vadd.f32 %v1724, %v1725
      %1990 = vadd.xlane.f32.xlu0 %v1989
      %v1991 = vpop.xlane.xlu0 %1990
      %v1992 = vadd.f32 %v1726, %v1727
      %1993 = vadd.xlane.f32.xlu0 %v1992
      %v1994 = vpop.xlane.xlu0 %1993
      %v1995 = vadd.f32 %v1728, %v1729
      %1996 = vadd.xlane.f32.xlu0 %v1995
      %v1997 = vpop.xlane.xlu0 %1996
      %v1998 = vadd.f32 %v1730, %v1731
      %1999 = vadd.xlane.f32.xlu0 %v1998
      %v2000 = vpop.xlane.xlu0 %1999
      %v2001 = vadd.f32 %v1732, %v1733
      %2002 = vadd.xlane.f32.xlu0 %v2001
      %v2003 = vpop.xlane.xlu0 %2002
      %v2004 = vadd.f32 %v1734, %v1735
      %2005 = vadd.xlane.f32.xlu0 %v2004
      %v2006 = vpop.xlane.xlu0 %2005
      %v2007 = vadd.f32 %v1736, %v1737
      %2008 = vadd.xlane.f32.xlu0 %v2007
      %v2009 = vpop.xlane.xlu0 %2008
      %v2010 = vadd.f32 %v1738, %v1739
      %2011 = vadd.xlane.f32.xlu0 %v2010
      %v2012 = vpop.xlane.xlu0 %2011
      %v2013 = vadd.f32 %v1740, %v1741
      %2014 = vadd.xlane.f32.xlu0 %v2013
      %v2015 = vpop.xlane.xlu0 %2014
      %v2016 = vadd.f32 %v1742, %v1743
      %2017 = vadd.xlane.f32.xlu0 %v2016
      %v2018 = vpop.xlane.xlu0 %2017
      %v2019 = vadd.f32 %v1744, %v1745
      %2020 = vadd.xlane.f32.xlu0 %v2019
      %v2021 = vpop.xlane.xlu0 %2020
      %v2022 = vadd.f32 %v1746, %v1747
      %2023 = vadd.xlane.f32.xlu0 %v2022
      %v2024 = vpop.xlane.xlu0 %2023
      %v2025 = vadd.f32 %v1748, %v1749
      %2026 = vadd.xlane.f32.xlu0 %v2025
      %v2027 = vpop.xlane.xlu0 %2026
      %v2028 = vadd.f32 %v1750, %v1751
      %2029 = vadd.xlane.f32.xlu0 %v2028
      %v2030 = vpop.xlane.xlu0 %2029
      %v2031 = vadd.f32 %v1752, %v1753
      %2032 = vadd.xlane.f32.xlu0 %v2031
      %v2033 = vpop.xlane.xlu0 %2032
      %v2034 = vadd.f32 %v1754, %v1755
      %2035 = vadd.xlane.f32.xlu0 %v2034
      %v2036 = vpop.xlane.xlu0 %2035
      %v2037 = vadd.f32 %v1756, %v1757
      %2038 = vadd.xlane.f32.xlu0 %v2037
      %v2039 = vpop.xlane.xlu0 %2038
      %v2040 = vadd.f32 %v1758, %v1759
      %2041 = vadd.xlane.f32.xlu0 %v2040
      %v2042 = vpop.xlane.xlu0 %2041
      %v2043 = vadd.f32 %v1760, %v1761
      %2044 = vadd.xlane.f32.xlu0 %v2043
      %v2045 = vpop.xlane.xlu0 %2044
      %v2046 = vadd.f32 %v1762, %v1763
      %2047 = vadd.xlane.f32.xlu0 %v2046
      %v2048 = vpop.xlane.xlu0 %2047
      %v2049 = vadd.f32 %v1764, %v1765
      %2050 = vadd.xlane.f32.xlu0 %v2049
      %v2051 = vpop.xlane.xlu0 %2050
      %v2052 = vadd.f32 %v1766, %v1767
      %2053 = vadd.xlane.f32.xlu0 %v2052
      %v2054 = vpop.xlane.xlu0 %2053
      %v2055 = vadd.f32 %v1768, %v1769
      %2056 = vadd.xlane.f32.xlu0 %v2055
      %v2057 = vpop.xlane.xlu0 %2056
      %v2058 = vadd.f32 %v1770, %v1771
      %2059 = vadd.xlane.f32.xlu0 %v2058
      %v2060 = vpop.xlane.xlu0 %2059
      %v2061 = vadd.f32 %v1772, %v1773
      %2062 = vadd.xlane.f32.xlu0 %v2061
      %v2063 = vpop.xlane.xlu0 %2062
      %v2064 = vadd.f32 %v1774, %v1775
      %2065 = vadd.xlane.f32.xlu0 %v2064
      %v2066 = vpop.xlane.xlu0 %2065
      %v2067 = vadd.f32 %v1776, %v1777
      %2068 = vadd.xlane.f32.xlu0 %v2067
      %v2069 = vpop.xlane.xlu0 %2068
      %v2070 = vadd.f32 %v1778, %v1779
      %2071 = vadd.xlane.f32.xlu0 %v2070
      %v2072 = vpop.xlane.xlu0 %2071
      %v2073 = vadd.f32 %v1780, %v1781
      %2074 = vadd.xlane.f32.xlu0 %v2073
      %v2075 = vpop.xlane.xlu0 %2074
      %v2076 = vadd.f32 %v1782, %v1783
      %2077 = vadd.xlane.f32.xlu0 %v2076
      %v2078 = vpop.xlane.xlu0 %2077
      %v2079 = vadd.f32 %v1784, %v1785
      %2080 = vadd.xlane.f32.xlu0 %v2079
      %v2081 = vpop.xlane.xlu0 %2080
      %v2082 = vadd.f32 %v1786, %v1787
      %2083 = vadd.xlane.f32.xlu0 %v2082
      %v2084 = vpop.xlane.xlu0 %2083
      %v2085 = vadd.f32 %v1788, %v1789
      %2086 = vadd.xlane.f32.xlu0 %v2085
      %v2087 = vpop.xlane.xlu0 %2086
      %v2088 = vadd.f32 %v1790, %v1791
      %2089 = vadd.xlane.f32.xlu0 %v2088
      %v2090 = vpop.xlane.xlu0 %2089
      %v2091 = vadd.f32 %v1792, %v1793
      %2092 = vadd.xlane.f32.xlu0 %v2091
      %v2093 = vpop.xlane.xlu0 %2092
      %v2094 = vadd.f32 %v1794, %v1795
      %2095 = vadd.xlane.f32.xlu0 %v2094
      %v2096 = vpop.xlane.xlu0 %2095
      %v2097 = vadd.f32 %v1796, %v1797
      %2098 = vadd.xlane.f32.xlu0 %v2097
      %v2099 = vpop.xlane.xlu0 %2098
      %v2100 = vadd.f32 %v1798, %v1799
      %2101 = vadd.xlane.f32.xlu0 %v2100
      %v2102 = vpop.xlane.xlu0 %2101
      %v2103 = vadd.f32 %v1800, %v1801
      %2104 = vadd.xlane.f32.xlu0 %v2103
      %v2105 = vpop.xlane.xlu0 %2104
      %v2106 = vadd.f32 %v1802, %v1803
      %2107 = vadd.xlane.f32.xlu0 %v2106
      %v2108 = vpop.xlane.xlu0 %2107
      %v2109 = vadd.f32 %v1804, %v1805
      %2110 = vadd.xlane.f32.xlu0 %v2109
      %v2111 = vpop.xlane.xlu0 %2110
      %v2112 = vadd.f32 %v1806, %v1807
      %2113 = vadd.xlane.f32.xlu0 %v2112
      %v2114 = vpop.xlane.xlu0 %2113
      %v2115 = vadd.f32 %v1808, %v1809
      %2116 = vadd.xlane.f32.xlu0 %v2115
      %v2117 = vpop.xlane.xlu0 %2116
      %v2118 = vadd.f32 %v1810, %v1811
      %2119 = vadd.xlane.f32.xlu0 %v2118
      %v2120 = vpop.xlane.xlu0 %2119
      %v2121 = vadd.f32 %v1812, %v1813
      %2122 = vadd.xlane.f32.xlu0 %v2121
      %v2123 = vpop.xlane.xlu0 %2122
      %v2124 = vadd.f32 %v1814, %v1815
      %2125 = vadd.xlane.f32.xlu0 %v2124
      %v2126 = vpop.xlane.xlu0 %2125
      %v2127 = vadd.f32 %v1816, %v1817
      %2128 = vadd.xlane.f32.xlu0 %v2127
      %v2129 = vpop.xlane.xlu0 %2128
      %v2130 = vadd.f32 %v1818, %v1819
      %2131 = vadd.xlane.f32.xlu0 %v2130
      %v2132 = vpop.xlane.xlu0 %2131
      %v2133 = vadd.f32 %v1820, %v1821
      %2134 = vadd.xlane.f32.xlu0 %v2133
      %v2135 = vpop.xlane.xlu0 %2134
      %v2136 = vadd.f32 %v1822, %v1823
      %2137 = vadd.xlane.f32.xlu0 %v2136
      %v2138 = vpop.xlane.xlu0 %2137
      %v2139 = vadd.f32 %v1824, %v1825
      %2140 = vadd.xlane.f32.xlu0 %v2139
      %v2141 = vpop.xlane.xlu0 %2140
      %v2142 = vadd.f32 %v1826, %v1827
      %2143 = vadd.xlane.f32.xlu0 %v2142
      %v2144 = vpop.xlane.xlu0 %2143
      %v2145 = vadd.f32 %v1828, %v1829
      %2146 = vadd.xlane.f32.xlu0 %v2145
      %v2147 = vpop.xlane.xlu0 %2146
      %v2148 = vadd.f32 %v1830, %v1831
      %2149 = vadd.xlane.f32.xlu0 %v2148
      %v2150 = vpop.xlane.xlu0 %2149
      %v2151 = vadd.f32 %v1832, %v1833
      %2152 = vadd.xlane.f32.xlu0 %v2151
      %v2153 = vpop.xlane.xlu0 %2152
      %v2154 = vadd.f32 %v1834, %v1916
      %v2155 = vadd.f32 %v1835, %v1919
      %v2156 = vadd.f32 %v1836, %v1922
      %v2157 = vadd.f32 %v1837, %v1925
      %v2158 = vadd.f32 %v1838, %v1928
      %v2159 = vadd.f32 %v1839, %v1931
      %v2160 = vadd.f32 %v1840, %v1934
      %v2161 = vadd.f32 %v1841, %v1937
      %v2162 = vadd.f32 %v1842, %v1940
      %v2163 = vadd.f32 %v1843, %v1943
      %v2164 = vadd.f32 %v1844, %v1946
      %v2165 = vadd.f32 %v1845, %v1949
      %v2166 = vadd.f32 %v1846, %v1952
      %v2167 = vadd.f32 %v1847, %v1955
      %v2168 = vadd.f32 %v1848, %v1958
      %v2169 = vadd.f32 %v1849, %v1961
      %v2170 = vadd.f32 %v1850, %v1964
      %v2171 = vadd.f32 %v1851, %v1967
      %v2172 = vadd.f32 %v1852, %v1970
      %v2173 = vadd.f32 %v1853, %v1973
      %v2174 = vadd.f32 %v1854, %v1976
      %v2175 = vadd.f32 %v1855, %v1979
      %v2176 = vadd.f32 %v1856, %v1982
      %v2177 = vadd.f32 %v1857, %v1985
      %v2178 = vadd.f32 %v1858, %v1988
      %v2179 = vadd.f32 %v1859, %v1991
      %v2180 = vadd.f32 %v1860, %v1994
      %v2181 = vadd.f32 %v1861, %v1997
      %v2182 = vadd.f32 %v1862, %v2000
      %v2183 = vadd.f32 %v1863, %v2003
      %v2184 = vadd.f32 %v1864, %v2006
      %v2185 = vadd.f32 %v1865, %v2009
      %v2186 = vadd.f32 %v1866, %v2012
      %v2187 = vadd.f32 %v1867, %v2015
      %v2188 = vadd.f32 %v1868, %v2018
      %v2189 = vadd.f32 %v1869, %v2021
      %v2190 = vadd.f32 %v1870, %v2024
      %v2191 = vadd.f32 %v1871, %v2027
      %v2192 = vadd.f32 %v1872, %v2030
      %v2193 = vadd.f32 %v1873, %v2033
      %v2194 = vadd.f32 %v1874, %v2036
      %v2195 = vadd.f32 %v1875, %v2039
      %v2196 = vadd.f32 %v1876, %v2042
      %v2197 = vadd.f32 %v1877, %v2045
      %v2198 = vadd.f32 %v1878, %v2048
      %v2199 = vadd.f32 %v1879, %v2051
      %v2200 = vadd.f32 %v1880, %v2054
      %v2201 = vadd.f32 %v1881, %v2057
      %v2202 = vadd.f32 %v1882, %v2060
      %v2203 = vadd.f32 %v1883, %v2063
      %v2204 = vadd.f32 %v1884, %v2066
      %v2205 = vadd.f32 %v1885, %v2069
      %v2206 = vadd.f32 %v1886, %v2072
      %v2207 = vadd.f32 %v1887, %v2075
      %v2208 = vadd.f32 %v1888, %v2078
      %v2209 = vadd.f32 %v1889, %v2081
      %v2210 = vadd.f32 %v1890, %v2084
      %v2211 = vadd.f32 %v1891, %v2087
      %v2212 = vadd.f32 %v1892, %v2090
      %v2213 = vadd.f32 %v1893, %v2093
      %v2214 = vadd.f32 %v1894, %v2096
      %v2215 = vadd.f32 %v1895, %v2099
      %v2216 = vadd.f32 %v1896, %v2102
      %v2217 = vadd.f32 %v1897, %v2105
      %v2218 = vadd.f32 %v1898, %v2108
      %v2219 = vadd.f32 %v1899, %v2111
      %v2220 = vadd.f32 %v1900, %v2114
      %v2221 = vadd.f32 %v1901, %v2117
      %v2222 = vadd.f32 %v1902, %v2120
      %v2223 = vadd.f32 %v1903, %v2123
      %v2224 = vadd.f32 %v1904, %v2126
      %v2225 = vadd.f32 %v1905, %v2129
      %v2226 = vadd.f32 %v1906, %v2132
      %v2227 = vadd.f32 %v1907, %v2135
      %v2228 = vadd.f32 %v1908, %v2138
      %v2229 = vadd.f32 %v1909, %v2141
      %v2230 = vadd.f32 %v1910, %v2144
      %v2231 = vadd.f32 %v1911, %v2147
      %v2232 = vadd.f32 %v1912, %v2150
      %v2233 = vadd.f32 %v1913, %v2153
      %vm2234 = vcmask 7168
      %2235 = vst.msk [vmem:[#allocation2] sm:$0xff] %vm2234, %v2154
      %2236 = vst.msk [vmem:[#allocation2 + $0x8] sm:$0xff] %vm2234, %v2155
      %2237 = vst.msk [vmem:[#allocation2 + $0x10] sm:$0xff] %vm2234, %v2156
      %2238 = vst.msk [vmem:[#allocation2 + $0x18] sm:$0xff] %vm2234, %v2157
      %2239 = vst.msk [vmem:[#allocation2 + $0x20] sm:$0xff] %vm2234, %v2158
      %2240 = vst.msk [vmem:[#allocation2 + $0x28] sm:$0xff] %vm2234, %v2159
      %2241 = vst.msk [vmem:[#allocation2 + $0x30] sm:$0xff] %vm2234, %v2160
      %2242 = vst.msk [vmem:[#allocation2 + $0x38] sm:$0xff] %vm2234, %v2161
      %2243 = vst.msk [vmem:[#allocation2 + $0x40] sm:$0xff] %vm2234, %v2162
      %2244 = vst.msk [vmem:[#allocation2 + $0x48] sm:$0xff] %vm2234, %v2163
      %2245 = vst.msk [vmem:[#allocation2 + $0x50] sm:$0xff] %vm2234, %v2164
      %2246 = vst.msk [vmem:[#allocation2 + $0x58] sm:$0xff] %vm2234, %v2165
      %2247 = vst.msk [vmem:[#allocation2 + $0x60] sm:$0xff] %vm2234, %v2166
      %2248 = vst.msk [vmem:[#allocation2 + $0x68] sm:$0xff] %vm2234, %v2167
      %2249 = vst.msk [vmem:[#allocation2 + $0x70] sm:$0xff] %vm2234, %v2168
      %2250 = vst.msk [vmem:[#allocation2 + $0x78] sm:$0xff] %vm2234, %v2169
      %2251 = vst.msk [vmem:[#allocation2 + $0x80] sm:$0xff] %vm2234, %v2170
      %2252 = vst.msk [vmem:[#allocation2 + $0x88] sm:$0xff] %vm2234, %v2171
      %2253 = vst.msk [vmem:[#allocation2 + $0x90] sm:$0xff] %vm2234, %v2172
      %2254 = vst.msk [vmem:[#allocation2 + $0x98] sm:$0xff] %vm2234, %v2173
      %2255 = vst.msk [vmem:[#allocation2 + $0xa0] sm:$0xff] %vm2234, %v2174
      %2256 = vst.msk [vmem:[#allocation2 + $0xa8] sm:$0xff] %vm2234, %v2175
      %2257 = vst.msk [vmem:[#allocation2 + $0xb0] sm:$0xff] %vm2234, %v2176
      %2258 = vst.msk [vmem:[#allocation2 + $0xb8] sm:$0xff] %vm2234, %v2177
      %2259 = vst.msk [vmem:[#allocation2 + $0xc0] sm:$0xff] %vm2234, %v2178
      %2260 = vst.msk [vmem:[#allocation2 + $0xc8] sm:$0xff] %vm2234, %v2179
      %2261 = vst.msk [vmem:[#allocation2 + $0xd0] sm:$0xff] %vm2234, %v2180
      %2262 = vst.msk [vmem:[#allocation2 + $0xd8] sm:$0xff] %vm2234, %v2181
      %2263 = vst.msk [vmem:[#allocation2 + $0xe0] sm:$0xff] %vm2234, %v2182
      %2264 = vst.msk [vmem:[#allocation2 + $0xe8] sm:$0xff] %vm2234, %v2183
      %2265 = vst.msk [vmem:[#allocation2 + $0xf0] sm:$0xff] %vm2234, %v2184
      %2266 = vst.msk [vmem:[#allocation2 + $0xf8] sm:$0xff] %vm2234, %v2185
      %2267 = vst.msk [vmem:[#allocation2 + $0x100] sm:$0xff] %vm2234, %v2186
      %2268 = vst.msk [vmem:[#allocation2 + $0x108] sm:$0xff] %vm2234, %v2187
      %2269 = vst.msk [vmem:[#allocation2 + $0x110] sm:$0xff] %vm2234, %v2188
      %2270 = vst.msk [vmem:[#allocation2 + $0x118] sm:$0xff] %vm2234, %v2189
      %2271 = vst.msk [vmem:[#allocation2 + $0x120] sm:$0xff] %vm2234, %v2190
      %2272 = vst.msk [vmem:[#allocation2 + $0x128] sm:$0xff] %vm2234, %v2191
      %2273 = vst.msk [vmem:[#allocation2 + $0x130] sm:$0xff] %vm2234, %v2192
      %2274 = vst.msk [vmem:[#allocation2 + $0x138] sm:$0xff] %vm2234, %v2193
      %2275 = vst.msk [vmem:[#allocation2 + $0x140] sm:$0xff] %vm2234, %v2194
      %2276 = vst.msk [vmem:[#allocation2 + $0x148] sm:$0xff] %vm2234, %v2195
      %2277 = vst.msk [vmem:[#allocation2 + $0x150] sm:$0xff] %vm2234, %v2196
      %2278 = vst.msk [vmem:[#allocation2 + $0x158] sm:$0xff] %vm2234, %v2197
      %2279 = vst.msk [vmem:[#allocation2 + $0x160] sm:$0xff] %vm2234, %v2198
      %2280 = vst.msk [vmem:[#allocation2 + $0x168] sm:$0xff] %vm2234, %v2199
      %2281 = vst.msk [vmem:[#allocation2 + $0x170] sm:$0xff] %vm2234, %v2200
      %2282 = vst.msk [vmem:[#allocation2 + $0x178] sm:$0xff] %vm2234, %v2201
      %2283 = vst.msk [vmem:[#allocation2 + $0x180] sm:$0xff] %vm2234, %v2202
      %2284 = vst.msk [vmem:[#allocation2 + $0x188] sm:$0xff] %vm2234, %v2203
      %2285 = vst.msk [vmem:[#allocation2 + $0x190] sm:$0xff] %vm2234, %v2204
      %2286 = vst.msk [vmem:[#allocation2 + $0x198] sm:$0xff] %vm2234, %v2205
      %2287 = vst.msk [vmem:[#allocation2 + $0x1a0] sm:$0xff] %vm2234, %v2206
      %2288 = vst.msk [vmem:[#allocation2 + $0x1a8] sm:$0xff] %vm2234, %v2207
      %2289 = vst.msk [vmem:[#allocation2 + $0x1b0] sm:$0xff] %vm2234, %v2208
      %2290 = vst.msk [vmem:[#allocation2 + $0x1b8] sm:$0xff] %vm2234, %v2209
      %2291 = vst.msk [vmem:[#allocation2 + $0x1c0] sm:$0xff] %vm2234, %v2210
      %2292 = vst.msk [vmem:[#allocation2 + $0x1c8] sm:$0xff] %vm2234, %v2211
      %2293 = vst.msk [vmem:[#allocation2 + $0x1d0] sm:$0xff] %vm2234, %v2212
      %2294 = vst.msk [vmem:[#allocation2 + $0x1d8] sm:$0xff] %vm2234, %v2213
      %2295 = vst.msk [vmem:[#allocation2 + $0x1e0] sm:$0xff] %vm2234, %v2214
      %2296 = vst.msk [vmem:[#allocation2 + $0x1e8] sm:$0xff] %vm2234, %v2215
      %2297 = vst.msk [vmem:[#allocation2 + $0x1f0] sm:$0xff] %vm2234, %v2216
      %2298 = vst.msk [vmem:[#allocation2 + $0x1f8] sm:$0xff] %vm2234, %v2217
      %2299 = vst.msk [vmem:[#allocation2 + $0x200] sm:$0xff] %vm2234, %v2218
      %2300 = vst.msk [vmem:[#allocation2 + $0x208] sm:$0xff] %vm2234, %v2219
      %2301 = vst.msk [vmem:[#allocation2 + $0x210] sm:$0xff] %vm2234, %v2220
      %2302 = vst.msk [vmem:[#allocation2 + $0x218] sm:$0xff] %vm2234, %v2221
      %2303 = vst.msk [vmem:[#allocation2 + $0x220] sm:$0xff] %vm2234, %v2222
      %2304 = vst.msk [vmem:[#allocation2 + $0x228] sm:$0xff] %vm2234, %v2223
      %2305 = vst.msk [vmem:[#allocation2 + $0x230] sm:$0xff] %vm2234, %v2224
      %2306 = vst.msk [vmem:[#allocation2 + $0x238] sm:$0xff] %vm2234, %v2225
      %2307 = vst.msk [vmem:[#allocation2 + $0x240] sm:$0xff] %vm2234, %v2226
      %2308 = vst.msk [vmem:[#allocation2 + $0x248] sm:$0xff] %vm2234, %v2227
      %2309 = vst.msk [vmem:[#allocation2 + $0x250] sm:$0xff] %vm2234, %v2228
      %2310 = vst.msk [vmem:[#allocation2 + $0x258] sm:$0xff] %vm2234, %v2229
      %2311 = vst.msk [vmem:[#allocation2 + $0x260] sm:$0xff] %vm2234, %v2230
      %2312 = vst.msk [vmem:[#allocation2 + $0x268] sm:$0xff] %vm2234, %v2231
      %2313 = vst.msk [vmem:[#allocation2 + $0x270] sm:$0xff] %vm2234, %v2232
      %2314 = vst.msk [vmem:[#allocation2 + $0x278] sm:$0xff] %vm2234, %v2233
      // Predicated region
      $region45: #{rgbd_forward.4} parent=39 // pred_check
        %p2315 = pneg %p288
      $region46: #{rgbd_forward.4} parent=39 // pred_check_branch
        %2317 = sbr.rel (%p2315) target = $region48
      $region47: #{rgbd_forward.4} parent=39 // pred_region
        %v2318 = vld [vmem:[#allocation2] sm:$0xff]
        %v2319 = vld [vmem:[#allocation2 + $0x8] sm:$0xff]
        %v2320 = vld [vmem:[#allocation2 + $0x10] sm:$0xff]
        %v2321 = vld [vmem:[#allocation2 + $0x18] sm:$0xff]
        %v2322 = vld [vmem:[#allocation2 + $0x20] sm:$0xff]
        %v2323 = vld [vmem:[#allocation2 + $0x28] sm:$0xff]
        %v2324 = vld [vmem:[#allocation2 + $0x30] sm:$0xff]
        %v2325 = vld [vmem:[#allocation2 + $0x38] sm:$0xff]
        %v2326 = vld [vmem:[#allocation2 + $0x40] sm:$0xff]
        %v2327 = vld [vmem:[#allocation2 + $0x48] sm:$0xff]
        %v2328 = vld [vmem:[#allocation2 + $0x50] sm:$0xff]
        %v2329 = vld [vmem:[#allocation2 + $0x58] sm:$0xff]
        %v2330 = vld [vmem:[#allocation2 + $0x60] sm:$0xff]
        %v2331 = vld [vmem:[#allocation2 + $0x68] sm:$0xff]
        %v2332 = vld [vmem:[#allocation2 + $0x70] sm:$0xff]
        %v2333 = vld [vmem:[#allocation2 + $0x78] sm:$0xff]
        %v2334 = vld [vmem:[#allocation2 + $0x80] sm:$0xff]
        %v2335 = vld [vmem:[#allocation2 + $0x88] sm:$0xff]
        %v2336 = vld [vmem:[#allocation2 + $0x90] sm:$0xff]
        %v2337 = vld [vmem:[#allocation2 + $0x98] sm:$0xff]
        %v2338 = vld [vmem:[#allocation2 + $0xa0] sm:$0xff]
        %v2339 = vld [vmem:[#allocation2 + $0xa8] sm:$0xff]
        %v2340 = vld [vmem:[#allocation2 + $0xb0] sm:$0xff]
        %v2341 = vld [vmem:[#allocation2 + $0xb8] sm:$0xff]
        %v2342 = vld [vmem:[#allocation2 + $0xc0] sm:$0xff]
        %v2343 = vld [vmem:[#allocation2 + $0xc8] sm:$0xff]
        %v2344 = vld [vmem:[#allocation2 + $0xd0] sm:$0xff]
        %v2345 = vld [vmem:[#allocation2 + $0xd8] sm:$0xff]
        %v2346 = vld [vmem:[#allocation2 + $0xe0] sm:$0xff]
        %v2347 = vld [vmem:[#allocation2 + $0xe8] sm:$0xff]
        %v2348 = vld [vmem:[#allocation2 + $0xf0] sm:$0xff]
        %v2349 = vld [vmem:[#allocation2 + $0xf8] sm:$0xff]
        %v2350 = vld [vmem:[#allocation2 + $0x100] sm:$0xff]
        %v2351 = vld [vmem:[#allocation2 + $0x108] sm:$0xff]
        %v2352 = vld [vmem:[#allocation2 + $0x110] sm:$0xff]
        %v2353 = vld [vmem:[#allocation2 + $0x118] sm:$0xff]
        %v2354 = vld [vmem:[#allocation2 + $0x120] sm:$0xff]
        %v2355 = vld [vmem:[#allocation2 + $0x128] sm:$0xff]
        %v2356 = vld [vmem:[#allocation2 + $0x130] sm:$0xff]
        %v2357 = vld [vmem:[#allocation2 + $0x138] sm:$0xff]
        %v2358 = vld [vmem:[#allocation2 + $0x140] sm:$0xff]
        %v2359 = vld [vmem:[#allocation2 + $0x148] sm:$0xff]
        %v2360 = vld [vmem:[#allocation2 + $0x150] sm:$0xff]
        %v2361 = vld [vmem:[#allocation2 + $0x158] sm:$0xff]
        %v2362 = vld [vmem:[#allocation2 + $0x160] sm:$0xff]
        %v2363 = vld [vmem:[#allocation2 + $0x168] sm:$0xff]
        %v2364 = vld [vmem:[#allocation2 + $0x170] sm:$0xff]
        %v2365 = vld [vmem:[#allocation2 + $0x178] sm:$0xff]
        %v2366 = vld [vmem:[#allocation2 + $0x180] sm:$0xff]
        %v2367 = vld [vmem:[#allocation2 + $0x188] sm:$0xff]
        %v2368 = vld [vmem:[#allocation2 + $0x190] sm:$0xff]
        %v2369 = vld [vmem:[#allocation2 + $0x198] sm:$0xff]
        %v2370 = vld [vmem:[#allocation2 + $0x1a0] sm:$0xff]
        %v2371 = vld [vmem:[#allocation2 + $0x1a8] sm:$0xff]
        %v2372 = vld [vmem:[#allocation2 + $0x1b0] sm:$0xff]
        %v2373 = vld [vmem:[#allocation2 + $0x1b8] sm:$0xff]
        %v2374 = vld [vmem:[#allocation2 + $0x1c0] sm:$0xff]
        %v2375 = vld [vmem:[#allocation2 + $0x1c8] sm:$0xff]
        %v2376 = vld [vmem:[#allocation2 + $0x1d0] sm:$0xff]
        %v2377 = vld [vmem:[#allocation2 + $0x1d8] sm:$0xff]
        %v2378 = vld [vmem:[#allocation2 + $0x1e0] sm:$0xff]
        %v2379 = vld [vmem:[#allocation2 + $0x1e8] sm:$0xff]
        %v2380 = vld [vmem:[#allocation2 + $0x1f0] sm:$0xff]
        %v2381 = vld [vmem:[#allocation2 + $0x1f8] sm:$0xff]
        %v2382 = vld [vmem:[#allocation2 + $0x200] sm:$0xff]
        %v2383 = vld [vmem:[#allocation2 + $0x208] sm:$0xff]
        %v2384 = vld [vmem:[#allocation2 + $0x210] sm:$0xff]
        %v2385 = vld [vmem:[#allocation2 + $0x218] sm:$0xff]
        %v2386 = vld [vmem:[#allocation2 + $0x220] sm:$0xff]
        %v2387 = vld [vmem:[#allocation2 + $0x228] sm:$0xff]
        %v2388 = vld [vmem:[#allocation2 + $0x230] sm:$0xff]
        %v2389 = vld [vmem:[#allocation2 + $0x238] sm:$0xff]
        %v2390 = vld [vmem:[#allocation2 + $0x240] sm:$0xff]
        %v2391 = vld [vmem:[#allocation2 + $0x248] sm:$0xff]
        %v2392 = vld [vmem:[#allocation2 + $0x250] sm:$0xff]
        %v2393 = vld [vmem:[#allocation2 + $0x258] sm:$0xff]
        %v2394 = vld [vmem:[#allocation2 + $0x260] sm:$0xff]
        %v2395 = vld [vmem:[#allocation2 + $0x268] sm:$0xff]
        %v2396 = vld [vmem:[#allocation2 + $0x270] sm:$0xff]
        %v2397 = vld [vmem:[#allocation2 + $0x278] sm:$0xff]
        %v2398 = vmul.f32 %v2318, 0.00390625
        %v2399 = vmul.f32 %v2319, 0.00390625
        %v2400 = vmul.f32 %v2320, 0.00390625
        %v2401 = vmul.f32 %v2321, 0.00390625
        %v2402 = vmul.f32 %v2322, 0.00390625
        %v2403 = vmul.f32 %v2323, 0.00390625
        %v2404 = vmul.f32 %v2324, 0.00390625
        %v2405 = vmul.f32 %v2325, 0.00390625
        %v2406 = vmul.f32 %v2326, 0.00390625
        %v2407 = vmul.f32 %v2327, 0.00390625
        %v2408 = vmul.f32 %v2328, 0.00390625
        %v2409 = vmul.f32 %v2329, 0.00390625
        %v2410 = vmul.f32 %v2330, 0.00390625
        %v2411 = vmul.f32 %v2331, 0.00390625
        %v2412 = vmul.f32 %v2332, 0.00390625
        %v2413 = vmul.f32 %v2333, 0.00390625
        %v2414 = vmul.f32 %v2334, 0.00390625
        %v2415 = vmul.f32 %v2335, 0.00390625
        %v2416 = vmul.f32 %v2336, 0.00390625
        %v2417 = vmul.f32 %v2337, 0.00390625
        %v2418 = vmul.f32 %v2338, 0.00390625
        %v2419 = vmul.f32 %v2339, 0.00390625
        %v2420 = vmul.f32 %v2340, 0.00390625
        %v2421 = vmul.f32 %v2341, 0.00390625
        %v2422 = vmul.f32 %v2342, 0.00390625
        %v2423 = vmul.f32 %v2343, 0.00390625
        %v2424 = vmul.f32 %v2344, 0.00390625
        %v2425 = vmul.f32 %v2345, 0.00390625
        %v2426 = vmul.f32 %v2346, 0.00390625
        %v2427 = vmul.f32 %v2347, 0.00390625
        %v2428 = vmul.f32 %v2348, 0.00390625
        %v2429 = vmul.f32 %v2349, 0.00390625
        %v2430 = vmul.f32 %v2350, 0.00390625
        %v2431 = vmul.f32 %v2351, 0.00390625
        %v2432 = vmul.f32 %v2352, 0.00390625
        %v2433 = vmul.f32 %v2353, 0.00390625
        %v2434 = vmul.f32 %v2354, 0.00390625
        %v2435 = vmul.f32 %v2355, 0.00390625
        %v2436 = vmul.f32 %v2356, 0.00390625
        %v2437 = vmul.f32 %v2357, 0.00390625
        %v2438 = vmul.f32 %v2358, 0.00390625
        %v2439 = vmul.f32 %v2359, 0.00390625
        %v2440 = vmul.f32 %v2360, 0.00390625
        %v2441 = vmul.f32 %v2361, 0.00390625
        %v2442 = vmul.f32 %v2362, 0.00390625
        %v2443 = vmul.f32 %v2363, 0.00390625
        %v2444 = vmul.f32 %v2364, 0.00390625
        %v2445 = vmul.f32 %v2365, 0.00390625
        %v2446 = vmul.f32 %v2366, 0.00390625
        %v2447 = vmul.f32 %v2367, 0.00390625
        %v2448 = vmul.f32 %v2368, 0.00390625
        %v2449 = vmul.f32 %v2369, 0.00390625
        %v2450 = vmul.f32 %v2370, 0.00390625
        %v2451 = vmul.f32 %v2371, 0.00390625
        %v2452 = vmul.f32 %v2372, 0.00390625
        %v2453 = vmul.f32 %v2373, 0.00390625
        %v2454 = vmul.f32 %v2374, 0.00390625
        %v2455 = vmul.f32 %v2375, 0.00390625
        %v2456 = vmul.f32 %v2376, 0.00390625
        %v2457 = vmul.f32 %v2377, 0.00390625
        %v2458 = vmul.f32 %v2378, 0.00390625
        %v2459 = vmul.f32 %v2379, 0.00390625
        %v2460 = vmul.f32 %v2380, 0.00390625
        %v2461 = vmul.f32 %v2381, 0.00390625
        %v2462 = vmul.f32 %v2382, 0.00390625
        %v2463 = vmul.f32 %v2383, 0.00390625
        %v2464 = vmul.f32 %v2384, 0.00390625
        %v2465 = vmul.f32 %v2385, 0.00390625
        %v2466 = vmul.f32 %v2386, 0.00390625
        %v2467 = vmul.f32 %v2387, 0.00390625
        %v2468 = vmul.f32 %v2388, 0.00390625
        %v2469 = vmul.f32 %v2389, 0.00390625
        %v2470 = vmul.f32 %v2390, 0.00390625
        %v2471 = vmul.f32 %v2391, 0.00390625
        %v2472 = vmul.f32 %v2392, 0.00390625
        %v2473 = vmul.f32 %v2393, 0.00390625
        %v2474 = vmul.f32 %v2394, 0.00390625
        %v2475 = vmul.f32 %v2395, 0.00390625
        %v2476 = vmul.f32 %v2396, 0.00390625
        %v2477 = vmul.f32 %v2397, 0.00390625
        %2478 = vst.msk [vmem:[%s284] sm:$0xff] %vm2234, %v2398
        %2479 = vst.msk [vmem:[%s284 + $0x8] sm:$0xff] %vm2234, %v2399
        %2480 = vst.msk [vmem:[%s284 + $0x10] sm:$0xff] %vm2234, %v2400
        %2481 = vst.msk [vmem:[%s284 + $0x18] sm:$0xff] %vm2234, %v2401
        %2482 = vst.msk [vmem:[%s284 + $0x20] sm:$0xff] %vm2234, %v2402
        %2483 = vst.msk [vmem:[%s284 + $0x28] sm:$0xff] %vm2234, %v2403
        %2484 = vst.msk [vmem:[%s284 + $0x30] sm:$0xff] %vm2234, %v2404
        %2485 = vst.msk [vmem:[%s284 + $0x38] sm:$0xff] %vm2234, %v2405
        %2486 = vst.msk [vmem:[%s284 + $0x40] sm:$0xff] %vm2234, %v2406
        %2487 = vst.msk [vmem:[%s284 + $0x48] sm:$0xff] %vm2234, %v2407
        %2488 = vst.msk [vmem:[%s284 + $0x50] sm:$0xff] %vm2234, %v2408
        %2489 = vst.msk [vmem:[%s284 + $0x58] sm:$0xff] %vm2234, %v2409
        %2490 = vst.msk [vmem:[%s284 + $0x60] sm:$0xff] %vm2234, %v2410
        %2491 = vst.msk [vmem:[%s284 + $0x68] sm:$0xff] %vm2234, %v2411
        %2492 = vst.msk [vmem:[%s284 + $0x70] sm:$0xff] %vm2234, %v2412
        %2493 = vst.msk [vmem:[%s284 + $0x78] sm:$0xff] %vm2234, %v2413
        %2494 = vst.msk [vmem:[%s284 + $0x80] sm:$0xff] %vm2234, %v2414
        %2495 = vst.msk [vmem:[%s284 + $0x88] sm:$0xff] %vm2234, %v2415
        %2496 = vst.msk [vmem:[%s284 + $0x90] sm:$0xff] %vm2234, %v2416
        %2497 = vst.msk [vmem:[%s284 + $0x98] sm:$0xff] %vm2234, %v2417
        %2498 = vst.msk [vmem:[%s284 + $0xa0] sm:$0xff] %vm2234, %v2418
        %2499 = vst.msk [vmem:[%s284 + $0xa8] sm:$0xff] %vm2234, %v2419
        %2500 = vst.msk [vmem:[%s284 + $0xb0] sm:$0xff] %vm2234, %v2420
        %2501 = vst.msk [vmem:[%s284 + $0xb8] sm:$0xff] %vm2234, %v2421
        %2502 = vst.msk [vmem:[%s284 + $0xc0] sm:$0xff] %vm2234, %v2422
        %2503 = vst.msk [vmem:[%s284 + $0xc8] sm:$0xff] %vm2234, %v2423
        %2504 = vst.msk [vmem:[%s284 + $0xd0] sm:$0xff] %vm2234, %v2424
        %2505 = vst.msk [vmem:[%s284 + $0xd8] sm:$0xff] %vm2234, %v2425
        %2506 = vst.msk [vmem:[%s284 + $0xe0] sm:$0xff] %vm2234, %v2426
        %2507 = vst.msk [vmem:[%s284 + $0xe8] sm:$0xff] %vm2234, %v2427
        %2508 = vst.msk [vmem:[%s284 + $0xf0] sm:$0xff] %vm2234, %v2428
        %2509 = vst.msk [vmem:[%s284 + $0xf8] sm:$0xff] %vm2234, %v2429
        %2510 = vst.msk [vmem:[%s284 + $0x100] sm:$0xff] %vm2234, %v2430
        %2511 = vst.msk [vmem:[%s284 + $0x108] sm:$0xff] %vm2234, %v2431
        %2512 = vst.msk [vmem:[%s284 + $0x110] sm:$0xff] %vm2234, %v2432
        %2513 = vst.msk [vmem:[%s284 + $0x118] sm:$0xff] %vm2234, %v2433
        %2514 = vst.msk [vmem:[%s284 + $0x120] sm:$0xff] %vm2234, %v2434
        %2515 = vst.msk [vmem:[%s284 + $0x128] sm:$0xff] %vm2234, %v2435
        %2516 = vst.msk [vmem:[%s284 + $0x130] sm:$0xff] %vm2234, %v2436
        %2517 = vst.msk [vmem:[%s284 + $0x138] sm:$0xff] %vm2234, %v2437
        %2518 = vst.msk [vmem:[%s284 + $0x140] sm:$0xff] %vm2234, %v2438
        %2519 = vst.msk [vmem:[%s284 + $0x148] sm:$0xff] %vm2234, %v2439
        %2520 = vst.msk [vmem:[%s284 + $0x150] sm:$0xff] %vm2234, %v2440
        %2521 = vst.msk [vmem:[%s284 + $0x158] sm:$0xff] %vm2234, %v2441
        %2522 = vst.msk [vmem:[%s284 + $0x160] sm:$0xff] %vm2234, %v2442
        %2523 = vst.msk [vmem:[%s284 + $0x168] sm:$0xff] %vm2234, %v2443
        %2524 = vst.msk [vmem:[%s284 + $0x170] sm:$0xff] %vm2234, %v2444
        %2525 = vst.msk [vmem:[%s284 + $0x178] sm:$0xff] %vm2234, %v2445
        %2526 = vst.msk [vmem:[%s284 + $0x180] sm:$0xff] %vm2234, %v2446
        %2527 = vst.msk [vmem:[%s284 + $0x188] sm:$0xff] %vm2234, %v2447
        %2528 = vst.msk [vmem:[%s284 + $0x190] sm:$0xff] %vm2234, %v2448
        %2529 = vst.msk [vmem:[%s284 + $0x198] sm:$0xff] %vm2234, %v2449
        %2530 = vst.msk [vmem:[%s284 + $0x1a0] sm:$0xff] %vm2234, %v2450
        %2531 = vst.msk [vmem:[%s284 + $0x1a8] sm:$0xff] %vm2234, %v2451
        %2532 = vst.msk [vmem:[%s284 + $0x1b0] sm:$0xff] %vm2234, %v2452
        %2533 = vst.msk [vmem:[%s284 + $0x1b8] sm:$0xff] %vm2234, %v2453
        %2534 = vst.msk [vmem:[%s284 + $0x1c0] sm:$0xff] %vm2234, %v2454
        %2535 = vst.msk [vmem:[%s284 + $0x1c8] sm:$0xff] %vm2234, %v2455
        %2536 = vst.msk [vmem:[%s284 + $0x1d0] sm:$0xff] %vm2234, %v2456
        %2537 = vst.msk [vmem:[%s284 + $0x1d8] sm:$0xff] %vm2234, %v2457
        %2538 = vst.msk [vmem:[%s284 + $0x1e0] sm:$0xff] %vm2234, %v2458
        %2539 = vst.msk [vmem:[%s284 + $0x1e8] sm:$0xff] %vm2234, %v2459
        %2540 = vst.msk [vmem:[%s284 + $0x1f0] sm:$0xff] %vm2234, %v2460
        %2541 = vst.msk [vmem:[%s284 + $0x1f8] sm:$0xff] %vm2234, %v2461
        %2542 = vst.msk [vmem:[%s284 + $0x200] sm:$0xff] %vm2234, %v2462
        %2543 = vst.msk [vmem:[%s284 + $0x208] sm:$0xff] %vm2234, %v2463
        %2544 = vst.msk [vmem:[%s284 + $0x210] sm:$0xff] %vm2234, %v2464
        %2545 = vst.msk [vmem:[%s284 + $0x218] sm:$0xff] %vm2234, %v2465
        %2546 = vst.msk [vmem:[%s284 + $0x220] sm:$0xff] %vm2234, %v2466
        %2547 = vst.msk [vmem:[%s284 + $0x228] sm:$0xff] %vm2234, %v2467
        %2548 = vst.msk [vmem:[%s284 + $0x230] sm:$0xff] %vm2234, %v2468
        %2549 = vst.msk [vmem:[%s284 + $0x238] sm:$0xff] %vm2234, %v2469
        %2550 = vst.msk [vmem:[%s284 + $0x240] sm:$0xff] %vm2234, %v2470
        %2551 = vst.msk [vmem:[%s284 + $0x248] sm:$0xff] %vm2234, %v2471
        %2552 = vst.msk [vmem:[%s284 + $0x250] sm:$0xff] %vm2234, %v2472
        %2553 = vst.msk [vmem:[%s284 + $0x258] sm:$0xff] %vm2234, %v2473
        %2554 = vst.msk [vmem:[%s284 + $0x260] sm:$0xff] %vm2234, %v2474
        %2555 = vst.msk [vmem:[%s284 + $0x268] sm:$0xff] %vm2234, %v2475
        %2556 = vst.msk [vmem:[%s284 + $0x270] sm:$0xff] %vm2234, %v2476
        %2557 = vst.msk [vmem:[%s284 + $0x278] sm:$0xff] %vm2234, %v2477
        %v2558 = vld [vmem:[%s3] sm:$0xff]
        %v2559 = vld [vmem:[%s3 + $0x8] sm:$0xff]
        %v2560 = vld [vmem:[%s3 + $0x10] sm:$0xff]
        %v2561 = vld [vmem:[%s3 + $0x18] sm:$0xff]
        %v2562 = vld [vmem:[%s3 + $0x20] sm:$0xff]
        %v2563 = vld [vmem:[%s3 + $0x28] sm:$0xff]
        %v2564 = vld [vmem:[%s3 + $0x30] sm:$0xff]
        %v2565 = vld [vmem:[%s3 + $0x38] sm:$0xff]
        %v2566 = vld [vmem:[%s3 + $0x40] sm:$0xff]
        %v2567 = vld [vmem:[%s3 + $0x48] sm:$0xff]
        %v2568 = vld [vmem:[%s3 + $0x50] sm:$0xff]
        %v2569 = vld [vmem:[%s3 + $0x58] sm:$0xff]
        %v2570 = vld [vmem:[%s3 + $0x60] sm:$0xff]
        %v2571 = vld [vmem:[%s3 + $0x68] sm:$0xff]
        %v2572 = vld [vmem:[%s3 + $0x70] sm:$0xff]
        %v2573 = vld [vmem:[%s3 + $0x78] sm:$0xff]
        %v2574 = vld [vmem:[%s3 + $0x80] sm:$0xff]
        %v2575 = vld [vmem:[%s3 + $0x88] sm:$0xff]
        %v2576 = vld [vmem:[%s3 + $0x90] sm:$0xff]
        %v2577 = vld [vmem:[%s3 + $0x98] sm:$0xff]
        %v2578 = vld [vmem:[%s3 + $0xa0] sm:$0xff]
        %v2579 = vld [vmem:[%s3 + $0xa8] sm:$0xff]
        %v2580 = vld [vmem:[%s3 + $0xb0] sm:$0xff]
        %v2581 = vld [vmem:[%s3 + $0xb8] sm:$0xff]
        %v2582 = vld [vmem:[%s3 + $0xc0] sm:$0xff]
        %v2583 = vld [vmem:[%s3 + $0xc8] sm:$0xff]
        %v2584 = vld [vmem:[%s3 + $0xd0] sm:$0xff]
        %v2585 = vld [vmem:[%s3 + $0xd8] sm:$0xff]
        %v2586 = vld [vmem:[%s3 + $0xe0] sm:$0xff]
        %v2587 = vld [vmem:[%s3 + $0xe8] sm:$0xff]
        %v2588 = vld [vmem:[%s3 + $0xf0] sm:$0xff]
        %v2589 = vld [vmem:[%s3 + $0xf8] sm:$0xff]
        %v2590 = vld [vmem:[%s3 + $0x100] sm:$0xff]
        %v2591 = vld [vmem:[%s3 + $0x108] sm:$0xff]
        %v2592 = vld [vmem:[%s3 + $0x110] sm:$0xff]
        %v2593 = vld [vmem:[%s3 + $0x118] sm:$0xff]
        %v2594 = vld [vmem:[%s3 + $0x120] sm:$0xff]
        %v2595 = vld [vmem:[%s3 + $0x128] sm:$0xff]
        %v2596 = vld [vmem:[%s3 + $0x130] sm:$0xff]
        %v2597 = vld [vmem:[%s3 + $0x138] sm:$0xff]
        %v2598 = vld [vmem:[%s3 + $0x140] sm:$0xff]
        %v2599 = vld [vmem:[%s3 + $0x148] sm:$0xff]
        %v2600 = vld [vmem:[%s3 + $0x150] sm:$0xff]
        %v2601 = vld [vmem:[%s3 + $0x158] sm:$0xff]
        %v2602 = vld [vmem:[%s3 + $0x160] sm:$0xff]
        %v2603 = vld [vmem:[%s3 + $0x168] sm:$0xff]
        %v2604 = vld [vmem:[%s3 + $0x170] sm:$0xff]
        %v2605 = vld [vmem:[%s3 + $0x178] sm:$0xff]
        %v2606 = vld [vmem:[%s3 + $0x180] sm:$0xff]
        %v2607 = vld [vmem:[%s3 + $0x188] sm:$0xff]
        %v2608 = vld [vmem:[%s3 + $0x190] sm:$0xff]
        %v2609 = vld [vmem:[%s3 + $0x198] sm:$0xff]
        %v2610 = vld [vmem:[%s3 + $0x1a0] sm:$0xff]
        %v2611 = vld [vmem:[%s3 + $0x1a8] sm:$0xff]
        %v2612 = vld [vmem:[%s3 + $0x1b0] sm:$0xff]
        %v2613 = vld [vmem:[%s3 + $0x1b8] sm:$0xff]
        %v2614 = vld [vmem:[%s3 + $0x1c0] sm:$0xff]
        %v2615 = vld [vmem:[%s3 + $0x1c8] sm:$0xff]
        %v2616 = vld [vmem:[%s3 + $0x1d0] sm:$0xff]
        %v2617 = vld [vmem:[%s3 + $0x1d8] sm:$0xff]
        %v2618 = vld [vmem:[%s3 + $0x1e0] sm:$0xff]
        %v2619 = vld [vmem:[%s3 + $0x1e8] sm:$0xff]
        %v2620 = vld [vmem:[%s3 + $0x1f0] sm:$0xff]
        %v2621 = vld [vmem:[%s3 + $0x1f8] sm:$0xff]
        %v2622 = vld [vmem:[%s3 + $0x200] sm:$0xff]
        %v2623 = vld [vmem:[%s3 + $0x208] sm:$0xff]
        %v2624 = vld [vmem:[%s3 + $0x210] sm:$0xff]
        %v2625 = vld [vmem:[%s3 + $0x218] sm:$0xff]
        %v2626 = vld [vmem:[%s3 + $0x220] sm:$0xff]
        %v2627 = vld [vmem:[%s3 + $0x228] sm:$0xff]
        %v2628 = vld [vmem:[%s3 + $0x230] sm:$0xff]
        %v2629 = vld [vmem:[%s3 + $0x238] sm:$0xff]
        %v2630 = vld [vmem:[%s3 + $0x240] sm:$0xff]
        %v2631 = vld [vmem:[%s3 + $0x248] sm:$0xff]
        %v2632 = vld [vmem:[%s3 + $0x250] sm:$0xff]
        %v2633 = vld [vmem:[%s3 + $0x258] sm:$0xff]
        %v2634 = vld [vmem:[%s3 + $0x260] sm:$0xff]
        %v2635 = vld [vmem:[%s3 + $0x268] sm:$0xff]
        %v2636 = vld [vmem:[%s3 + $0x270] sm:$0xff]
        %v2637 = vld [vmem:[%s3 + $0x278] sm:$0xff]
        %v2638 = vmul.f32 %v2398, %v2558
        %v2639 = vmul.f32 %v2399, %v2559
        %v2640 = vmul.f32 %v2400, %v2560
        %v2641 = vmul.f32 %v2401, %v2561
        %v2642 = vmul.f32 %v2402, %v2562
        %v2643 = vmul.f32 %v2403, %v2563
        %v2644 = vmul.f32 %v2404, %v2564
        %v2645 = vmul.f32 %v2405, %v2565
        %v2646 = vmul.f32 %v2406, %v2566
        %v2647 = vmul.f32 %v2407, %v2567
        %v2648 = vmul.f32 %v2408, %v2568
        %v2649 = vmul.f32 %v2409, %v2569
        %v2650 = vmul.f32 %v2410, %v2570
        %v2651 = vmul.f32 %v2411, %v2571
        %v2652 = vmul.f32 %v2412, %v2572
        %v2653 = vmul.f32 %v2413, %v2573
        %v2654 = vmul.f32 %v2414, %v2574
        %v2655 = vmul.f32 %v2415, %v2575
        %v2656 = vmul.f32 %v2416, %v2576
        %v2657 = vmul.f32 %v2417, %v2577
        %v2658 = vmul.f32 %v2418, %v2578
        %v2659 = vmul.f32 %v2419, %v2579
        %v2660 = vmul.f32 %v2420, %v2580
        %v2661 = vmul.f32 %v2421, %v2581
        %v2662 = vmul.f32 %v2422, %v2582
        %v2663 = vmul.f32 %v2423, %v2583
        %v2664 = vmul.f32 %v2424, %v2584
        %v2665 = vmul.f32 %v2425, %v2585
        %v2666 = vmul.f32 %v2426, %v2586
        %v2667 = vmul.f32 %v2427, %v2587
        %v2668 = vmul.f32 %v2428, %v2588
        %v2669 = vmul.f32 %v2429, %v2589
        %v2670 = vmul.f32 %v2430, %v2590
        %v2671 = vmul.f32 %v2431, %v2591
        %v2672 = vmul.f32 %v2432, %v2592
        %v2673 = vmul.f32 %v2433, %v2593
        %v2674 = vmul.f32 %v2434, %v2594
        %v2675 = vmul.f32 %v2435, %v2595
        %v2676 = vmul.f32 %v2436, %v2596
        %v2677 = vmul.f32 %v2437, %v2597
        %v2678 = vmul.f32 %v2438, %v2598
        %v2679 = vmul.f32 %v2439, %v2599
        %v2680 = vmul.f32 %v2440, %v2600
        %v2681 = vmul.f32 %v2441, %v2601
        %v2682 = vmul.f32 %v2442, %v2602
        %v2683 = vmul.f32 %v2443, %v2603
        %v2684 = vmul.f32 %v2444, %v2604
        %v2685 = vmul.f32 %v2445, %v2605
        %v2686 = vmul.f32 %v2446, %v2606
        %v2687 = vmul.f32 %v2447, %v2607
        %v2688 = vmul.f32 %v2448, %v2608
        %v2689 = vmul.f32 %v2449, %v2609
        %v2690 = vmul.f32 %v2450, %v2610
        %v2691 = vmul.f32 %v2451, %v2611
        %v2692 = vmul.f32 %v2452, %v2612
        %v2693 = vmul.f32 %v2453, %v2613
        %v2694 = vmul.f32 %v2454, %v2614
        %v2695 = vmul.f32 %v2455, %v2615
        %v2696 = vmul.f32 %v2456, %v2616
        %v2697 = vmul.f32 %v2457, %v2617
        %v2698 = vmul.f32 %v2458, %v2618
        %v2699 = vmul.f32 %v2459, %v2619
        %v2700 = vmul.f32 %v2460, %v2620
        %v2701 = vmul.f32 %v2461, %v2621
        %v2702 = vmul.f32 %v2462, %v2622
        %v2703 = vmul.f32 %v2463, %v2623
        %v2704 = vmul.f32 %v2464, %v2624
        %v2705 = vmul.f32 %v2465, %v2625
        %v2706 = vmul.f32 %v2466, %v2626
        %v2707 = vmul.f32 %v2467, %v2627
        %v2708 = vmul.f32 %v2468, %v2628
        %v2709 = vmul.f32 %v2469, %v2629
        %v2710 = vmul.f32 %v2470, %v2630
        %v2711 = vmul.f32 %v2471, %v2631
        %v2712 = vmul.f32 %v2472, %v2632
        %v2713 = vmul.f32 %v2473, %v2633
        %v2714 = vmul.f32 %v2474, %v2634
        %v2715 = vmul.f32 %v2475, %v2635
        %v2716 = vmul.f32 %v2476, %v2636
        %v2717 = vmul.f32 %v2477, %v2637
        %v2718 = vsel %vm2234, %v2638, 0.0
        %v2719 = vsel %vm2234, %v2639, 0.0
        %v2720 = vadd.f32 %v2718, %v2719
        %v2721 = vsel %vm2234, %v2640, 0.0
        %v2722 = vadd.f32 %v2720, %v2721
        %v2723 = vsel %vm2234, %v2641, 0.0
        %v2724 = vadd.f32 %v2722, %v2723
        %v2725 = vsel %vm2234, %v2642, 0.0
        %v2726 = vadd.f32 %v2724, %v2725
        %v2727 = vsel %vm2234, %v2643, 0.0
        %v2728 = vadd.f32 %v2726, %v2727
        %v2729 = vsel %vm2234, %v2644, 0.0
        %v2730 = vadd.f32 %v2728, %v2729
        %v2731 = vsel %vm2234, %v2645, 0.0
        %v2732 = vadd.f32 %v2730, %v2731
        %v2733 = vsel %vm2234, %v2646, 0.0
        %v2734 = vadd.f32 %v2732, %v2733
        %v2735 = vsel %vm2234, %v2647, 0.0
        %v2736 = vadd.f32 %v2734, %v2735
        %v2737 = vsel %vm2234, %v2648, 0.0
        %v2738 = vadd.f32 %v2736, %v2737
        %v2739 = vsel %vm2234, %v2649, 0.0
        %v2740 = vadd.f32 %v2738, %v2739
        %v2741 = vsel %vm2234, %v2650, 0.0
        %v2742 = vadd.f32 %v2740, %v2741
        %v2743 = vsel %vm2234, %v2651, 0.0
        %v2744 = vadd.f32 %v2742, %v2743
        %v2745 = vsel %vm2234, %v2652, 0.0
        %v2746 = vadd.f32 %v2744, %v2745
        %v2747 = vsel %vm2234, %v2653, 0.0
        %v2748 = vadd.f32 %v2746, %v2747
        %v2749 = vsel %vm2234, %v2654, 0.0
        %v2750 = vadd.f32 %v2748, %v2749
        %v2751 = vsel %vm2234, %v2655, 0.0
        %v2752 = vadd.f32 %v2750, %v2751
        %v2753 = vsel %vm2234, %v2656, 0.0
        %v2754 = vadd.f32 %v2752, %v2753
        %v2755 = vsel %vm2234, %v2657, 0.0
        %v2756 = vadd.f32 %v2754, %v2755
        %v2757 = vsel %vm2234, %v2658, 0.0
        %v2758 = vadd.f32 %v2756, %v2757
        %v2759 = vsel %vm2234, %v2659, 0.0
        %v2760 = vadd.f32 %v2758, %v2759
        %v2761 = vsel %vm2234, %v2660, 0.0
        %v2762 = vadd.f32 %v2760, %v2761
        %v2763 = vsel %vm2234, %v2661, 0.0
        %v2764 = vadd.f32 %v2762, %v2763
        %v2765 = vsel %vm2234, %v2662, 0.0
        %v2766 = vadd.f32 %v2764, %v2765
        %v2767 = vsel %vm2234, %v2663, 0.0
        %v2768 = vadd.f32 %v2766, %v2767
        %v2769 = vsel %vm2234, %v2664, 0.0
        %v2770 = vadd.f32 %v2768, %v2769
        %v2771 = vsel %vm2234, %v2665, 0.0
        %v2772 = vadd.f32 %v2770, %v2771
        %v2773 = vsel %vm2234, %v2666, 0.0
        %v2774 = vadd.f32 %v2772, %v2773
        %v2775 = vsel %vm2234, %v2667, 0.0
        %v2776 = vadd.f32 %v2774, %v2775
        %v2777 = vsel %vm2234, %v2668, 0.0
        %v2778 = vadd.f32 %v2776, %v2777
        %v2779 = vsel %vm2234, %v2669, 0.0
        %v2780 = vadd.f32 %v2778, %v2779
        %v2781 = vsel %vm2234, %v2670, 0.0
        %v2782 = vadd.f32 %v2780, %v2781
        %v2783 = vsel %vm2234, %v2671, 0.0
        %v2784 = vadd.f32 %v2782, %v2783
        %v2785 = vsel %vm2234, %v2672, 0.0
        %v2786 = vadd.f32 %v2784, %v2785
        %v2787 = vsel %vm2234, %v2673, 0.0
        %v2788 = vadd.f32 %v2786, %v2787
        %v2789 = vsel %vm2234, %v2674, 0.0
        %v2790 = vadd.f32 %v2788, %v2789
        %v2791 = vsel %vm2234, %v2675, 0.0
        %v2792 = vadd.f32 %v2790, %v2791
        %v2793 = vsel %vm2234, %v2676, 0.0
        %v2794 = vadd.f32 %v2792, %v2793
        %v2795 = vsel %vm2234, %v2677, 0.0
        %v2796 = vadd.f32 %v2794, %v2795
        %v2797 = vsel %vm2234, %v2678, 0.0
        %v2798 = vadd.f32 %v2796, %v2797
        %v2799 = vsel %vm2234, %v2679, 0.0
        %v2800 = vadd.f32 %v2798, %v2799
        %v2801 = vsel %vm2234, %v2680, 0.0
        %v2802 = vadd.f32 %v2800, %v2801
        %v2803 = vsel %vm2234, %v2681, 0.0
        %v2804 = vadd.f32 %v2802, %v2803
        %v2805 = vsel %vm2234, %v2682, 0.0
        %v2806 = vadd.f32 %v2804, %v2805
        %v2807 = vsel %vm2234, %v2683, 0.0
        %v2808 = vadd.f32 %v2806, %v2807
        %v2809 = vsel %vm2234, %v2684, 0.0
        %v2810 = vadd.f32 %v2808, %v2809
        %v2811 = vsel %vm2234, %v2685, 0.0
        %v2812 = vadd.f32 %v2810, %v2811
        %v2813 = vsel %vm2234, %v2686, 0.0
        %v2814 = vadd.f32 %v2812, %v2813
        %v2815 = vsel %vm2234, %v2687, 0.0
        %v2816 = vadd.f32 %v2814, %v2815
        %v2817 = vsel %vm2234, %v2688, 0.0
        %v2818 = vadd.f32 %v2816, %v2817
        %v2819 = vsel %vm2234, %v2689, 0.0
        %v2820 = vadd.f32 %v2818, %v2819
        %v2821 = vsel %vm2234, %v2690, 0.0
        %v2822 = vadd.f32 %v2820, %v2821
        %v2823 = vsel %vm2234, %v2691, 0.0
        %v2824 = vadd.f32 %v2822, %v2823
        %v2825 = vsel %vm2234, %v2692, 0.0
        %v2826 = vadd.f32 %v2824, %v2825
        %v2827 = vsel %vm2234, %v2693, 0.0
        %v2828 = vadd.f32 %v2826, %v2827
        %v2829 = vsel %vm2234, %v2694, 0.0
        %v2830 = vadd.f32 %v2828, %v2829
        %v2831 = vsel %vm2234, %v2695, 0.0
        %v2832 = vadd.f32 %v2830, %v2831
        %v2833 = vsel %vm2234, %v2696, 0.0
        %v2834 = vadd.f32 %v2832, %v2833
        %v2835 = vsel %vm2234, %v2697, 0.0
        %v2836 = vadd.f32 %v2834, %v2835
        %v2837 = vsel %vm2234, %v2698, 0.0
        %v2838 = vadd.f32 %v2836, %v2837
        %v2839 = vsel %vm2234, %v2699, 0.0
        %v2840 = vadd.f32 %v2838, %v2839
        %v2841 = vsel %vm2234, %v2700, 0.0
        %v2842 = vadd.f32 %v2840, %v2841
        %v2843 = vsel %vm2234, %v2701, 0.0
        %v2844 = vadd.f32 %v2842, %v2843
        %v2845 = vsel %vm2234, %v2702, 0.0
        %v2846 = vadd.f32 %v2844, %v2845
        %v2847 = vsel %vm2234, %v2703, 0.0
        %v2848 = vadd.f32 %v2846, %v2847
        %v2849 = vsel %vm2234, %v2704, 0.0
        %v2850 = vadd.f32 %v2848, %v2849
        %v2851 = vsel %vm2234, %v2705, 0.0
        %v2852 = vadd.f32 %v2850, %v2851
        %v2853 = vsel %vm2234, %v2706, 0.0
        %v2854 = vadd.f32 %v2852, %v2853
        %v2855 = vsel %vm2234, %v2707, 0.0
        %v2856 = vadd.f32 %v2854, %v2855
        %v2857 = vsel %vm2234, %v2708, 0.0
        %v2858 = vadd.f32 %v2856, %v2857
        %v2859 = vsel %vm2234, %v2709, 0.0
        %v2860 = vadd.f32 %v2858, %v2859
        %v2861 = vsel %vm2234, %v2710, 0.0
        %v2862 = vadd.f32 %v2860, %v2861
        %v2863 = vsel %vm2234, %v2711, 0.0
        %v2864 = vadd.f32 %v2862, %v2863
        %v2865 = vsel %vm2234, %v2712, 0.0
        %v2866 = vadd.f32 %v2864, %v2865
        %v2867 = vsel %vm2234, %v2713, 0.0
        %v2868 = vadd.f32 %v2866, %v2867
        %v2869 = vsel %vm2234, %v2714, 0.0
        %v2870 = vadd.f32 %v2868, %v2869
        %v2871 = vsel %vm2234, %v2715, 0.0
        %v2872 = vadd.f32 %v2870, %v2871
        %v2873 = vsel %vm2234, %v2716, 0.0
        %v2874 = vadd.f32 %v2872, %v2873
        %v2875 = vsel %vm2234, %v2717, 0.0
        %v2876 = vadd.f32 %v2874, %v2875
        %v2877 = vrot.slane %v2876, 4
        %v2878 = vadd.f32 %v2876, %v2877
        %v2879 = vrot.slane %v2878, 2
        %v2880 = vadd.f32 %v2878, %v2879
        %v2881 = vrot.slane %v2880, 1
        %v2882 = vadd.f32 %v2880, %v2881
        %v2883 = vld [vmem:[#allocation3] sm:$0x1]
        %v2884 = vadd.f32 %v2882, %v2883
        %v2885 = vmul.f32 %v2884, 0.5
        %v2886 = vtanh.pop %v2885
        %v2887 = vadd.f32 %v2886, 1.0
        %v2888 = vmul.f32 %v2887, 0.5
        %vm2889 = vcmask 0
        %2890 = vst.msk [vmem:[%s287] sm:$0x1] %vm2889, %v2888
      $region48: #{rgbd_forward.4} parent=39 // pred_fallthru
        _
      %p2891 = scmp.lt.s32.totalorder %s24, 1
      %s2892 = scalar_select %p2891, %s24, 1
      %s2893 = smul.addr %s2892, 80
      %s2894 = smul.addr %s2893, 8
      %s2895 = scalar_lea.vmem %s5, %s2894
      %p2896 = scmp.lt.s32.totalorder %s24, 1
      %s2897 = scalar_select %p2896, %s24, 1
      %s2898 = scalar_lea.vmem %s6, %s2897
      // Predicated region
      $region49: #{rgbd_forward.4} parent=39 // pred_check
        %p2899 = pneg %p162
      $region50: #{rgbd_forward.4} parent=39 // pred_check_branch
        %2901 = sbr.rel (%p2899) target = $region52
      $region51: #{rgbd_forward.4} parent=39 // pred_region
        _
      $region52: #{rgbd_forward.4} parent=39 // pred_fallthru
        _
      // Predicated region
      $region53: #{rgbd_forward.4} parent=39 // pred_check
        %p2902 = pneg %p188
      $region54: #{rgbd_forward.4} parent=39 // pred_check_branch
        %2904 = sbr.rel (%p2902) target = $region56
      $region55: #{rgbd_forward.4} parent=39 // pred_region
        _
      $region56: #{rgbd_forward.4} parent=39 // pred_fallthru
        _
    $region40: #{rgbd_forward.4} parent=5 // pred_fallthru
      _
    %p2905 = scmp.le.s32.totalorder 2, %s15
    // Predicated region
    $region57: #{rgbd_forward.4} parent=5 // pred_check
      %p2906 = pneg %p2905
    $region58: #{rgbd_forward.4} parent=5 // pred_check_branch
      %2908 = sbr.rel (%p2906) target = $region60
    $region59: #{rgbd_forward.4} parent=5 // pred_region
      %s2909 = ssub.s32 %s15, 2
      // Predicated region
      $region61: #{rgbd_forward.4} parent=59 // pred_check
        %p2910 = pneg %p168
      $region62: #{rgbd_forward.4} parent=59 // pred_check_branch
        %2912 = sbr.rel (%p2910) target = $region64
      $region63: #{rgbd_forward.4} parent=59 // pred_region
        %p2913 = scmp.lt.s32.totalorder %s26, 1
        %s2914 = scalar_select %p2913, %s26, 1
        %s2915 = smul.addr %s2914, 80
        %s2916 = smul.addr %s2915, 8
        %s2917 = scalar_lea.vmem %s5, %s2916
      $region64: #{rgbd_forward.4} parent=59 // pred_fallthru
        _
      // Predicated region
      $region65: #{rgbd_forward.4} parent=59 // pred_check
        %p2918 = pneg %p194
      $region66: #{rgbd_forward.4} parent=59 // pred_check_branch
        %2920 = sbr.rel (%p2918) target = $region68
      $region67: #{rgbd_forward.4} parent=59 // pred_region
        %p2921 = scmp.lt.s32.totalorder %s26, 1
        %s2922 = scalar_select %p2921, %s26, 1
        %s2923 = scalar_lea.vmem %s6, %s2922
      $region68: #{rgbd_forward.4} parent=59 // pred_fallthru
        _
    $region60: #{rgbd_forward.4} parent=5 // pred_fallthru
      _
  $region6: #{rgbd_forward.4} parent=0 // loop_footer
    %s19 = sadd.s32 1, %s15
  $region7: #{rgbd_forward.4} parent=0 // loop_footer_branch
    %14 = sbr.rel target = $region3
  $region8: #{rgbd_forward.4} parent=0 // loop_exit
    _

// kernel: rgbd_forward.3
$region0: #{rgbd_forward.3}
  #allocation0 [shape = 'u32[]', space=smem, size = 0x4, offset = 0x4, fixed_abs, tag = 'smem constant byte address 0x4 - core index']
  #allocation1 [shape = 'u32[144,128]{1,0:T(1,128)}', space=vmem, size = 0x12000, scoped, tag = 'internal scratch']
  #allocation2 [shape = 'f32[1280,1]{1,0:T(8,128)}', space=vmem, size = 0xa0000, scoped, tag = 'scratch operand']
  #allocation3 [shape = 'f32[1,1]{1,0:T(1,128)S(1)}', space=vmem, size = 0x200, scoped, tag = 'scoped memory for rgbd_forward.3']
  %s0 = inlined_call_operand.vmem [shape: bf16[2,3,256], index: 0, kind: input, shape index: {}]
  %s1 = inlined_call_operand.vmem [shape: f32[1280,3], index: 1, kind: input, shape index: {}]
  %s2 = inlined_call_operand.vmem [shape: f32[1280,1], index: 2, kind: input, shape index: {}]
  %s3 = inlined_call_operand.vmem [shape: f32[1280,1], index: 3, kind: input, shape index: {}]
  %s4 = inlined_call_operand.<no memory space> [shape: f32[1,1], index: 4, kind: input, shape index: {}]
  %s5 = inlined_call_operand.vmem [shape: f32[2,1280,1], index: 5, kind: output, shape index: {0}]
  %s6 = inlined_call_operand.vmem [shape: f32[2,1,1], index: 6, kind: output, shape index: {1}]
  %7 = xla_tuple %s5, %s6
  %s8 = sld [smem:[#allocation0]]
  $region69: #{rgbd_forward.3} parent=0
    _
  %s10 = ssub.s32 1, %s8
  %s11 = scalar_select 0, %s10, %s8
  %v12 = vstv %s4
  %13 = vst [vmem:[#allocation3] sm:$0x1] %v12
  loop: start=0, step=1, limit=4
  $region2: #{rgbd_forward.3} parent=0 // loop_pre_header
    _
  $region3: #{rgbd_forward.3} parent=0 // loop_header
    %s15 = sphi 0, %s19
    %p16 = scmp.ge.s32.totalorder %s15, 4
    %s22 = sphi 0, %s34
    %s23 = sphi 0, %s30
    %s24 = sphi 0, %s22
    %s25 = sphi 0, %s23
    %s26 = sphi 0, %s24
    %s27 = sphi 0, %s25
    %s39 = sphi 0, %s41
    %s42 = sphi 0, %s39
    %s43 = sphi 0, %s42
    %s59 = sphi 0, %s43
    %s63 = sphi 0, %s63
    %s65 = sphi 0, %s63
    %s66 = sphi 0, %s65
    %s80 = sphi 0, %s66
    %s84 = sphi 0, %s84
    %s86 = sphi 0, %s84
    %s87 = sphi 0, %s86
    %s101 = sphi 0, %s87
    %s105 = sphi 0, %s105
    %s107 = sphi 0, %s105
    %s108 = sphi 0, %s107
    %s122 = sphi 0, %s108
    %s126 = sphi 0, %s126
    %s128 = sphi 0, %s126
    %s129 = sphi 0, %s128
    %s143 = sphi 0, %s129
    %s149 = sphi 0, %s151
    %s152 = sphi 0, %s149
    %s153 = sphi 0, %s152
    %s169 = sphi 0, %s153
    %s175 = sphi 0, %s177
    %s178 = sphi 0, %s175
    %s179 = sphi 0, %s178
    %s195 = sphi 0, %s179
  $region4: #{rgbd_forward.3} parent=0 // loop_header_branch
    %18 = sbr.rel (%p16) target = $region8
  $region5: #{rgbd_forward.3} parent=0 // loop_body
    %s20 = ssub.s32 %s15, 1
    %s21 = ssub.s32 %s15, 2
    %s28 = sadd.s32 1, %s23
    %p29 = scmp.ge.s32.totalorder %s28, 1
    %s30 = scalar_select %p29, 0, %s28
    %s31 = sadd.s32 1, %s22
    %s32 = scalar_select %p29, %s31, %s22
    %p33 = scmp.ge.s32.totalorder %s32, 2
    %s34 = scalar_select %p33, 0, %s32
    %s35 = ssub.s32 %s22, %s34
    %s36 = ssub.s32 %s23, %s30
    %s37 = sor.u32 %s35, %s36
    %p38 = scmp.eq.s32.totalorder %s37, 0
    %s40 = sadd.s32 %s39, 1
    %s41 = scalar_select %p38, %s39, %s40
    %p44 = pneg %p38
    %p45 = scmp.eq.s32.totalorder %s15, 1
    %p46 = por %p44, %p45
    %p47 = scmp.ne.s32.totalorder %s39, %s42
    %p48 = scmp.eq.s32.totalorder %s15, 0
    %p49 = por %p47, %p48
    %p50 = scmp.ne.s32.totalorder %s39, %s42
    %p51 = scmp.eq.s32.totalorder %s20, 1
    %p52 = por %p50, %p51
    %p53 = scmp.ne.s32.totalorder %s42, %s43
    %p54 = scmp.eq.s32.totalorder %s20, 0
    %p55 = por %p53, %p54
    %p56 = scmp.ne.s32.totalorder %s42, %s43
    %p57 = scmp.eq.s32.totalorder %s21, 1
    %p58 = por %p56, %p57
    %p60 = scmp.ne.s32.totalorder %s43, %s59
    %p61 = scmp.eq.s32.totalorder %s21, 0
    %p62 = por %p60, %p61
    %s64 = sadd.s32 %s63, 1
    %p67 = scmp.eq.s32.totalorder %s15, 1
    %p68 = scmp.ne.s32.totalorder %s63, %s65
    %p69 = scmp.eq.s32.totalorder %s15, 0
    %p70 = por %p68, %p69
    %p71 = scmp.ne.s32.totalorder %s63, %s65
    %p72 = scmp.eq.s32.totalorder %s20, 1
    %p73 = por %p71, %p72
    %p74 = scmp.ne.s32.totalorder %s65, %s66
    %p75 = scmp.eq.s32.totalorder %s20, 0
    %p76 = por %p74, %p75
    %p77 = scmp.ne.s32.totalorder %s65, %s66
    %p78 = scmp.eq.s32.totalorder %s21, 1
    %p79 = por %p77, %p78
    %p81 = scmp.ne.s32.totalorder %s66, %s80
    %p82 = scmp.eq.s32.totalorder %s21, 0
    %p83 = por %p81, %p82
    %s85 = sadd.s32 %s84, 1
    %p88 = scmp.eq.s32.totalorder %s15, 1
    %p89 = scmp.ne.s32.totalorder %s84, %s86
    %p90 = scmp.eq.s32.totalorder %s15, 0
    %p91 = por %p89, %p90
    %p92 = scmp.ne.s32.totalorder %s84, %s86
    %p93 = scmp.eq.s32.totalorder %s20, 1
    %p94 = por %p92, %p93
    %p95 = scmp.ne.s32.totalorder %s86, %s87
    %p96 = scmp.eq.s32.totalorder %s20, 0
    %p97 = por %p95, %p96
    %p98 = scmp.ne.s32.totalorder %s86, %s87
    %p99 = scmp.eq.s32.totalorder %s21, 1
    %p100 = por %p98, %p99
    %p102 = scmp.ne.s32.totalorder %s87, %s101
    %p103 = scmp.eq.s32.totalorder %s21, 0
    %p104 = por %p102, %p103
    %s106 = sadd.s32 %s105, 1
    %p109 = scmp.eq.s32.totalorder %s15, 1
    %p110 = scmp.ne.s32.totalorder %s105, %s107
    %p111 = scmp.eq.s32.totalorder %s15, 0
    %p112 = por %p110, %p111
    %p113 = scmp.ne.s32.totalorder %s105, %s107
    %p114 = scmp.eq.s32.totalorder %s20, 1
    %p115 = por %p113, %p114
    %p116 = scmp.ne.s32.totalorder %s107, %s108
    %p117 = scmp.eq.s32.totalorder %s20, 0
    %p118 = por %p116, %p117
    %p119 = scmp.ne.s32.totalorder %s107, %s108
    %p120 = scmp.eq.s32.totalorder %s21, 1
    %p121 = por %p119, %p120
    %p123 = scmp.ne.s32.totalorder %s108, %s122
    %p124 = scmp.eq.s32.totalorder %s21, 0
    %p125 = por %p123, %p124
    %s127 = sadd.s32 %s126, 1
    %p130 = scmp.eq.s32.totalorder %s15, 1
    %p131 = scmp.ne.s32.totalorder %s126, %s128
    %p132 = scmp.eq.s32.totalorder %s15, 0
    %p133 = por %p131, %p132
    %p134 = scmp.ne.s32.totalorder %s126, %s128
    %p135 = scmp.eq.s32.totalorder %s20, 1
    %p136 = por %p134, %p135
    %p137 = scmp.ne.s32.totalorder %s128, %s129
    %p138 = scmp.eq.s32.totalorder %s20, 0
    %p139 = por %p137, %p138
    %p140 = scmp.ne.s32.totalorder %s128, %s129
    %p141 = scmp.eq.s32.totalorder %s21, 1
    %p142 = por %p140, %p141
    %p144 = scmp.ne.s32.totalorder %s129, %s143
    %p145 = scmp.eq.s32.totalorder %s21, 0
    %p146 = por %p144, %p145
    %s147 = ssub.s32 %s22, %s34
    %p148 = scmp.eq.s32.totalorder %s147, 0
    %s150 = sadd.s32 %s149, 1
    %s151 = scalar_select %p148, %s149, %s150
    %p154 = pneg %p148
    %p155 = scmp.eq.s32.totalorder %s15, 1
    %p156 = por %p154, %p155
    %p157 = scmp.ne.s32.totalorder %s149, %s152
    %p158 = scmp.eq.s32.totalorder %s15, 0
    %p159 = por %p157, %p158
    %p160 = scmp.ne.s32.totalorder %s149, %s152
    %p161 = scmp.eq.s32.totalorder %s20, 1
    %p162 = por %p160, %p161
    %p163 = scmp.ne.s32.totalorder %s152, %s153
    %p164 = scmp.eq.s32.totalorder %s20, 0
    %p165 = por %p163, %p164
    %p166 = scmp.ne.s32.totalorder %s152, %s153
    %p167 = scmp.eq.s32.totalorder %s21, 1
    %p168 = por %p166, %p167
    %p170 = scmp.ne.s32.totalorder %s153, %s169
    %p171 = scmp.eq.s32.totalorder %s21, 0
    %p172 = por %p170, %p171
    %s173 = ssub.s32 %s22, %s34
    %p174 = scmp.eq.s32.totalorder %s173, 0
    %s176 = sadd.s32 %s175, 1
    %s177 = scalar_select %p174, %s175, %s176
    %p180 = pneg %p174
    %p181 = scmp.eq.s32.totalorder %s15, 1
    %p182 = por %p180, %p181
    %p183 = scmp.ne.s32.totalorder %s175, %s178
    %p184 = scmp.eq.s32.totalorder %s15, 0
    %p185 = por %p183, %p184
    %p186 = scmp.ne.s32.totalorder %s175, %s178
    %p187 = scmp.eq.s32.totalorder %s20, 1
    %p188 = por %p186, %p187
    %p189 = scmp.ne.s32.totalorder %s178, %s179
    %p190 = scmp.eq.s32.totalorder %s20, 0
    %p191 = por %p189, %p190
    %p192 = scmp.ne.s32.totalorder %s178, %s179
    %p193 = scmp.eq.s32.totalorder %s21, 1
    %p194 = por %p192, %p193
    %p196 = scmp.ne.s32.totalorder %s179, %s195
    %p197 = scmp.eq.s32.totalorder %s21, 0
    %p198 = por %p196, %p197
    %p199 = scmp.le.s32.totalorder 1, %s15
    %p200 = scmp.lt.s32.totalorder %s15, 3
    %p201 = pnand %p199, %p200
    %p202 = pneg %p201
    // Predicated region
    $region9: #{rgbd_forward.3} parent=5 // pred_check
      _
    $region10: #{rgbd_forward.3} parent=5 // pred_check_branch
      %204 = sbr.rel (%p201) target = $region12
    $region11: #{rgbd_forward.3} parent=5 // pred_region
      %s205 = ssub.s32 %s15, 1
      // Predicated region
      $region13: #{rgbd_forward.3} parent=11 // pred_check
        %p206 = pneg %p76
      $region14: #{rgbd_forward.3} parent=11 // pred_check_branch
        %208 = sbr.rel (%p206) target = $region16
      $region15: #{rgbd_forward.3} parent=11 // pred_region
        _
      $region16: #{rgbd_forward.3} parent=11 // pred_fallthru
        _
      // Predicated region
      $region17: #{rgbd_forward.3} parent=11 // pred_check
        %p209 = pneg %p97
      $region18: #{rgbd_forward.3} parent=11 // pred_check_branch
        %211 = sbr.rel (%p209) target = $region20
      $region19: #{rgbd_forward.3} parent=11 // pred_region
        _
      $region20: #{rgbd_forward.3} parent=11 // pred_fallthru
        _
      // Predicated region
      $region21: #{rgbd_forward.3} parent=11 // pred_check
        %p212 = pneg %p118
      $region22: #{rgbd_forward.3} parent=11 // pred_check_branch
        %214 = sbr.rel (%p212) target = $region24
      $region23: #{rgbd_forward.3} parent=11 // pred_region
        _
      $region24: #{rgbd_forward.3} parent=11 // pred_fallthru
        _
      // Predicated region
      $region25: #{rgbd_forward.3} parent=11 // pred_check
        %p215 = pneg %p139
      $region26: #{rgbd_forward.3} parent=11 // pred_check_branch
        %217 = sbr.rel (%p215) target = $region28
      $region27: #{rgbd_forward.3} parent=11 // pred_region
        _
      $region28: #{rgbd_forward.3} parent=11 // pred_fallthru
        _
    $region12: #{rgbd_forward.3} parent=5 // pred_fallthru
      _
    %p218 = scmp.lt.s32.totalorder %s15, 2
    // Predicated region
    $region29: #{rgbd_forward.3} parent=5 // pred_check
      %p219 = pneg %p218
    $region30: #{rgbd_forward.3} parent=5 // pred_check_branch
      %221 = sbr.rel (%p219) target = $region32
    $region31: #{rgbd_forward.3} parent=5 // pred_region
      // Predicated region
      $region33: #{rgbd_forward.3} parent=31 // pred_check
        %p222 = pneg %p49
      $region34: #{rgbd_forward.3} parent=31 // pred_check_branch
        %224 = sbr.rel (%p222) target = $region36
      $region35: #{rgbd_forward.3} parent=31 // pred_region
        %s225 = smul.u32 2, %s23
        %p226 = scmp.lt.s32.totalorder %s22, 1
        %s227 = scalar_select %p226, %s22, 1
        %p228 = scmp.lt.s32.totalorder %s225, 1
        %s229 = scalar_select %p228, %s225, 1
        %s230 = smul.addr %s227, 2
        %s231 = sadd.s32 %s229, %s230
        %s232 = smul.addr %s231, 2
        %s233 = scalar_lea.vmem %s0, %s232
        %s234 = smul.u32 2, %s23
      $region36: #{rgbd_forward.3} parent=31 // pred_fallthru
        _
    $region32: #{rgbd_forward.3} parent=5 // pred_fallthru
      _
    %p235 = scmp.le.s32.totalorder 1, %s15
    %p236 = scmp.lt.s32.totalorder %s15, 3
    %p237 = pnand %p235, %p236
    %p238 = pneg %p237
    // Predicated region
    $region37: #{rgbd_forward.3} parent=5 // pred_check
      _
    $region38: #{rgbd_forward.3} parent=5 // pred_check_branch
      %240 = sbr.rel (%p237) target = $region40
    $region39: #{rgbd_forward.3} parent=5 // pred_region
      %s241 = ssub.s32 %s15, 1
      %s242 = smul.u32 2, %s25
      %p243 = scmp.lt.s32.totalorder %s24, 1
      %s244 = scalar_select %p243, %s24, 1
      %p245 = scmp.lt.s32.totalorder %s242, 1
      %s246 = scalar_select %p245, %s242, 1
      %s247 = smul.addr %s244, 2
      %s248 = sadd.s32 %s246, %s247
      %s249 = smul.addr %s248, 2
      %s250 = scalar_lea.vmem %s0, %s249
      %p251 = pneg %p55
      %p252 = pneg %p52
      %p253 = pneg %p76
      %p254 = pneg %p73
      %p255 = pneg %p97
      %p256 = pneg %p94
      %p257 = pneg %p118
      %p258 = pneg %p115
      %p259 = pneg %p139
      %p260 = pneg %p136
      %p261 = pneg %p165
      %p262 = pneg %p162
      %p263 = scmp.lt.s32.totalorder %s24, 1
      %s264 = scalar_select %p263, %s24, 1
      %s265 = smul.addr %s264, 160
      %s266 = smul.addr %s265, 8
      %s267 = scalar_lea.vmem %s5, %s266
      %p268 = pneg %p191
      %p269 = pneg %p188
      %p270 = scmp.lt.s32.totalorder %s24, 1
      %s271 = scalar_select %p270, %s24, 1
      %s272 = scalar_lea.vmem %s6, %s271
      %s273 = smul.u32 2, %s25
      %p274 = scmp.lt.s32.totalorder %s24, 1
      %s275 = scalar_select %p274, %s24, 1
      %p276 = scmp.lt.s32.totalorder %s273, 1
      %s277 = scalar_select %p276, %s273, 1
      %s278 = smul.addr %s275, 2
      %s279 = sadd.s32 %s277, %s278
      %s280 = smul.addr %s279, 2
      %s281 = scalar_lea.vmem %s0, %s280
      %s282 = smul.u32 2, %s25
      %p283 = scmp.lt.s32.totalorder %s24, 1
      %s284 = scalar_select %p283, %s24, 1
      %s285 = smul.addr %s284, 160
      %s286 = smul.addr %s285, 8
      %s287 = scalar_lea.vmem %s5, %s286
      %p288 = scmp.lt.s32.totalorder %s24, 1
      %s289 = scalar_select %p288, %s24, 1
      %s290 = scalar_lea.vmem %s6, %s289
      %p291 = scmp.eq.s32.totalorder %s25, 0
      // Predicated region
      $region41: #{rgbd_forward.3} parent=39 // pred_check
        %p292 = pneg %p291
      $region42: #{rgbd_forward.3} parent=39 // pred_check_branch
        %294 = sbr.rel (%p292) target = $region44
      $region43: #{rgbd_forward.3} parent=39 // pred_region
        %vm295 = vcmask 7168
        %296 = vst.msk [vmem:[#allocation2] sm:$0xff] %vm295, 0.0
        %297 = vst.msk [vmem:[#allocation2 + $0x8] sm:$0xff] %vm295, 0.0
        %298 = vst.msk [vmem:[#allocation2 + $0x10] sm:$0xff] %vm295, 0.0
        %299 = vst.msk [vmem:[#allocation2 + $0x18] sm:$0xff] %vm295, 0.0
        %300 = vst.msk [vmem:[#allocation2 + $0x20] sm:$0xff] %vm295, 0.0
        %301 = vst.msk [vmem:[#allocation2 + $0x28] sm:$0xff] %vm295, 0.0
        %302 = vst.msk [vmem:[#allocation2 + $0x30] sm:$0xff] %vm295, 0.0
        %303 = vst.msk [vmem:[#allocation2 + $0x38] sm:$0xff] %vm295, 0.0
        %304 = vst.msk [vmem:[#allocation2 + $0x40] sm:$0xff] %vm295, 0.0
        %305 = vst.msk [vmem:[#allocation2 + $0x48] sm:$0xff] %vm295, 0.0
        %306 = vst.msk [vmem:[#allocation2 + $0x50] sm:$0xff] %vm295, 0.0
        %307 = vst.msk [vmem:[#allocation2 + $0x58] sm:$0xff] %vm295, 0.0
        %308 = vst.msk [vmem:[#allocation2 + $0x60] sm:$0xff] %vm295, 0.0
        %309 = vst.msk [vmem:[#allocation2 + $0x68] sm:$0xff] %vm295, 0.0
        %310 = vst.msk [vmem:[#allocation2 + $0x70] sm:$0xff] %vm295, 0.0
        %311 = vst.msk [vmem:[#allocation2 + $0x78] sm:$0xff] %vm295, 0.0
        %312 = vst.msk [vmem:[#allocation2 + $0x80] sm:$0xff] %vm295, 0.0
        %313 = vst.msk [vmem:[#allocation2 + $0x88] sm:$0xff] %vm295, 0.0
        %314 = vst.msk [vmem:[#allocation2 + $0x90] sm:$0xff] %vm295, 0.0
        %315 = vst.msk [vmem:[#allocation2 + $0x98] sm:$0xff] %vm295, 0.0
        %316 = vst.msk [vmem:[#allocation2 + $0xa0] sm:$0xff] %vm295, 0.0
        %317 = vst.msk [vmem:[#allocation2 + $0xa8] sm:$0xff] %vm295, 0.0
        %318 = vst.msk [vmem:[#allocation2 + $0xb0] sm:$0xff] %vm295, 0.0
        %319 = vst.msk [vmem:[#allocation2 + $0xb8] sm:$0xff] %vm295, 0.0
        %320 = vst.msk [vmem:[#allocation2 + $0xc0] sm:$0xff] %vm295, 0.0
        %321 = vst.msk [vmem:[#allocation2 + $0xc8] sm:$0xff] %vm295, 0.0
        %322 = vst.msk [vmem:[#allocation2 + $0xd0] sm:$0xff] %vm295, 0.0
        %323 = vst.msk [vmem:[#allocation2 + $0xd8] sm:$0xff] %vm295, 0.0
        %324 = vst.msk [vmem:[#allocation2 + $0xe0] sm:$0xff] %vm295, 0.0
        %325 = vst.msk [vmem:[#allocation2 + $0xe8] sm:$0xff] %vm295, 0.0
        %326 = vst.msk [vmem:[#allocation2 + $0xf0] sm:$0xff] %vm295, 0.0
        %327 = vst.msk [vmem:[#allocation2 + $0xf8] sm:$0xff] %vm295, 0.0
        %328 = vst.msk [vmem:[#allocation2 + $0x100] sm:$0xff] %vm295, 0.0
        %329 = vst.msk [vmem:[#allocation2 + $0x108] sm:$0xff] %vm295, 0.0
        %330 = vst.msk [vmem:[#allocation2 + $0x110] sm:$0xff] %vm295, 0.0
        %331 = vst.msk [vmem:[#allocation2 + $0x118] sm:$0xff] %vm295, 0.0
        %332 = vst.msk [vmem:[#allocation2 + $0x120] sm:$0xff] %vm295, 0.0
        %333 = vst.msk [vmem:[#allocation2 + $0x128] sm:$0xff] %vm295, 0.0
        %334 = vst.msk [vmem:[#allocation2 + $0x130] sm:$0xff] %vm295, 0.0
        %335 = vst.msk [vmem:[#allocation2 + $0x138] sm:$0xff] %vm295, 0.0
        %336 = vst.msk [vmem:[#allocation2 + $0x140] sm:$0xff] %vm295, 0.0
        %337 = vst.msk [vmem:[#allocation2 + $0x148] sm:$0xff] %vm295, 0.0
        %338 = vst.msk [vmem:[#allocation2 + $0x150] sm:$0xff] %vm295, 0.0
        %339 = vst.msk [vmem:[#allocation2 + $0x158] sm:$0xff] %vm295, 0.0
        %340 = vst.msk [vmem:[#allocation2 + $0x160] sm:$0xff] %vm295, 0.0
        %341 = vst.msk [vmem:[#allocation2 + $0x168] sm:$0xff] %vm295, 0.0
        %342 = vst.msk [vmem:[#allocation2 + $0x170] sm:$0xff] %vm295, 0.0
        %343 = vst.msk [vmem:[#allocation2 + $0x178] sm:$0xff] %vm295, 0.0
        %344 = vst.msk [vmem:[#allocation2 + $0x180] sm:$0xff] %vm295, 0.0
        %345 = vst.msk [vmem:[#allocation2 + $0x188] sm:$0xff] %vm295, 0.0
        %346 = vst.msk [vmem:[#allocation2 + $0x190] sm:$0xff] %vm295, 0.0
        %347 = vst.msk [vmem:[#allocation2 + $0x198] sm:$0xff] %vm295, 0.0
        %348 = vst.msk [vmem:[#allocation2 + $0x1a0] sm:$0xff] %vm295, 0.0
        %349 = vst.msk [vmem:[#allocation2 + $0x1a8] sm:$0xff] %vm295, 0.0
        %350 = vst.msk [vmem:[#allocation2 + $0x1b0] sm:$0xff] %vm295, 0.0
        %351 = vst.msk [vmem:[#allocation2 + $0x1b8] sm:$0xff] %vm295, 0.0
        %352 = vst.msk [vmem:[#allocation2 + $0x1c0] sm:$0xff] %vm295, 0.0
        %353 = vst.msk [vmem:[#allocation2 + $0x1c8] sm:$0xff] %vm295, 0.0
        %354 = vst.msk [vmem:[#allocation2 + $0x1d0] sm:$0xff] %vm295, 0.0
        %355 = vst.msk [vmem:[#allocation2 + $0x1d8] sm:$0xff] %vm295, 0.0
        %356 = vst.msk [vmem:[#allocation2 + $0x1e0] sm:$0xff] %vm295, 0.0
        %357 = vst.msk [vmem:[#allocation2 + $0x1e8] sm:$0xff] %vm295, 0.0
        %358 = vst.msk [vmem:[#allocation2 + $0x1f0] sm:$0xff] %vm295, 0.0
        %359 = vst.msk [vmem:[#allocation2 + $0x1f8] sm:$0xff] %vm295, 0.0
        %360 = vst.msk [vmem:[#allocation2 + $0x200] sm:$0xff] %vm295, 0.0
        %361 = vst.msk [vmem:[#allocation2 + $0x208] sm:$0xff] %vm295, 0.0
        %362 = vst.msk [vmem:[#allocation2 + $0x210] sm:$0xff] %vm295, 0.0
        %363 = vst.msk [vmem:[#allocation2 + $0x218] sm:$0xff] %vm295, 0.0
        %364 = vst.msk [vmem:[#allocation2 + $0x220] sm:$0xff] %vm295, 0.0
        %365 = vst.msk [vmem:[#allocation2 + $0x228] sm:$0xff] %vm295, 0.0
        %366 = vst.msk [vmem:[#allocation2 + $0x230] sm:$0xff] %vm295, 0.0
        %367 = vst.msk [vmem:[#allocation2 + $0x238] sm:$0xff] %vm295, 0.0
        %368 = vst.msk [vmem:[#allocation2 + $0x240] sm:$0xff] %vm295, 0.0
        %369 = vst.msk [vmem:[#allocation2 + $0x248] sm:$0xff] %vm295, 0.0
        %370 = vst.msk [vmem:[#allocation2 + $0x250] sm:$0xff] %vm295, 0.0
        %371 = vst.msk [vmem:[#allocation2 + $0x258] sm:$0xff] %vm295, 0.0
        %372 = vst.msk [vmem:[#allocation2 + $0x260] sm:$0xff] %vm295, 0.0
        %373 = vst.msk [vmem:[#allocation2 + $0x268] sm:$0xff] %vm295, 0.0
        %374 = vst.msk [vmem:[#allocation2 + $0x270] sm:$0xff] %vm295, 0.0
        %375 = vst.msk [vmem:[#allocation2 + $0x278] sm:$0xff] %vm295, 0.0
        %376 = vst.msk [vmem:[#allocation2 + $0x280] sm:$0xff] %vm295, 0.0
        %377 = vst.msk [vmem:[#allocation2 + $0x288] sm:$0xff] %vm295, 0.0
        %378 = vst.msk [vmem:[#allocation2 + $0x290] sm:$0xff] %vm295, 0.0
        %379 = vst.msk [vmem:[#allocation2 + $0x298] sm:$0xff] %vm295, 0.0
        %380 = vst.msk [vmem:[#allocation2 + $0x2a0] sm:$0xff] %vm295, 0.0
        %381 = vst.msk [vmem:[#allocation2 + $0x2a8] sm:$0xff] %vm295, 0.0
        %382 = vst.msk [vmem:[#allocation2 + $0x2b0] sm:$0xff] %vm295, 0.0
        %383 = vst.msk [vmem:[#allocation2 + $0x2b8] sm:$0xff] %vm295, 0.0
        %384 = vst.msk [vmem:[#allocation2 + $0x2c0] sm:$0xff] %vm295, 0.0
        %385 = vst.msk [vmem:[#allocation2 + $0x2c8] sm:$0xff] %vm295, 0.0
        %386 = vst.msk [vmem:[#allocation2 + $0x2d0] sm:$0xff] %vm295, 0.0
        %387 = vst.msk [vmem:[#allocation2 + $0x2d8] sm:$0xff] %vm295, 0.0
        %388 = vst.msk [vmem:[#allocation2 + $0x2e0] sm:$0xff] %vm295, 0.0
        %389 = vst.msk [vmem:[#allocation2 + $0x2e8] sm:$0xff] %vm295, 0.0
        %390 = vst.msk [vmem:[#allocation2 + $0x2f0] sm:$0xff] %vm295, 0.0
        %391 = vst.msk [vmem:[#allocation2 + $0x2f8] sm:$0xff] %vm295, 0.0
        %392 = vst.msk [vmem:[#allocation2 + $0x300] sm:$0xff] %vm295, 0.0
        %393 = vst.msk [vmem:[#allocation2 + $0x308] sm:$0xff] %vm295, 0.0
        %394 = vst.msk [vmem:[#allocation2 + $0x310] sm:$0xff] %vm295, 0.0
        %395 = vst.msk [vmem:[#allocation2 + $0x318] sm:$0xff] %vm295, 0.0
        %396 = vst.msk [vmem:[#allocation2 + $0x320] sm:$0xff] %vm295, 0.0
        %397 = vst.msk [vmem:[#allocation2 + $0x328] sm:$0xff] %vm295, 0.0
        %398 = vst.msk [vmem:[#allocation2 + $0x330] sm:$0xff] %vm295, 0.0
        %399 = vst.msk [vmem:[#allocation2 + $0x338] sm:$0xff] %vm295, 0.0
        %400 = vst.msk [vmem:[#allocation2 + $0x340] sm:$0xff] %vm295, 0.0
        %401 = vst.msk [vmem:[#allocation2 + $0x348] sm:$0xff] %vm295, 0.0
        %402 = vst.msk [vmem:[#allocation2 + $0x350] sm:$0xff] %vm295, 0.0
        %403 = vst.msk [vmem:[#allocation2 + $0x358] sm:$0xff] %vm295, 0.0
        %404 = vst.msk [vmem:[#allocation2 + $0x360] sm:$0xff] %vm295, 0.0
        %405 = vst.msk [vmem:[#allocation2 + $0x368] sm:$0xff] %vm295, 0.0
        %406 = vst.msk [vmem:[#allocation2 + $0x370] sm:$0xff] %vm295, 0.0
        %407 = vst.msk [vmem:[#allocation2 + $0x378] sm:$0xff] %vm295, 0.0
        %408 = vst.msk [vmem:[#allocation2 + $0x380] sm:$0xff] %vm295, 0.0
        %409 = vst.msk [vmem:[#allocation2 + $0x388] sm:$0xff] %vm295, 0.0
        %410 = vst.msk [vmem:[#allocation2 + $0x390] sm:$0xff] %vm295, 0.0
        %411 = vst.msk [vmem:[#allocation2 + $0x398] sm:$0xff] %vm295, 0.0
        %412 = vst.msk [vmem:[#allocation2 + $0x3a0] sm:$0xff] %vm295, 0.0
        %413 = vst.msk [vmem:[#allocation2 + $0x3a8] sm:$0xff] %vm295, 0.0
        %414 = vst.msk [vmem:[#allocation2 + $0x3b0] sm:$0xff] %vm295, 0.0
        %415 = vst.msk [vmem:[#allocation2 + $0x3b8] sm:$0xff] %vm295, 0.0
        %416 = vst.msk [vmem:[#allocation2 + $0x3c0] sm:$0xff] %vm295, 0.0
        %417 = vst.msk [vmem:[#allocation2 + $0x3c8] sm:$0xff] %vm295, 0.0
        %418 = vst.msk [vmem:[#allocation2 + $0x3d0] sm:$0xff] %vm295, 0.0
        %419 = vst.msk [vmem:[#allocation2 + $0x3d8] sm:$0xff] %vm295, 0.0
        %420 = vst.msk [vmem:[#allocation2 + $0x3e0] sm:$0xff] %vm295, 0.0
        %421 = vst.msk [vmem:[#allocation2 + $0x3e8] sm:$0xff] %vm295, 0.0
        %422 = vst.msk [vmem:[#allocation2 + $0x3f0] sm:$0xff] %vm295, 0.0
        %423 = vst.msk [vmem:[#allocation2 + $0x3f8] sm:$0xff] %vm295, 0.0
        %424 = vst.msk [vmem:[#allocation2 + $0x400] sm:$0xff] %vm295, 0.0
        %425 = vst.msk [vmem:[#allocation2 + $0x408] sm:$0xff] %vm295, 0.0
        %426 = vst.msk [vmem:[#allocation2 + $0x410] sm:$0xff] %vm295, 0.0
        %427 = vst.msk [vmem:[#allocation2 + $0x418] sm:$0xff] %vm295, 0.0
        %428 = vst.msk [vmem:[#allocation2 + $0x420] sm:$0xff] %vm295, 0.0
        %429 = vst.msk [vmem:[#allocation2 + $0x428] sm:$0xff] %vm295, 0.0
        %430 = vst.msk [vmem:[#allocation2 + $0x430] sm:$0xff] %vm295, 0.0
        %431 = vst.msk [vmem:[#allocation2 + $0x438] sm:$0xff] %vm295, 0.0
        %432 = vst.msk [vmem:[#allocation2 + $0x440] sm:$0xff] %vm295, 0.0
        %433 = vst.msk [vmem:[#allocation2 + $0x448] sm:$0xff] %vm295, 0.0
        %434 = vst.msk [vmem:[#allocation2 + $0x450] sm:$0xff] %vm295, 0.0
        %435 = vst.msk [vmem:[#allocation2 + $0x458] sm:$0xff] %vm295, 0.0
        %436 = vst.msk [vmem:[#allocation2 + $0x460] sm:$0xff] %vm295, 0.0
        %437 = vst.msk [vmem:[#allocation2 + $0x468] sm:$0xff] %vm295, 0.0
        %438 = vst.msk [vmem:[#allocation2 + $0x470] sm:$0xff] %vm295, 0.0
        %439 = vst.msk [vmem:[#allocation2 + $0x478] sm:$0xff] %vm295, 0.0
        %440 = vst.msk [vmem:[#allocation2 + $0x480] sm:$0xff] %vm295, 0.0
        %441 = vst.msk [vmem:[#allocation2 + $0x488] sm:$0xff] %vm295, 0.0
        %442 = vst.msk [vmem:[#allocation2 + $0x490] sm:$0xff] %vm295, 0.0
        %443 = vst.msk [vmem:[#allocation2 + $0x498] sm:$0xff] %vm295, 0.0
        %444 = vst.msk [vmem:[#allocation2 + $0x4a0] sm:$0xff] %vm295, 0.0
        %445 = vst.msk [vmem:[#allocation2 + $0x4a8] sm:$0xff] %vm295, 0.0
        %446 = vst.msk [vmem:[#allocation2 + $0x4b0] sm:$0xff] %vm295, 0.0
        %447 = vst.msk [vmem:[#allocation2 + $0x4b8] sm:$0xff] %vm295, 0.0
        %448 = vst.msk [vmem:[#allocation2 + $0x4c0] sm:$0xff] %vm295, 0.0
        %449 = vst.msk [vmem:[#allocation2 + $0x4c8] sm:$0xff] %vm295, 0.0
        %450 = vst.msk [vmem:[#allocation2 + $0x4d0] sm:$0xff] %vm295, 0.0
        %451 = vst.msk [vmem:[#allocation2 + $0x4d8] sm:$0xff] %vm295, 0.0
        %452 = vst.msk [vmem:[#allocation2 + $0x4e0] sm:$0xff] %vm295, 0.0
        %453 = vst.msk [vmem:[#allocation2 + $0x4e8] sm:$0xff] %vm295, 0.0
        %454 = vst.msk [vmem:[#allocation2 + $0x4f0] sm:$0xff] %vm295, 0.0
        %455 = vst.msk [vmem:[#allocation2 + $0x4f8] sm:$0xff] %vm295, 0.0
      $region44: #{rgbd_forward.3} parent=39 // pred_fallthru
        _
      %v456 = vld [vmem:[%s281] sm:$0xf]
      %v457 = vunpack.c.l.bf16 %v456
      %v458 = vld [vmem:[%s1] sm:$0xff]
      %v459 = vld [vmem:[%s1 + $0x8] sm:$0xff]
      %v460 = vld [vmem:[%s1 + $0x10] sm:$0xff]
      %v461 = vld [vmem:[%s1 + $0x18] sm:$0xff]
      %v462 = vld [vmem:[%s1 + $0x20] sm:$0xff]
      %v463 = vld [vmem:[%s1 + $0x28] sm:$0xff]
      %v464 = vld [vmem:[%s1 + $0x30] sm:$0xff]
      %v465 = vld [vmem:[%s1 + $0x38] sm:$0xff]
      %v466 = vld [vmem:[%s1 + $0x40] sm:$0xff]
      %v467 = vld [vmem:[%s1 + $0x48] sm:$0xff]
      %v468 = vld [vmem:[%s1 + $0x50] sm:$0xff]
      %v469 = vld [vmem:[%s1 + $0x58] sm:$0xff]
      %v470 = vld [vmem:[%s1 + $0x60] sm:$0xff]
      %v471 = vld [vmem:[%s1 + $0x68] sm:$0xff]
      %v472 = vld [vmem:[%s1 + $0x70] sm:$0xff]
      %v473 = vld [vmem:[%s1 + $0x78] sm:$0xff]
      %v474 = vld [vmem:[%s1 + $0x80] sm:$0xff]
      %v475 = vld [vmem:[%s1 + $0x88] sm:$0xff]
      %v476 = vld [vmem:[%s1 + $0x90] sm:$0xff]
      %v477 = vld [vmem:[%s1 + $0x98] sm:$0xff]
      %v478 = vld [vmem:[%s1 + $0xa0] sm:$0xff]
      %v479 = vld [vmem:[%s1 + $0xa8] sm:$0xff]
      %v480 = vld [vmem:[%s1 + $0xb0] sm:$0xff]
      %v481 = vld [vmem:[%s1 + $0xb8] sm:$0xff]
      %v482 = vld [vmem:[%s1 + $0xc0] sm:$0xff]
      %v483 = vld [vmem:[%s1 + $0xc8] sm:$0xff]
      %v484 = vld [vmem:[%s1 + $0xd0] sm:$0xff]
      %v485 = vld [vmem:[%s1 + $0xd8] sm:$0xff]
      %v486 = vld [vmem:[%s1 + $0xe0] sm:$0xff]
      %v487 = vld [vmem:[%s1 + $0xe8] sm:$0xff]
      %v488 = vld [vmem:[%s1 + $0xf0] sm:$0xff]
      %v489 = vld [vmem:[%s1 + $0xf8] sm:$0xff]
      %v490 = vld [vmem:[%s1 + $0x100] sm:$0xff]
      %v491 = vld [vmem:[%s1 + $0x108] sm:$0xff]
      %v492 = vld [vmem:[%s1 + $0x110] sm:$0xff]
      %v493 = vld [vmem:[%s1 + $0x118] sm:$0xff]
      %v494 = vld [vmem:[%s1 + $0x120] sm:$0xff]
      %v495 = vld [vmem:[%s1 + $0x128] sm:$0xff]
      %v496 = vld [vmem:[%s1 + $0x130] sm:$0xff]
      %v497 = vld [vmem:[%s1 + $0x138] sm:$0xff]
      %v498 = vld [vmem:[%s1 + $0x140] sm:$0xff]
      %v499 = vld [vmem:[%s1 + $0x148] sm:$0xff]
      %v500 = vld [vmem:[%s1 + $0x150] sm:$0xff]
      %v501 = vld [vmem:[%s1 + $0x158] sm:$0xff]
      %v502 = vld [vmem:[%s1 + $0x160] sm:$0xff]
      %v503 = vld [vmem:[%s1 + $0x168] sm:$0xff]
      %v504 = vld [vmem:[%s1 + $0x170] sm:$0xff]
      %v505 = vld [vmem:[%s1 + $0x178] sm:$0xff]
      %v506 = vld [vmem:[%s1 + $0x180] sm:$0xff]
      %v507 = vld [vmem:[%s1 + $0x188] sm:$0xff]
      %v508 = vld [vmem:[%s1 + $0x190] sm:$0xff]
      %v509 = vld [vmem:[%s1 + $0x198] sm:$0xff]
      %v510 = vld [vmem:[%s1 + $0x1a0] sm:$0xff]
      %v511 = vld [vmem:[%s1 + $0x1a8] sm:$0xff]
      %v512 = vld [vmem:[%s1 + $0x1b0] sm:$0xff]
      %v513 = vld [vmem:[%s1 + $0x1b8] sm:$0xff]
      %v514 = vld [vmem:[%s1 + $0x1c0] sm:$0xff]
      %v515 = vld [vmem:[%s1 + $0x1c8] sm:$0xff]
      %v516 = vld [vmem:[%s1 + $0x1d0] sm:$0xff]
      %v517 = vld [vmem:[%s1 + $0x1d8] sm:$0xff]
      %v518 = vld [vmem:[%s1 + $0x1e0] sm:$0xff]
      %v519 = vld [vmem:[%s1 + $0x1e8] sm:$0xff]
      %v520 = vld [vmem:[%s1 + $0x1f0] sm:$0xff]
      %v521 = vld [vmem:[%s1 + $0x1f8] sm:$0xff]
      %v522 = vld [vmem:[%s1 + $0x200] sm:$0xff]
      %v523 = vld [vmem:[%s1 + $0x208] sm:$0xff]
      %v524 = vld [vmem:[%s1 + $0x210] sm:$0xff]
      %v525 = vld [vmem:[%s1 + $0x218] sm:$0xff]
      %v526 = vld [vmem:[%s1 + $0x220] sm:$0xff]
      %v527 = vld [vmem:[%s1 + $0x228] sm:$0xff]
      %v528 = vld [vmem:[%s1 + $0x230] sm:$0xff]
      %v529 = vld [vmem:[%s1 + $0x238] sm:$0xff]
      %v530 = vld [vmem:[%s1 + $0x240] sm:$0xff]
      %v531 = vld [vmem:[%s1 + $0x248] sm:$0xff]
      %v532 = vld [vmem:[%s1 + $0x250] sm:$0xff]
      %v533 = vld [vmem:[%s1 + $0x258] sm:$0xff]
      %v534 = vld [vmem:[%s1 + $0x260] sm:$0xff]
      %v535 = vld [vmem:[%s1 + $0x268] sm:$0xff]
      %v536 = vld [vmem:[%s1 + $0x270] sm:$0xff]
      %v537 = vld [vmem:[%s1 + $0x278] sm:$0xff]
      %v538 = vld [vmem:[%s1 + $0x280] sm:$0xff]
      %v539 = vld [vmem:[%s1 + $0x288] sm:$0xff]
      %v540 = vld [vmem:[%s1 + $0x290] sm:$0xff]
      %v541 = vld [vmem:[%s1 + $0x298] sm:$0xff]
      %v542 = vld [vmem:[%s1 + $0x2a0] sm:$0xff]
      %v543 = vld [vmem:[%s1 + $0x2a8] sm:$0xff]
      %v544 = vld [vmem:[%s1 + $0x2b0] sm:$0xff]
      %v545 = vld [vmem:[%s1 + $0x2b8] sm:$0xff]
      %v546 = vld [vmem:[%s1 + $0x2c0] sm:$0xff]
      %v547 = vld [vmem:[%s1 + $0x2c8] sm:$0xff]
      %v548 = vld [vmem:[%s1 + $0x2d0] sm:$0xff]
      %v549 = vld [vmem:[%s1 + $0x2d8] sm:$0xff]
      %v550 = vld [vmem:[%s1 + $0x2e0] sm:$0xff]
      %v551 = vld [vmem:[%s1 + $0x2e8] sm:$0xff]
      %v552 = vld [vmem:[%s1 + $0x2f0] sm:$0xff]
      %v553 = vld [vmem:[%s1 + $0x2f8] sm:$0xff]
      %v554 = vld [vmem:[%s1 + $0x300] sm:$0xff]
      %v555 = vld [vmem:[%s1 + $0x308] sm:$0xff]
      %v556 = vld [vmem:[%s1 + $0x310] sm:$0xff]
      %v557 = vld [vmem:[%s1 + $0x318] sm:$0xff]
      %v558 = vld [vmem:[%s1 + $0x320] sm:$0xff]
      %v559 = vld [vmem:[%s1 + $0x328] sm:$0xff]
      %v560 = vld [vmem:[%s1 + $0x330] sm:$0xff]
      %v561 = vld [vmem:[%s1 + $0x338] sm:$0xff]
      %v562 = vld [vmem:[%s1 + $0x340] sm:$0xff]
      %v563 = vld [vmem:[%s1 + $0x348] sm:$0xff]
      %v564 = vld [vmem:[%s1 + $0x350] sm:$0xff]
      %v565 = vld [vmem:[%s1 + $0x358] sm:$0xff]
      %v566 = vld [vmem:[%s1 + $0x360] sm:$0xff]
      %v567 = vld [vmem:[%s1 + $0x368] sm:$0xff]
      %v568 = vld [vmem:[%s1 + $0x370] sm:$0xff]
      %v569 = vld [vmem:[%s1 + $0x378] sm:$0xff]
      %v570 = vld [vmem:[%s1 + $0x380] sm:$0xff]
      %v571 = vld [vmem:[%s1 + $0x388] sm:$0xff]
      %v572 = vld [vmem:[%s1 + $0x390] sm:$0xff]
      %v573 = vld [vmem:[%s1 + $0x398] sm:$0xff]
      %v574 = vld [vmem:[%s1 + $0x3a0] sm:$0xff]
      %v575 = vld [vmem:[%s1 + $0x3a8] sm:$0xff]
      %v576 = vld [vmem:[%s1 + $0x3b0] sm:$0xff]
      %v577 = vld [vmem:[%s1 + $0x3b8] sm:$0xff]
      %v578 = vld [vmem:[%s1 + $0x3c0] sm:$0xff]
      %v579 = vld [vmem:[%s1 + $0x3c8] sm:$0xff]
      %v580 = vld [vmem:[%s1 + $0x3d0] sm:$0xff]
      %v581 = vld [vmem:[%s1 + $0x3d8] sm:$0xff]
      %v582 = vld [vmem:[%s1 + $0x3e0] sm:$0xff]
      %v583 = vld [vmem:[%s1 + $0x3e8] sm:$0xff]
      %v584 = vld [vmem:[%s1 + $0x3f0] sm:$0xff]
      %v585 = vld [vmem:[%s1 + $0x3f8] sm:$0xff]
      %v586 = vld [vmem:[%s1 + $0x400] sm:$0xff]
      %v587 = vld [vmem:[%s1 + $0x408] sm:$0xff]
      %v588 = vld [vmem:[%s1 + $0x410] sm:$0xff]
      %v589 = vld [vmem:[%s1 + $0x418] sm:$0xff]
      %v590 = vld [vmem:[%s1 + $0x420] sm:$0xff]
      %v591 = vld [vmem:[%s1 + $0x428] sm:$0xff]
      %v592 = vld [vmem:[%s1 + $0x430] sm:$0xff]
      %v593 = vld [vmem:[%s1 + $0x438] sm:$0xff]
      %v594 = vld [vmem:[%s1 + $0x440] sm:$0xff]
      %v595 = vld [vmem:[%s1 + $0x448] sm:$0xff]
      %v596 = vld [vmem:[%s1 + $0x450] sm:$0xff]
      %v597 = vld [vmem:[%s1 + $0x458] sm:$0xff]
      %v598 = vld [vmem:[%s1 + $0x460] sm:$0xff]
      %v599 = vld [vmem:[%s1 + $0x468] sm:$0xff]
      %v600 = vld [vmem:[%s1 + $0x470] sm:$0xff]
      %v601 = vld [vmem:[%s1 + $0x478] sm:$0xff]
      %v602 = vld [vmem:[%s1 + $0x480] sm:$0xff]
      %v603 = vld [vmem:[%s1 + $0x488] sm:$0xff]
      %v604 = vld [vmem:[%s1 + $0x490] sm:$0xff]
      %v605 = vld [vmem:[%s1 + $0x498] sm:$0xff]
      %v606 = vld [vmem:[%s1 + $0x4a0] sm:$0xff]
      %v607 = vld [vmem:[%s1 + $0x4a8] sm:$0xff]
      %v608 = vld [vmem:[%s1 + $0x4b0] sm:$0xff]
      %v609 = vld [vmem:[%s1 + $0x4b8] sm:$0xff]
      %v610 = vld [vmem:[%s1 + $0x4c0] sm:$0xff]
      %v611 = vld [vmem:[%s1 + $0x4c8] sm:$0xff]
      %v612 = vld [vmem:[%s1 + $0x4d0] sm:$0xff]
      %v613 = vld [vmem:[%s1 + $0x4d8] sm:$0xff]
      %v614 = vld [vmem:[%s1 + $0x4e0] sm:$0xff]
      %v615 = vld [vmem:[%s1 + $0x4e8] sm:$0xff]
      %v616 = vld [vmem:[%s1 + $0x4f0] sm:$0xff]
      %v617 = vld [vmem:[%s1 + $0x4f8] sm:$0xff]
      %619 = vset.pattern.permute.xlu0 0
      %620 = vperm.xlu0 %619, %v458
      %v621 = vpop.permute.xlu0 %620
      %624 = vset.pattern.permute.xlu0 0
      %625 = vperm.xlu0 %624, %v459
      %v626 = vpop.permute.xlu0 %625
      %629 = vset.pattern.permute.xlu0 0
      %630 = vperm.xlu0 %629, %v460
      %v631 = vpop.permute.xlu0 %630
      %634 = vset.pattern.permute.xlu0 0
      %635 = vperm.xlu0 %634, %v461
      %v636 = vpop.permute.xlu0 %635
      %639 = vset.pattern.permute.xlu0 0
      %640 = vperm.xlu0 %639, %v462
      %v641 = vpop.permute.xlu0 %640
      %644 = vset.pattern.permute.xlu0 0
      %645 = vperm.xlu0 %644, %v463
      %v646 = vpop.permute.xlu0 %645
      %649 = vset.pattern.permute.xlu0 0
      %650 = vperm.xlu0 %649, %v464
      %v651 = vpop.permute.xlu0 %650
      %654 = vset.pattern.permute.xlu0 0
      %655 = vperm.xlu0 %654, %v465
      %v656 = vpop.permute.xlu0 %655
      %659 = vset.pattern.permute.xlu0 0
      %660 = vperm.xlu0 %659, %v466
      %v661 = vpop.permute.xlu0 %660
      %664 = vset.pattern.permute.xlu0 0
      %665 = vperm.xlu0 %664, %v467
      %v666 = vpop.permute.xlu0 %665
      %669 = vset.pattern.permute.xlu0 0
      %670 = vperm.xlu0 %669, %v468
      %v671 = vpop.permute.xlu0 %670
      %674 = vset.pattern.permute.xlu0 0
      %675 = vperm.xlu0 %674, %v469
      %v676 = vpop.permute.xlu0 %675
      %679 = vset.pattern.permute.xlu0 0
      %680 = vperm.xlu0 %679, %v470
      %v681 = vpop.permute.xlu0 %680
      %684 = vset.pattern.permute.xlu0 0
      %685 = vperm.xlu0 %684, %v471
      %v686 = vpop.permute.xlu0 %685
      %689 = vset.pattern.permute.xlu0 0
      %690 = vperm.xlu0 %689, %v472
      %v691 = vpop.permute.xlu0 %690
      %694 = vset.pattern.permute.xlu0 0
      %695 = vperm.xlu0 %694, %v473
      %v696 = vpop.permute.xlu0 %695
      %699 = vset.pattern.permute.xlu0 0
      %700 = vperm.xlu0 %699, %v474
      %v701 = vpop.permute.xlu0 %700
      %704 = vset.pattern.permute.xlu0 0
      %705 = vperm.xlu0 %704, %v475
      %v706 = vpop.permute.xlu0 %705
      %709 = vset.pattern.permute.xlu0 0
      %710 = vperm.xlu0 %709, %v476
      %v711 = vpop.permute.xlu0 %710
      %714 = vset.pattern.permute.xlu0 0
      %715 = vperm.xlu0 %714, %v477
      %v716 = vpop.permute.xlu0 %715
      %719 = vset.pattern.permute.xlu0 0
      %720 = vperm.xlu0 %719, %v478
      %v721 = vpop.permute.xlu0 %720
      %724 = vset.pattern.permute.xlu0 0
      %725 = vperm.xlu0 %724, %v479
      %v726 = vpop.permute.xlu0 %725
      %729 = vset.pattern.permute.xlu0 0
      %730 = vperm.xlu0 %729, %v480
      %v731 = vpop.permute.xlu0 %730
      %734 = vset.pattern.permute.xlu0 0
      %735 = vperm.xlu0 %734, %v481
      %v736 = vpop.permute.xlu0 %735
      %739 = vset.pattern.permute.xlu0 0
      %740 = vperm.xlu0 %739, %v482
      %v741 = vpop.permute.xlu0 %740
      %744 = vset.pattern.permute.xlu0 0
      %745 = vperm.xlu0 %744, %v483
      %v746 = vpop.permute.xlu0 %745
      %749 = vset.pattern.permute.xlu0 0
      %750 = vperm.xlu0 %749, %v484
      %v751 = vpop.permute.xlu0 %750
      %754 = vset.pattern.permute.xlu0 0
      %755 = vperm.xlu0 %754, %v485
      %v756 = vpop.permute.xlu0 %755
      %759 = vset.pattern.permute.xlu0 0
      %760 = vperm.xlu0 %759, %v486
      %v761 = vpop.permute.xlu0 %760
      %764 = vset.pattern.permute.xlu0 0
      %765 = vperm.xlu0 %764, %v487
      %v766 = vpop.permute.xlu0 %765
      %769 = vset.pattern.permute.xlu0 0
      %770 = vperm.xlu0 %769, %v488
      %v771 = vpop.permute.xlu0 %770
      %774 = vset.pattern.permute.xlu0 0
      %775 = vperm.xlu0 %774, %v489
      %v776 = vpop.permute.xlu0 %775
      %779 = vset.pattern.permute.xlu0 0
      %780 = vperm.xlu0 %779, %v490
      %v781 = vpop.permute.xlu0 %780
      %784 = vset.pattern.permute.xlu0 0
      %785 = vperm.xlu0 %784, %v491
      %v786 = vpop.permute.xlu0 %785
      %789 = vset.pattern.permute.xlu0 0
      %790 = vperm.xlu0 %789, %v492
      %v791 = vpop.permute.xlu0 %790
      %794 = vset.pattern.permute.xlu0 0
      %795 = vperm.xlu0 %794, %v493
      %v796 = vpop.permute.xlu0 %795
      %799 = vset.pattern.permute.xlu0 0
      %800 = vperm.xlu0 %799, %v494
      %v801 = vpop.permute.xlu0 %800
      %804 = vset.pattern.permute.xlu0 0
      %805 = vperm.xlu0 %804, %v495
      %v806 = vpop.permute.xlu0 %805
      %809 = vset.pattern.permute.xlu0 0
      %810 = vperm.xlu0 %809, %v496
      %v811 = vpop.permute.xlu0 %810
      %814 = vset.pattern.permute.xlu0 0
      %815 = vperm.xlu0 %814, %v497
      %v816 = vpop.permute.xlu0 %815
      %819 = vset.pattern.permute.xlu0 0
      %820 = vperm.xlu0 %819, %v498
      %v821 = vpop.permute.xlu0 %820
      %824 = vset.pattern.permute.xlu0 0
      %825 = vperm.xlu0 %824, %v499
      %v826 = vpop.permute.xlu0 %825
      %829 = vset.pattern.permute.xlu0 0
      %830 = vperm.xlu0 %829, %v500
      %v831 = vpop.permute.xlu0 %830
      %834 = vset.pattern.permute.xlu0 0
      %835 = vperm.xlu0 %834, %v501
      %v836 = vpop.permute.xlu0 %835
      %839 = vset.pattern.permute.xlu0 0
      %840 = vperm.xlu0 %839, %v502
      %v841 = vpop.permute.xlu0 %840
      %844 = vset.pattern.permute.xlu0 0
      %845 = vperm.xlu0 %844, %v503
      %v846 = vpop.permute.xlu0 %845
      %849 = vset.pattern.permute.xlu0 0
      %850 = vperm.xlu0 %849, %v504
      %v851 = vpop.permute.xlu0 %850
      %854 = vset.pattern.permute.xlu0 0
      %855 = vperm.xlu0 %854, %v505
      %v856 = vpop.permute.xlu0 %855
      %859 = vset.pattern.permute.xlu0 0
      %860 = vperm.xlu0 %859, %v506
      %v861 = vpop.permute.xlu0 %860
      %864 = vset.pattern.permute.xlu0 0
      %865 = vperm.xlu0 %864, %v507
      %v866 = vpop.permute.xlu0 %865
      %869 = vset.pattern.permute.xlu0 0
      %870 = vperm.xlu0 %869, %v508
      %v871 = vpop.permute.xlu0 %870
      %874 = vset.pattern.permute.xlu0 0
      %875 = vperm.xlu0 %874, %v509
      %v876 = vpop.permute.xlu0 %875
      %879 = vset.pattern.permute.xlu0 0
      %880 = vperm.xlu0 %879, %v510
      %v881 = vpop.permute.xlu0 %880
      %884 = vset.pattern.permute.xlu0 0
      %885 = vperm.xlu0 %884, %v511
      %v886 = vpop.permute.xlu0 %885
      %889 = vset.pattern.permute.xlu0 0
      %890 = vperm.xlu0 %889, %v512
      %v891 = vpop.permute.xlu0 %890
      %894 = vset.pattern.permute.xlu0 0
      %895 = vperm.xlu0 %894, %v513
      %v896 = vpop.permute.xlu0 %895
      %899 = vset.pattern.permute.xlu0 0
      %900 = vperm.xlu0 %899, %v514
      %v901 = vpop.permute.xlu0 %900
      %904 = vset.pattern.permute.xlu0 0
      %905 = vperm.xlu0 %904, %v515
      %v906 = vpop.permute.xlu0 %905
      %909 = vset.pattern.permute.xlu0 0
      %910 = vperm.xlu0 %909, %v516
      %v911 = vpop.permute.xlu0 %910
      %914 = vset.pattern.permute.xlu0 0
      %915 = vperm.xlu0 %914, %v517
      %v916 = vpop.permute.xlu0 %915
      %919 = vset.pattern.permute.xlu0 0
      %920 = vperm.xlu0 %919, %v518
      %v921 = vpop.permute.xlu0 %920
      %924 = vset.pattern.permute.xlu0 0
      %925 = vperm.xlu0 %924, %v519
      %v926 = vpop.permute.xlu0 %925
      %929 = vset.pattern.permute.xlu0 0
      %930 = vperm.xlu0 %929, %v520
      %v931 = vpop.permute.xlu0 %930
      %934 = vset.pattern.permute.xlu0 0
      %935 = vperm.xlu0 %934, %v521
      %v936 = vpop.permute.xlu0 %935
      %939 = vset.pattern.permute.xlu0 0
      %940 = vperm.xlu0 %939, %v522
      %v941 = vpop.permute.xlu0 %940
      %944 = vset.pattern.permute.xlu0 0
      %945 = vperm.xlu0 %944, %v523
      %v946 = vpop.permute.xlu0 %945
      %949 = vset.pattern.permute.xlu0 0
      %950 = vperm.xlu0 %949, %v524
      %v951 = vpop.permute.xlu0 %950
      %954 = vset.pattern.permute.xlu0 0
      %955 = vperm.xlu0 %954, %v525
      %v956 = vpop.permute.xlu0 %955
      %959 = vset.pattern.permute.xlu0 0
      %960 = vperm.xlu0 %959, %v526
      %v961 = vpop.permute.xlu0 %960
      %964 = vset.pattern.permute.xlu0 0
      %965 = vperm.xlu0 %964, %v527
      %v966 = vpop.permute.xlu0 %965
      %969 = vset.pattern.permute.xlu0 0
      %970 = vperm.xlu0 %969, %v528
      %v971 = vpop.permute.xlu0 %970
      %974 = vset.pattern.permute.xlu0 0
      %975 = vperm.xlu0 %974, %v529
      %v976 = vpop.permute.xlu0 %975
      %979 = vset.pattern.permute.xlu0 0
      %980 = vperm.xlu0 %979, %v530
      %v981 = vpop.permute.xlu0 %980
      %984 = vset.pattern.permute.xlu0 0
      %985 = vperm.xlu0 %984, %v531
      %v986 = vpop.permute.xlu0 %985
      %989 = vset.pattern.permute.xlu0 0
      %990 = vperm.xlu0 %989, %v532
      %v991 = vpop.permute.xlu0 %990
      %994 = vset.pattern.permute.xlu0 0
      %995 = vperm.xlu0 %994, %v533
      %v996 = vpop.permute.xlu0 %995
      %999 = vset.pattern.permute.xlu0 0
      %1000 = vperm.xlu0 %999, %v534
      %v1001 = vpop.permute.xlu0 %1000
      %1004 = vset.pattern.permute.xlu0 0
      %1005 = vperm.xlu0 %1004, %v535
      %v1006 = vpop.permute.xlu0 %1005
      %1009 = vset.pattern.permute.xlu0 0
      %1010 = vperm.xlu0 %1009, %v536
      %v1011 = vpop.permute.xlu0 %1010
      %1014 = vset.pattern.permute.xlu0 0
      %1015 = vperm.xlu0 %1014, %v537
      %v1016 = vpop.permute.xlu0 %1015
      %1019 = vset.pattern.permute.xlu0 0
      %1020 = vperm.xlu0 %1019, %v538
      %v1021 = vpop.permute.xlu0 %1020
      %1024 = vset.pattern.permute.xlu0 0
      %1025 = vperm.xlu0 %1024, %v539
      %v1026 = vpop.permute.xlu0 %1025
      %1029 = vset.pattern.permute.xlu0 0
      %1030 = vperm.xlu0 %1029, %v540
      %v1031 = vpop.permute.xlu0 %1030
      %1034 = vset.pattern.permute.xlu0 0
      %1035 = vperm.xlu0 %1034, %v541
      %v1036 = vpop.permute.xlu0 %1035
      %1039 = vset.pattern.permute.xlu0 0
      %1040 = vperm.xlu0 %1039, %v542
      %v1041 = vpop.permute.xlu0 %1040
      %1044 = vset.pattern.permute.xlu0 0
      %1045 = vperm.xlu0 %1044, %v543
      %v1046 = vpop.permute.xlu0 %1045
      %1049 = vset.pattern.permute.xlu0 0
      %1050 = vperm.xlu0 %1049, %v544
      %v1051 = vpop.permute.xlu0 %1050
      %1054 = vset.pattern.permute.xlu0 0
      %1055 = vperm.xlu0 %1054, %v545
      %v1056 = vpop.permute.xlu0 %1055
      %1059 = vset.pattern.permute.xlu0 0
      %1060 = vperm.xlu0 %1059, %v546
      %v1061 = vpop.permute.xlu0 %1060
      %1064 = vset.pattern.permute.xlu0 0
      %1065 = vperm.xlu0 %1064, %v547
      %v1066 = vpop.permute.xlu0 %1065
      %1069 = vset.pattern.permute.xlu0 0
      %1070 = vperm.xlu0 %1069, %v548
      %v1071 = vpop.permute.xlu0 %1070
      %1074 = vset.pattern.permute.xlu0 0
      %1075 = vperm.xlu0 %1074, %v549
      %v1076 = vpop.permute.xlu0 %1075
      %1079 = vset.pattern.permute.xlu0 0
      %1080 = vperm.xlu0 %1079, %v550
      %v1081 = vpop.permute.xlu0 %1080
      %1084 = vset.pattern.permute.xlu0 0
      %1085 = vperm.xlu0 %1084, %v551
      %v1086 = vpop.permute.xlu0 %1085
      %1089 = vset.pattern.permute.xlu0 0
      %1090 = vperm.xlu0 %1089, %v552
      %v1091 = vpop.permute.xlu0 %1090
      %1094 = vset.pattern.permute.xlu0 0
      %1095 = vperm.xlu0 %1094, %v553
      %v1096 = vpop.permute.xlu0 %1095
      %1099 = vset.pattern.permute.xlu0 0
      %1100 = vperm.xlu0 %1099, %v554
      %v1101 = vpop.permute.xlu0 %1100
      %1104 = vset.pattern.permute.xlu0 0
      %1105 = vperm.xlu0 %1104, %v555
      %v1106 = vpop.permute.xlu0 %1105
      %1109 = vset.pattern.permute.xlu0 0
      %1110 = vperm.xlu0 %1109, %v556
      %v1111 = vpop.permute.xlu0 %1110
      %1114 = vset.pattern.permute.xlu0 0
      %1115 = vperm.xlu0 %1114, %v557
      %v1116 = vpop.permute.xlu0 %1115
      %1119 = vset.pattern.permute.xlu0 0
      %1120 = vperm.xlu0 %1119, %v558
      %v1121 = vpop.permute.xlu0 %1120
      %1124 = vset.pattern.permute.xlu0 0
      %1125 = vperm.xlu0 %1124, %v559
      %v1126 = vpop.permute.xlu0 %1125
      %1129 = vset.pattern.permute.xlu0 0
      %1130 = vperm.xlu0 %1129, %v560
      %v1131 = vpop.permute.xlu0 %1130
      %1134 = vset.pattern.permute.xlu0 0
      %1135 = vperm.xlu0 %1134, %v561
      %v1136 = vpop.permute.xlu0 %1135
      %1139 = vset.pattern.permute.xlu0 0
      %1140 = vperm.xlu0 %1139, %v562
      %v1141 = vpop.permute.xlu0 %1140
      %1144 = vset.pattern.permute.xlu0 0
      %1145 = vperm.xlu0 %1144, %v563
      %v1146 = vpop.permute.xlu0 %1145
      %1149 = vset.pattern.permute.xlu0 0
      %1150 = vperm.xlu0 %1149, %v564
      %v1151 = vpop.permute.xlu0 %1150
      %1154 = vset.pattern.permute.xlu0 0
      %1155 = vperm.xlu0 %1154, %v565
      %v1156 = vpop.permute.xlu0 %1155
      %1159 = vset.pattern.permute.xlu0 0
      %1160 = vperm.xlu0 %1159, %v566
      %v1161 = vpop.permute.xlu0 %1160
      %1164 = vset.pattern.permute.xlu0 0
      %1165 = vperm.xlu0 %1164, %v567
      %v1166 = vpop.permute.xlu0 %1165
      %1169 = vset.pattern.permute.xlu0 0
      %1170 = vperm.xlu0 %1169, %v568
      %v1171 = vpop.permute.xlu0 %1170
      %1174 = vset.pattern.permute.xlu0 0
      %1175 = vperm.xlu0 %1174, %v569
      %v1176 = vpop.permute.xlu0 %1175
      %1179 = vset.pattern.permute.xlu0 0
      %1180 = vperm.xlu0 %1179, %v570
      %v1181 = vpop.permute.xlu0 %1180
      %1184 = vset.pattern.permute.xlu0 0
      %1185 = vperm.xlu0 %1184, %v571
      %v1186 = vpop.permute.xlu0 %1185
      %1189 = vset.pattern.permute.xlu0 0
      %1190 = vperm.xlu0 %1189, %v572
      %v1191 = vpop.permute.xlu0 %1190
      %1194 = vset.pattern.permute.xlu0 0
      %1195 = vperm.xlu0 %1194, %v573
      %v1196 = vpop.permute.xlu0 %1195
      %1199 = vset.pattern.permute.xlu0 0
      %1200 = vperm.xlu0 %1199, %v574
      %v1201 = vpop.permute.xlu0 %1200
      %1204 = vset.pattern.permute.xlu0 0
      %1205 = vperm.xlu0 %1204, %v575
      %v1206 = vpop.permute.xlu0 %1205
      %1209 = vset.pattern.permute.xlu0 0
      %1210 = vperm.xlu0 %1209, %v576
      %v1211 = vpop.permute.xlu0 %1210
      %1214 = vset.pattern.permute.xlu0 0
      %1215 = vperm.xlu0 %1214, %v577
      %v1216 = vpop.permute.xlu0 %1215
      %1219 = vset.pattern.permute.xlu0 0
      %1220 = vperm.xlu0 %1219, %v578
      %v1221 = vpop.permute.xlu0 %1220
      %1224 = vset.pattern.permute.xlu0 0
      %1225 = vperm.xlu0 %1224, %v579
      %v1226 = vpop.permute.xlu0 %1225
      %1229 = vset.pattern.permute.xlu0 0
      %1230 = vperm.xlu0 %1229, %v580
      %v1231 = vpop.permute.xlu0 %1230
      %1234 = vset.pattern.permute.xlu0 0
      %1235 = vperm.xlu0 %1234, %v581
      %v1236 = vpop.permute.xlu0 %1235
      %1239 = vset.pattern.permute.xlu0 0
      %1240 = vperm.xlu0 %1239, %v582
      %v1241 = vpop.permute.xlu0 %1240
      %1244 = vset.pattern.permute.xlu0 0
      %1245 = vperm.xlu0 %1244, %v583
      %v1246 = vpop.permute.xlu0 %1245
      %1249 = vset.pattern.permute.xlu0 0
      %1250 = vperm.xlu0 %1249, %v584
      %v1251 = vpop.permute.xlu0 %1250
      %1254 = vset.pattern.permute.xlu0 0
      %1255 = vperm.xlu0 %1254, %v585
      %v1256 = vpop.permute.xlu0 %1255
      %1259 = vset.pattern.permute.xlu0 0
      %1260 = vperm.xlu0 %1259, %v586
      %v1261 = vpop.permute.xlu0 %1260
      %1264 = vset.pattern.permute.xlu0 0
      %1265 = vperm.xlu0 %1264, %v587
      %v1266 = vpop.permute.xlu0 %1265
      %1269 = vset.pattern.permute.xlu0 0
      %1270 = vperm.xlu0 %1269, %v588
      %v1271 = vpop.permute.xlu0 %1270
      %1274 = vset.pattern.permute.xlu0 0
      %1275 = vperm.xlu0 %1274, %v589
      %v1276 = vpop.permute.xlu0 %1275
      %1279 = vset.pattern.permute.xlu0 0
      %1280 = vperm.xlu0 %1279, %v590
      %v1281 = vpop.permute.xlu0 %1280
      %1284 = vset.pattern.permute.xlu0 0
      %1285 = vperm.xlu0 %1284, %v591
      %v1286 = vpop.permute.xlu0 %1285
      %1289 = vset.pattern.permute.xlu0 0
      %1290 = vperm.xlu0 %1289, %v592
      %v1291 = vpop.permute.xlu0 %1290
      %1294 = vset.pattern.permute.xlu0 0
      %1295 = vperm.xlu0 %1294, %v593
      %v1296 = vpop.permute.xlu0 %1295
      %1299 = vset.pattern.permute.xlu0 0
      %1300 = vperm.xlu0 %1299, %v594
      %v1301 = vpop.permute.xlu0 %1300
      %1304 = vset.pattern.permute.xlu0 0
      %1305 = vperm.xlu0 %1304, %v595
      %v1306 = vpop.permute.xlu0 %1305
      %1309 = vset.pattern.permute.xlu0 0
      %1310 = vperm.xlu0 %1309, %v596
      %v1311 = vpop.permute.xlu0 %1310
      %1314 = vset.pattern.permute.xlu0 0
      %1315 = vperm.xlu0 %1314, %v597
      %v1316 = vpop.permute.xlu0 %1315
      %1319 = vset.pattern.permute.xlu0 0
      %1320 = vperm.xlu0 %1319, %v598
      %v1321 = vpop.permute.xlu0 %1320
      %1324 = vset.pattern.permute.xlu0 0
      %1325 = vperm.xlu0 %1324, %v599
      %v1326 = vpop.permute.xlu0 %1325
      %1329 = vset.pattern.permute.xlu0 0
      %1330 = vperm.xlu0 %1329, %v600
      %v1331 = vpop.permute.xlu0 %1330
      %1334 = vset.pattern.permute.xlu0 0
      %1335 = vperm.xlu0 %1334, %v601
      %v1336 = vpop.permute.xlu0 %1335
      %1339 = vset.pattern.permute.xlu0 0
      %1340 = vperm.xlu0 %1339, %v602
      %v1341 = vpop.permute.xlu0 %1340
      %1344 = vset.pattern.permute.xlu0 0
      %1345 = vperm.xlu0 %1344, %v603
      %v1346 = vpop.permute.xlu0 %1345
      %1349 = vset.pattern.permute.xlu0 0
      %1350 = vperm.xlu0 %1349, %v604
      %v1351 = vpop.permute.xlu0 %1350
      %1354 = vset.pattern.permute.xlu0 0
      %1355 = vperm.xlu0 %1354, %v605
      %v1356 = vpop.permute.xlu0 %1355
      %1359 = vset.pattern.permute.xlu0 0
      %1360 = vperm.xlu0 %1359, %v606
      %v1361 = vpop.permute.xlu0 %1360
      %1364 = vset.pattern.permute.xlu0 0
      %1365 = vperm.xlu0 %1364, %v607
      %v1366 = vpop.permute.xlu0 %1365
      %1369 = vset.pattern.permute.xlu0 0
      %1370 = vperm.xlu0 %1369, %v608
      %v1371 = vpop.permute.xlu0 %1370
      %1374 = vset.pattern.permute.xlu0 0
      %1375 = vperm.xlu0 %1374, %v609
      %v1376 = vpop.permute.xlu0 %1375
      %1379 = vset.pattern.permute.xlu0 0
      %1380 = vperm.xlu0 %1379, %v610
      %v1381 = vpop.permute.xlu0 %1380
      %1384 = vset.pattern.permute.xlu0 0
      %1385 = vperm.xlu0 %1384, %v611
      %v1386 = vpop.permute.xlu0 %1385
      %1389 = vset.pattern.permute.xlu0 0
      %1390 = vperm.xlu0 %1389, %v612
      %v1391 = vpop.permute.xlu0 %1390
      %1394 = vset.pattern.permute.xlu0 0
      %1395 = vperm.xlu0 %1394, %v613
      %v1396 = vpop.permute.xlu0 %1395
      %1399 = vset.pattern.permute.xlu0 0
      %1400 = vperm.xlu0 %1399, %v614
      %v1401 = vpop.permute.xlu0 %1400
      %1404 = vset.pattern.permute.xlu0 0
      %1405 = vperm.xlu0 %1404, %v615
      %v1406 = vpop.permute.xlu0 %1405
      %1409 = vset.pattern.permute.xlu0 0
      %1410 = vperm.xlu0 %1409, %v616
      %v1411 = vpop.permute.xlu0 %1410
      %1414 = vset.pattern.permute.xlu0 0
      %1415 = vperm.xlu0 %1414, %v617
      %v1416 = vpop.permute.xlu0 %1415
      %v1419 = vlaneseq
      %v1420 = vshrl.u32 %v1419, 7
      %v1421 = vsub.s32 0, %v1420
      %v1422 = vrot.slane %v457, %v1421
      %v1423 = vlaneseq
      %v1424 = vshrl.u32 %v1423, 7
      %v1425 = vsub.s32 4, %v1424
      %v1426 = vrot.slane %v457, %v1425
      %v1429 = vlaneseq
      %v1430 = vshrl.u32 %v1429, 7
      %v1431 = vsub.s32 0, %v1430
      %v1432 = vrot.slane %v1422, %v1431
      %v1433 = vlaneseq
      %v1434 = vshrl.u32 %v1433, 7
      %v1435 = vsub.s32 0, %v1434
      %v1436 = vrot.slane %v1426, %v1435
      %v1437 = vmul.f32 %v621, %v1432
      %v1438 = vmul.f32 %v621, %v1436
      %v1439 = vmul.f32 %v626, %v1432
      %v1440 = vmul.f32 %v626, %v1436
      %v1441 = vmul.f32 %v631, %v1432
      %v1442 = vmul.f32 %v631, %v1436
      %v1443 = vmul.f32 %v636, %v1432
      %v1444 = vmul.f32 %v636, %v1436
      %v1445 = vmul.f32 %v641, %v1432
      %v1446 = vmul.f32 %v641, %v1436
      %v1447 = vmul.f32 %v646, %v1432
      %v1448 = vmul.f32 %v646, %v1436
      %v1449 = vmul.f32 %v651, %v1432
      %v1450 = vmul.f32 %v651, %v1436
      %v1451 = vmul.f32 %v656, %v1432
      %v1452 = vmul.f32 %v656, %v1436
      %v1453 = vmul.f32 %v661, %v1432
      %v1454 = vmul.f32 %v661, %v1436
      %v1455 = vmul.f32 %v666, %v1432
      %v1456 = vmul.f32 %v666, %v1436
      %v1457 = vmul.f32 %v671, %v1432
      %v1458 = vmul.f32 %v671, %v1436
      %v1459 = vmul.f32 %v676, %v1432
      %v1460 = vmul.f32 %v676, %v1436
      %v1461 = vmul.f32 %v681, %v1432
      %v1462 = vmul.f32 %v681, %v1436
      %v1463 = vmul.f32 %v686, %v1432
      %v1464 = vmul.f32 %v686, %v1436
      %v1465 = vmul.f32 %v691, %v1432
      %v1466 = vmul.f32 %v691, %v1436
      %v1467 = vmul.f32 %v696, %v1432
      %v1468 = vmul.f32 %v696, %v1436
      %v1469 = vmul.f32 %v701, %v1432
      %v1470 = vmul.f32 %v701, %v1436
      %v1471 = vmul.f32 %v706, %v1432
      %v1472 = vmul.f32 %v706, %v1436
      %v1473 = vmul.f32 %v711, %v1432
      %v1474 = vmul.f32 %v711, %v1436
      %v1475 = vmul.f32 %v716, %v1432
      %v1476 = vmul.f32 %v716, %v1436
      %v1477 = vmul.f32 %v721, %v1432
      %v1478 = vmul.f32 %v721, %v1436
      %v1479 = vmul.f32 %v726, %v1432
      %v1480 = vmul.f32 %v726, %v1436
      %v1481 = vmul.f32 %v731, %v1432
      %v1482 = vmul.f32 %v731, %v1436
      %v1483 = vmul.f32 %v736, %v1432
      %v1484 = vmul.f32 %v736, %v1436
      %v1485 = vmul.f32 %v741, %v1432
      %v1486 = vmul.f32 %v741, %v1436
      %v1487 = vmul.f32 %v746, %v1432
      %v1488 = vmul.f32 %v746, %v1436
      %v1489 = vmul.f32 %v751, %v1432
      %v1490 = vmul.f32 %v751, %v1436
      %v1491 = vmul.f32 %v756, %v1432
      %v1492 = vmul.f32 %v756, %v1436
      %v1493 = vmul.f32 %v761, %v1432
      %v1494 = vmul.f32 %v761, %v1436
      %v1495 = vmul.f32 %v766, %v1432
      %v1496 = vmul.f32 %v766, %v1436
      %v1497 = vmul.f32 %v771, %v1432
      %v1498 = vmul.f32 %v771, %v1436
      %v1499 = vmul.f32 %v776, %v1432
      %v1500 = vmul.f32 %v776, %v1436
      %v1501 = vmul.f32 %v781, %v1432
      %v1502 = vmul.f32 %v781, %v1436
      %v1503 = vmul.f32 %v786, %v1432
      %v1504 = vmul.f32 %v786, %v1436
      %v1505 = vmul.f32 %v791, %v1432
      %v1506 = vmul.f32 %v791, %v1436
      %v1507 = vmul.f32 %v796, %v1432
      %v1508 = vmul.f32 %v796, %v1436
      %v1509 = vmul.f32 %v801, %v1432
      %v1510 = vmul.f32 %v801, %v1436
      %v1511 = vmul.f32 %v806, %v1432
      %v1512 = vmul.f32 %v806, %v1436
      %v1513 = vmul.f32 %v811, %v1432
      %v1514 = vmul.f32 %v811, %v1436
      %v1515 = vmul.f32 %v816, %v1432
      %v1516 = vmul.f32 %v816, %v1436
      %v1517 = vmul.f32 %v821, %v1432
      %v1518 = vmul.f32 %v821, %v1436
      %v1519 = vmul.f32 %v826, %v1432
      %v1520 = vmul.f32 %v826, %v1436
      %v1521 = vmul.f32 %v831, %v1432
      %v1522 = vmul.f32 %v831, %v1436
      %v1523 = vmul.f32 %v836, %v1432
      %v1524 = vmul.f32 %v836, %v1436
      %v1525 = vmul.f32 %v841, %v1432
      %v1526 = vmul.f32 %v841, %v1436
      %v1527 = vmul.f32 %v846, %v1432
      %v1528 = vmul.f32 %v846, %v1436
      %v1529 = vmul.f32 %v851, %v1432
      %v1530 = vmul.f32 %v851, %v1436
      %v1531 = vmul.f32 %v856, %v1432
      %v1532 = vmul.f32 %v856, %v1436
      %v1533 = vmul.f32 %v861, %v1432
      %v1534 = vmul.f32 %v861, %v1436
      %v1535 = vmul.f32 %v866, %v1432
      %v1536 = vmul.f32 %v866, %v1436
      %v1537 = vmul.f32 %v871, %v1432
      %v1538 = vmul.f32 %v871, %v1436
      %v1539 = vmul.f32 %v876, %v1432
      %v1540 = vmul.f32 %v876, %v1436
      %v1541 = vmul.f32 %v881, %v1432
      %v1542 = vmul.f32 %v881, %v1436
      %v1543 = vmul.f32 %v886, %v1432
      %v1544 = vmul.f32 %v886, %v1436
      %v1545 = vmul.f32 %v891, %v1432
      %v1546 = vmul.f32 %v891, %v1436
      %v1547 = vmul.f32 %v896, %v1432
      %v1548 = vmul.f32 %v896, %v1436
      %v1549 = vmul.f32 %v901, %v1432
      %v1550 = vmul.f32 %v901, %v1436
      %v1551 = vmul.f32 %v906, %v1432
      %v1552 = vmul.f32 %v906, %v1436
      %v1553 = vmul.f32 %v911, %v1432
      %v1554 = vmul.f32 %v911, %v1436
      %v1555 = vmul.f32 %v916, %v1432
      %v1556 = vmul.f32 %v916, %v1436
      %v1557 = vmul.f32 %v921, %v1432
      %v1558 = vmul.f32 %v921, %v1436
      %v1559 = vmul.f32 %v926, %v1432
      %v1560 = vmul.f32 %v926, %v1436
      %v1561 = vmul.f32 %v931, %v1432
      %v1562 = vmul.f32 %v931, %v1436
      %v1563 = vmul.f32 %v936, %v1432
      %v1564 = vmul.f32 %v936, %v1436
      %v1565 = vmul.f32 %v941, %v1432
      %v1566 = vmul.f32 %v941, %v1436
      %v1567 = vmul.f32 %v946, %v1432
      %v1568 = vmul.f32 %v946, %v1436
      %v1569 = vmul.f32 %v951, %v1432
      %v1570 = vmul.f32 %v951, %v1436
      %v1571 = vmul.f32 %v956, %v1432
      %v1572 = vmul.f32 %v956, %v1436
      %v1573 = vmul.f32 %v961, %v1432
      %v1574 = vmul.f32 %v961, %v1436
      %v1575 = vmul.f32 %v966, %v1432
      %v1576 = vmul.f32 %v966, %v1436
      %v1577 = vmul.f32 %v971, %v1432
      %v1578 = vmul.f32 %v971, %v1436
      %v1579 = vmul.f32 %v976, %v1432
      %v1580 = vmul.f32 %v976, %v1436
      %v1581 = vmul.f32 %v981, %v1432
      %v1582 = vmul.f32 %v981, %v1436
      %v1583 = vmul.f32 %v986, %v1432
      %v1584 = vmul.f32 %v986, %v1436
      %v1585 = vmul.f32 %v991, %v1432
      %v1586 = vmul.f32 %v991, %v1436
      %v1587 = vmul.f32 %v996, %v1432
      %v1588 = vmul.f32 %v996, %v1436
      %v1589 = vmul.f32 %v1001, %v1432
      %v1590 = vmul.f32 %v1001, %v1436
      %v1591 = vmul.f32 %v1006, %v1432
      %v1592 = vmul.f32 %v1006, %v1436
      %v1593 = vmul.f32 %v1011, %v1432
      %v1594 = vmul.f32 %v1011, %v1436
      %v1595 = vmul.f32 %v1016, %v1432
      %v1596 = vmul.f32 %v1016, %v1436
      %v1597 = vmul.f32 %v1021, %v1432
      %v1598 = vmul.f32 %v1021, %v1436
      %v1599 = vmul.f32 %v1026, %v1432
      %v1600 = vmul.f32 %v1026, %v1436
      %v1601 = vmul.f32 %v1031, %v1432
      %v1602 = vmul.f32 %v1031, %v1436
      %v1603 = vmul.f32 %v1036, %v1432
      %v1604 = vmul.f32 %v1036, %v1436
      %v1605 = vmul.f32 %v1041, %v1432
      %v1606 = vmul.f32 %v1041, %v1436
      %v1607 = vmul.f32 %v1046, %v1432
      %v1608 = vmul.f32 %v1046, %v1436
      %v1609 = vmul.f32 %v1051, %v1432
      %v1610 = vmul.f32 %v1051, %v1436
      %v1611 = vmul.f32 %v1056, %v1432
      %v1612 = vmul.f32 %v1056, %v1436
      %v1613 = vmul.f32 %v1061, %v1432
      %v1614 = vmul.f32 %v1061, %v1436
      %v1615 = vmul.f32 %v1066, %v1432
      %v1616 = vmul.f32 %v1066, %v1436
      %v1617 = vmul.f32 %v1071, %v1432
      %v1618 = vmul.f32 %v1071, %v1436
      %v1619 = vmul.f32 %v1076, %v1432
      %v1620 = vmul.f32 %v1076, %v1436
      %v1621 = vmul.f32 %v1081, %v1432
      %v1622 = vmul.f32 %v1081, %v1436
      %v1623 = vmul.f32 %v1086, %v1432
      %v1624 = vmul.f32 %v1086, %v1436
      %v1625 = vmul.f32 %v1091, %v1432
      %v1626 = vmul.f32 %v1091, %v1436
      %v1627 = vmul.f32 %v1096, %v1432
      %v1628 = vmul.f32 %v1096, %v1436
      %v1629 = vmul.f32 %v1101, %v1432
      %v1630 = vmul.f32 %v1101, %v1436
      %v1631 = vmul.f32 %v1106, %v1432
      %v1632 = vmul.f32 %v1106, %v1436
      %v1633 = vmul.f32 %v1111, %v1432
      %v1634 = vmul.f32 %v1111, %v1436
      %v1635 = vmul.f32 %v1116, %v1432
      %v1636 = vmul.f32 %v1116, %v1436
      %v1637 = vmul.f32 %v1121, %v1432
      %v1638 = vmul.f32 %v1121, %v1436
      %v1639 = vmul.f32 %v1126, %v1432
      %v1640 = vmul.f32 %v1126, %v1436
      %v1641 = vmul.f32 %v1131, %v1432
      %v1642 = vmul.f32 %v1131, %v1436
      %v1643 = vmul.f32 %v1136, %v1432
      %v1644 = vmul.f32 %v1136, %v1436
      %v1645 = vmul.f32 %v1141, %v1432
      %v1646 = vmul.f32 %v1141, %v1436
      %v1647 = vmul.f32 %v1146, %v1432
      %v1648 = vmul.f32 %v1146, %v1436
      %v1649 = vmul.f32 %v1151, %v1432
      %v1650 = vmul.f32 %v1151, %v1436
      %v1651 = vmul.f32 %v1156, %v1432
      %v1652 = vmul.f32 %v1156, %v1436
      %v1653 = vmul.f32 %v1161, %v1432
      %v1654 = vmul.f32 %v1161, %v1436
      %v1655 = vmul.f32 %v1166, %v1432
      %v1656 = vmul.f32 %v1166, %v1436
      %v1657 = vmul.f32 %v1171, %v1432
      %v1658 = vmul.f32 %v1171, %v1436
      %v1659 = vmul.f32 %v1176, %v1432
      %v1660 = vmul.f32 %v1176, %v1436
      %v1661 = vmul.f32 %v1181, %v1432
      %v1662 = vmul.f32 %v1181, %v1436
      %v1663 = vmul.f32 %v1186, %v1432
      %v1664 = vmul.f32 %v1186, %v1436
      %v1665 = vmul.f32 %v1191, %v1432
      %v1666 = vmul.f32 %v1191, %v1436
      %v1667 = vmul.f32 %v1196, %v1432
      %v1668 = vmul.f32 %v1196, %v1436
      %v1669 = vmul.f32 %v1201, %v1432
      %v1670 = vmul.f32 %v1201, %v1436
      %v1671 = vmul.f32 %v1206, %v1432
      %v1672 = vmul.f32 %v1206, %v1436
      %v1673 = vmul.f32 %v1211, %v1432
      %v1674 = vmul.f32 %v1211, %v1436
      %v1675 = vmul.f32 %v1216, %v1432
      %v1676 = vmul.f32 %v1216, %v1436
      %v1677 = vmul.f32 %v1221, %v1432
      %v1678 = vmul.f32 %v1221, %v1436
      %v1679 = vmul.f32 %v1226, %v1432
      %v1680 = vmul.f32 %v1226, %v1436
      %v1681 = vmul.f32 %v1231, %v1432
      %v1682 = vmul.f32 %v1231, %v1436
      %v1683 = vmul.f32 %v1236, %v1432
      %v1684 = vmul.f32 %v1236, %v1436
      %v1685 = vmul.f32 %v1241, %v1432
      %v1686 = vmul.f32 %v1241, %v1436
      %v1687 = vmul.f32 %v1246, %v1432
      %v1688 = vmul.f32 %v1246, %v1436
      %v1689 = vmul.f32 %v1251, %v1432
      %v1690 = vmul.f32 %v1251, %v1436
      %v1691 = vmul.f32 %v1256, %v1432
      %v1692 = vmul.f32 %v1256, %v1436
      %v1693 = vmul.f32 %v1261, %v1432
      %v1694 = vmul.f32 %v1261, %v1436
      %v1695 = vmul.f32 %v1266, %v1432
      %v1696 = vmul.f32 %v1266, %v1436
      %v1697 = vmul.f32 %v1271, %v1432
      %v1698 = vmul.f32 %v1271, %v1436
      %v1699 = vmul.f32 %v1276, %v1432
      %v1700 = vmul.f32 %v1276, %v1436
      %v1701 = vmul.f32 %v1281, %v1432
      %v1702 = vmul.f32 %v1281, %v1436
      %v1703 = vmul.f32 %v1286, %v1432
      %v1704 = vmul.f32 %v1286, %v1436
      %v1705 = vmul.f32 %v1291, %v1432
      %v1706 = vmul.f32 %v1291, %v1436
      %v1707 = vmul.f32 %v1296, %v1432
      %v1708 = vmul.f32 %v1296, %v1436
      %v1709 = vmul.f32 %v1301, %v1432
      %v1710 = vmul.f32 %v1301, %v1436
      %v1711 = vmul.f32 %v1306, %v1432
      %v1712 = vmul.f32 %v1306, %v1436
      %v1713 = vmul.f32 %v1311, %v1432
      %v1714 = vmul.f32 %v1311, %v1436
      %v1715 = vmul.f32 %v1316, %v1432
      %v1716 = vmul.f32 %v1316, %v1436
      %v1717 = vmul.f32 %v1321, %v1432
      %v1718 = vmul.f32 %v1321, %v1436
      %v1719 = vmul.f32 %v1326, %v1432
      %v1720 = vmul.f32 %v1326, %v1436
      %v1721 = vmul.f32 %v1331, %v1432
      %v1722 = vmul.f32 %v1331, %v1436
      %v1723 = vmul.f32 %v1336, %v1432
      %v1724 = vmul.f32 %v1336, %v1436
      %v1725 = vmul.f32 %v1341, %v1432
      %v1726 = vmul.f32 %v1341, %v1436
      %v1727 = vmul.f32 %v1346, %v1432
      %v1728 = vmul.f32 %v1346, %v1436
      %v1729 = vmul.f32 %v1351, %v1432
      %v1730 = vmul.f32 %v1351, %v1436
      %v1731 = vmul.f32 %v1356, %v1432
      %v1732 = vmul.f32 %v1356, %v1436
      %v1733 = vmul.f32 %v1361, %v1432
      %v1734 = vmul.f32 %v1361, %v1436
      %v1735 = vmul.f32 %v1366, %v1432
      %v1736 = vmul.f32 %v1366, %v1436
      %v1737 = vmul.f32 %v1371, %v1432
      %v1738 = vmul.f32 %v1371, %v1436
      %v1739 = vmul.f32 %v1376, %v1432
      %v1740 = vmul.f32 %v1376, %v1436
      %v1741 = vmul.f32 %v1381, %v1432
      %v1742 = vmul.f32 %v1381, %v1436
      %v1743 = vmul.f32 %v1386, %v1432
      %v1744 = vmul.f32 %v1386, %v1436
      %v1745 = vmul.f32 %v1391, %v1432
      %v1746 = vmul.f32 %v1391, %v1436
      %v1747 = vmul.f32 %v1396, %v1432
      %v1748 = vmul.f32 %v1396, %v1436
      %v1749 = vmul.f32 %v1401, %v1432
      %v1750 = vmul.f32 %v1401, %v1436
      %v1751 = vmul.f32 %v1406, %v1432
      %v1752 = vmul.f32 %v1406, %v1436
      %v1753 = vmul.f32 %v1411, %v1432
      %v1754 = vmul.f32 %v1411, %v1436
      %v1755 = vmul.f32 %v1416, %v1432
      %v1756 = vmul.f32 %v1416, %v1436
      %1757 = vset.pattern.permute.xlu0 1
      %1758 = vperm.xlu0 %1757, %v458
      %v1759 = vpop.permute.xlu0 %1758
      %1761 = vset.pattern.permute.xlu0 1
      %1762 = vperm.xlu0 %1761, %v459
      %v1763 = vpop.permute.xlu0 %1762
      %1765 = vset.pattern.permute.xlu0 1
      %1766 = vperm.xlu0 %1765, %v460
      %v1767 = vpop.permute.xlu0 %1766
      %1769 = vset.pattern.permute.xlu0 1
      %1770 = vperm.xlu0 %1769, %v461
      %v1771 = vpop.permute.xlu0 %1770
      %1773 = vset.pattern.permute.xlu0 1
      %1774 = vperm.xlu0 %1773, %v462
      %v1775 = vpop.permute.xlu0 %1774
      %1777 = vset.pattern.permute.xlu0 1
      %1778 = vperm.xlu0 %1777, %v463
      %v1779 = vpop.permute.xlu0 %1778
      %1781 = vset.pattern.permute.xlu0 1
      %1782 = vperm.xlu0 %1781, %v464
      %v1783 = vpop.permute.xlu0 %1782
      %1785 = vset.pattern.permute.xlu0 1
      %1786 = vperm.xlu0 %1785, %v465
      %v1787 = vpop.permute.xlu0 %1786
      %1789 = vset.pattern.permute.xlu0 1
      %1790 = vperm.xlu0 %1789, %v466
      %v1791 = vpop.permute.xlu0 %1790
      %1793 = vset.pattern.permute.xlu0 1
      %1794 = vperm.xlu0 %1793, %v467
      %v1795 = vpop.permute.xlu0 %1794
      %1797 = vset.pattern.permute.xlu0 1
      %1798 = vperm.xlu0 %1797, %v468
      %v1799 = vpop.permute.xlu0 %1798
      %1801 = vset.pattern.permute.xlu0 1
      %1802 = vperm.xlu0 %1801, %v469
      %v1803 = vpop.permute.xlu0 %1802
      %1805 = vset.pattern.permute.xlu0 1
      %1806 = vperm.xlu0 %1805, %v470
      %v1807 = vpop.permute.xlu0 %1806
      %1809 = vset.pattern.permute.xlu0 1
      %1810 = vperm.xlu0 %1809, %v471
      %v1811 = vpop.permute.xlu0 %1810
      %1813 = vset.pattern.permute.xlu0 1
      %1814 = vperm.xlu0 %1813, %v472
      %v1815 = vpop.permute.xlu0 %1814
      %1817 = vset.pattern.permute.xlu0 1
      %1818 = vperm.xlu0 %1817, %v473
      %v1819 = vpop.permute.xlu0 %1818
      %1821 = vset.pattern.permute.xlu0 1
      %1822 = vperm.xlu0 %1821, %v474
      %v1823 = vpop.permute.xlu0 %1822
      %1825 = vset.pattern.permute.xlu0 1
      %1826 = vperm.xlu0 %1825, %v475
      %v1827 = vpop.permute.xlu0 %1826
      %1829 = vset.pattern.permute.xlu0 1
      %1830 = vperm.xlu0 %1829, %v476
      %v1831 = vpop.permute.xlu0 %1830
      %1833 = vset.pattern.permute.xlu0 1
      %1834 = vperm.xlu0 %1833, %v477
      %v1835 = vpop.permute.xlu0 %1834
      %1837 = vset.pattern.permute.xlu0 1
      %1838 = vperm.xlu0 %1837, %v478
      %v1839 = vpop.permute.xlu0 %1838
      %1841 = vset.pattern.permute.xlu0 1
      %1842 = vperm.xlu0 %1841, %v479
      %v1843 = vpop.permute.xlu0 %1842
      %1845 = vset.pattern.permute.xlu0 1
      %1846 = vperm.xlu0 %1845, %v480
      %v1847 = vpop.permute.xlu0 %1846
      %1849 = vset.pattern.permute.xlu0 1
      %1850 = vperm.xlu0 %1849, %v481
      %v1851 = vpop.permute.xlu0 %1850
      %1853 = vset.pattern.permute.xlu0 1
      %1854 = vperm.xlu0 %1853, %v482
      %v1855 = vpop.permute.xlu0 %1854
      %1857 = vset.pattern.permute.xlu0 1
      %1858 = vperm.xlu0 %1857, %v483
      %v1859 = vpop.permute.xlu0 %1858
      %1861 = vset.pattern.permute.xlu0 1
      %1862 = vperm.xlu0 %1861, %v484
      %v1863 = vpop.permute.xlu0 %1862
      %1865 = vset.pattern.permute.xlu0 1
      %1866 = vperm.xlu0 %1865, %v485
      %v1867 = vpop.permute.xlu0 %1866
      %1869 = vset.pattern.permute.xlu0 1
      %1870 = vperm.xlu0 %1869, %v486
      %v1871 = vpop.permute.xlu0 %1870
      %1873 = vset.pattern.permute.xlu0 1
      %1874 = vperm.xlu0 %1873, %v487
      %v1875 = vpop.permute.xlu0 %1874
      %1877 = vset.pattern.permute.xlu0 1
      %1878 = vperm.xlu0 %1877, %v488
      %v1879 = vpop.permute.xlu0 %1878
      %1881 = vset.pattern.permute.xlu0 1
      %1882 = vperm.xlu0 %1881, %v489
      %v1883 = vpop.permute.xlu0 %1882
      %1885 = vset.pattern.permute.xlu0 1
      %1886 = vperm.xlu0 %1885, %v490
      %v1887 = vpop.permute.xlu0 %1886
      %1889 = vset.pattern.permute.xlu0 1
      %1890 = vperm.xlu0 %1889, %v491
      %v1891 = vpop.permute.xlu0 %1890
      %1893 = vset.pattern.permute.xlu0 1
      %1894 = vperm.xlu0 %1893, %v492
      %v1895 = vpop.permute.xlu0 %1894
      %1897 = vset.pattern.permute.xlu0 1
      %1898 = vperm.xlu0 %1897, %v493
      %v1899 = vpop.permute.xlu0 %1898
      %1901 = vset.pattern.permute.xlu0 1
      %1902 = vperm.xlu0 %1901, %v494
      %v1903 = vpop.permute.xlu0 %1902
      %1905 = vset.pattern.permute.xlu0 1
      %1906 = vperm.xlu0 %1905, %v495
      %v1907 = vpop.permute.xlu0 %1906
      %1909 = vset.pattern.permute.xlu0 1
      %1910 = vperm.xlu0 %1909, %v496
      %v1911 = vpop.permute.xlu0 %1910
      %1913 = vset.pattern.permute.xlu0 1
      %1914 = vperm.xlu0 %1913, %v497
      %v1915 = vpop.permute.xlu0 %1914
      %1917 = vset.pattern.permute.xlu0 1
      %1918 = vperm.xlu0 %1917, %v498
      %v1919 = vpop.permute.xlu0 %1918
      %1921 = vset.pattern.permute.xlu0 1
      %1922 = vperm.xlu0 %1921, %v499
      %v1923 = vpop.permute.xlu0 %1922
      %1925 = vset.pattern.permute.xlu0 1
      %1926 = vperm.xlu0 %1925, %v500
      %v1927 = vpop.permute.xlu0 %1926
      %1929 = vset.pattern.permute.xlu0 1
      %1930 = vperm.xlu0 %1929, %v501
      %v1931 = vpop.permute.xlu0 %1930
      %1933 = vset.pattern.permute.xlu0 1
      %1934 = vperm.xlu0 %1933, %v502
      %v1935 = vpop.permute.xlu0 %1934
      %1937 = vset.pattern.permute.xlu0 1
      %1938 = vperm.xlu0 %1937, %v503
      %v1939 = vpop.permute.xlu0 %1938
      %1941 = vset.pattern.permute.xlu0 1
      %1942 = vperm.xlu0 %1941, %v504
      %v1943 = vpop.permute.xlu0 %1942
      %1945 = vset.pattern.permute.xlu0 1
      %1946 = vperm.xlu0 %1945, %v505
      %v1947 = vpop.permute.xlu0 %1946
      %1949 = vset.pattern.permute.xlu0 1
      %1950 = vperm.xlu0 %1949, %v506
      %v1951 = vpop.permute.xlu0 %1950
      %1953 = vset.pattern.permute.xlu0 1
      %1954 = vperm.xlu0 %1953, %v507
      %v1955 = vpop.permute.xlu0 %1954
      %1957 = vset.pattern.permute.xlu0 1
      %1958 = vperm.xlu0 %1957, %v508
      %v1959 = vpop.permute.xlu0 %1958
      %1961 = vset.pattern.permute.xlu0 1
      %1962 = vperm.xlu0 %1961, %v509
      %v1963 = vpop.permute.xlu0 %1962
      %1965 = vset.pattern.permute.xlu0 1
      %1966 = vperm.xlu0 %1965, %v510
      %v1967 = vpop.permute.xlu0 %1966
      %1969 = vset.pattern.permute.xlu0 1
      %1970 = vperm.xlu0 %1969, %v511
      %v1971 = vpop.permute.xlu0 %1970
      %1973 = vset.pattern.permute.xlu0 1
      %1974 = vperm.xlu0 %1973, %v512
      %v1975 = vpop.permute.xlu0 %1974
      %1977 = vset.pattern.permute.xlu0 1
      %1978 = vperm.xlu0 %1977, %v513
      %v1979 = vpop.permute.xlu0 %1978
      %1981 = vset.pattern.permute.xlu0 1
      %1982 = vperm.xlu0 %1981, %v514
      %v1983 = vpop.permute.xlu0 %1982
      %1985 = vset.pattern.permute.xlu0 1
      %1986 = vperm.xlu0 %1985, %v515
      %v1987 = vpop.permute.xlu0 %1986
      %1989 = vset.pattern.permute.xlu0 1
      %1990 = vperm.xlu0 %1989, %v516
      %v1991 = vpop.permute.xlu0 %1990
      %1993 = vset.pattern.permute.xlu0 1
      %1994 = vperm.xlu0 %1993, %v517
      %v1995 = vpop.permute.xlu0 %1994
      %1997 = vset.pattern.permute.xlu0 1
      %1998 = vperm.xlu0 %1997, %v518
      %v1999 = vpop.permute.xlu0 %1998
      %2001 = vset.pattern.permute.xlu0 1
      %2002 = vperm.xlu0 %2001, %v519
      %v2003 = vpop.permute.xlu0 %2002
      %2005 = vset.pattern.permute.xlu0 1
      %2006 = vperm.xlu0 %2005, %v520
      %v2007 = vpop.permute.xlu0 %2006
      %2009 = vset.pattern.permute.xlu0 1
      %2010 = vperm.xlu0 %2009, %v521
      %v2011 = vpop.permute.xlu0 %2010
      %2013 = vset.pattern.permute.xlu0 1
      %2014 = vperm.xlu0 %2013, %v522
      %v2015 = vpop.permute.xlu0 %2014
      %2017 = vset.pattern.permute.xlu0 1
      %2018 = vperm.xlu0 %2017, %v523
      %v2019 = vpop.permute.xlu0 %2018
      %2021 = vset.pattern.permute.xlu0 1
      %2022 = vperm.xlu0 %2021, %v524
      %v2023 = vpop.permute.xlu0 %2022
      %2025 = vset.pattern.permute.xlu0 1
      %2026 = vperm.xlu0 %2025, %v525
      %v2027 = vpop.permute.xlu0 %2026
      %2029 = vset.pattern.permute.xlu0 1
      %2030 = vperm.xlu0 %2029, %v526
      %v2031 = vpop.permute.xlu0 %2030
      %2033 = vset.pattern.permute.xlu0 1
      %2034 = vperm.xlu0 %2033, %v527
      %v2035 = vpop.permute.xlu0 %2034
      %2037 = vset.pattern.permute.xlu0 1
      %2038 = vperm.xlu0 %2037, %v528
      %v2039 = vpop.permute.xlu0 %2038
      %2041 = vset.pattern.permute.xlu0 1
      %2042 = vperm.xlu0 %2041, %v529
      %v2043 = vpop.permute.xlu0 %2042
      %2045 = vset.pattern.permute.xlu0 1
      %2046 = vperm.xlu0 %2045, %v530
      %v2047 = vpop.permute.xlu0 %2046
      %2049 = vset.pattern.permute.xlu0 1
      %2050 = vperm.xlu0 %2049, %v531
      %v2051 = vpop.permute.xlu0 %2050
      %2053 = vset.pattern.permute.xlu0 1
      %2054 = vperm.xlu0 %2053, %v532
      %v2055 = vpop.permute.xlu0 %2054
      %2057 = vset.pattern.permute.xlu0 1
      %2058 = vperm.xlu0 %2057, %v533
      %v2059 = vpop.permute.xlu0 %2058
      %2061 = vset.pattern.permute.xlu0 1
      %2062 = vperm.xlu0 %2061, %v534
      %v2063 = vpop.permute.xlu0 %2062
      %2065 = vset.pattern.permute.xlu0 1
      %2066 = vperm.xlu0 %2065, %v535
      %v2067 = vpop.permute.xlu0 %2066
      %2069 = vset.pattern.permute.xlu0 1
      %2070 = vperm.xlu0 %2069, %v536
      %v2071 = vpop.permute.xlu0 %2070
      %2073 = vset.pattern.permute.xlu0 1
      %2074 = vperm.xlu0 %2073, %v537
      %v2075 = vpop.permute.xlu0 %2074
      %2077 = vset.pattern.permute.xlu0 1
      %2078 = vperm.xlu0 %2077, %v538
      %v2079 = vpop.permute.xlu0 %2078
      %2081 = vset.pattern.permute.xlu0 1
      %2082 = vperm.xlu0 %2081, %v539
      %v2083 = vpop.permute.xlu0 %2082
      %2085 = vset.pattern.permute.xlu0 1
      %2086 = vperm.xlu0 %2085, %v540
      %v2087 = vpop.permute.xlu0 %2086
      %2089 = vset.pattern.permute.xlu0 1
      %2090 = vperm.xlu0 %2089, %v541
      %v2091 = vpop.permute.xlu0 %2090
      %2093 = vset.pattern.permute.xlu0 1
      %2094 = vperm.xlu0 %2093, %v542
      %v2095 = vpop.permute.xlu0 %2094
      %2097 = vset.pattern.permute.xlu0 1
      %2098 = vperm.xlu0 %2097, %v543
      %v2099 = vpop.permute.xlu0 %2098
      %2101 = vset.pattern.permute.xlu0 1
      %2102 = vperm.xlu0 %2101, %v544
      %v2103 = vpop.permute.xlu0 %2102
      %2105 = vset.pattern.permute.xlu0 1
      %2106 = vperm.xlu0 %2105, %v545
      %v2107 = vpop.permute.xlu0 %2106
      %2109 = vset.pattern.permute.xlu0 1
      %2110 = vperm.xlu0 %2109, %v546
      %v2111 = vpop.permute.xlu0 %2110
      %2113 = vset.pattern.permute.xlu0 1
      %2114 = vperm.xlu0 %2113, %v547
      %v2115 = vpop.permute.xlu0 %2114
      %2117 = vset.pattern.permute.xlu0 1
      %2118 = vperm.xlu0 %2117, %v548
      %v2119 = vpop.permute.xlu0 %2118
      %2121 = vset.pattern.permute.xlu0 1
      %2122 = vperm.xlu0 %2121, %v549
      %v2123 = vpop.permute.xlu0 %2122
      %2125 = vset.pattern.permute.xlu0 1
      %2126 = vperm.xlu0 %2125, %v550
      %v2127 = vpop.permute.xlu0 %2126
      %2129 = vset.pattern.permute.xlu0 1
      %2130 = vperm.xlu0 %2129, %v551
      %v2131 = vpop.permute.xlu0 %2130
      %2133 = vset.pattern.permute.xlu0 1
      %2134 = vperm.xlu0 %2133, %v552
      %v2135 = vpop.permute.xlu0 %2134
      %2137 = vset.pattern.permute.xlu0 1
      %2138 = vperm.xlu0 %2137, %v553
      %v2139 = vpop.permute.xlu0 %2138
      %2141 = vset.pattern.permute.xlu0 1
      %2142 = vperm.xlu0 %2141, %v554
      %v2143 = vpop.permute.xlu0 %2142
      %2145 = vset.pattern.permute.xlu0 1
      %2146 = vperm.xlu0 %2145, %v555
      %v2147 = vpop.permute.xlu0 %2146
      %2149 = vset.pattern.permute.xlu0 1
      %2150 = vperm.xlu0 %2149, %v556
      %v2151 = vpop.permute.xlu0 %2150
      %2153 = vset.pattern.permute.xlu0 1
      %2154 = vperm.xlu0 %2153, %v557
      %v2155 = vpop.permute.xlu0 %2154
      %2157 = vset.pattern.permute.xlu0 1
      %2158 = vperm.xlu0 %2157, %v558
      %v2159 = vpop.permute.xlu0 %2158
      %2161 = vset.pattern.permute.xlu0 1
      %2162 = vperm.xlu0 %2161, %v559
      %v2163 = vpop.permute.xlu0 %2162
      %2165 = vset.pattern.permute.xlu0 1
      %2166 = vperm.xlu0 %2165, %v560
      %v2167 = vpop.permute.xlu0 %2166
      %2169 = vset.pattern.permute.xlu0 1
      %2170 = vperm.xlu0 %2169, %v561
      %v2171 = vpop.permute.xlu0 %2170
      %2173 = vset.pattern.permute.xlu0 1
      %2174 = vperm.xlu0 %2173, %v562
      %v2175 = vpop.permute.xlu0 %2174
      %2177 = vset.pattern.permute.xlu0 1
      %2178 = vperm.xlu0 %2177, %v563
      %v2179 = vpop.permute.xlu0 %2178
      %2181 = vset.pattern.permute.xlu0 1
      %2182 = vperm.xlu0 %2181, %v564
      %v2183 = vpop.permute.xlu0 %2182
      %2185 = vset.pattern.permute.xlu0 1
      %2186 = vperm.xlu0 %2185, %v565
      %v2187 = vpop.permute.xlu0 %2186
      %2189 = vset.pattern.permute.xlu0 1
      %2190 = vperm.xlu0 %2189, %v566
      %v2191 = vpop.permute.xlu0 %2190
      %2193 = vset.pattern.permute.xlu0 1
      %2194 = vperm.xlu0 %2193, %v567
      %v2195 = vpop.permute.xlu0 %2194
      %2197 = vset.pattern.permute.xlu0 1
      %2198 = vperm.xlu0 %2197, %v568
      %v2199 = vpop.permute.xlu0 %2198
      %2201 = vset.pattern.permute.xlu0 1
      %2202 = vperm.xlu0 %2201, %v569
      %v2203 = vpop.permute.xlu0 %2202
      %2205 = vset.pattern.permute.xlu0 1
      %2206 = vperm.xlu0 %2205, %v570
      %v2207 = vpop.permute.xlu0 %2206
      %2209 = vset.pattern.permute.xlu0 1
      %2210 = vperm.xlu0 %2209, %v571
      %v2211 = vpop.permute.xlu0 %2210
      %2213 = vset.pattern.permute.xlu0 1
      %2214 = vperm.xlu0 %2213, %v572
      %v2215 = vpop.permute.xlu0 %2214
      %2217 = vset.pattern.permute.xlu0 1
      %2218 = vperm.xlu0 %2217, %v573
      %v2219 = vpop.permute.xlu0 %2218
      %2221 = vset.pattern.permute.xlu0 1
      %2222 = vperm.xlu0 %2221, %v574
      %v2223 = vpop.permute.xlu0 %2222
      %2225 = vset.pattern.permute.xlu0 1
      %2226 = vperm.xlu0 %2225, %v575
      %v2227 = vpop.permute.xlu0 %2226
      %2229 = vset.pattern.permute.xlu0 1
      %2230 = vperm.xlu0 %2229, %v576
      %v2231 = vpop.permute.xlu0 %2230
      %2233 = vset.pattern.permute.xlu0 1
      %2234 = vperm.xlu0 %2233, %v577
      %v2235 = vpop.permute.xlu0 %2234
      %2237 = vset.pattern.permute.xlu0 1
      %2238 = vperm.xlu0 %2237, %v578
      %v2239 = vpop.permute.xlu0 %2238
      %2241 = vset.pattern.permute.xlu0 1
      %2242 = vperm.xlu0 %2241, %v579
      %v2243 = vpop.permute.xlu0 %2242
      %2245 = vset.pattern.permute.xlu0 1
      %2246 = vperm.xlu0 %2245, %v580
      %v2247 = vpop.permute.xlu0 %2246
      %2249 = vset.pattern.permute.xlu0 1
      %2250 = vperm.xlu0 %2249, %v581
      %v2251 = vpop.permute.xlu0 %2250
      %2253 = vset.pattern.permute.xlu0 1
      %2254 = vperm.xlu0 %2253, %v582
      %v2255 = vpop.permute.xlu0 %2254
      %2257 = vset.pattern.permute.xlu0 1
      %2258 = vperm.xlu0 %2257, %v583
      %v2259 = vpop.permute.xlu0 %2258
      %2261 = vset.pattern.permute.xlu0 1
      %2262 = vperm.xlu0 %2261, %v584
      %v2263 = vpop.permute.xlu0 %2262
      %2265 = vset.pattern.permute.xlu0 1
      %2266 = vperm.xlu0 %2265, %v585
      %v2267 = vpop.permute.xlu0 %2266
      %2269 = vset.pattern.permute.xlu0 1
      %2270 = vperm.xlu0 %2269, %v586
      %v2271 = vpop.permute.xlu0 %2270
      %2273 = vset.pattern.permute.xlu0 1
      %2274 = vperm.xlu0 %2273, %v587
      %v2275 = vpop.permute.xlu0 %2274
      %2277 = vset.pattern.permute.xlu0 1
      %2278 = vperm.xlu0 %2277, %v588
      %v2279 = vpop.permute.xlu0 %2278
      %2281 = vset.pattern.permute.xlu0 1
      %2282 = vperm.xlu0 %2281, %v589
      %v2283 = vpop.permute.xlu0 %2282
      %2285 = vset.pattern.permute.xlu0 1
      %2286 = vperm.xlu0 %2285, %v590
      %v2287 = vpop.permute.xlu0 %2286
      %2289 = vset.pattern.permute.xlu0 1
      %2290 = vperm.xlu0 %2289, %v591
      %v2291 = vpop.permute.xlu0 %2290
      %2293 = vset.pattern.permute.xlu0 1
      %2294 = vperm.xlu0 %2293, %v592
      %v2295 = vpop.permute.xlu0 %2294
      %2297 = vset.pattern.permute.xlu0 1
      %2298 = vperm.xlu0 %2297, %v593
      %v2299 = vpop.permute.xlu0 %2298
      %2301 = vset.pattern.permute.xlu0 1
      %2302 = vperm.xlu0 %2301, %v594
      %v2303 = vpop.permute.xlu0 %2302
      %2305 = vset.pattern.permute.xlu0 1
      %2306 = vperm.xlu0 %2305, %v595
      %v2307 = vpop.permute.xlu0 %2306
      %2309 = vset.pattern.permute.xlu0 1
      %2310 = vperm.xlu0 %2309, %v596
      %v2311 = vpop.permute.xlu0 %2310
      %2313 = vset.pattern.permute.xlu0 1
      %2314 = vperm.xlu0 %2313, %v597
      %v2315 = vpop.permute.xlu0 %2314
      %2317 = vset.pattern.permute.xlu0 1
      %2318 = vperm.xlu0 %2317, %v598
      %v2319 = vpop.permute.xlu0 %2318
      %2321 = vset.pattern.permute.xlu0 1
      %2322 = vperm.xlu0 %2321, %v599
      %v2323 = vpop.permute.xlu0 %2322
      %2325 = vset.pattern.permute.xlu0 1
      %2326 = vperm.xlu0 %2325, %v600
      %v2327 = vpop.permute.xlu0 %2326
      %2329 = vset.pattern.permute.xlu0 1
      %2330 = vperm.xlu0 %2329, %v601
      %v2331 = vpop.permute.xlu0 %2330
      %2333 = vset.pattern.permute.xlu0 1
      %2334 = vperm.xlu0 %2333, %v602
      %v2335 = vpop.permute.xlu0 %2334
      %2337 = vset.pattern.permute.xlu0 1
      %2338 = vperm.xlu0 %2337, %v603
      %v2339 = vpop.permute.xlu0 %2338
      %2341 = vset.pattern.permute.xlu0 1
      %2342 = vperm.xlu0 %2341, %v604
      %v2343 = vpop.permute.xlu0 %2342
      %2345 = vset.pattern.permute.xlu0 1
      %2346 = vperm.xlu0 %2345, %v605
      %v2347 = vpop.permute.xlu0 %2346
      %2349 = vset.pattern.permute.xlu0 1
      %2350 = vperm.xlu0 %2349, %v606
      %v2351 = vpop.permute.xlu0 %2350
      %2353 = vset.pattern.permute.xlu0 1
      %2354 = vperm.xlu0 %2353, %v607
      %v2355 = vpop.permute.xlu0 %2354
      %2357 = vset.pattern.permute.xlu0 1
      %2358 = vperm.xlu0 %2357, %v608
      %v2359 = vpop.permute.xlu0 %2358
      %2361 = vset.pattern.permute.xlu0 1
      %2362 = vperm.xlu0 %2361, %v609
      %v2363 = vpop.permute.xlu0 %2362
      %2365 = vset.pattern.permute.xlu0 1
      %2366 = vperm.xlu0 %2365, %v610
      %v2367 = vpop.permute.xlu0 %2366
      %2369 = vset.pattern.permute.xlu0 1
      %2370 = vperm.xlu0 %2369, %v611
      %v2371 = vpop.permute.xlu0 %2370
      %2373 = vset.pattern.permute.xlu0 1
      %2374 = vperm.xlu0 %2373, %v612
      %v2375 = vpop.permute.xlu0 %2374
      %2377 = vset.pattern.permute.xlu0 1
      %2378 = vperm.xlu0 %2377, %v613
      %v2379 = vpop.permute.xlu0 %2378
      %2381 = vset.pattern.permute.xlu0 1
      %2382 = vperm.xlu0 %2381, %v614
      %v2383 = vpop.permute.xlu0 %2382
      %2385 = vset.pattern.permute.xlu0 1
      %2386 = vperm.xlu0 %2385, %v615
      %v2387 = vpop.permute.xlu0 %2386
      %2389 = vset.pattern.permute.xlu0 1
      %2390 = vperm.xlu0 %2389, %v616
      %v2391 = vpop.permute.xlu0 %2390
      %2393 = vset.pattern.permute.xlu0 1
      %2394 = vperm.xlu0 %2393, %v617
      %v2395 = vpop.permute.xlu0 %2394
      %v2397 = vlaneseq
      %v2398 = vshrl.u32 %v2397, 7
      %v2399 = vsub.s32 1, %v2398
      %v2400 = vrot.slane %v457, %v2399
      %v2401 = vlaneseq
      %v2402 = vshrl.u32 %v2401, 7
      %v2403 = vsub.s32 5, %v2402
      %v2404 = vrot.slane %v457, %v2403
      %v2407 = vlaneseq
      %v2408 = vshrl.u32 %v2407, 7
      %v2409 = vsub.s32 1, %v2408
      %v2410 = vrot.slane %v2400, %v2409
      %v2411 = vlaneseq
      %v2412 = vshrl.u32 %v2411, 7
      %v2413 = vsub.s32 1, %v2412
      %v2414 = vrot.slane %v2404, %v2413
      %v2415 = vmul.f32 %v1759, %v2410
      %v2416 = vmul.f32 %v1759, %v2414
      %v2417 = vmul.f32 %v1763, %v2410
      %v2418 = vmul.f32 %v1763, %v2414
      %v2419 = vmul.f32 %v1767, %v2410
      %v2420 = vmul.f32 %v1767, %v2414
      %v2421 = vmul.f32 %v1771, %v2410
      %v2422 = vmul.f32 %v1771, %v2414
      %v2423 = vmul.f32 %v1775, %v2410
      %v2424 = vmul.f32 %v1775, %v2414
      %v2425 = vmul.f32 %v1779, %v2410
      %v2426 = vmul.f32 %v1779, %v2414
      %v2427 = vmul.f32 %v1783, %v2410
      %v2428 = vmul.f32 %v1783, %v2414
      %v2429 = vmul.f32 %v1787, %v2410
      %v2430 = vmul.f32 %v1787, %v2414
      %v2431 = vmul.f32 %v1791, %v2410
      %v2432 = vmul.f32 %v1791, %v2414
      %v2433 = vmul.f32 %v1795, %v2410
      %v2434 = vmul.f32 %v1795, %v2414
      %v2435 = vmul.f32 %v1799, %v2410
      %v2436 = vmul.f32 %v1799, %v2414
      %v2437 = vmul.f32 %v1803, %v2410
      %v2438 = vmul.f32 %v1803, %v2414
      %v2439 = vmul.f32 %v1807, %v2410
      %v2440 = vmul.f32 %v1807, %v2414
      %v2441 = vmul.f32 %v1811, %v2410
      %v2442 = vmul.f32 %v1811, %v2414
      %v2443 = vmul.f32 %v1815, %v2410
      %v2444 = vmul.f32 %v1815, %v2414
      %v2445 = vmul.f32 %v1819, %v2410
      %v2446 = vmul.f32 %v1819, %v2414
      %v2447 = vmul.f32 %v1823, %v2410
      %v2448 = vmul.f32 %v1823, %v2414
      %v2449 = vmul.f32 %v1827, %v2410
      %v2450 = vmul.f32 %v1827, %v2414
      %v2451 = vmul.f32 %v1831, %v2410
      %v2452 = vmul.f32 %v1831, %v2414
      %v2453 = vmul.f32 %v1835, %v2410
      %v2454 = vmul.f32 %v1835, %v2414
      %v2455 = vmul.f32 %v1839, %v2410
      %v2456 = vmul.f32 %v1839, %v2414
      %v2457 = vmul.f32 %v1843, %v2410
      %v2458 = vmul.f32 %v1843, %v2414
      %v2459 = vmul.f32 %v1847, %v2410
      %v2460 = vmul.f32 %v1847, %v2414
      %v2461 = vmul.f32 %v1851, %v2410
      %v2462 = vmul.f32 %v1851, %v2414
      %v2463 = vmul.f32 %v1855, %v2410
      %v2464 = vmul.f32 %v1855, %v2414
      %v2465 = vmul.f32 %v1859, %v2410
      %v2466 = vmul.f32 %v1859, %v2414
      %v2467 = vmul.f32 %v1863, %v2410
      %v2468 = vmul.f32 %v1863, %v2414
      %v2469 = vmul.f32 %v1867, %v2410
      %v2470 = vmul.f32 %v1867, %v2414
      %v2471 = vmul.f32 %v1871, %v2410
      %v2472 = vmul.f32 %v1871, %v2414
      %v2473 = vmul.f32 %v1875, %v2410
      %v2474 = vmul.f32 %v1875, %v2414
      %v2475 = vmul.f32 %v1879, %v2410
      %v2476 = vmul.f32 %v1879, %v2414
      %v2477 = vmul.f32 %v1883, %v2410
      %v2478 = vmul.f32 %v1883, %v2414
      %v2479 = vmul.f32 %v1887, %v2410
      %v2480 = vmul.f32 %v1887, %v2414
      %v2481 = vmul.f32 %v1891, %v2410
      %v2482 = vmul.f32 %v1891, %v2414
      %v2483 = vmul.f32 %v1895, %v2410
      %v2484 = vmul.f32 %v1895, %v2414
      %v2485 = vmul.f32 %v1899, %v2410
      %v2486 = vmul.f32 %v1899, %v2414
      %v2487 = vmul.f32 %v1903, %v2410
      %v2488 = vmul.f32 %v1903, %v2414
      %v2489 = vmul.f32 %v1907, %v2410
      %v2490 = vmul.f32 %v1907, %v2414
      %v2491 = vmul.f32 %v1911, %v2410
      %v2492 = vmul.f32 %v1911, %v2414
      %v2493 = vmul.f32 %v1915, %v2410
      %v2494 = vmul.f32 %v1915, %v2414
      %v2495 = vmul.f32 %v1919, %v2410
      %v2496 = vmul.f32 %v1919, %v2414
      %v2497 = vmul.f32 %v1923, %v2410
      %v2498 = vmul.f32 %v1923, %v2414
      %v2499 = vmul.f32 %v1927, %v2410
      %v2500 = vmul.f32 %v1927, %v2414
      %v2501 = vmul.f32 %v1931, %v2410
      %v2502 = vmul.f32 %v1931, %v2414
      %v2503 = vmul.f32 %v1935, %v2410
      %v2504 = vmul.f32 %v1935, %v2414
      %v2505 = vmul.f32 %v1939, %v2410
      %v2506 = vmul.f32 %v1939, %v2414
      %v2507 = vmul.f32 %v1943, %v2410
      %v2508 = vmul.f32 %v1943, %v2414
      %v2509 = vmul.f32 %v1947, %v2410
      %v2510 = vmul.f32 %v1947, %v2414
      %v2511 = vmul.f32 %v1951, %v2410
      %v2512 = vmul.f32 %v1951, %v2414
      %v2513 = vmul.f32 %v1955, %v2410
      %v2514 = vmul.f32 %v1955, %v2414
      %v2515 = vmul.f32 %v1959, %v2410
      %v2516 = vmul.f32 %v1959, %v2414
      %v2517 = vmul.f32 %v1963, %v2410
      %v2518 = vmul.f32 %v1963, %v2414
      %v2519 = vmul.f32 %v1967, %v2410
      %v2520 = vmul.f32 %v1967, %v2414
      %v2521 = vmul.f32 %v1971, %v2410
      %v2522 = vmul.f32 %v1971, %v2414
      %v2523 = vmul.f32 %v1975, %v2410
      %v2524 = vmul.f32 %v1975, %v2414
      %v2525 = vmul.f32 %v1979, %v2410
      %v2526 = vmul.f32 %v1979, %v2414
      %v2527 = vmul.f32 %v1983, %v2410
      %v2528 = vmul.f32 %v1983, %v2414
      %v2529 = vmul.f32 %v1987, %v2410
      %v2530 = vmul.f32 %v1987, %v2414
      %v2531 = vmul.f32 %v1991, %v2410
      %v2532 = vmul.f32 %v1991, %v2414
      %v2533 = vmul.f32 %v1995, %v2410
      %v2534 = vmul.f32 %v1995, %v2414
      %v2535 = vmul.f32 %v1999, %v2410
      %v2536 = vmul.f32 %v1999, %v2414
      %v2537 = vmul.f32 %v2003, %v2410
      %v2538 = vmul.f32 %v2003, %v2414
      %v2539 = vmul.f32 %v2007, %v2410
      %v2540 = vmul.f32 %v2007, %v2414
      %v2541 = vmul.f32 %v2011, %v2410
      %v2542 = vmul.f32 %v2011, %v2414
      %v2543 = vmul.f32 %v2015, %v2410
      %v2544 = vmul.f32 %v2015, %v2414
      %v2545 = vmul.f32 %v2019, %v2410
      %v2546 = vmul.f32 %v2019, %v2414
      %v2547 = vmul.f32 %v2023, %v2410
      %v2548 = vmul.f32 %v2023, %v2414
      %v2549 = vmul.f32 %v2027, %v2410
      %v2550 = vmul.f32 %v2027, %v2414
      %v2551 = vmul.f32 %v2031, %v2410
      %v2552 = vmul.f32 %v2031, %v2414
      %v2553 = vmul.f32 %v2035, %v2410
      %v2554 = vmul.f32 %v2035, %v2414
      %v2555 = vmul.f32 %v2039, %v2410
      %v2556 = vmul.f32 %v2039, %v2414
      %v2557 = vmul.f32 %v2043, %v2410
      %v2558 = vmul.f32 %v2043, %v2414
      %v2559 = vmul.f32 %v2047, %v2410
      %v2560 = vmul.f32 %v2047, %v2414
      %v2561 = vmul.f32 %v2051, %v2410
      %v2562 = vmul.f32 %v2051, %v2414
      %v2563 = vmul.f32 %v2055, %v2410
      %v2564 = vmul.f32 %v2055, %v2414
      %v2565 = vmul.f32 %v2059, %v2410
      %v2566 = vmul.f32 %v2059, %v2414
      %v2567 = vmul.f32 %v2063, %v2410
      %v2568 = vmul.f32 %v2063, %v2414
      %v2569 = vmul.f32 %v2067, %v2410
      %v2570 = vmul.f32 %v2067, %v2414
      %v2571 = vmul.f32 %v2071, %v2410
      %v2572 = vmul.f32 %v2071, %v2414
      %v2573 = vmul.f32 %v2075, %v2410
      %v2574 = vmul.f32 %v2075, %v2414
      %v2575 = vmul.f32 %v2079, %v2410
      %v2576 = vmul.f32 %v2079, %v2414
      %v2577 = vmul.f32 %v2083, %v2410
      %v2578 = vmul.f32 %v2083, %v2414
      %v2579 = vmul.f32 %v2087, %v2410
      %v2580 = vmul.f32 %v2087, %v2414
      %v2581 = vmul.f32 %v2091, %v2410
      %v2582 = vmul.f32 %v2091, %v2414
      %v2583 = vmul.f32 %v2095, %v2410
      %v2584 = vmul.f32 %v2095, %v2414
      %v2585 = vmul.f32 %v2099, %v2410
      %v2586 = vmul.f32 %v2099, %v2414
      %v2587 = vmul.f32 %v2103, %v2410
      %v2588 = vmul.f32 %v2103, %v2414
      %v2589 = vmul.f32 %v2107, %v2410
      %v2590 = vmul.f32 %v2107, %v2414
      %v2591 = vmul.f32 %v2111, %v2410
      %v2592 = vmul.f32 %v2111, %v2414
      %v2593 = vmul.f32 %v2115, %v2410
      %v2594 = vmul.f32 %v2115, %v2414
      %v2595 = vmul.f32 %v2119, %v2410
      %v2596 = vmul.f32 %v2119, %v2414
      %v2597 = vmul.f32 %v2123, %v2410
      %v2598 = vmul.f32 %v2123, %v2414
      %v2599 = vmul.f32 %v2127, %v2410
      %v2600 = vmul.f32 %v2127, %v2414
      %v2601 = vmul.f32 %v2131, %v2410
      %v2602 = vmul.f32 %v2131, %v2414
      %v2603 = vmul.f32 %v2135, %v2410
      %v2604 = vmul.f32 %v2135, %v2414
      %v2605 = vmul.f32 %v2139, %v2410
      %v2606 = vmul.f32 %v2139, %v2414
      %v2607 = vmul.f32 %v2143, %v2410
      %v2608 = vmul.f32 %v2143, %v2414
      %v2609 = vmul.f32 %v2147, %v2410
      %v2610 = vmul.f32 %v2147, %v2414
      %v2611 = vmul.f32 %v2151, %v2410
      %v2612 = vmul.f32 %v2151, %v2414
      %v2613 = vmul.f32 %v2155, %v2410
      %v2614 = vmul.f32 %v2155, %v2414
      %v2615 = vmul.f32 %v2159, %v2410
      %v2616 = vmul.f32 %v2159, %v2414
      %v2617 = vmul.f32 %v2163, %v2410
      %v2618 = vmul.f32 %v2163, %v2414
      %v2619 = vmul.f32 %v2167, %v2410
      %v2620 = vmul.f32 %v2167, %v2414
      %v2621 = vmul.f32 %v2171, %v2410
      %v2622 = vmul.f32 %v2171, %v2414
      %v2623 = vmul.f32 %v2175, %v2410
      %v2624 = vmul.f32 %v2175, %v2414
      %v2625 = vmul.f32 %v2179, %v2410
      %v2626 = vmul.f32 %v2179, %v2414
      %v2627 = vmul.f32 %v2183, %v2410
      %v2628 = vmul.f32 %v2183, %v2414
      %v2629 = vmul.f32 %v2187, %v2410
      %v2630 = vmul.f32 %v2187, %v2414
      %v2631 = vmul.f32 %v2191, %v2410
      %v2632 = vmul.f32 %v2191, %v2414
      %v2633 = vmul.f32 %v2195, %v2410
      %v2634 = vmul.f32 %v2195, %v2414
      %v2635 = vmul.f32 %v2199, %v2410
      %v2636 = vmul.f32 %v2199, %v2414
      %v2637 = vmul.f32 %v2203, %v2410
      %v2638 = vmul.f32 %v2203, %v2414
      %v2639 = vmul.f32 %v2207, %v2410
      %v2640 = vmul.f32 %v2207, %v2414
      %v2641 = vmul.f32 %v2211, %v2410
      %v2642 = vmul.f32 %v2211, %v2414
      %v2643 = vmul.f32 %v2215, %v2410
      %v2644 = vmul.f32 %v2215, %v2414
      %v2645 = vmul.f32 %v2219, %v2410
      %v2646 = vmul.f32 %v2219, %v2414
      %v2647 = vmul.f32 %v2223, %v2410
      %v2648 = vmul.f32 %v2223, %v2414
      %v2649 = vmul.f32 %v2227, %v2410
      %v2650 = vmul.f32 %v2227, %v2414
      %v2651 = vmul.f32 %v2231, %v2410
      %v2652 = vmul.f32 %v2231, %v2414
      %v2653 = vmul.f32 %v2235, %v2410
      %v2654 = vmul.f32 %v2235, %v2414
      %v2655 = vmul.f32 %v2239, %v2410
      %v2656 = vmul.f32 %v2239, %v2414
      %v2657 = vmul.f32 %v2243, %v2410
      %v2658 = vmul.f32 %v2243, %v2414
      %v2659 = vmul.f32 %v2247, %v2410
      %v2660 = vmul.f32 %v2247, %v2414
      %v2661 = vmul.f32 %v2251, %v2410
      %v2662 = vmul.f32 %v2251, %v2414
      %v2663 = vmul.f32 %v2255, %v2410
      %v2664 = vmul.f32 %v2255, %v2414
      %v2665 = vmul.f32 %v2259, %v2410
      %v2666 = vmul.f32 %v2259, %v2414
      %v2667 = vmul.f32 %v2263, %v2410
      %v2668 = vmul.f32 %v2263, %v2414
      %v2669 = vmul.f32 %v2267, %v2410
      %v2670 = vmul.f32 %v2267, %v2414
      %v2671 = vmul.f32 %v2271, %v2410
      %v2672 = vmul.f32 %v2271, %v2414
      %v2673 = vmul.f32 %v2275, %v2410
      %v2674 = vmul.f32 %v2275, %v2414
      %v2675 = vmul.f32 %v2279, %v2410
      %v2676 = vmul.f32 %v2279, %v2414
      %v2677 = vmul.f32 %v2283, %v2410
      %v2678 = vmul.f32 %v2283, %v2414
      %v2679 = vmul.f32 %v2287, %v2410
      %v2680 = vmul.f32 %v2287, %v2414
      %v2681 = vmul.f32 %v2291, %v2410
      %v2682 = vmul.f32 %v2291, %v2414
      %v2683 = vmul.f32 %v2295, %v2410
      %v2684 = vmul.f32 %v2295, %v2414
      %v2685 = vmul.f32 %v2299, %v2410
      %v2686 = vmul.f32 %v2299, %v2414
      %v2687 = vmul.f32 %v2303, %v2410
      %v2688 = vmul.f32 %v2303, %v2414
      %v2689 = vmul.f32 %v2307, %v2410
      %v2690 = vmul.f32 %v2307, %v2414
      %v2691 = vmul.f32 %v2311, %v2410
      %v2692 = vmul.f32 %v2311, %v2414
      %v2693 = vmul.f32 %v2315, %v2410
      %v2694 = vmul.f32 %v2315, %v2414
      %v2695 = vmul.f32 %v2319, %v2410
      %v2696 = vmul.f32 %v2319, %v2414
      %v2697 = vmul.f32 %v2323, %v2410
      %v2698 = vmul.f32 %v2323, %v2414
      %v2699 = vmul.f32 %v2327, %v2410
      %v2700 = vmul.f32 %v2327, %v2414
      %v2701 = vmul.f32 %v2331, %v2410
      %v2702 = vmul.f32 %v2331, %v2414
      %v2703 = vmul.f32 %v2335, %v2410
      %v2704 = vmul.f32 %v2335, %v2414
      %v2705 = vmul.f32 %v2339, %v2410
      %v2706 = vmul.f32 %v2339, %v2414
      %v2707 = vmul.f32 %v2343, %v2410
      %v2708 = vmul.f32 %v2343, %v2414
      %v2709 = vmul.f32 %v2347, %v2410
      %v2710 = vmul.f32 %v2347, %v2414
      %v2711 = vmul.f32 %v2351, %v2410
      %v2712 = vmul.f32 %v2351, %v2414
      %v2713 = vmul.f32 %v2355, %v2410
      %v2714 = vmul.f32 %v2355, %v2414
      %v2715 = vmul.f32 %v2359, %v2410
      %v2716 = vmul.f32 %v2359, %v2414
      %v2717 = vmul.f32 %v2363, %v2410
      %v2718 = vmul.f32 %v2363, %v2414
      %v2719 = vmul.f32 %v2367, %v2410
      %v2720 = vmul.f32 %v2367, %v2414
      %v2721 = vmul.f32 %v2371, %v2410
      %v2722 = vmul.f32 %v2371, %v2414
      %v2723 = vmul.f32 %v2375, %v2410
      %v2724 = vmul.f32 %v2375, %v2414
      %v2725 = vmul.f32 %v2379, %v2410
      %v2726 = vmul.f32 %v2379, %v2414
      %v2727 = vmul.f32 %v2383, %v2410
      %v2728 = vmul.f32 %v2383, %v2414
      %v2729 = vmul.f32 %v2387, %v2410
      %v2730 = vmul.f32 %v2387, %v2414
      %v2731 = vmul.f32 %v2391, %v2410
      %v2732 = vmul.f32 %v2391, %v2414
      %v2733 = vmul.f32 %v2395, %v2410
      %v2734 = vmul.f32 %v2395, %v2414
      %v2735 = vadd.f32 %v1437, %v2415
      %v2736 = vadd.f32 %v1438, %v2416
      %v2737 = vadd.f32 %v1439, %v2417
      %v2738 = vadd.f32 %v1440, %v2418
      %v2739 = vadd.f32 %v1441, %v2419
      %v2740 = vadd.f32 %v1442, %v2420
      %v2741 = vadd.f32 %v1443, %v2421
      %v2742 = vadd.f32 %v1444, %v2422
      %v2743 = vadd.f32 %v1445, %v2423
      %v2744 = vadd.f32 %v1446, %v2424
      %v2745 = vadd.f32 %v1447, %v2425
      %v2746 = vadd.f32 %v1448, %v2426
      %v2747 = vadd.f32 %v1449, %v2427
      %v2748 = vadd.f32 %v1450, %v2428
      %v2749 = vadd.f32 %v1451, %v2429
      %v2750 = vadd.f32 %v1452, %v2430
      %v2751 = vadd.f32 %v1453, %v2431
      %v2752 = vadd.f32 %v1454, %v2432
      %v2753 = vadd.f32 %v1455, %v2433
      %v2754 = vadd.f32 %v1456, %v2434
      %v2755 = vadd.f32 %v1457, %v2435
      %v2756 = vadd.f32 %v1458, %v2436
      %v2757 = vadd.f32 %v1459, %v2437
      %v2758 = vadd.f32 %v1460, %v2438
      %v2759 = vadd.f32 %v1461, %v2439
      %v2760 = vadd.f32 %v1462, %v2440
      %v2761 = vadd.f32 %v1463, %v2441
      %v2762 = vadd.f32 %v1464, %v2442
      %v2763 = vadd.f32 %v1465, %v2443
      %v2764 = vadd.f32 %v1466, %v2444
      %v2765 = vadd.f32 %v1467, %v2445
      %v2766 = vadd.f32 %v1468, %v2446
      %v2767 = vadd.f32 %v1469, %v2447
      %v2768 = vadd.f32 %v1470, %v2448
      %v2769 = vadd.f32 %v1471, %v2449
      %v2770 = vadd.f32 %v1472, %v2450
      %v2771 = vadd.f32 %v1473, %v2451
      %v2772 = vadd.f32 %v1474, %v2452
      %v2773 = vadd.f32 %v1475, %v2453
      %v2774 = vadd.f32 %v1476, %v2454
      %v2775 = vadd.f32 %v1477, %v2455
      %v2776 = vadd.f32 %v1478, %v2456
      %v2777 = vadd.f32 %v1479, %v2457
      %v2778 = vadd.f32 %v1480, %v2458
      %v2779 = vadd.f32 %v1481, %v2459
      %v2780 = vadd.f32 %v1482, %v2460
      %v2781 = vadd.f32 %v1483, %v2461
      %v2782 = vadd.f32 %v1484, %v2462
      %v2783 = vadd.f32 %v1485, %v2463
      %v2784 = vadd.f32 %v1486, %v2464
      %v2785 = vadd.f32 %v1487, %v2465
      %v2786 = vadd.f32 %v1488, %v2466
      %v2787 = vadd.f32 %v1489, %v2467
      %v2788 = vadd.f32 %v1490, %v2468
      %v2789 = vadd.f32 %v1491, %v2469
      %v2790 = vadd.f32 %v1492, %v2470
      %v2791 = vadd.f32 %v1493, %v2471
      %v2792 = vadd.f32 %v1494, %v2472
      %v2793 = vadd.f32 %v1495, %v2473
      %v2794 = vadd.f32 %v1496, %v2474
      %v2795 = vadd.f32 %v1497, %v2475
      %v2796 = vadd.f32 %v1498, %v2476
      %v2797 = vadd.f32 %v1499, %v2477
      %v2798 = vadd.f32 %v1500, %v2478
      %v2799 = vadd.f32 %v1501, %v2479
      %v2800 = vadd.f32 %v1502, %v2480
      %v2801 = vadd.f32 %v1503, %v2481
      %v2802 = vadd.f32 %v1504, %v2482
      %v2803 = vadd.f32 %v1505, %v2483
      %v2804 = vadd.f32 %v1506, %v2484
      %v2805 = vadd.f32 %v1507, %v2485
      %v2806 = vadd.f32 %v1508, %v2486
      %v2807 = vadd.f32 %v1509, %v2487
      %v2808 = vadd.f32 %v1510, %v2488
      %v2809 = vadd.f32 %v1511, %v2489
      %v2810 = vadd.f32 %v1512, %v2490
      %v2811 = vadd.f32 %v1513, %v2491
      %v2812 = vadd.f32 %v1514, %v2492
      %v2813 = vadd.f32 %v1515, %v2493
      %v2814 = vadd.f32 %v1516, %v2494
      %v2815 = vadd.f32 %v1517, %v2495
      %v2816 = vadd.f32 %v1518, %v2496
      %v2817 = vadd.f32 %v1519, %v2497
      %v2818 = vadd.f32 %v1520, %v2498
      %v2819 = vadd.f32 %v1521, %v2499
      %v2820 = vadd.f32 %v1522, %v2500
      %v2821 = vadd.f32 %v1523, %v2501
      %v2822 = vadd.f32 %v1524, %v2502
      %v2823 = vadd.f32 %v1525, %v2503
      %v2824 = vadd.f32 %v1526, %v2504
      %v2825 = vadd.f32 %v1527, %v2505
      %v2826 = vadd.f32 %v1528, %v2506
      %v2827 = vadd.f32 %v1529, %v2507
      %v2828 = vadd.f32 %v1530, %v2508
      %v2829 = vadd.f32 %v1531, %v2509
      %v2830 = vadd.f32 %v1532, %v2510
      %v2831 = vadd.f32 %v1533, %v2511
      %v2832 = vadd.f32 %v1534, %v2512
      %v2833 = vadd.f32 %v1535, %v2513
      %v2834 = vadd.f32 %v1536, %v2514
      %v2835 = vadd.f32 %v1537, %v2515
      %v2836 = vadd.f32 %v1538, %v2516
      %v2837 = vadd.f32 %v1539, %v2517
      %v2838 = vadd.f32 %v1540, %v2518
      %v2839 = vadd.f32 %v1541, %v2519
      %v2840 = vadd.f32 %v1542, %v2520
      %v2841 = vadd.f32 %v1543, %v2521
      %v2842 = vadd.f32 %v1544, %v2522
      %v2843 = vadd.f32 %v1545, %v2523
      %v2844 = vadd.f32 %v1546, %v2524
      %v2845 = vadd.f32 %v1547, %v2525
      %v2846 = vadd.f32 %v1548, %v2526
      %v2847 = vadd.f32 %v1549, %v2527
      %v2848 = vadd.f32 %v1550, %v2528
      %v2849 = vadd.f32 %v1551, %v2529
      %v2850 = vadd.f32 %v1552, %v2530
      %v2851 = vadd.f32 %v1553, %v2531
      %v2852 = vadd.f32 %v1554, %v2532
      %v2853 = vadd.f32 %v1555, %v2533
      %v2854 = vadd.f32 %v1556, %v2534
      %v2855 = vadd.f32 %v1557, %v2535
      %v2856 = vadd.f32 %v1558, %v2536
      %v2857 = vadd.f32 %v1559, %v2537
      %v2858 = vadd.f32 %v1560, %v2538
      %v2859 = vadd.f32 %v1561, %v2539
      %v2860 = vadd.f32 %v1562, %v2540
      %v2861 = vadd.f32 %v1563, %v2541
      %v2862 = vadd.f32 %v1564, %v2542
      %v2863 = vadd.f32 %v1565, %v2543
      %v2864 = vadd.f32 %v1566, %v2544
      %v2865 = vadd.f32 %v1567, %v2545
      %v2866 = vadd.f32 %v1568, %v2546
      %v2867 = vadd.f32 %v1569, %v2547
      %v2868 = vadd.f32 %v1570, %v2548
      %v2869 = vadd.f32 %v1571, %v2549
      %v2870 = vadd.f32 %v1572, %v2550
      %v2871 = vadd.f32 %v1573, %v2551
      %v2872 = vadd.f32 %v1574, %v2552
      %v2873 = vadd.f32 %v1575, %v2553
      %v2874 = vadd.f32 %v1576, %v2554
      %v2875 = vadd.f32 %v1577, %v2555
      %v2876 = vadd.f32 %v1578, %v2556
      %v2877 = vadd.f32 %v1579, %v2557
      %v2878 = vadd.f32 %v1580, %v2558
      %v2879 = vadd.f32 %v1581, %v2559
      %v2880 = vadd.f32 %v1582, %v2560
      %v2881 = vadd.f32 %v1583, %v2561
      %v2882 = vadd.f32 %v1584, %v2562
      %v2883 = vadd.f32 %v1585, %v2563
      %v2884 = vadd.f32 %v1586, %v2564
      %v2885 = vadd.f32 %v1587, %v2565
      %v2886 = vadd.f32 %v1588, %v2566
      %v2887 = vadd.f32 %v1589, %v2567
      %v2888 = vadd.f32 %v1590, %v2568
      %v2889 = vadd.f32 %v1591, %v2569
      %v2890 = vadd.f32 %v1592, %v2570
      %v2891 = vadd.f32 %v1593, %v2571
      %v2892 = vadd.f32 %v1594, %v2572
      %v2893 = vadd.f32 %v1595, %v2573
      %v2894 = vadd.f32 %v1596, %v2574
      %v2895 = vadd.f32 %v1597, %v2575
      %v2896 = vadd.f32 %v1598, %v2576
      %v2897 = vadd.f32 %v1599, %v2577
      %v2898 = vadd.f32 %v1600, %v2578
      %v2899 = vadd.f32 %v1601, %v2579
      %v2900 = vadd.f32 %v1602, %v2580
      %v2901 = vadd.f32 %v1603, %v2581
      %v2902 = vadd.f32 %v1604, %v2582
      %v2903 = vadd.f32 %v1605, %v2583
      %v2904 = vadd.f32 %v1606, %v2584
      %v2905 = vadd.f32 %v1607, %v2585
      %v2906 = vadd.f32 %v1608, %v2586
      %v2907 = vadd.f32 %v1609, %v2587
      %v2908 = vadd.f32 %v1610, %v2588
      %v2909 = vadd.f32 %v1611, %v2589
      %v2910 = vadd.f32 %v1612, %v2590
      %v2911 = vadd.f32 %v1613, %v2591
      %v2912 = vadd.f32 %v1614, %v2592
      %v2913 = vadd.f32 %v1615, %v2593
      %v2914 = vadd.f32 %v1616, %v2594
      %v2915 = vadd.f32 %v1617, %v2595
      %v2916 = vadd.f32 %v1618, %v2596
      %v2917 = vadd.f32 %v1619, %v2597
      %v2918 = vadd.f32 %v1620, %v2598
      %v2919 = vadd.f32 %v1621, %v2599
      %v2920 = vadd.f32 %v1622, %v2600
      %v2921 = vadd.f32 %v1623, %v2601
      %v2922 = vadd.f32 %v1624, %v2602
      %v2923 = vadd.f32 %v1625, %v2603
      %v2924 = vadd.f32 %v1626, %v2604
      %v2925 = vadd.f32 %v1627, %v2605
      %v2926 = vadd.f32 %v1628, %v2606
      %v2927 = vadd.f32 %v1629, %v2607
      %v2928 = vadd.f32 %v1630, %v2608
      %v2929 = vadd.f32 %v1631, %v2609
      %v2930 = vadd.f32 %v1632, %v2610
      %v2931 = vadd.f32 %v1633, %v2611
      %v2932 = vadd.f32 %v1634, %v2612
      %v2933 = vadd.f32 %v1635, %v2613
      %v2934 = vadd.f32 %v1636, %v2614
      %v2935 = vadd.f32 %v1637, %v2615
      %v2936 = vadd.f32 %v1638, %v2616
      %v2937 = vadd.f32 %v1639, %v2617
      %v2938 = vadd.f32 %v1640, %v2618
      %v2939 = vadd.f32 %v1641, %v2619
      %v2940 = vadd.f32 %v1642, %v2620
      %v2941 = vadd.f32 %v1643, %v2621
      %v2942 = vadd.f32 %v1644, %v2622
      %v2943 = vadd.f32 %v1645, %v2623
      %v2944 = vadd.f32 %v1646, %v2624
      %v2945 = vadd.f32 %v1647, %v2625
      %v2946 = vadd.f32 %v1648, %v2626
      %v2947 = vadd.f32 %v1649, %v2627
      %v2948 = vadd.f32 %v1650, %v2628
      %v2949 = vadd.f32 %v1651, %v2629
      %v2950 = vadd.f32 %v1652, %v2630
      %v2951 = vadd.f32 %v1653, %v2631
      %v2952 = vadd.f32 %v1654, %v2632
      %v2953 = vadd.f32 %v1655, %v2633
      %v2954 = vadd.f32 %v1656, %v2634
      %v2955 = vadd.f32 %v1657, %v2635
      %v2956 = vadd.f32 %v1658, %v2636
      %v2957 = vadd.f32 %v1659, %v2637
      %v2958 = vadd.f32 %v1660, %v2638
      %v2959 = vadd.f32 %v1661, %v2639
      %v2960 = vadd.f32 %v1662, %v2640
      %v2961 = vadd.f32 %v1663, %v2641
      %v2962 = vadd.f32 %v1664, %v2642
      %v2963 = vadd.f32 %v1665, %v2643
      %v2964 = vadd.f32 %v1666, %v2644
      %v2965 = vadd.f32 %v1667, %v2645
      %v2966 = vadd.f32 %v1668, %v2646
      %v2967 = vadd.f32 %v1669, %v2647
      %v2968 = vadd.f32 %v1670, %v2648
      %v2969 = vadd.f32 %v1671, %v2649
      %v2970 = vadd.f32 %v1672, %v2650
      %v2971 = vadd.f32 %v1673, %v2651
      %v2972 = vadd.f32 %v1674, %v2652
      %v2973 = vadd.f32 %v1675, %v2653
      %v2974 = vadd.f32 %v1676, %v2654
      %v2975 = vadd.f32 %v1677, %v2655
      %v2976 = vadd.f32 %v1678, %v2656
      %v2977 = vadd.f32 %v1679, %v2657
      %v2978 = vadd.f32 %v1680, %v2658
      %v2979 = vadd.f32 %v1681, %v2659
      %v2980 = vadd.f32 %v1682, %v2660
      %v2981 = vadd.f32 %v1683, %v2661
      %v2982 = vadd.f32 %v1684, %v2662
      %v2983 = vadd.f32 %v1685, %v2663
      %v2984 = vadd.f32 %v1686, %v2664
      %v2985 = vadd.f32 %v1687, %v2665
      %v2986 = vadd.f32 %v1688, %v2666
      %v2987 = vadd.f32 %v1689, %v2667
      %v2988 = vadd.f32 %v1690, %v2668
      %v2989 = vadd.f32 %v1691, %v2669
      %v2990 = vadd.f32 %v1692, %v2670
      %v2991 = vadd.f32 %v1693, %v2671
      %v2992 = vadd.f32 %v1694, %v2672
      %v2993 = vadd.f32 %v1695, %v2673
      %v2994 = vadd.f32 %v1696, %v2674
      %v2995 = vadd.f32 %v1697, %v2675
      %v2996 = vadd.f32 %v1698, %v2676
      %v2997 = vadd.f32 %v1699, %v2677
      %v2998 = vadd.f32 %v1700, %v2678
      %v2999 = vadd.f32 %v1701, %v2679
      %v3000 = vadd.f32 %v1702, %v2680
      %v3001 = vadd.f32 %v1703, %v2681
      %v3002 = vadd.f32 %v1704, %v2682
      %v3003 = vadd.f32 %v1705, %v2683
      %v3004 = vadd.f32 %v1706, %v2684
      %v3005 = vadd.f32 %v1707, %v2685
      %v3006 = vadd.f32 %v1708, %v2686
      %v3007 = vadd.f32 %v1709, %v2687
      %v3008 = vadd.f32 %v1710, %v2688
      %v3009 = vadd.f32 %v1711, %v2689
      %v3010 = vadd.f32 %v1712, %v2690
      %v3011 = vadd.f32 %v1713, %v2691
      %v3012 = vadd.f32 %v1714, %v2692
      %v3013 = vadd.f32 %v1715, %v2693
      %v3014 = vadd.f32 %v1716, %v2694
      %v3015 = vadd.f32 %v1717, %v2695
      %v3016 = vadd.f32 %v1718, %v2696
      %v3017 = vadd.f32 %v1719, %v2697
      %v3018 = vadd.f32 %v1720, %v2698
      %v3019 = vadd.f32 %v1721, %v2699
      %v3020 = vadd.f32 %v1722, %v2700
      %v3021 = vadd.f32 %v1723, %v2701
      %v3022 = vadd.f32 %v1724, %v2702
      %v3023 = vadd.f32 %v1725, %v2703
      %v3024 = vadd.f32 %v1726, %v2704
      %v3025 = vadd.f32 %v1727, %v2705
      %v3026 = vadd.f32 %v1728, %v2706
      %v3027 = vadd.f32 %v1729, %v2707
      %v3028 = vadd.f32 %v1730, %v2708
      %v3029 = vadd.f32 %v1731, %v2709
      %v3030 = vadd.f32 %v1732, %v2710
      %v3031 = vadd.f32 %v1733, %v2711
      %v3032 = vadd.f32 %v1734, %v2712
      %v3033 = vadd.f32 %v1735, %v2713
      %v3034 = vadd.f32 %v1736, %v2714
      %v3035 = vadd.f32 %v1737, %v2715
      %v3036 = vadd.f32 %v1738, %v2716
      %v3037 = vadd.f32 %v1739, %v2717
      %v3038 = vadd.f32 %v1740, %v2718
      %v3039 = vadd.f32 %v1741, %v2719
      %v3040 = vadd.f32 %v1742, %v2720
      %v3041 = vadd.f32 %v1743, %v2721
      %v3042 = vadd.f32 %v1744, %v2722
      %v3043 = vadd.f32 %v1745, %v2723
      %v3044 = vadd.f32 %v1746, %v2724
      %v3045 = vadd.f32 %v1747, %v2725
      %v3046 = vadd.f32 %v1748, %v2726
      %v3047 = vadd.f32 %v1749, %v2727
      %v3048 = vadd.f32 %v1750, %v2728
      %v3049 = vadd.f32 %v1751, %v2729
      %v3050 = vadd.f32 %v1752, %v2730
      %v3051 = vadd.f32 %v1753, %v2731
      %v3052 = vadd.f32 %v1754, %v2732
      %v3053 = vadd.f32 %v1755, %v2733
      %v3054 = vadd.f32 %v1756, %v2734
      %3055 = vset.pattern.permute.xlu0 2
      %3056 = vperm.xlu0 %3055, %v458
      %v3057 = vpop.permute.xlu0 %3056
      %3059 = vset.pattern.permute.xlu0 2
      %3060 = vperm.xlu0 %3059, %v459
      %v3061 = vpop.permute.xlu0 %3060
      %3063 = vset.pattern.permute.xlu0 2
      %3064 = vperm.xlu0 %3063, %v460
      %v3065 = vpop.permute.xlu0 %3064
      %3067 = vset.pattern.permute.xlu0 2
      %3068 = vperm.xlu0 %3067, %v461
      %v3069 = vpop.permute.xlu0 %3068
      %3071 = vset.pattern.permute.xlu0 2
      %3072 = vperm.xlu0 %3071, %v462
      %v3073 = vpop.permute.xlu0 %3072
      %3075 = vset.pattern.permute.xlu0 2
      %3076 = vperm.xlu0 %3075, %v463
      %v3077 = vpop.permute.xlu0 %3076
      %3079 = vset.pattern.permute.xlu0 2
      %3080 = vperm.xlu0 %3079, %v464
      %v3081 = vpop.permute.xlu0 %3080
      %3083 = vset.pattern.permute.xlu0 2
      %3084 = vperm.xlu0 %3083, %v465
      %v3085 = vpop.permute.xlu0 %3084
      %3087 = vset.pattern.permute.xlu0 2
      %3088 = vperm.xlu0 %3087, %v466
      %v3089 = vpop.permute.xlu0 %3088
      %3091 = vset.pattern.permute.xlu0 2
      %3092 = vperm.xlu0 %3091, %v467
      %v3093 = vpop.permute.xlu0 %3092
      %3095 = vset.pattern.permute.xlu0 2
      %3096 = vperm.xlu0 %3095, %v468
      %v3097 = vpop.permute.xlu0 %3096
      %3099 = vset.pattern.permute.xlu0 2
      %3100 = vperm.xlu0 %3099, %v469
      %v3101 = vpop.permute.xlu0 %3100
      %3103 = vset.pattern.permute.xlu0 2
      %3104 = vperm.xlu0 %3103, %v470
      %v3105 = vpop.permute.xlu0 %3104
      %3107 = vset.pattern.permute.xlu0 2
      %3108 = vperm.xlu0 %3107, %v471
      %v3109 = vpop.permute.xlu0 %3108
      %3111 = vset.pattern.permute.xlu0 2
      %3112 = vperm.xlu0 %3111, %v472
      %v3113 = vpop.permute.xlu0 %3112
      %3115 = vset.pattern.permute.xlu0 2
      %3116 = vperm.xlu0 %3115, %v473
      %v3117 = vpop.permute.xlu0 %3116
      %3119 = vset.pattern.permute.xlu0 2
      %3120 = vperm.xlu0 %3119, %v474
      %v3121 = vpop.permute.xlu0 %3120
      %3123 = vset.pattern.permute.xlu0 2
      %3124 = vperm.xlu0 %3123, %v475
      %v3125 = vpop.permute.xlu0 %3124
      %3127 = vset.pattern.permute.xlu0 2
      %3128 = vperm.xlu0 %3127, %v476
      %v3129 = vpop.permute.xlu0 %3128
      %3131 = vset.pattern.permute.xlu0 2
      %3132 = vperm.xlu0 %3131, %v477
      %v3133 = vpop.permute.xlu0 %3132
      %3135 = vset.pattern.permute.xlu0 2
      %3136 = vperm.xlu0 %3135, %v478
      %v3137 = vpop.permute.xlu0 %3136
      %3139 = vset.pattern.permute.xlu0 2
      %3140 = vperm.xlu0 %3139, %v479
      %v3141 = vpop.permute.xlu0 %3140
      %3143 = vset.pattern.permute.xlu0 2
      %3144 = vperm.xlu0 %3143, %v480
      %v3145 = vpop.permute.xlu0 %3144
      %3147 = vset.pattern.permute.xlu0 2
      %3148 = vperm.xlu0 %3147, %v481
      %v3149 = vpop.permute.xlu0 %3148
      %3151 = vset.pattern.permute.xlu0 2
      %3152 = vperm.xlu0 %3151, %v482
      %v3153 = vpop.permute.xlu0 %3152
      %3155 = vset.pattern.permute.xlu0 2
      %3156 = vperm.xlu0 %3155, %v483
      %v3157 = vpop.permute.xlu0 %3156
      %3159 = vset.pattern.permute.xlu0 2
      %3160 = vperm.xlu0 %3159, %v484
      %v3161 = vpop.permute.xlu0 %3160
      %3163 = vset.pattern.permute.xlu0 2
      %3164 = vperm.xlu0 %3163, %v485
      %v3165 = vpop.permute.xlu0 %3164
      %3167 = vset.pattern.permute.xlu0 2
      %3168 = vperm.xlu0 %3167, %v486
      %v3169 = vpop.permute.xlu0 %3168
      %3171 = vset.pattern.permute.xlu0 2
      %3172 = vperm.xlu0 %3171, %v487
      %v3173 = vpop.permute.xlu0 %3172
      %3175 = vset.pattern.permute.xlu0 2
      %3176 = vperm.xlu0 %3175, %v488
      %v3177 = vpop.permute.xlu0 %3176
      %3179 = vset.pattern.permute.xlu0 2
      %3180 = vperm.xlu0 %3179, %v489
      %v3181 = vpop.permute.xlu0 %3180
      %3183 = vset.pattern.permute.xlu0 2
      %3184 = vperm.xlu0 %3183, %v490
      %v3185 = vpop.permute.xlu0 %3184
      %3187 = vset.pattern.permute.xlu0 2
      %3188 = vperm.xlu0 %3187, %v491
      %v3189 = vpop.permute.xlu0 %3188
      %3191 = vset.pattern.permute.xlu0 2
      %3192 = vperm.xlu0 %3191, %v492
      %v3193 = vpop.permute.xlu0 %3192
      %3195 = vset.pattern.permute.xlu0 2
      %3196 = vperm.xlu0 %3195, %v493
      %v3197 = vpop.permute.xlu0 %3196
      %3199 = vset.pattern.permute.xlu0 2
      %3200 = vperm.xlu0 %3199, %v494
      %v3201 = vpop.permute.xlu0 %3200
      %3203 = vset.pattern.permute.xlu0 2
      %3204 = vperm.xlu0 %3203, %v495
      %v3205 = vpop.permute.xlu0 %3204
      %3207 = vset.pattern.permute.xlu0 2
      %3208 = vperm.xlu0 %3207, %v496
      %v3209 = vpop.permute.xlu0 %3208
      %3211 = vset.pattern.permute.xlu0 2
      %3212 = vperm.xlu0 %3211, %v497
      %v3213 = vpop.permute.xlu0 %3212
      %3215 = vset.pattern.permute.xlu0 2
      %3216 = vperm.xlu0 %3215, %v498
      %v3217 = vpop.permute.xlu0 %3216
      %3219 = vset.pattern.permute.xlu0 2
      %3220 = vperm.xlu0 %3219, %v499
      %v3221 = vpop.permute.xlu0 %3220
      %3223 = vset.pattern.permute.xlu0 2
      %3224 = vperm.xlu0 %3223, %v500
      %v3225 = vpop.permute.xlu0 %3224
      %3227 = vset.pattern.permute.xlu0 2
      %3228 = vperm.xlu0 %3227, %v501
      %v3229 = vpop.permute.xlu0 %3228
      %3231 = vset.pattern.permute.xlu0 2
      %3232 = vperm.xlu0 %3231, %v502
      %v3233 = vpop.permute.xlu0 %3232
      %3235 = vset.pattern.permute.xlu0 2
      %3236 = vperm.xlu0 %3235, %v503
      %v3237 = vpop.permute.xlu0 %3236
      %3239 = vset.pattern.permute.xlu0 2
      %3240 = vperm.xlu0 %3239, %v504
      %v3241 = vpop.permute.xlu0 %3240
      %3243 = vset.pattern.permute.xlu0 2
      %3244 = vperm.xlu0 %3243, %v505
      %v3245 = vpop.permute.xlu0 %3244
      %3247 = vset.pattern.permute.xlu0 2
      %3248 = vperm.xlu0 %3247, %v506
      %v3249 = vpop.permute.xlu0 %3248
      %3251 = vset.pattern.permute.xlu0 2
      %3252 = vperm.xlu0 %3251, %v507
      %v3253 = vpop.permute.xlu0 %3252
      %3255 = vset.pattern.permute.xlu0 2
      %3256 = vperm.xlu0 %3255, %v508
      %v3257 = vpop.permute.xlu0 %3256
      %3259 = vset.pattern.permute.xlu0 2
      %3260 = vperm.xlu0 %3259, %v509
      %v3261 = vpop.permute.xlu0 %3260
      %3263 = vset.pattern.permute.xlu0 2
      %3264 = vperm.xlu0 %3263, %v510
      %v3265 = vpop.permute.xlu0 %3264
      %3267 = vset.pattern.permute.xlu0 2
      %3268 = vperm.xlu0 %3267, %v511
      %v3269 = vpop.permute.xlu0 %3268
      %3271 = vset.pattern.permute.xlu0 2
      %3272 = vperm.xlu0 %3271, %v512
      %v3273 = vpop.permute.xlu0 %3272
      %3275 = vset.pattern.permute.xlu0 2
      %3276 = vperm.xlu0 %3275, %v513
      %v3277 = vpop.permute.xlu0 %3276
      %3279 = vset.pattern.permute.xlu0 2
      %3280 = vperm.xlu0 %3279, %v514
      %v3281 = vpop.permute.xlu0 %3280
      %3283 = vset.pattern.permute.xlu0 2
      %3284 = vperm.xlu0 %3283, %v515
      %v3285 = vpop.permute.xlu0 %3284
      %3287 = vset.pattern.permute.xlu0 2
      %3288 = vperm.xlu0 %3287, %v516
      %v3289 = vpop.permute.xlu0 %3288
      %3291 = vset.pattern.permute.xlu0 2
      %3292 = vperm.xlu0 %3291, %v517
      %v3293 = vpop.permute.xlu0 %3292
      %3295 = vset.pattern.permute.xlu0 2
      %3296 = vperm.xlu0 %3295, %v518
      %v3297 = vpop.permute.xlu0 %3296
      %3299 = vset.pattern.permute.xlu0 2
      %3300 = vperm.xlu0 %3299, %v519
      %v3301 = vpop.permute.xlu0 %3300
      %3303 = vset.pattern.permute.xlu0 2
      %3304 = vperm.xlu0 %3303, %v520
      %v3305 = vpop.permute.xlu0 %3304
      %3307 = vset.pattern.permute.xlu0 2
      %3308 = vperm.xlu0 %3307, %v521
      %v3309 = vpop.permute.xlu0 %3308
      %3311 = vset.pattern.permute.xlu0 2
      %3312 = vperm.xlu0 %3311, %v522
      %v3313 = vpop.permute.xlu0 %3312
      %3315 = vset.pattern.permute.xlu0 2
      %3316 = vperm.xlu0 %3315, %v523
      %v3317 = vpop.permute.xlu0 %3316
      %3319 = vset.pattern.permute.xlu0 2
      %3320 = vperm.xlu0 %3319, %v524
      %v3321 = vpop.permute.xlu0 %3320
      %3323 = vset.pattern.permute.xlu0 2
      %3324 = vperm.xlu0 %3323, %v525
      %v3325 = vpop.permute.xlu0 %3324
      %3327 = vset.pattern.permute.xlu0 2
      %3328 = vperm.xlu0 %3327, %v526
      %v3329 = vpop.permute.xlu0 %3328
      %3331 = vset.pattern.permute.xlu0 2
      %3332 = vperm.xlu0 %3331, %v527
      %v3333 = vpop.permute.xlu0 %3332
      %3335 = vset.pattern.permute.xlu0 2
      %3336 = vperm.xlu0 %3335, %v528
      %v3337 = vpop.permute.xlu0 %3336
      %3339 = vset.pattern.permute.xlu0 2
      %3340 = vperm.xlu0 %3339, %v529
      %v3341 = vpop.permute.xlu0 %3340
      %3343 = vset.pattern.permute.xlu0 2
      %3344 = vperm.xlu0 %3343, %v530
      %v3345 = vpop.permute.xlu0 %3344
      %3347 = vset.pattern.permute.xlu0 2
      %3348 = vperm.xlu0 %3347, %v531
      %v3349 = vpop.permute.xlu0 %3348
      %3351 = vset.pattern.permute.xlu0 2
      %3352 = vperm.xlu0 %3351, %v532
      %v3353 = vpop.permute.xlu0 %3352
      %3355 = vset.pattern.permute.xlu0 2
      %3356 = vperm.xlu0 %3355, %v533
      %v3357 = vpop.permute.xlu0 %3356
      %3359 = vset.pattern.permute.xlu0 2
      %3360 = vperm.xlu0 %3359, %v534
      %v3361 = vpop.permute.xlu0 %3360
      %3363 = vset.pattern.permute.xlu0 2
      %3364 = vperm.xlu0 %3363, %v535
      %v3365 = vpop.permute.xlu0 %3364
      %3367 = vset.pattern.permute.xlu0 2
      %3368 = vperm.xlu0 %3367, %v536
      %v3369 = vpop.permute.xlu0 %3368
      %3371 = vset.pattern.permute.xlu0 2
      %3372 = vperm.xlu0 %3371, %v537
      %v3373 = vpop.permute.xlu0 %3372
      %3375 = vset.pattern.permute.xlu0 2
      %3376 = vperm.xlu0 %3375, %v538
      %v3377 = vpop.permute.xlu0 %3376
      %3379 = vset.pattern.permute.xlu0 2
      %3380 = vperm.xlu0 %3379, %v539
      %v3381 = vpop.permute.xlu0 %3380
      %3383 = vset.pattern.permute.xlu0 2
      %3384 = vperm.xlu0 %3383, %v540
      %v3385 = vpop.permute.xlu0 %3384
      %3387 = vset.pattern.permute.xlu0 2
      %3388 = vperm.xlu0 %3387, %v541
      %v3389 = vpop.permute.xlu0 %3388
      %3391 = vset.pattern.permute.xlu0 2
      %3392 = vperm.xlu0 %3391, %v542
      %v3393 = vpop.permute.xlu0 %3392
      %3395 = vset.pattern.permute.xlu0 2
      %3396 = vperm.xlu0 %3395, %v543
      %v3397 = vpop.permute.xlu0 %3396
      %3399 = vset.pattern.permute.xlu0 2
      %3400 = vperm.xlu0 %3399, %v544
      %v3401 = vpop.permute.xlu0 %3400
      %3403 = vset.pattern.permute.xlu0 2
      %3404 = vperm.xlu0 %3403, %v545
      %v3405 = vpop.permute.xlu0 %3404
      %3407 = vset.pattern.permute.xlu0 2
      %3408 = vperm.xlu0 %3407, %v546
      %v3409 = vpop.permute.xlu0 %3408
      %3411 = vset.pattern.permute.xlu0 2
      %3412 = vperm.xlu0 %3411, %v547
      %v3413 = vpop.permute.xlu0 %3412
      %3415 = vset.pattern.permute.xlu0 2
      %3416 = vperm.xlu0 %3415, %v548
      %v3417 = vpop.permute.xlu0 %3416
      %3419 = vset.pattern.permute.xlu0 2
      %3420 = vperm.xlu0 %3419, %v549
      %v3421 = vpop.permute.xlu0 %3420
      %3423 = vset.pattern.permute.xlu0 2
      %3424 = vperm.xlu0 %3423, %v550
      %v3425 = vpop.permute.xlu0 %3424
      %3427 = vset.pattern.permute.xlu0 2
      %3428 = vperm.xlu0 %3427, %v551
      %v3429 = vpop.permute.xlu0 %3428
      %3431 = vset.pattern.permute.xlu0 2
      %3432 = vperm.xlu0 %3431, %v552
      %v3433 = vpop.permute.xlu0 %3432
      %3435 = vset.pattern.permute.xlu0 2
      %3436 = vperm.xlu0 %3435, %v553
      %v3437 = vpop.permute.xlu0 %3436
      %3439 = vset.pattern.permute.xlu0 2
      %3440 = vperm.xlu0 %3439, %v554
      %v3441 = vpop.permute.xlu0 %3440
      %3443 = vset.pattern.permute.xlu0 2
      %3444 = vperm.xlu0 %3443, %v555
      %v3445 = vpop.permute.xlu0 %3444
      %3447 = vset.pattern.permute.xlu0 2
      %3448 = vperm.xlu0 %3447, %v556
      %v3449 = vpop.permute.xlu0 %3448
      %3451 = vset.pattern.permute.xlu0 2
      %3452 = vperm.xlu0 %3451, %v557
      %v3453 = vpop.permute.xlu0 %3452
      %3455 = vset.pattern.permute.xlu0 2
      %3456 = vperm.xlu0 %3455, %v558
      %v3457 = vpop.permute.xlu0 %3456
      %3459 = vset.pattern.permute.xlu0 2
      %3460 = vperm.xlu0 %3459, %v559
      %v3461 = vpop.permute.xlu0 %3460
      %3463 = vset.pattern.permute.xlu0 2
      %3464 = vperm.xlu0 %3463, %v560
      %v3465 = vpop.permute.xlu0 %3464
      %3467 = vset.pattern.permute.xlu0 2
      %3468 = vperm.xlu0 %3467, %v561
      %v3469 = vpop.permute.xlu0 %3468
      %3471 = vset.pattern.permute.xlu0 2
      %3472 = vperm.xlu0 %3471, %v562
      %v3473 = vpop.permute.xlu0 %3472
      %3475 = vset.pattern.permute.xlu0 2
      %3476 = vperm.xlu0 %3475, %v563
      %v3477 = vpop.permute.xlu0 %3476
      %3479 = vset.pattern.permute.xlu0 2
      %3480 = vperm.xlu0 %3479, %v564
      %v3481 = vpop.permute.xlu0 %3480
      %3483 = vset.pattern.permute.xlu0 2
      %3484 = vperm.xlu0 %3483, %v565
      %v3485 = vpop.permute.xlu0 %3484
      %3487 = vset.pattern.permute.xlu0 2
      %3488 = vperm.xlu0 %3487, %v566
      %v3489 = vpop.permute.xlu0 %3488
      %3491 = vset.pattern.permute.xlu0 2
      %3492 = vperm.xlu0 %3491, %v567
      %v3493 = vpop.permute.xlu0 %3492
      %3495 = vset.pattern.permute.xlu0 2
      %3496 = vperm.xlu0 %3495, %v568
      %v3497 = vpop.permute.xlu0 %3496
      %3499 = vset.pattern.permute.xlu0 2
      %3500 = vperm.xlu0 %3499, %v569
      %v3501 = vpop.permute.xlu0 %3500
      %3503 = vset.pattern.permute.xlu0 2
      %3504 = vperm.xlu0 %3503, %v570
      %v3505 = vpop.permute.xlu0 %3504
      %3507 = vset.pattern.permute.xlu0 2
      %3508 = vperm.xlu0 %3507, %v571
      %v3509 = vpop.permute.xlu0 %3508
      %3511 = vset.pattern.permute.xlu0 2
      %3512 = vperm.xlu0 %3511, %v572
      %v3513 = vpop.permute.xlu0 %3512
      %3515 = vset.pattern.permute.xlu0 2
      %3516 = vperm.xlu0 %3515, %v573
      %v3517 = vpop.permute.xlu0 %3516
      %3519 = vset.pattern.permute.xlu0 2
      %3520 = vperm.xlu0 %3519, %v574
      %v3521 = vpop.permute.xlu0 %3520
      %3523 = vset.pattern.permute.xlu0 2
      %3524 = vperm.xlu0 %3523, %v575
      %v3525 = vpop.permute.xlu0 %3524
      %3527 = vset.pattern.permute.xlu0 2
      %3528 = vperm.xlu0 %3527, %v576
      %v3529 = vpop.permute.xlu0 %3528
      %3531 = vset.pattern.permute.xlu0 2
      %3532 = vperm.xlu0 %3531, %v577
      %v3533 = vpop.permute.xlu0 %3532
      %3535 = vset.pattern.permute.xlu0 2
      %3536 = vperm.xlu0 %3535, %v578
      %v3537 = vpop.permute.xlu0 %3536
      %3539 = vset.pattern.permute.xlu0 2
      %3540 = vperm.xlu0 %3539, %v579
      %v3541 = vpop.permute.xlu0 %3540
      %3543 = vset.pattern.permute.xlu0 2
      %3544 = vperm.xlu0 %3543, %v580
      %v3545 = vpop.permute.xlu0 %3544
      %3547 = vset.pattern.permute.xlu0 2
      %3548 = vperm.xlu0 %3547, %v581
      %v3549 = vpop.permute.xlu0 %3548
      %3551 = vset.pattern.permute.xlu0 2
      %3552 = vperm.xlu0 %3551, %v582
      %v3553 = vpop.permute.xlu0 %3552
      %3555 = vset.pattern.permute.xlu0 2
      %3556 = vperm.xlu0 %3555, %v583
      %v3557 = vpop.permute.xlu0 %3556
      %3559 = vset.pattern.permute.xlu0 2
      %3560 = vperm.xlu0 %3559, %v584
      %v3561 = vpop.permute.xlu0 %3560
      %3563 = vset.pattern.permute.xlu0 2
      %3564 = vperm.xlu0 %3563, %v585
      %v3565 = vpop.permute.xlu0 %3564
      %3567 = vset.pattern.permute.xlu0 2
      %3568 = vperm.xlu0 %3567, %v586
      %v3569 = vpop.permute.xlu0 %3568
      %3571 = vset.pattern.permute.xlu0 2
      %3572 = vperm.xlu0 %3571, %v587
      %v3573 = vpop.permute.xlu0 %3572
      %3575 = vset.pattern.permute.xlu0 2
      %3576 = vperm.xlu0 %3575, %v588
      %v3577 = vpop.permute.xlu0 %3576
      %3579 = vset.pattern.permute.xlu0 2
      %3580 = vperm.xlu0 %3579, %v589
      %v3581 = vpop.permute.xlu0 %3580
      %3583 = vset.pattern.permute.xlu0 2
      %3584 = vperm.xlu0 %3583, %v590
      %v3585 = vpop.permute.xlu0 %3584
      %3587 = vset.pattern.permute.xlu0 2
      %3588 = vperm.xlu0 %3587, %v591
      %v3589 = vpop.permute.xlu0 %3588
      %3591 = vset.pattern.permute.xlu0 2
      %3592 = vperm.xlu0 %3591, %v592
      %v3593 = vpop.permute.xlu0 %3592
      %3595 = vset.pattern.permute.xlu0 2
      %3596 = vperm.xlu0 %3595, %v593
      %v3597 = vpop.permute.xlu0 %3596
      %3599 = vset.pattern.permute.xlu0 2
      %3600 = vperm.xlu0 %3599, %v594
      %v3601 = vpop.permute.xlu0 %3600
      %3603 = vset.pattern.permute.xlu0 2
      %3604 = vperm.xlu0 %3603, %v595
      %v3605 = vpop.permute.xlu0 %3604
      %3607 = vset.pattern.permute.xlu0 2
      %3608 = vperm.xlu0 %3607, %v596
      %v3609 = vpop.permute.xlu0 %3608
      %3611 = vset.pattern.permute.xlu0 2
      %3612 = vperm.xlu0 %3611, %v597
      %v3613 = vpop.permute.xlu0 %3612
      %3615 = vset.pattern.permute.xlu0 2
      %3616 = vperm.xlu0 %3615, %v598
      %v3617 = vpop.permute.xlu0 %3616
      %3619 = vset.pattern.permute.xlu0 2
      %3620 = vperm.xlu0 %3619, %v599
      %v3621 = vpop.permute.xlu0 %3620
      %3623 = vset.pattern.permute.xlu0 2
      %3624 = vperm.xlu0 %3623, %v600
      %v3625 = vpop.permute.xlu0 %3624
      %3627 = vset.pattern.permute.xlu0 2
      %3628 = vperm.xlu0 %3627, %v601
      %v3629 = vpop.permute.xlu0 %3628
      %3631 = vset.pattern.permute.xlu0 2
      %3632 = vperm.xlu0 %3631, %v602
      %v3633 = vpop.permute.xlu0 %3632
      %3635 = vset.pattern.permute.xlu0 2
      %3636 = vperm.xlu0 %3635, %v603
      %v3637 = vpop.permute.xlu0 %3636
      %3639 = vset.pattern.permute.xlu0 2
      %3640 = vperm.xlu0 %3639, %v604
      %v3641 = vpop.permute.xlu0 %3640
      %3643 = vset.pattern.permute.xlu0 2
      %3644 = vperm.xlu0 %3643, %v605
      %v3645 = vpop.permute.xlu0 %3644
      %3647 = vset.pattern.permute.xlu0 2
      %3648 = vperm.xlu0 %3647, %v606
      %v3649 = vpop.permute.xlu0 %3648
      %3651 = vset.pattern.permute.xlu0 2
      %3652 = vperm.xlu0 %3651, %v607
      %v3653 = vpop.permute.xlu0 %3652
      %3655 = vset.pattern.permute.xlu0 2
      %3656 = vperm.xlu0 %3655, %v608
      %v3657 = vpop.permute.xlu0 %3656
      %3659 = vset.pattern.permute.xlu0 2
      %3660 = vperm.xlu0 %3659, %v609
      %v3661 = vpop.permute.xlu0 %3660
      %3663 = vset.pattern.permute.xlu0 2
      %3664 = vperm.xlu0 %3663, %v610
      %v3665 = vpop.permute.xlu0 %3664
      %3667 = vset.pattern.permute.xlu0 2
      %3668 = vperm.xlu0 %3667, %v611
      %v3669 = vpop.permute.xlu0 %3668
      %3671 = vset.pattern.permute.xlu0 2
      %3672 = vperm.xlu0 %3671, %v612
      %v3673 = vpop.permute.xlu0 %3672
      %3675 = vset.pattern.permute.xlu0 2
      %3676 = vperm.xlu0 %3675, %v613
      %v3677 = vpop.permute.xlu0 %3676
      %3679 = vset.pattern.permute.xlu0 2
      %3680 = vperm.xlu0 %3679, %v614
      %v3681 = vpop.permute.xlu0 %3680
      %3683 = vset.pattern.permute.xlu0 2
      %3684 = vperm.xlu0 %3683, %v615
      %v3685 = vpop.permute.xlu0 %3684
      %3687 = vset.pattern.permute.xlu0 2
      %3688 = vperm.xlu0 %3687, %v616
      %v3689 = vpop.permute.xlu0 %3688
      %3691 = vset.pattern.permute.xlu0 2
      %3692 = vperm.xlu0 %3691, %v617
      %v3693 = vpop.permute.xlu0 %3692
      %v3695 = vlaneseq
      %v3696 = vshrl.u32 %v3695, 7
      %v3697 = vsub.s32 2, %v3696
      %v3698 = vrot.slane %v457, %v3697
      %v3699 = vlaneseq
      %v3700 = vshrl.u32 %v3699, 7
      %v3701 = vsub.s32 6, %v3700
      %v3702 = vrot.slane %v457, %v3701
      %v3705 = vlaneseq
      %v3706 = vshrl.u32 %v3705, 7
      %v3707 = vsub.s32 2, %v3706
      %v3708 = vrot.slane %v3698, %v3707
      %v3709 = vlaneseq
      %v3710 = vshrl.u32 %v3709, 7
      %v3711 = vsub.s32 2, %v3710
      %v3712 = vrot.slane %v3702, %v3711
      %v3713 = vmul.f32 %v3057, %v3708
      %v3714 = vmul.f32 %v3057, %v3712
      %v3715 = vmul.f32 %v3061, %v3708
      %v3716 = vmul.f32 %v3061, %v3712
      %v3717 = vmul.f32 %v3065, %v3708
      %v3718 = vmul.f32 %v3065, %v3712
      %v3719 = vmul.f32 %v3069, %v3708
      %v3720 = vmul.f32 %v3069, %v3712
      %v3721 = vmul.f32 %v3073, %v3708
      %v3722 = vmul.f32 %v3073, %v3712
      %v3723 = vmul.f32 %v3077, %v3708
      %v3724 = vmul.f32 %v3077, %v3712
      %v3725 = vmul.f32 %v3081, %v3708
      %v3726 = vmul.f32 %v3081, %v3712
      %v3727 = vmul.f32 %v3085, %v3708
      %v3728 = vmul.f32 %v3085, %v3712
      %v3729 = vmul.f32 %v3089, %v3708
      %v3730 = vmul.f32 %v3089, %v3712
      %v3731 = vmul.f32 %v3093, %v3708
      %v3732 = vmul.f32 %v3093, %v3712
      %v3733 = vmul.f32 %v3097, %v3708
      %v3734 = vmul.f32 %v3097, %v3712
      %v3735 = vmul.f32 %v3101, %v3708
      %v3736 = vmul.f32 %v3101, %v3712
      %v3737 = vmul.f32 %v3105, %v3708
      %v3738 = vmul.f32 %v3105, %v3712
      %v3739 = vmul.f32 %v3109, %v3708
      %v3740 = vmul.f32 %v3109, %v3712
      %v3741 = vmul.f32 %v3113, %v3708
      %v3742 = vmul.f32 %v3113, %v3712
      %v3743 = vmul.f32 %v3117, %v3708
      %v3744 = vmul.f32 %v3117, %v3712
      %v3745 = vmul.f32 %v3121, %v3708
      %v3746 = vmul.f32 %v3121, %v3712
      %v3747 = vmul.f32 %v3125, %v3708
      %v3748 = vmul.f32 %v3125, %v3712
      %v3749 = vmul.f32 %v3129, %v3708
      %v3750 = vmul.f32 %v3129, %v3712
      %v3751 = vmul.f32 %v3133, %v3708
      %v3752 = vmul.f32 %v3133, %v3712
      %v3753 = vmul.f32 %v3137, %v3708
      %v3754 = vmul.f32 %v3137, %v3712
      %v3755 = vmul.f32 %v3141, %v3708
      %v3756 = vmul.f32 %v3141, %v3712
      %v3757 = vmul.f32 %v3145, %v3708
      %v3758 = vmul.f32 %v3145, %v3712
      %v3759 = vmul.f32 %v3149, %v3708
      %v3760 = vmul.f32 %v3149, %v3712
      %v3761 = vmul.f32 %v3153, %v3708
      %v3762 = vmul.f32 %v3153, %v3712
      %v3763 = vmul.f32 %v3157, %v3708
      %v3764 = vmul.f32 %v3157, %v3712
      %v3765 = vmul.f32 %v3161, %v3708
      %v3766 = vmul.f32 %v3161, %v3712
      %v3767 = vmul.f32 %v3165, %v3708
      %v3768 = vmul.f32 %v3165, %v3712
      %v3769 = vmul.f32 %v3169, %v3708
      %v3770 = vmul.f32 %v3169, %v3712
      %v3771 = vmul.f32 %v3173, %v3708
      %v3772 = vmul.f32 %v3173, %v3712
      %v3773 = vmul.f32 %v3177, %v3708
      %v3774 = vmul.f32 %v3177, %v3712
      %v3775 = vmul.f32 %v3181, %v3708
      %v3776 = vmul.f32 %v3181, %v3712
      %v3777 = vmul.f32 %v3185, %v3708
      %v3778 = vmul.f32 %v3185, %v3712
      %v3779 = vmul.f32 %v3189, %v3708
      %v3780 = vmul.f32 %v3189, %v3712
      %v3781 = vmul.f32 %v3193, %v3708
      %v3782 = vmul.f32 %v3193, %v3712
      %v3783 = vmul.f32 %v3197, %v3708
      %v3784 = vmul.f32 %v3197, %v3712
      %v3785 = vmul.f32 %v3201, %v3708
      %v3786 = vmul.f32 %v3201, %v3712
      %v3787 = vmul.f32 %v3205, %v3708
      %v3788 = vmul.f32 %v3205, %v3712
      %v3789 = vmul.f32 %v3209, %v3708
      %v3790 = vmul.f32 %v3209, %v3712
      %v3791 = vmul.f32 %v3213, %v3708
      %v3792 = vmul.f32 %v3213, %v3712
      %v3793 = vmul.f32 %v3217, %v3708
      %v3794 = vmul.f32 %v3217, %v3712
      %v3795 = vmul.f32 %v3221, %v3708
      %v3796 = vmul.f32 %v3221, %v3712
      %v3797 = vmul.f32 %v3225, %v3708
      %v3798 = vmul.f32 %v3225, %v3712
      %v3799 = vmul.f32 %v3229, %v3708
      %v3800 = vmul.f32 %v3229, %v3712
      %v3801 = vmul.f32 %v3233, %v3708
      %v3802 = vmul.f32 %v3233, %v3712
      %v3803 = vmul.f32 %v3237, %v3708
      %v3804 = vmul.f32 %v3237, %v3712
      %v3805 = vmul.f32 %v3241, %v3708
      %v3806 = vmul.f32 %v3241, %v3712
      %v3807 = vmul.f32 %v3245, %v3708
      %v3808 = vmul.f32 %v3245, %v3712
      %v3809 = vmul.f32 %v3249, %v3708
      %v3810 = vmul.f32 %v3249, %v3712
      %v3811 = vmul.f32 %v3253, %v3708
      %v3812 = vmul.f32 %v3253, %v3712
      %v3813 = vmul.f32 %v3257, %v3708
      %v3814 = vmul.f32 %v3257, %v3712
      %v3815 = vmul.f32 %v3261, %v3708
      %v3816 = vmul.f32 %v3261, %v3712
      %v3817 = vmul.f32 %v3265, %v3708
      %v3818 = vmul.f32 %v3265, %v3712
      %v3819 = vmul.f32 %v3269, %v3708
      %v3820 = vmul.f32 %v3269, %v3712
      %v3821 = vmul.f32 %v3273, %v3708
      %v3822 = vmul.f32 %v3273, %v3712
      %v3823 = vmul.f32 %v3277, %v3708
      %v3824 = vmul.f32 %v3277, %v3712
      %v3825 = vmul.f32 %v3281, %v3708
      %v3826 = vmul.f32 %v3281, %v3712
      %v3827 = vmul.f32 %v3285, %v3708
      %v3828 = vmul.f32 %v3285, %v3712
      %v3829 = vmul.f32 %v3289, %v3708
      %v3830 = vmul.f32 %v3289, %v3712
      %v3831 = vmul.f32 %v3293, %v3708
      %v3832 = vmul.f32 %v3293, %v3712
      %v3833 = vmul.f32 %v3297, %v3708
      %v3834 = vmul.f32 %v3297, %v3712
      %v3835 = vmul.f32 %v3301, %v3708
      %v3836 = vmul.f32 %v3301, %v3712
      %v3837 = vmul.f32 %v3305, %v3708
      %v3838 = vmul.f32 %v3305, %v3712
      %v3839 = vmul.f32 %v3309, %v3708
      %v3840 = vmul.f32 %v3309, %v3712
      %v3841 = vmul.f32 %v3313, %v3708
      %v3842 = vmul.f32 %v3313, %v3712
      %v3843 = vmul.f32 %v3317, %v3708
      %v3844 = vmul.f32 %v3317, %v3712
      %v3845 = vmul.f32 %v3321, %v3708
      %v3846 = vmul.f32 %v3321, %v3712
      %v3847 = vmul.f32 %v3325, %v3708
      %v3848 = vmul.f32 %v3325, %v3712
      %v3849 = vmul.f32 %v3329, %v3708
      %v3850 = vmul.f32 %v3329, %v3712
      %v3851 = vmul.f32 %v3333, %v3708
      %v3852 = vmul.f32 %v3333, %v3712
      %v3853 = vmul.f32 %v3337, %v3708
      %v3854 = vmul.f32 %v3337, %v3712
      %v3855 = vmul.f32 %v3341, %v3708
      %v3856 = vmul.f32 %v3341, %v3712
      %v3857 = vmul.f32 %v3345, %v3708
      %v3858 = vmul.f32 %v3345, %v3712
      %v3859 = vmul.f32 %v3349, %v3708
      %v3860 = vmul.f32 %v3349, %v3712
      %v3861 = vmul.f32 %v3353, %v3708
      %v3862 = vmul.f32 %v3353, %v3712
      %v3863 = vmul.f32 %v3357, %v3708
      %v3864 = vmul.f32 %v3357, %v3712
      %v3865 = vmul.f32 %v3361, %v3708
      %v3866 = vmul.f32 %v3361, %v3712
      %v3867 = vmul.f32 %v3365, %v3708
      %v3868 = vmul.f32 %v3365, %v3712
      %v3869 = vmul.f32 %v3369, %v3708
      %v3870 = vmul.f32 %v3369, %v3712
      %v3871 = vmul.f32 %v3373, %v3708
      %v3872 = vmul.f32 %v3373, %v3712
      %v3873 = vmul.f32 %v3377, %v3708
      %v3874 = vmul.f32 %v3377, %v3712
      %v3875 = vmul.f32 %v3381, %v3708
      %v3876 = vmul.f32 %v3381, %v3712
      %v3877 = vmul.f32 %v3385, %v3708
      %v3878 = vmul.f32 %v3385, %v3712
      %v3879 = vmul.f32 %v3389, %v3708
      %v3880 = vmul.f32 %v3389, %v3712
      %v3881 = vmul.f32 %v3393, %v3708
      %v3882 = vmul.f32 %v3393, %v3712
      %v3883 = vmul.f32 %v3397, %v3708
      %v3884 = vmul.f32 %v3397, %v3712
      %v3885 = vmul.f32 %v3401, %v3708
      %v3886 = vmul.f32 %v3401, %v3712
      %v3887 = vmul.f32 %v3405, %v3708
      %v3888 = vmul.f32 %v3405, %v3712
      %v3889 = vmul.f32 %v3409, %v3708
      %v3890 = vmul.f32 %v3409, %v3712
      %v3891 = vmul.f32 %v3413, %v3708
      %v3892 = vmul.f32 %v3413, %v3712
      %v3893 = vmul.f32 %v3417, %v3708
      %v3894 = vmul.f32 %v3417, %v3712
      %v3895 = vmul.f32 %v3421, %v3708
      %v3896 = vmul.f32 %v3421, %v3712
      %v3897 = vmul.f32 %v3425, %v3708
      %v3898 = vmul.f32 %v3425, %v3712
      %v3899 = vmul.f32 %v3429, %v3708
      %v3900 = vmul.f32 %v3429, %v3712
      %v3901 = vmul.f32 %v3433, %v3708
      %v3902 = vmul.f32 %v3433, %v3712
      %v3903 = vmul.f32 %v3437, %v3708
      %v3904 = vmul.f32 %v3437, %v3712
      %v3905 = vmul.f32 %v3441, %v3708
      %v3906 = vmul.f32 %v3441, %v3712
      %v3907 = vmul.f32 %v3445, %v3708
      %v3908 = vmul.f32 %v3445, %v3712
      %v3909 = vmul.f32 %v3449, %v3708
      %v3910 = vmul.f32 %v3449, %v3712
      %v3911 = vmul.f32 %v3453, %v3708
      %v3912 = vmul.f32 %v3453, %v3712
      %v3913 = vmul.f32 %v3457, %v3708
      %v3914 = vmul.f32 %v3457, %v3712
      %v3915 = vmul.f32 %v3461, %v3708
      %v3916 = vmul.f32 %v3461, %v3712
      %v3917 = vmul.f32 %v3465, %v3708
      %v3918 = vmul.f32 %v3465, %v3712
      %v3919 = vmul.f32 %v3469, %v3708
      %v3920 = vmul.f32 %v3469, %v3712
      %v3921 = vmul.f32 %v3473, %v3708
      %v3922 = vmul.f32 %v3473, %v3712
      %v3923 = vmul.f32 %v3477, %v3708
      %v3924 = vmul.f32 %v3477, %v3712
      %v3925 = vmul.f32 %v3481, %v3708
      %v3926 = vmul.f32 %v3481, %v3712
      %v3927 = vmul.f32 %v3485, %v3708
      %v3928 = vmul.f32 %v3485, %v3712
      %v3929 = vmul.f32 %v3489, %v3708
      %v3930 = vmul.f32 %v3489, %v3712
      %v3931 = vmul.f32 %v3493, %v3708
      %v3932 = vmul.f32 %v3493, %v3712
      %v3933 = vmul.f32 %v3497, %v3708
      %v3934 = vmul.f32 %v3497, %v3712
      %v3935 = vmul.f32 %v3501, %v3708
      %v3936 = vmul.f32 %v3501, %v3712
      %v3937 = vmul.f32 %v3505, %v3708
      %v3938 = vmul.f32 %v3505, %v3712
      %v3939 = vmul.f32 %v3509, %v3708
      %v3940 = vmul.f32 %v3509, %v3712
      %v3941 = vmul.f32 %v3513, %v3708
      %v3942 = vmul.f32 %v3513, %v3712
      %v3943 = vmul.f32 %v3517, %v3708
      %v3944 = vmul.f32 %v3517, %v3712
      %v3945 = vmul.f32 %v3521, %v3708
      %v3946 = vmul.f32 %v3521, %v3712
      %v3947 = vmul.f32 %v3525, %v3708
      %v3948 = vmul.f32 %v3525, %v3712
      %v3949 = vmul.f32 %v3529, %v3708
      %v3950 = vmul.f32 %v3529, %v3712
      %v3951 = vmul.f32 %v3533, %v3708
      %v3952 = vmul.f32 %v3533, %v3712
      %v3953 = vmul.f32 %v3537, %v3708
      %v3954 = vmul.f32 %v3537, %v3712
      %v3955 = vmul.f32 %v3541, %v3708
      %v3956 = vmul.f32 %v3541, %v3712
      %v3957 = vmul.f32 %v3545, %v3708
      %v3958 = vmul.f32 %v3545, %v3712
      %v3959 = vmul.f32 %v3549, %v3708
      %v3960 = vmul.f32 %v3549, %v3712
      %v3961 = vmul.f32 %v3553, %v3708
      %v3962 = vmul.f32 %v3553, %v3712
      %v3963 = vmul.f32 %v3557, %v3708
      %v3964 = vmul.f32 %v3557, %v3712
      %v3965 = vmul.f32 %v3561, %v3708
      %v3966 = vmul.f32 %v3561, %v3712
      %v3967 = vmul.f32 %v3565, %v3708
      %v3968 = vmul.f32 %v3565, %v3712
      %v3969 = vmul.f32 %v3569, %v3708
      %v3970 = vmul.f32 %v3569, %v3712
      %v3971 = vmul.f32 %v3573, %v3708
      %v3972 = vmul.f32 %v3573, %v3712
      %v3973 = vmul.f32 %v3577, %v3708
      %v3974 = vmul.f32 %v3577, %v3712
      %v3975 = vmul.f32 %v3581, %v3708
      %v3976 = vmul.f32 %v3581, %v3712
      %v3977 = vmul.f32 %v3585, %v3708
      %v3978 = vmul.f32 %v3585, %v3712
      %v3979 = vmul.f32 %v3589, %v3708
      %v3980 = vmul.f32 %v3589, %v3712
      %v3981 = vmul.f32 %v3593, %v3708
      %v3982 = vmul.f32 %v3593, %v3712
      %v3983 = vmul.f32 %v3597, %v3708
      %v3984 = vmul.f32 %v3597, %v3712
      %v3985 = vmul.f32 %v3601, %v3708
      %v3986 = vmul.f32 %v3601, %v3712
      %v3987 = vmul.f32 %v3605, %v3708
      %v3988 = vmul.f32 %v3605, %v3712
      %v3989 = vmul.f32 %v3609, %v3708
      %v3990 = vmul.f32 %v3609, %v3712
      %v3991 = vmul.f32 %v3613, %v3708
      %v3992 = vmul.f32 %v3613, %v3712
      %v3993 = vmul.f32 %v3617, %v3708
      %v3994 = vmul.f32 %v3617, %v3712
      %v3995 = vmul.f32 %v3621, %v3708
      %v3996 = vmul.f32 %v3621, %v3712
      %v3997 = vmul.f32 %v3625, %v3708
      %v3998 = vmul.f32 %v3625, %v3712
      %v3999 = vmul.f32 %v3629, %v3708
      %v4000 = vmul.f32 %v3629, %v3712
      %v4001 = vmul.f32 %v3633, %v3708
      %v4002 = vmul.f32 %v3633, %v3712
      %v4003 = vmul.f32 %v3637, %v3708
      %v4004 = vmul.f32 %v3637, %v3712
      %v4005 = vmul.f32 %v3641, %v3708
      %v4006 = vmul.f32 %v3641, %v3712
      %v4007 = vmul.f32 %v3645, %v3708
      %v4008 = vmul.f32 %v3645, %v3712
      %v4009 = vmul.f32 %v3649, %v3708
      %v4010 = vmul.f32 %v3649, %v3712
      %v4011 = vmul.f32 %v3653, %v3708
      %v4012 = vmul.f32 %v3653, %v3712
      %v4013 = vmul.f32 %v3657, %v3708
      %v4014 = vmul.f32 %v3657, %v3712
      %v4015 = vmul.f32 %v3661, %v3708
      %v4016 = vmul.f32 %v3661, %v3712
      %v4017 = vmul.f32 %v3665, %v3708
      %v4018 = vmul.f32 %v3665, %v3712
      %v4019 = vmul.f32 %v3669, %v3708
      %v4020 = vmul.f32 %v3669, %v3712
      %v4021 = vmul.f32 %v3673, %v3708
      %v4022 = vmul.f32 %v3673, %v3712
      %v4023 = vmul.f32 %v3677, %v3708
      %v4024 = vmul.f32 %v3677, %v3712
      %v4025 = vmul.f32 %v3681, %v3708
      %v4026 = vmul.f32 %v3681, %v3712
      %v4027 = vmul.f32 %v3685, %v3708
      %v4028 = vmul.f32 %v3685, %v3712
      %v4029 = vmul.f32 %v3689, %v3708
      %v4030 = vmul.f32 %v3689, %v3712
      %v4031 = vmul.f32 %v3693, %v3708
      %v4032 = vmul.f32 %v3693, %v3712
      %v4033 = vadd.f32 %v2735, %v3713
      %v4034 = vadd.f32 %v2736, %v3714
      %v4035 = vadd.f32 %v2737, %v3715
      %v4036 = vadd.f32 %v2738, %v3716
      %v4037 = vadd.f32 %v2739, %v3717
      %v4038 = vadd.f32 %v2740, %v3718
      %v4039 = vadd.f32 %v2741, %v3719
      %v4040 = vadd.f32 %v2742, %v3720
      %v4041 = vadd.f32 %v2743, %v3721
      %v4042 = vadd.f32 %v2744, %v3722
      %v4043 = vadd.f32 %v2745, %v3723
      %v4044 = vadd.f32 %v2746, %v3724
      %v4045 = vadd.f32 %v2747, %v3725
      %v4046 = vadd.f32 %v2748, %v3726
      %v4047 = vadd.f32 %v2749, %v3727
      %v4048 = vadd.f32 %v2750, %v3728
      %v4049 = vadd.f32 %v2751, %v3729
      %v4050 = vadd.f32 %v2752, %v3730
      %v4051 = vadd.f32 %v2753, %v3731
      %v4052 = vadd.f32 %v2754, %v3732
      %v4053 = vadd.f32 %v2755, %v3733
      %v4054 = vadd.f32 %v2756, %v3734
      %v4055 = vadd.f32 %v2757, %v3735
      %v4056 = vadd.f32 %v2758, %v3736
      %v4057 = vadd.f32 %v2759, %v3737
      %v4058 = vadd.f32 %v2760, %v3738
      %v4059 = vadd.f32 %v2761, %v3739
      %v4060 = vadd.f32 %v2762, %v3740
      %v4061 = vadd.f32 %v2763, %v3741
      %v4062 = vadd.f32 %v2764, %v3742
      %v4063 = vadd.f32 %v2765, %v3743
      %v4064 = vadd.f32 %v2766, %v3744
      %v4065 = vadd.f32 %v2767, %v3745
      %v4066 = vadd.f32 %v2768, %v3746
      %v4067 = vadd.f32 %v2769, %v3747
      %v4068 = vadd.f32 %v2770, %v3748
      %v4069 = vadd.f32 %v2771, %v3749
      %v4070 = vadd.f32 %v2772, %v3750
      %v4071 = vadd.f32 %v2773, %v3751
      %v4072 = vadd.f32 %v2774, %v3752
      %v4073 = vadd.f32 %v2775, %v3753
      %v4074 = vadd.f32 %v2776, %v3754
      %v4075 = vadd.f32 %v2777, %v3755
      %v4076 = vadd.f32 %v2778, %v3756
      %v4077 = vadd.f32 %v2779, %v3757
      %v4078 = vadd.f32 %v2780, %v3758
      %v4079 = vadd.f32 %v2781, %v3759
      %v4080 = vadd.f32 %v2782, %v3760
      %v4081 = vadd.f32 %v2783, %v3761
      %v4082 = vadd.f32 %v2784, %v3762
      %v4083 = vadd.f32 %v2785, %v3763
      %v4084 = vadd.f32 %v2786, %v3764
      %v4085 = vadd.f32 %v2787, %v3765
      %v4086 = vadd.f32 %v2788, %v3766
      %v4087 = vadd.f32 %v2789, %v3767
      %v4088 = vadd.f32 %v2790, %v3768
      %v4089 = vadd.f32 %v2791, %v3769
      %v4090 = vadd.f32 %v2792, %v3770
      %v4091 = vadd.f32 %v2793, %v3771
      %v4092 = vadd.f32 %v2794, %v3772
      %v4093 = vadd.f32 %v2795, %v3773
      %v4094 = vadd.f32 %v2796, %v3774
      %v4095 = vadd.f32 %v2797, %v3775
      %v4096 = vadd.f32 %v2798, %v3776
      %v4097 = vadd.f32 %v2799, %v3777
      %v4098 = vadd.f32 %v2800, %v3778
      %v4099 = vadd.f32 %v2801, %v3779
      %v4100 = vadd.f32 %v2802, %v3780
      %v4101 = vadd.f32 %v2803, %v3781
      %v4102 = vadd.f32 %v2804, %v3782
      %v4103 = vadd.f32 %v2805, %v3783
      %v4104 = vadd.f32 %v2806, %v3784
      %v4105 = vadd.f32 %v2807, %v3785
      %v4106 = vadd.f32 %v2808, %v3786
      %v4107 = vadd.f32 %v2809, %v3787
      %v4108 = vadd.f32 %v2810, %v3788
      %v4109 = vadd.f32 %v2811, %v3789
      %v4110 = vadd.f32 %v2812, %v3790
      %v4111 = vadd.f32 %v2813, %v3791
      %v4112 = vadd.f32 %v2814, %v3792
      %v4113 = vadd.f32 %v2815, %v3793
      %v4114 = vadd.f32 %v2816, %v3794
      %v4115 = vadd.f32 %v2817, %v3795
      %v4116 = vadd.f32 %v2818, %v3796
      %v4117 = vadd.f32 %v2819, %v3797
      %v4118 = vadd.f32 %v2820, %v3798
      %v4119 = vadd.f32 %v2821, %v3799
      %v4120 = vadd.f32 %v2822, %v3800
      %v4121 = vadd.f32 %v2823, %v3801
      %v4122 = vadd.f32 %v2824, %v3802
      %v4123 = vadd.f32 %v2825, %v3803
      %v4124 = vadd.f32 %v2826, %v3804
      %v4125 = vadd.f32 %v2827, %v3805
      %v4126 = vadd.f32 %v2828, %v3806
      %v4127 = vadd.f32 %v2829, %v3807
      %v4128 = vadd.f32 %v2830, %v3808
      %v4129 = vadd.f32 %v2831, %v3809
      %v4130 = vadd.f32 %v2832, %v3810
      %v4131 = vadd.f32 %v2833, %v3811
      %v4132 = vadd.f32 %v2834, %v3812
      %v4133 = vadd.f32 %v2835, %v3813
      %v4134 = vadd.f32 %v2836, %v3814
      %v4135 = vadd.f32 %v2837, %v3815
      %v4136 = vadd.f32 %v2838, %v3816
      %v4137 = vadd.f32 %v2839, %v3817
      %v4138 = vadd.f32 %v2840, %v3818
      %v4139 = vadd.f32 %v2841, %v3819
      %v4140 = vadd.f32 %v2842, %v3820
      %v4141 = vadd.f32 %v2843, %v3821
      %v4142 = vadd.f32 %v2844, %v3822
      %v4143 = vadd.f32 %v2845, %v3823
      %v4144 = vadd.f32 %v2846, %v3824
      %v4145 = vadd.f32 %v2847, %v3825
      %v4146 = vadd.f32 %v2848, %v3826
      %v4147 = vadd.f32 %v2849, %v3827
      %v4148 = vadd.f32 %v2850, %v3828
      %v4149 = vadd.f32 %v2851, %v3829
      %v4150 = vadd.f32 %v2852, %v3830
      %v4151 = vadd.f32 %v2853, %v3831
      %v4152 = vadd.f32 %v2854, %v3832
      %v4153 = vadd.f32 %v2855, %v3833
      %v4154 = vadd.f32 %v2856, %v3834
      %v4155 = vadd.f32 %v2857, %v3835
      %v4156 = vadd.f32 %v2858, %v3836
      %v4157 = vadd.f32 %v2859, %v3837
      %v4158 = vadd.f32 %v2860, %v3838
      %v4159 = vadd.f32 %v2861, %v3839
      %v4160 = vadd.f32 %v2862, %v3840
      %v4161 = vadd.f32 %v2863, %v3841
      %v4162 = vadd.f32 %v2864, %v3842
      %v4163 = vadd.f32 %v2865, %v3843
      %v4164 = vadd.f32 %v2866, %v3844
      %v4165 = vadd.f32 %v2867, %v3845
      %v4166 = vadd.f32 %v2868, %v3846
      %v4167 = vadd.f32 %v2869, %v3847
      %v4168 = vadd.f32 %v2870, %v3848
      %v4169 = vadd.f32 %v2871, %v3849
      %v4170 = vadd.f32 %v2872, %v3850
      %v4171 = vadd.f32 %v2873, %v3851
      %v4172 = vadd.f32 %v2874, %v3852
      %v4173 = vadd.f32 %v2875, %v3853
      %v4174 = vadd.f32 %v2876, %v3854
      %v4175 = vadd.f32 %v2877, %v3855
      %v4176 = vadd.f32 %v2878, %v3856
      %v4177 = vadd.f32 %v2879, %v3857
      %v4178 = vadd.f32 %v2880, %v3858
      %v4179 = vadd.f32 %v2881, %v3859
      %v4180 = vadd.f32 %v2882, %v3860
      %v4181 = vadd.f32 %v2883, %v3861
      %v4182 = vadd.f32 %v2884, %v3862
      %v4183 = vadd.f32 %v2885, %v3863
      %v4184 = vadd.f32 %v2886, %v3864
      %v4185 = vadd.f32 %v2887, %v3865
      %v4186 = vadd.f32 %v2888, %v3866
      %v4187 = vadd.f32 %v2889, %v3867
      %v4188 = vadd.f32 %v2890, %v3868
      %v4189 = vadd.f32 %v2891, %v3869
      %v4190 = vadd.f32 %v2892, %v3870
      %v4191 = vadd.f32 %v2893, %v3871
      %v4192 = vadd.f32 %v2894, %v3872
      %v4193 = vadd.f32 %v2895, %v3873
      %v4194 = vadd.f32 %v2896, %v3874
      %v4195 = vadd.f32 %v2897, %v3875
      %v4196 = vadd.f32 %v2898, %v3876
      %v4197 = vadd.f32 %v2899, %v3877
      %v4198 = vadd.f32 %v2900, %v3878
      %v4199 = vadd.f32 %v2901, %v3879
      %v4200 = vadd.f32 %v2902, %v3880
      %v4201 = vadd.f32 %v2903, %v3881
      %v4202 = vadd.f32 %v2904, %v3882
      %v4203 = vadd.f32 %v2905, %v3883
      %v4204 = vadd.f32 %v2906, %v3884
      %v4205 = vadd.f32 %v2907, %v3885
      %v4206 = vadd.f32 %v2908, %v3886
      %v4207 = vadd.f32 %v2909, %v3887
      %v4208 = vadd.f32 %v2910, %v3888
      %v4209 = vadd.f32 %v2911, %v3889
      %v4210 = vadd.f32 %v2912, %v3890
      %v4211 = vadd.f32 %v2913, %v3891
      %v4212 = vadd.f32 %v2914, %v3892
      %v4213 = vadd.f32 %v2915, %v3893
      %v4214 = vadd.f32 %v2916, %v3894
      %v4215 = vadd.f32 %v2917, %v3895
      %v4216 = vadd.f32 %v2918, %v3896
      %v4217 = vadd.f32 %v2919, %v3897
      %v4218 = vadd.f32 %v2920, %v3898
      %v4219 = vadd.f32 %v2921, %v3899
      %v4220 = vadd.f32 %v2922, %v3900
      %v4221 = vadd.f32 %v2923, %v3901
      %v4222 = vadd.f32 %v2924, %v3902
      %v4223 = vadd.f32 %v2925, %v3903
      %v4224 = vadd.f32 %v2926, %v3904
      %v4225 = vadd.f32 %v2927, %v3905
      %v4226 = vadd.f32 %v2928, %v3906
      %v4227 = vadd.f32 %v2929, %v3907
      %v4228 = vadd.f32 %v2930, %v3908
      %v4229 = vadd.f32 %v2931, %v3909
      %v4230 = vadd.f32 %v2932, %v3910
      %v4231 = vadd.f32 %v2933, %v3911
      %v4232 = vadd.f32 %v2934, %v3912
      %v4233 = vadd.f32 %v2935, %v3913
      %v4234 = vadd.f32 %v2936, %v3914
      %v4235 = vadd.f32 %v2937, %v3915
      %v4236 = vadd.f32 %v2938, %v3916
      %v4237 = vadd.f32 %v2939, %v3917
      %v4238 = vadd.f32 %v2940, %v3918
      %v4239 = vadd.f32 %v2941, %v3919
      %v4240 = vadd.f32 %v2942, %v3920
      %v4241 = vadd.f32 %v2943, %v3921
      %v4242 = vadd.f32 %v2944, %v3922
      %v4243 = vadd.f32 %v2945, %v3923
      %v4244 = vadd.f32 %v2946, %v3924
      %v4245 = vadd.f32 %v2947, %v3925
      %v4246 = vadd.f32 %v2948, %v3926
      %v4247 = vadd.f32 %v2949, %v3927
      %v4248 = vadd.f32 %v2950, %v3928
      %v4249 = vadd.f32 %v2951, %v3929
      %v4250 = vadd.f32 %v2952, %v3930
      %v4251 = vadd.f32 %v2953, %v3931
      %v4252 = vadd.f32 %v2954, %v3932
      %v4253 = vadd.f32 %v2955, %v3933
      %v4254 = vadd.f32 %v2956, %v3934
      %v4255 = vadd.f32 %v2957, %v3935
      %v4256 = vadd.f32 %v2958, %v3936
      %v4257 = vadd.f32 %v2959, %v3937
      %v4258 = vadd.f32 %v2960, %v3938
      %v4259 = vadd.f32 %v2961, %v3939
      %v4260 = vadd.f32 %v2962, %v3940
      %v4261 = vadd.f32 %v2963, %v3941
      %v4262 = vadd.f32 %v2964, %v3942
      %v4263 = vadd.f32 %v2965, %v3943
      %v4264 = vadd.f32 %v2966, %v3944
      %v4265 = vadd.f32 %v2967, %v3945
      %v4266 = vadd.f32 %v2968, %v3946
      %v4267 = vadd.f32 %v2969, %v3947
      %v4268 = vadd.f32 %v2970, %v3948
      %v4269 = vadd.f32 %v2971, %v3949
      %v4270 = vadd.f32 %v2972, %v3950
      %v4271 = vadd.f32 %v2973, %v3951
      %v4272 = vadd.f32 %v2974, %v3952
      %v4273 = vadd.f32 %v2975, %v3953
      %v4274 = vadd.f32 %v2976, %v3954
      %v4275 = vadd.f32 %v2977, %v3955
      %v4276 = vadd.f32 %v2978, %v3956
      %v4277 = vadd.f32 %v2979, %v3957
      %v4278 = vadd.f32 %v2980, %v3958
      %v4279 = vadd.f32 %v2981, %v3959
      %v4280 = vadd.f32 %v2982, %v3960
      %v4281 = vadd.f32 %v2983, %v3961
      %v4282 = vadd.f32 %v2984, %v3962
      %v4283 = vadd.f32 %v2985, %v3963
      %v4284 = vadd.f32 %v2986, %v3964
      %v4285 = vadd.f32 %v2987, %v3965
      %v4286 = vadd.f32 %v2988, %v3966
      %v4287 = vadd.f32 %v2989, %v3967
      %v4288 = vadd.f32 %v2990, %v3968
      %v4289 = vadd.f32 %v2991, %v3969
      %v4290 = vadd.f32 %v2992, %v3970
      %v4291 = vadd.f32 %v2993, %v3971
      %v4292 = vadd.f32 %v2994, %v3972
      %v4293 = vadd.f32 %v2995, %v3973
      %v4294 = vadd.f32 %v2996, %v3974
      %v4295 = vadd.f32 %v2997, %v3975
      %v4296 = vadd.f32 %v2998, %v3976
      %v4297 = vadd.f32 %v2999, %v3977
      %v4298 = vadd.f32 %v3000, %v3978
      %v4299 = vadd.f32 %v3001, %v3979
      %v4300 = vadd.f32 %v3002, %v3980
      %v4301 = vadd.f32 %v3003, %v3981
      %v4302 = vadd.f32 %v3004, %v3982
      %v4303 = vadd.f32 %v3005, %v3983
      %v4304 = vadd.f32 %v3006, %v3984
      %v4305 = vadd.f32 %v3007, %v3985
      %v4306 = vadd.f32 %v3008, %v3986
      %v4307 = vadd.f32 %v3009, %v3987
      %v4308 = vadd.f32 %v3010, %v3988
      %v4309 = vadd.f32 %v3011, %v3989
      %v4310 = vadd.f32 %v3012, %v3990
      %v4311 = vadd.f32 %v3013, %v3991
      %v4312 = vadd.f32 %v3014, %v3992
      %v4313 = vadd.f32 %v3015, %v3993
      %v4314 = vadd.f32 %v3016, %v3994
      %v4315 = vadd.f32 %v3017, %v3995
      %v4316 = vadd.f32 %v3018, %v3996
      %v4317 = vadd.f32 %v3019, %v3997
      %v4318 = vadd.f32 %v3020, %v3998
      %v4319 = vadd.f32 %v3021, %v3999
      %v4320 = vadd.f32 %v3022, %v4000
      %v4321 = vadd.f32 %v3023, %v4001
      %v4322 = vadd.f32 %v3024, %v4002
      %v4323 = vadd.f32 %v3025, %v4003
      %v4324 = vadd.f32 %v3026, %v4004
      %v4325 = vadd.f32 %v3027, %v4005
      %v4326 = vadd.f32 %v3028, %v4006
      %v4327 = vadd.f32 %v3029, %v4007
      %v4328 = vadd.f32 %v3030, %v4008
      %v4329 = vadd.f32 %v3031, %v4009
      %v4330 = vadd.f32 %v3032, %v4010
      %v4331 = vadd.f32 %v3033, %v4011
      %v4332 = vadd.f32 %v3034, %v4012
      %v4333 = vadd.f32 %v3035, %v4013
      %v4334 = vadd.f32 %v3036, %v4014
      %v4335 = vadd.f32 %v3037, %v4015
      %v4336 = vadd.f32 %v3038, %v4016
      %v4337 = vadd.f32 %v3039, %v4017
      %v4338 = vadd.f32 %v3040, %v4018
      %v4339 = vadd.f32 %v3041, %v4019
      %v4340 = vadd.f32 %v3042, %v4020
      %v4341 = vadd.f32 %v3043, %v4021
      %v4342 = vadd.f32 %v3044, %v4022
      %v4343 = vadd.f32 %v3045, %v4023
      %v4344 = vadd.f32 %v3046, %v4024
      %v4345 = vadd.f32 %v3047, %v4025
      %v4346 = vadd.f32 %v3048, %v4026
      %v4347 = vadd.f32 %v3049, %v4027
      %v4348 = vadd.f32 %v3050, %v4028
      %v4349 = vadd.f32 %v3051, %v4029
      %v4350 = vadd.f32 %v3052, %v4030
      %v4351 = vadd.f32 %v3053, %v4031
      %v4352 = vadd.f32 %v3054, %v4032
      %v4353 = vld [vmem:[%s2] sm:$0xff]
      %v4354 = vld [vmem:[%s2 + $0x8] sm:$0xff]
      %v4355 = vld [vmem:[%s2 + $0x10] sm:$0xff]
      %v4356 = vld [vmem:[%s2 + $0x18] sm:$0xff]
      %v4357 = vld [vmem:[%s2 + $0x20] sm:$0xff]
      %v4358 = vld [vmem:[%s2 + $0x28] sm:$0xff]
      %v4359 = vld [vmem:[%s2 + $0x30] sm:$0xff]
      %v4360 = vld [vmem:[%s2 + $0x38] sm:$0xff]
      %v4361 = vld [vmem:[%s2 + $0x40] sm:$0xff]
      %v4362 = vld [vmem:[%s2 + $0x48] sm:$0xff]
      %v4363 = vld [vmem:[%s2 + $0x50] sm:$0xff]
      %v4364 = vld [vmem:[%s2 + $0x58] sm:$0xff]
      %v4365 = vld [vmem:[%s2 + $0x60] sm:$0xff]
      %v4366 = vld [vmem:[%s2 + $0x68] sm:$0xff]
      %v4367 = vld [vmem:[%s2 + $0x70] sm:$0xff]
      %v4368 = vld [vmem:[%s2 + $0x78] sm:$0xff]
      %v4369 = vld [vmem:[%s2 + $0x80] sm:$0xff]
      %v4370 = vld [vmem:[%s2 + $0x88] sm:$0xff]
      %v4371 = vld [vmem:[%s2 + $0x90] sm:$0xff]
      %v4372 = vld [vmem:[%s2 + $0x98] sm:$0xff]
      %v4373 = vld [vmem:[%s2 + $0xa0] sm:$0xff]
      %v4374 = vld [vmem:[%s2 + $0xa8] sm:$0xff]
      %v4375 = vld [vmem:[%s2 + $0xb0] sm:$0xff]
      %v4376 = vld [vmem:[%s2 + $0xb8] sm:$0xff]
      %v4377 = vld [vmem:[%s2 + $0xc0] sm:$0xff]
      %v4378 = vld [vmem:[%s2 + $0xc8] sm:$0xff]
      %v4379 = vld [vmem:[%s2 + $0xd0] sm:$0xff]
      %v4380 = vld [vmem:[%s2 + $0xd8] sm:$0xff]
      %v4381 = vld [vmem:[%s2 + $0xe0] sm:$0xff]
      %v4382 = vld [vmem:[%s2 + $0xe8] sm:$0xff]
      %v4383 = vld [vmem:[%s2 + $0xf0] sm:$0xff]
      %v4384 = vld [vmem:[%s2 + $0xf8] sm:$0xff]
      %v4385 = vld [vmem:[%s2 + $0x100] sm:$0xff]
      %v4386 = vld [vmem:[%s2 + $0x108] sm:$0xff]
      %v4387 = vld [vmem:[%s2 + $0x110] sm:$0xff]
      %v4388 = vld [vmem:[%s2 + $0x118] sm:$0xff]
      %v4389 = vld [vmem:[%s2 + $0x120] sm:$0xff]
      %v4390 = vld [vmem:[%s2 + $0x128] sm:$0xff]
      %v4391 = vld [vmem:[%s2 + $0x130] sm:$0xff]
      %v4392 = vld [vmem:[%s2 + $0x138] sm:$0xff]
      %v4393 = vld [vmem:[%s2 + $0x140] sm:$0xff]
      %v4394 = vld [vmem:[%s2 + $0x148] sm:$0xff]
      %v4395 = vld [vmem:[%s2 + $0x150] sm:$0xff]
      %v4396 = vld [vmem:[%s2 + $0x158] sm:$0xff]
      %v4397 = vld [vmem:[%s2 + $0x160] sm:$0xff]
      %v4398 = vld [vmem:[%s2 + $0x168] sm:$0xff]
      %v4399 = vld [vmem:[%s2 + $0x170] sm:$0xff]
      %v4400 = vld [vmem:[%s2 + $0x178] sm:$0xff]
      %v4401 = vld [vmem:[%s2 + $0x180] sm:$0xff]
      %v4402 = vld [vmem:[%s2 + $0x188] sm:$0xff]
      %v4403 = vld [vmem:[%s2 + $0x190] sm:$0xff]
      %v4404 = vld [vmem:[%s2 + $0x198] sm:$0xff]
      %v4405 = vld [vmem:[%s2 + $0x1a0] sm:$0xff]
      %v4406 = vld [vmem:[%s2 + $0x1a8] sm:$0xff]
      %v4407 = vld [vmem:[%s2 + $0x1b0] sm:$0xff]
      %v4408 = vld [vmem:[%s2 + $0x1b8] sm:$0xff]
      %v4409 = vld [vmem:[%s2 + $0x1c0] sm:$0xff]
      %v4410 = vld [vmem:[%s2 + $0x1c8] sm:$0xff]
      %v4411 = vld [vmem:[%s2 + $0x1d0] sm:$0xff]
      %v4412 = vld [vmem:[%s2 + $0x1d8] sm:$0xff]
      %v4413 = vld [vmem:[%s2 + $0x1e0] sm:$0xff]
      %v4414 = vld [vmem:[%s2 + $0x1e8] sm:$0xff]
      %v4415 = vld [vmem:[%s2 + $0x1f0] sm:$0xff]
      %v4416 = vld [vmem:[%s2 + $0x1f8] sm:$0xff]
      %v4417 = vld [vmem:[%s2 + $0x200] sm:$0xff]
      %v4418 = vld [vmem:[%s2 + $0x208] sm:$0xff]
      %v4419 = vld [vmem:[%s2 + $0x210] sm:$0xff]
      %v4420 = vld [vmem:[%s2 + $0x218] sm:$0xff]
      %v4421 = vld [vmem:[%s2 + $0x220] sm:$0xff]
      %v4422 = vld [vmem:[%s2 + $0x228] sm:$0xff]
      %v4423 = vld [vmem:[%s2 + $0x230] sm:$0xff]
      %v4424 = vld [vmem:[%s2 + $0x238] sm:$0xff]
      %v4425 = vld [vmem:[%s2 + $0x240] sm:$0xff]
      %v4426 = vld [vmem:[%s2 + $0x248] sm:$0xff]
      %v4427 = vld [vmem:[%s2 + $0x250] sm:$0xff]
      %v4428 = vld [vmem:[%s2 + $0x258] sm:$0xff]
      %v4429 = vld [vmem:[%s2 + $0x260] sm:$0xff]
      %v4430 = vld [vmem:[%s2 + $0x268] sm:$0xff]
      %v4431 = vld [vmem:[%s2 + $0x270] sm:$0xff]
      %v4432 = vld [vmem:[%s2 + $0x278] sm:$0xff]
      %v4433 = vld [vmem:[%s2 + $0x280] sm:$0xff]
      %v4434 = vld [vmem:[%s2 + $0x288] sm:$0xff]
      %v4435 = vld [vmem:[%s2 + $0x290] sm:$0xff]
      %v4436 = vld [vmem:[%s2 + $0x298] sm:$0xff]
      %v4437 = vld [vmem:[%s2 + $0x2a0] sm:$0xff]
      %v4438 = vld [vmem:[%s2 + $0x2a8] sm:$0xff]
      %v4439 = vld [vmem:[%s2 + $0x2b0] sm:$0xff]
      %v4440 = vld [vmem:[%s2 + $0x2b8] sm:$0xff]
      %v4441 = vld [vmem:[%s2 + $0x2c0] sm:$0xff]
      %v4442 = vld [vmem:[%s2 + $0x2c8] sm:$0xff]
      %v4443 = vld [vmem:[%s2 + $0x2d0] sm:$0xff]
      %v4444 = vld [vmem:[%s2 + $0x2d8] sm:$0xff]
      %v4445 = vld [vmem:[%s2 + $0x2e0] sm:$0xff]
      %v4446 = vld [vmem:[%s2 + $0x2e8] sm:$0xff]
      %v4447 = vld [vmem:[%s2 + $0x2f0] sm:$0xff]
      %v4448 = vld [vmem:[%s2 + $0x2f8] sm:$0xff]
      %v4449 = vld [vmem:[%s2 + $0x300] sm:$0xff]
      %v4450 = vld [vmem:[%s2 + $0x308] sm:$0xff]
      %v4451 = vld [vmem:[%s2 + $0x310] sm:$0xff]
      %v4452 = vld [vmem:[%s2 + $0x318] sm:$0xff]
      %v4453 = vld [vmem:[%s2 + $0x320] sm:$0xff]
      %v4454 = vld [vmem:[%s2 + $0x328] sm:$0xff]
      %v4455 = vld [vmem:[%s2 + $0x330] sm:$0xff]
      %v4456 = vld [vmem:[%s2 + $0x338] sm:$0xff]
      %v4457 = vld [vmem:[%s2 + $0x340] sm:$0xff]
      %v4458 = vld [vmem:[%s2 + $0x348] sm:$0xff]
      %v4459 = vld [vmem:[%s2 + $0x350] sm:$0xff]
      %v4460 = vld [vmem:[%s2 + $0x358] sm:$0xff]
      %v4461 = vld [vmem:[%s2 + $0x360] sm:$0xff]
      %v4462 = vld [vmem:[%s2 + $0x368] sm:$0xff]
      %v4463 = vld [vmem:[%s2 + $0x370] sm:$0xff]
      %v4464 = vld [vmem:[%s2 + $0x378] sm:$0xff]
      %v4465 = vld [vmem:[%s2 + $0x380] sm:$0xff]
      %v4466 = vld [vmem:[%s2 + $0x388] sm:$0xff]
      %v4467 = vld [vmem:[%s2 + $0x390] sm:$0xff]
      %v4468 = vld [vmem:[%s2 + $0x398] sm:$0xff]
      %v4469 = vld [vmem:[%s2 + $0x3a0] sm:$0xff]
      %v4470 = vld [vmem:[%s2 + $0x3a8] sm:$0xff]
      %v4471 = vld [vmem:[%s2 + $0x3b0] sm:$0xff]
      %v4472 = vld [vmem:[%s2 + $0x3b8] sm:$0xff]
      %v4473 = vld [vmem:[%s2 + $0x3c0] sm:$0xff]
      %v4474 = vld [vmem:[%s2 + $0x3c8] sm:$0xff]
      %v4475 = vld [vmem:[%s2 + $0x3d0] sm:$0xff]
      %v4476 = vld [vmem:[%s2 + $0x3d8] sm:$0xff]
      %v4477 = vld [vmem:[%s2 + $0x3e0] sm:$0xff]
      %v4478 = vld [vmem:[%s2 + $0x3e8] sm:$0xff]
      %v4479 = vld [vmem:[%s2 + $0x3f0] sm:$0xff]
      %v4480 = vld [vmem:[%s2 + $0x3f8] sm:$0xff]
      %v4481 = vld [vmem:[%s2 + $0x400] sm:$0xff]
      %v4482 = vld [vmem:[%s2 + $0x408] sm:$0xff]
      %v4483 = vld [vmem:[%s2 + $0x410] sm:$0xff]
      %v4484 = vld [vmem:[%s2 + $0x418] sm:$0xff]
      %v4485 = vld [vmem:[%s2 + $0x420] sm:$0xff]
      %v4486 = vld [vmem:[%s2 + $0x428] sm:$0xff]
      %v4487 = vld [vmem:[%s2 + $0x430] sm:$0xff]
      %v4488 = vld [vmem:[%s2 + $0x438] sm:$0xff]
      %v4489 = vld [vmem:[%s2 + $0x440] sm:$0xff]
      %v4490 = vld [vmem:[%s2 + $0x448] sm:$0xff]
      %v4491 = vld [vmem:[%s2 + $0x450] sm:$0xff]
      %v4492 = vld [vmem:[%s2 + $0x458] sm:$0xff]
      %v4493 = vld [vmem:[%s2 + $0x460] sm:$0xff]
      %v4494 = vld [vmem:[%s2 + $0x468] sm:$0xff]
      %v4495 = vld [vmem:[%s2 + $0x470] sm:$0xff]
      %v4496 = vld [vmem:[%s2 + $0x478] sm:$0xff]
      %v4497 = vld [vmem:[%s2 + $0x480] sm:$0xff]
      %v4498 = vld [vmem:[%s2 + $0x488] sm:$0xff]
      %v4499 = vld [vmem:[%s2 + $0x490] sm:$0xff]
      %v4500 = vld [vmem:[%s2 + $0x498] sm:$0xff]
      %v4501 = vld [vmem:[%s2 + $0x4a0] sm:$0xff]
      %v4502 = vld [vmem:[%s2 + $0x4a8] sm:$0xff]
      %v4503 = vld [vmem:[%s2 + $0x4b0] sm:$0xff]
      %v4504 = vld [vmem:[%s2 + $0x4b8] sm:$0xff]
      %v4505 = vld [vmem:[%s2 + $0x4c0] sm:$0xff]
      %v4506 = vld [vmem:[%s2 + $0x4c8] sm:$0xff]
      %v4507 = vld [vmem:[%s2 + $0x4d0] sm:$0xff]
      %v4508 = vld [vmem:[%s2 + $0x4d8] sm:$0xff]
      %v4509 = vld [vmem:[%s2 + $0x4e0] sm:$0xff]
      %v4510 = vld [vmem:[%s2 + $0x4e8] sm:$0xff]
      %v4511 = vld [vmem:[%s2 + $0x4f0] sm:$0xff]
      %v4512 = vld [vmem:[%s2 + $0x4f8] sm:$0xff]
      %4514 = vset.pattern.permute.xlu0 0
      %4515 = vperm.xlu0 %4514, %v4353
      %v4516 = vpop.permute.xlu0 %4515
      %4519 = vset.pattern.permute.xlu0 0
      %4520 = vperm.xlu0 %4519, %v4354
      %v4521 = vpop.permute.xlu0 %4520
      %4524 = vset.pattern.permute.xlu0 0
      %4525 = vperm.xlu0 %4524, %v4355
      %v4526 = vpop.permute.xlu0 %4525
      %4529 = vset.pattern.permute.xlu0 0
      %4530 = vperm.xlu0 %4529, %v4356
      %v4531 = vpop.permute.xlu0 %4530
      %4534 = vset.pattern.permute.xlu0 0
      %4535 = vperm.xlu0 %4534, %v4357
      %v4536 = vpop.permute.xlu0 %4535
      %4539 = vset.pattern.permute.xlu0 0
      %4540 = vperm.xlu0 %4539, %v4358
      %v4541 = vpop.permute.xlu0 %4540
      %4544 = vset.pattern.permute.xlu0 0
      %4545 = vperm.xlu0 %4544, %v4359
      %v4546 = vpop.permute.xlu0 %4545
      %4549 = vset.pattern.permute.xlu0 0
      %4550 = vperm.xlu0 %4549, %v4360
      %v4551 = vpop.permute.xlu0 %4550
      %4554 = vset.pattern.permute.xlu0 0
      %4555 = vperm.xlu0 %4554, %v4361
      %v4556 = vpop.permute.xlu0 %4555
      %4559 = vset.pattern.permute.xlu0 0
      %4560 = vperm.xlu0 %4559, %v4362
      %v4561 = vpop.permute.xlu0 %4560
      %4564 = vset.pattern.permute.xlu0 0
      %4565 = vperm.xlu0 %4564, %v4363
      %v4566 = vpop.permute.xlu0 %4565
      %4569 = vset.pattern.permute.xlu0 0
      %4570 = vperm.xlu0 %4569, %v4364
      %v4571 = vpop.permute.xlu0 %4570
      %4574 = vset.pattern.permute.xlu0 0
      %4575 = vperm.xlu0 %4574, %v4365
      %v4576 = vpop.permute.xlu0 %4575
      %4579 = vset.pattern.permute.xlu0 0
      %4580 = vperm.xlu0 %4579, %v4366
      %v4581 = vpop.permute.xlu0 %4580
      %4584 = vset.pattern.permute.xlu0 0
      %4585 = vperm.xlu0 %4584, %v4367
      %v4586 = vpop.permute.xlu0 %4585
      %4589 = vset.pattern.permute.xlu0 0
      %4590 = vperm.xlu0 %4589, %v4368
      %v4591 = vpop.permute.xlu0 %4590
      %4594 = vset.pattern.permute.xlu0 0
      %4595 = vperm.xlu0 %4594, %v4369
      %v4596 = vpop.permute.xlu0 %4595
      %4599 = vset.pattern.permute.xlu0 0
      %4600 = vperm.xlu0 %4599, %v4370
      %v4601 = vpop.permute.xlu0 %4600
      %4604 = vset.pattern.permute.xlu0 0
      %4605 = vperm.xlu0 %4604, %v4371
      %v4606 = vpop.permute.xlu0 %4605
      %4609 = vset.pattern.permute.xlu0 0
      %4610 = vperm.xlu0 %4609, %v4372
      %v4611 = vpop.permute.xlu0 %4610
      %4614 = vset.pattern.permute.xlu0 0
      %4615 = vperm.xlu0 %4614, %v4373
      %v4616 = vpop.permute.xlu0 %4615
      %4619 = vset.pattern.permute.xlu0 0
      %4620 = vperm.xlu0 %4619, %v4374
      %v4621 = vpop.permute.xlu0 %4620
      %4624 = vset.pattern.permute.xlu0 0
      %4625 = vperm.xlu0 %4624, %v4375
      %v4626 = vpop.permute.xlu0 %4625
      %4629 = vset.pattern.permute.xlu0 0
      %4630 = vperm.xlu0 %4629, %v4376
      %v4631 = vpop.permute.xlu0 %4630
      %4634 = vset.pattern.permute.xlu0 0
      %4635 = vperm.xlu0 %4634, %v4377
      %v4636 = vpop.permute.xlu0 %4635
      %4639 = vset.pattern.permute.xlu0 0
      %4640 = vperm.xlu0 %4639, %v4378
      %v4641 = vpop.permute.xlu0 %4640
      %4644 = vset.pattern.permute.xlu0 0
      %4645 = vperm.xlu0 %4644, %v4379
      %v4646 = vpop.permute.xlu0 %4645
      %4649 = vset.pattern.permute.xlu0 0
      %4650 = vperm.xlu0 %4649, %v4380
      %v4651 = vpop.permute.xlu0 %4650
      %4654 = vset.pattern.permute.xlu0 0
      %4655 = vperm.xlu0 %4654, %v4381
      %v4656 = vpop.permute.xlu0 %4655
      %4659 = vset.pattern.permute.xlu0 0
      %4660 = vperm.xlu0 %4659, %v4382
      %v4661 = vpop.permute.xlu0 %4660
      %4664 = vset.pattern.permute.xlu0 0
      %4665 = vperm.xlu0 %4664, %v4383
      %v4666 = vpop.permute.xlu0 %4665
      %4669 = vset.pattern.permute.xlu0 0
      %4670 = vperm.xlu0 %4669, %v4384
      %v4671 = vpop.permute.xlu0 %4670
      %4674 = vset.pattern.permute.xlu0 0
      %4675 = vperm.xlu0 %4674, %v4385
      %v4676 = vpop.permute.xlu0 %4675
      %4679 = vset.pattern.permute.xlu0 0
      %4680 = vperm.xlu0 %4679, %v4386
      %v4681 = vpop.permute.xlu0 %4680
      %4684 = vset.pattern.permute.xlu0 0
      %4685 = vperm.xlu0 %4684, %v4387
      %v4686 = vpop.permute.xlu0 %4685
      %4689 = vset.pattern.permute.xlu0 0
      %4690 = vperm.xlu0 %4689, %v4388
      %v4691 = vpop.permute.xlu0 %4690
      %4694 = vset.pattern.permute.xlu0 0
      %4695 = vperm.xlu0 %4694, %v4389
      %v4696 = vpop.permute.xlu0 %4695
      %4699 = vset.pattern.permute.xlu0 0
      %4700 = vperm.xlu0 %4699, %v4390
      %v4701 = vpop.permute.xlu0 %4700
      %4704 = vset.pattern.permute.xlu0 0
      %4705 = vperm.xlu0 %4704, %v4391
      %v4706 = vpop.permute.xlu0 %4705
      %4709 = vset.pattern.permute.xlu0 0
      %4710 = vperm.xlu0 %4709, %v4392
      %v4711 = vpop.permute.xlu0 %4710
      %4714 = vset.pattern.permute.xlu0 0
      %4715 = vperm.xlu0 %4714, %v4393
      %v4716 = vpop.permute.xlu0 %4715
      %4719 = vset.pattern.permute.xlu0 0
      %4720 = vperm.xlu0 %4719, %v4394
      %v4721 = vpop.permute.xlu0 %4720
      %4724 = vset.pattern.permute.xlu0 0
      %4725 = vperm.xlu0 %4724, %v4395
      %v4726 = vpop.permute.xlu0 %4725
      %4729 = vset.pattern.permute.xlu0 0
      %4730 = vperm.xlu0 %4729, %v4396
      %v4731 = vpop.permute.xlu0 %4730
      %4734 = vset.pattern.permute.xlu0 0
      %4735 = vperm.xlu0 %4734, %v4397
      %v4736 = vpop.permute.xlu0 %4735
      %4739 = vset.pattern.permute.xlu0 0
      %4740 = vperm.xlu0 %4739, %v4398
      %v4741 = vpop.permute.xlu0 %4740
      %4744 = vset.pattern.permute.xlu0 0
      %4745 = vperm.xlu0 %4744, %v4399
      %v4746 = vpop.permute.xlu0 %4745
      %4749 = vset.pattern.permute.xlu0 0
      %4750 = vperm.xlu0 %4749, %v4400
      %v4751 = vpop.permute.xlu0 %4750
      %4754 = vset.pattern.permute.xlu0 0
      %4755 = vperm.xlu0 %4754, %v4401
      %v4756 = vpop.permute.xlu0 %4755
      %4759 = vset.pattern.permute.xlu0 0
      %4760 = vperm.xlu0 %4759, %v4402
      %v4761 = vpop.permute.xlu0 %4760
      %4764 = vset.pattern.permute.xlu0 0
      %4765 = vperm.xlu0 %4764, %v4403
      %v4766 = vpop.permute.xlu0 %4765
      %4769 = vset.pattern.permute.xlu0 0
      %4770 = vperm.xlu0 %4769, %v4404
      %v4771 = vpop.permute.xlu0 %4770
      %4774 = vset.pattern.permute.xlu0 0
      %4775 = vperm.xlu0 %4774, %v4405
      %v4776 = vpop.permute.xlu0 %4775
      %4779 = vset.pattern.permute.xlu0 0
      %4780 = vperm.xlu0 %4779, %v4406
      %v4781 = vpop.permute.xlu0 %4780
      %4784 = vset.pattern.permute.xlu0 0
      %4785 = vperm.xlu0 %4784, %v4407
      %v4786 = vpop.permute.xlu0 %4785
      %4789 = vset.pattern.permute.xlu0 0
      %4790 = vperm.xlu0 %4789, %v4408
      %v4791 = vpop.permute.xlu0 %4790
      %4794 = vset.pattern.permute.xlu0 0
      %4795 = vperm.xlu0 %4794, %v4409
      %v4796 = vpop.permute.xlu0 %4795
      %4799 = vset.pattern.permute.xlu0 0
      %4800 = vperm.xlu0 %4799, %v4410
      %v4801 = vpop.permute.xlu0 %4800
      %4804 = vset.pattern.permute.xlu0 0
      %4805 = vperm.xlu0 %4804, %v4411
      %v4806 = vpop.permute.xlu0 %4805
      %4809 = vset.pattern.permute.xlu0 0
      %4810 = vperm.xlu0 %4809, %v4412
      %v4811 = vpop.permute.xlu0 %4810
      %4814 = vset.pattern.permute.xlu0 0
      %4815 = vperm.xlu0 %4814, %v4413
      %v4816 = vpop.permute.xlu0 %4815
      %4819 = vset.pattern.permute.xlu0 0
      %4820 = vperm.xlu0 %4819, %v4414
      %v4821 = vpop.permute.xlu0 %4820
      %4824 = vset.pattern.permute.xlu0 0
      %4825 = vperm.xlu0 %4824, %v4415
      %v4826 = vpop.permute.xlu0 %4825
      %4829 = vset.pattern.permute.xlu0 0
      %4830 = vperm.xlu0 %4829, %v4416
      %v4831 = vpop.permute.xlu0 %4830
      %4834 = vset.pattern.permute.xlu0 0
      %4835 = vperm.xlu0 %4834, %v4417
      %v4836 = vpop.permute.xlu0 %4835
      %4839 = vset.pattern.permute.xlu0 0
      %4840 = vperm.xlu0 %4839, %v4418
      %v4841 = vpop.permute.xlu0 %4840
      %4844 = vset.pattern.permute.xlu0 0
      %4845 = vperm.xlu0 %4844, %v4419
      %v4846 = vpop.permute.xlu0 %4845
      %4849 = vset.pattern.permute.xlu0 0
      %4850 = vperm.xlu0 %4849, %v4420
      %v4851 = vpop.permute.xlu0 %4850
      %4854 = vset.pattern.permute.xlu0 0
      %4855 = vperm.xlu0 %4854, %v4421
      %v4856 = vpop.permute.xlu0 %4855
      %4859 = vset.pattern.permute.xlu0 0
      %4860 = vperm.xlu0 %4859, %v4422
      %v4861 = vpop.permute.xlu0 %4860
      %4864 = vset.pattern.permute.xlu0 0
      %4865 = vperm.xlu0 %4864, %v4423
      %v4866 = vpop.permute.xlu0 %4865
      %4869 = vset.pattern.permute.xlu0 0
      %4870 = vperm.xlu0 %4869, %v4424
      %v4871 = vpop.permute.xlu0 %4870
      %4874 = vset.pattern.permute.xlu0 0
      %4875 = vperm.xlu0 %4874, %v4425
      %v4876 = vpop.permute.xlu0 %4875
      %4879 = vset.pattern.permute.xlu0 0
      %4880 = vperm.xlu0 %4879, %v4426
      %v4881 = vpop.permute.xlu0 %4880
      %4884 = vset.pattern.permute.xlu0 0
      %4885 = vperm.xlu0 %4884, %v4427
      %v4886 = vpop.permute.xlu0 %4885
      %4889 = vset.pattern.permute.xlu0 0
      %4890 = vperm.xlu0 %4889, %v4428
      %v4891 = vpop.permute.xlu0 %4890
      %4894 = vset.pattern.permute.xlu0 0
      %4895 = vperm.xlu0 %4894, %v4429
      %v4896 = vpop.permute.xlu0 %4895
      %4899 = vset.pattern.permute.xlu0 0
      %4900 = vperm.xlu0 %4899, %v4430
      %v4901 = vpop.permute.xlu0 %4900
      %4904 = vset.pattern.permute.xlu0 0
      %4905 = vperm.xlu0 %4904, %v4431
      %v4906 = vpop.permute.xlu0 %4905
      %4909 = vset.pattern.permute.xlu0 0
      %4910 = vperm.xlu0 %4909, %v4432
      %v4911 = vpop.permute.xlu0 %4910
      %4914 = vset.pattern.permute.xlu0 0
      %4915 = vperm.xlu0 %4914, %v4433
      %v4916 = vpop.permute.xlu0 %4915
      %4919 = vset.pattern.permute.xlu0 0
      %4920 = vperm.xlu0 %4919, %v4434
      %v4921 = vpop.permute.xlu0 %4920
      %4924 = vset.pattern.permute.xlu0 0
      %4925 = vperm.xlu0 %4924, %v4435
      %v4926 = vpop.permute.xlu0 %4925
      %4929 = vset.pattern.permute.xlu0 0
      %4930 = vperm.xlu0 %4929, %v4436
      %v4931 = vpop.permute.xlu0 %4930
      %4934 = vset.pattern.permute.xlu0 0
      %4935 = vperm.xlu0 %4934, %v4437
      %v4936 = vpop.permute.xlu0 %4935
      %4939 = vset.pattern.permute.xlu0 0
      %4940 = vperm.xlu0 %4939, %v4438
      %v4941 = vpop.permute.xlu0 %4940
      %4944 = vset.pattern.permute.xlu0 0
      %4945 = vperm.xlu0 %4944, %v4439
      %v4946 = vpop.permute.xlu0 %4945
      %4949 = vset.pattern.permute.xlu0 0
      %4950 = vperm.xlu0 %4949, %v4440
      %v4951 = vpop.permute.xlu0 %4950
      %4954 = vset.pattern.permute.xlu0 0
      %4955 = vperm.xlu0 %4954, %v4441
      %v4956 = vpop.permute.xlu0 %4955
      %4959 = vset.pattern.permute.xlu0 0
      %4960 = vperm.xlu0 %4959, %v4442
      %v4961 = vpop.permute.xlu0 %4960
      %4964 = vset.pattern.permute.xlu0 0
      %4965 = vperm.xlu0 %4964, %v4443
      %v4966 = vpop.permute.xlu0 %4965
      %4969 = vset.pattern.permute.xlu0 0
      %4970 = vperm.xlu0 %4969, %v4444
      %v4971 = vpop.permute.xlu0 %4970
      %4974 = vset.pattern.permute.xlu0 0
      %4975 = vperm.xlu0 %4974, %v4445
      %v4976 = vpop.permute.xlu0 %4975
      %4979 = vset.pattern.permute.xlu0 0
      %4980 = vperm.xlu0 %4979, %v4446
      %v4981 = vpop.permute.xlu0 %4980
      %4984 = vset.pattern.permute.xlu0 0
      %4985 = vperm.xlu0 %4984, %v4447
      %v4986 = vpop.permute.xlu0 %4985
      %4989 = vset.pattern.permute.xlu0 0
      %4990 = vperm.xlu0 %4989, %v4448
      %v4991 = vpop.permute.xlu0 %4990
      %4994 = vset.pattern.permute.xlu0 0
      %4995 = vperm.xlu0 %4994, %v4449
      %v4996 = vpop.permute.xlu0 %4995
      %4999 = vset.pattern.permute.xlu0 0
      %5000 = vperm.xlu0 %4999, %v4450
      %v5001 = vpop.permute.xlu0 %5000
      %5004 = vset.pattern.permute.xlu0 0
      %5005 = vperm.xlu0 %5004, %v4451
      %v5006 = vpop.permute.xlu0 %5005
      %5009 = vset.pattern.permute.xlu0 0
      %5010 = vperm.xlu0 %5009, %v4452
      %v5011 = vpop.permute.xlu0 %5010
      %5014 = vset.pattern.permute.xlu0 0
      %5015 = vperm.xlu0 %5014, %v4453
      %v5016 = vpop.permute.xlu0 %5015
      %5019 = vset.pattern.permute.xlu0 0
      %5020 = vperm.xlu0 %5019, %v4454
      %v5021 = vpop.permute.xlu0 %5020
      %5024 = vset.pattern.permute.xlu0 0
      %5025 = vperm.xlu0 %5024, %v4455
      %v5026 = vpop.permute.xlu0 %5025
      %5029 = vset.pattern.permute.xlu0 0
      %5030 = vperm.xlu0 %5029, %v4456
      %v5031 = vpop.permute.xlu0 %5030
      %5034 = vset.pattern.permute.xlu0 0
      %5035 = vperm.xlu0 %5034, %v4457
      %v5036 = vpop.permute.xlu0 %5035
      %5039 = vset.pattern.permute.xlu0 0
      %5040 = vperm.xlu0 %5039, %v4458
      %v5041 = vpop.permute.xlu0 %5040
      %5044 = vset.pattern.permute.xlu0 0
      %5045 = vperm.xlu0 %5044, %v4459
      %v5046 = vpop.permute.xlu0 %5045
      %5049 = vset.pattern.permute.xlu0 0
      %5050 = vperm.xlu0 %5049, %v4460
      %v5051 = vpop.permute.xlu0 %5050
      %5054 = vset.pattern.permute.xlu0 0
      %5055 = vperm.xlu0 %5054, %v4461
      %v5056 = vpop.permute.xlu0 %5055
      %5059 = vset.pattern.permute.xlu0 0
      %5060 = vperm.xlu0 %5059, %v4462
      %v5061 = vpop.permute.xlu0 %5060
      %5064 = vset.pattern.permute.xlu0 0
      %5065 = vperm.xlu0 %5064, %v4463
      %v5066 = vpop.permute.xlu0 %5065
      %5069 = vset.pattern.permute.xlu0 0
      %5070 = vperm.xlu0 %5069, %v4464
      %v5071 = vpop.permute.xlu0 %5070
      %5074 = vset.pattern.permute.xlu0 0
      %5075 = vperm.xlu0 %5074, %v4465
      %v5076 = vpop.permute.xlu0 %5075
      %5079 = vset.pattern.permute.xlu0 0
      %5080 = vperm.xlu0 %5079, %v4466
      %v5081 = vpop.permute.xlu0 %5080
      %5084 = vset.pattern.permute.xlu0 0
      %5085 = vperm.xlu0 %5084, %v4467
      %v5086 = vpop.permute.xlu0 %5085
      %5089 = vset.pattern.permute.xlu0 0
      %5090 = vperm.xlu0 %5089, %v4468
      %v5091 = vpop.permute.xlu0 %5090
      %5094 = vset.pattern.permute.xlu0 0
      %5095 = vperm.xlu0 %5094, %v4469
      %v5096 = vpop.permute.xlu0 %5095
      %5099 = vset.pattern.permute.xlu0 0
      %5100 = vperm.xlu0 %5099, %v4470
      %v5101 = vpop.permute.xlu0 %5100
      %5104 = vset.pattern.permute.xlu0 0
      %5105 = vperm.xlu0 %5104, %v4471
      %v5106 = vpop.permute.xlu0 %5105
      %5109 = vset.pattern.permute.xlu0 0
      %5110 = vperm.xlu0 %5109, %v4472
      %v5111 = vpop.permute.xlu0 %5110
      %5114 = vset.pattern.permute.xlu0 0
      %5115 = vperm.xlu0 %5114, %v4473
      %v5116 = vpop.permute.xlu0 %5115
      %5119 = vset.pattern.permute.xlu0 0
      %5120 = vperm.xlu0 %5119, %v4474
      %v5121 = vpop.permute.xlu0 %5120
      %5124 = vset.pattern.permute.xlu0 0
      %5125 = vperm.xlu0 %5124, %v4475
      %v5126 = vpop.permute.xlu0 %5125
      %5129 = vset.pattern.permute.xlu0 0
      %5130 = vperm.xlu0 %5129, %v4476
      %v5131 = vpop.permute.xlu0 %5130
      %5134 = vset.pattern.permute.xlu0 0
      %5135 = vperm.xlu0 %5134, %v4477
      %v5136 = vpop.permute.xlu0 %5135
      %5139 = vset.pattern.permute.xlu0 0
      %5140 = vperm.xlu0 %5139, %v4478
      %v5141 = vpop.permute.xlu0 %5140
      %5144 = vset.pattern.permute.xlu0 0
      %5145 = vperm.xlu0 %5144, %v4479
      %v5146 = vpop.permute.xlu0 %5145
      %5149 = vset.pattern.permute.xlu0 0
      %5150 = vperm.xlu0 %5149, %v4480
      %v5151 = vpop.permute.xlu0 %5150
      %5154 = vset.pattern.permute.xlu0 0
      %5155 = vperm.xlu0 %5154, %v4481
      %v5156 = vpop.permute.xlu0 %5155
      %5159 = vset.pattern.permute.xlu0 0
      %5160 = vperm.xlu0 %5159, %v4482
      %v5161 = vpop.permute.xlu0 %5160
      %5164 = vset.pattern.permute.xlu0 0
      %5165 = vperm.xlu0 %5164, %v4483
      %v5166 = vpop.permute.xlu0 %5165
      %5169 = vset.pattern.permute.xlu0 0
      %5170 = vperm.xlu0 %5169, %v4484
      %v5171 = vpop.permute.xlu0 %5170
      %5174 = vset.pattern.permute.xlu0 0
      %5175 = vperm.xlu0 %5174, %v4485
      %v5176 = vpop.permute.xlu0 %5175
      %5179 = vset.pattern.permute.xlu0 0
      %5180 = vperm.xlu0 %5179, %v4486
      %v5181 = vpop.permute.xlu0 %5180
      %5184 = vset.pattern.permute.xlu0 0
      %5185 = vperm.xlu0 %5184, %v4487
      %v5186 = vpop.permute.xlu0 %5185
      %5189 = vset.pattern.permute.xlu0 0
      %5190 = vperm.xlu0 %5189, %v4488
      %v5191 = vpop.permute.xlu0 %5190
      %5194 = vset.pattern.permute.xlu0 0
      %5195 = vperm.xlu0 %5194, %v4489
      %v5196 = vpop.permute.xlu0 %5195
      %5199 = vset.pattern.permute.xlu0 0
      %5200 = vperm.xlu0 %5199, %v4490
      %v5201 = vpop.permute.xlu0 %5200
      %5204 = vset.pattern.permute.xlu0 0
      %5205 = vperm.xlu0 %5204, %v4491
      %v5206 = vpop.permute.xlu0 %5205
      %5209 = vset.pattern.permute.xlu0 0
      %5210 = vperm.xlu0 %5209, %v4492
      %v5211 = vpop.permute.xlu0 %5210
      %5214 = vset.pattern.permute.xlu0 0
      %5215 = vperm.xlu0 %5214, %v4493
      %v5216 = vpop.permute.xlu0 %5215
      %5219 = vset.pattern.permute.xlu0 0
      %5220 = vperm.xlu0 %5219, %v4494
      %v5221 = vpop.permute.xlu0 %5220
      %5224 = vset.pattern.permute.xlu0 0
      %5225 = vperm.xlu0 %5224, %v4495
      %v5226 = vpop.permute.xlu0 %5225
      %5229 = vset.pattern.permute.xlu0 0
      %5230 = vperm.xlu0 %5229, %v4496
      %v5231 = vpop.permute.xlu0 %5230
      %5234 = vset.pattern.permute.xlu0 0
      %5235 = vperm.xlu0 %5234, %v4497
      %v5236 = vpop.permute.xlu0 %5235
      %5239 = vset.pattern.permute.xlu0 0
      %5240 = vperm.xlu0 %5239, %v4498
      %v5241 = vpop.permute.xlu0 %5240
      %5244 = vset.pattern.permute.xlu0 0
      %5245 = vperm.xlu0 %5244, %v4499
      %v5246 = vpop.permute.xlu0 %5245
      %5249 = vset.pattern.permute.xlu0 0
      %5250 = vperm.xlu0 %5249, %v4500
      %v5251 = vpop.permute.xlu0 %5250
      %5254 = vset.pattern.permute.xlu0 0
      %5255 = vperm.xlu0 %5254, %v4501
      %v5256 = vpop.permute.xlu0 %5255
      %5259 = vset.pattern.permute.xlu0 0
      %5260 = vperm.xlu0 %5259, %v4502
      %v5261 = vpop.permute.xlu0 %5260
      %5264 = vset.pattern.permute.xlu0 0
      %5265 = vperm.xlu0 %5264, %v4503
      %v5266 = vpop.permute.xlu0 %5265
      %5269 = vset.pattern.permute.xlu0 0
      %5270 = vperm.xlu0 %5269, %v4504
      %v5271 = vpop.permute.xlu0 %5270
      %5274 = vset.pattern.permute.xlu0 0
      %5275 = vperm.xlu0 %5274, %v4505
      %v5276 = vpop.permute.xlu0 %5275
      %5279 = vset.pattern.permute.xlu0 0
      %5280 = vperm.xlu0 %5279, %v4506
      %v5281 = vpop.permute.xlu0 %5280
      %5284 = vset.pattern.permute.xlu0 0
      %5285 = vperm.xlu0 %5284, %v4507
      %v5286 = vpop.permute.xlu0 %5285
      %5289 = vset.pattern.permute.xlu0 0
      %5290 = vperm.xlu0 %5289, %v4508
      %v5291 = vpop.permute.xlu0 %5290
      %5294 = vset.pattern.permute.xlu0 0
      %5295 = vperm.xlu0 %5294, %v4509
      %v5296 = vpop.permute.xlu0 %5295
      %5299 = vset.pattern.permute.xlu0 0
      %5300 = vperm.xlu0 %5299, %v4510
      %v5301 = vpop.permute.xlu0 %5300
      %5304 = vset.pattern.permute.xlu0 0
      %5305 = vperm.xlu0 %5304, %v4511
      %v5306 = vpop.permute.xlu0 %5305
      %5309 = vset.pattern.permute.xlu0 0
      %5310 = vperm.xlu0 %5309, %v4512
      %v5311 = vpop.permute.xlu0 %5310
      %v5313 = vadd.f32 %v4033, %v4516
      %v5314 = vadd.f32 %v4034, %v4516
      %v5315 = vadd.f32 %v4035, %v4521
      %v5316 = vadd.f32 %v4036, %v4521
      %v5317 = vadd.f32 %v4037, %v4526
      %v5318 = vadd.f32 %v4038, %v4526
      %v5319 = vadd.f32 %v4039, %v4531
      %v5320 = vadd.f32 %v4040, %v4531
      %v5321 = vadd.f32 %v4041, %v4536
      %v5322 = vadd.f32 %v4042, %v4536
      %v5323 = vadd.f32 %v4043, %v4541
      %v5324 = vadd.f32 %v4044, %v4541
      %v5325 = vadd.f32 %v4045, %v4546
      %v5326 = vadd.f32 %v4046, %v4546
      %v5327 = vadd.f32 %v4047, %v4551
      %v5328 = vadd.f32 %v4048, %v4551
      %v5329 = vadd.f32 %v4049, %v4556
      %v5330 = vadd.f32 %v4050, %v4556
      %v5331 = vadd.f32 %v4051, %v4561
      %v5332 = vadd.f32 %v4052, %v4561
      %v5333 = vadd.f32 %v4053, %v4566
      %v5334 = vadd.f32 %v4054, %v4566
      %v5335 = vadd.f32 %v4055, %v4571
      %v5336 = vadd.f32 %v4056, %v4571
      %v5337 = vadd.f32 %v4057, %v4576
      %v5338 = vadd.f32 %v4058, %v4576
      %v5339 = vadd.f32 %v4059, %v4581
      %v5340 = vadd.f32 %v4060, %v4581
      %v5341 = vadd.f32 %v4061, %v4586
      %v5342 = vadd.f32 %v4062, %v4586
      %v5343 = vadd.f32 %v4063, %v4591
      %v5344 = vadd.f32 %v4064, %v4591
      %v5345 = vadd.f32 %v4065, %v4596
      %v5346 = vadd.f32 %v4066, %v4596
      %v5347 = vadd.f32 %v4067, %v4601
      %v5348 = vadd.f32 %v4068, %v4601
      %v5349 = vadd.f32 %v4069, %v4606
      %v5350 = vadd.f32 %v4070, %v4606
      %v5351 = vadd.f32 %v4071, %v4611
      %v5352 = vadd.f32 %v4072, %v4611
      %v5353 = vadd.f32 %v4073, %v4616
      %v5354 = vadd.f32 %v4074, %v4616
      %v5355 = vadd.f32 %v4075, %v4621
      %v5356 = vadd.f32 %v4076, %v4621
      %v5357 = vadd.f32 %v4077, %v4626
      %v5358 = vadd.f32 %v4078, %v4626
      %v5359 = vadd.f32 %v4079, %v4631
      %v5360 = vadd.f32 %v4080, %v4631
      %v5361 = vadd.f32 %v4081, %v4636
      %v5362 = vadd.f32 %v4082, %v4636
      %v5363 = vadd.f32 %v4083, %v4641
      %v5364 = vadd.f32 %v4084, %v4641
      %v5365 = vadd.f32 %v4085, %v4646
      %v5366 = vadd.f32 %v4086, %v4646
      %v5367 = vadd.f32 %v4087, %v4651
      %v5368 = vadd.f32 %v4088, %v4651
      %v5369 = vadd.f32 %v4089, %v4656
      %v5370 = vadd.f32 %v4090, %v4656
      %v5371 = vadd.f32 %v4091, %v4661
      %v5372 = vadd.f32 %v4092, %v4661
      %v5373 = vadd.f32 %v4093, %v4666
      %v5374 = vadd.f32 %v4094, %v4666
      %v5375 = vadd.f32 %v4095, %v4671
      %v5376 = vadd.f32 %v4096, %v4671
      %v5377 = vadd.f32 %v4097, %v4676
      %v5378 = vadd.f32 %v4098, %v4676
      %v5379 = vadd.f32 %v4099, %v4681
      %v5380 = vadd.f32 %v4100, %v4681
      %v5381 = vadd.f32 %v4101, %v4686
      %v5382 = vadd.f32 %v4102, %v4686
      %v5383 = vadd.f32 %v4103, %v4691
      %v5384 = vadd.f32 %v4104, %v4691
      %v5385 = vadd.f32 %v4105, %v4696
      %v5386 = vadd.f32 %v4106, %v4696
      %v5387 = vadd.f32 %v4107, %v4701
      %v5388 = vadd.f32 %v4108, %v4701
      %v5389 = vadd.f32 %v4109, %v4706
      %v5390 = vadd.f32 %v4110, %v4706
      %v5391 = vadd.f32 %v4111, %v4711
      %v5392 = vadd.f32 %v4112, %v4711
      %v5393 = vadd.f32 %v4113, %v4716
      %v5394 = vadd.f32 %v4114, %v4716
      %v5395 = vadd.f32 %v4115, %v4721
      %v5396 = vadd.f32 %v4116, %v4721
      %v5397 = vadd.f32 %v4117, %v4726
      %v5398 = vadd.f32 %v4118, %v4726
      %v5399 = vadd.f32 %v4119, %v4731
      %v5400 = vadd.f32 %v4120, %v4731
      %v5401 = vadd.f32 %v4121, %v4736
      %v5402 = vadd.f32 %v4122, %v4736
      %v5403 = vadd.f32 %v4123, %v4741
      %v5404 = vadd.f32 %v4124, %v4741
      %v5405 = vadd.f32 %v4125, %v4746
      %v5406 = vadd.f32 %v4126, %v4746
      %v5407 = vadd.f32 %v4127, %v4751
      %v5408 = vadd.f32 %v4128, %v4751
      %v5409 = vadd.f32 %v4129, %v4756
      %v5410 = vadd.f32 %v4130, %v4756
      %v5411 = vadd.f32 %v4131, %v4761
      %v5412 = vadd.f32 %v4132, %v4761
      %v5413 = vadd.f32 %v4133, %v4766
      %v5414 = vadd.f32 %v4134, %v4766
      %v5415 = vadd.f32 %v4135, %v4771
      %v5416 = vadd.f32 %v4136, %v4771
      %v5417 = vadd.f32 %v4137, %v4776
      %v5418 = vadd.f32 %v4138, %v4776
      %v5419 = vadd.f32 %v4139, %v4781
      %v5420 = vadd.f32 %v4140, %v4781
      %v5421 = vadd.f32 %v4141, %v4786
      %v5422 = vadd.f32 %v4142, %v4786
      %v5423 = vadd.f32 %v4143, %v4791
      %v5424 = vadd.f32 %v4144, %v4791
      %v5425 = vadd.f32 %v4145, %v4796
      %v5426 = vadd.f32 %v4146, %v4796
      %v5427 = vadd.f32 %v4147, %v4801
      %v5428 = vadd.f32 %v4148, %v4801
      %v5429 = vadd.f32 %v4149, %v4806
      %v5430 = vadd.f32 %v4150, %v4806
      %v5431 = vadd.f32 %v4151, %v4811
      %v5432 = vadd.f32 %v4152, %v4811
      %v5433 = vadd.f32 %v4153, %v4816
      %v5434 = vadd.f32 %v4154, %v4816
      %v5435 = vadd.f32 %v4155, %v4821
      %v5436 = vadd.f32 %v4156, %v4821
      %v5437 = vadd.f32 %v4157, %v4826
      %v5438 = vadd.f32 %v4158, %v4826
      %v5439 = vadd.f32 %v4159, %v4831
      %v5440 = vadd.f32 %v4160, %v4831
      %v5441 = vadd.f32 %v4161, %v4836
      %v5442 = vadd.f32 %v4162, %v4836
      %v5443 = vadd.f32 %v4163, %v4841
      %v5444 = vadd.f32 %v4164, %v4841
      %v5445 = vadd.f32 %v4165, %v4846
      %v5446 = vadd.f32 %v4166, %v4846
      %v5447 = vadd.f32 %v4167, %v4851
      %v5448 = vadd.f32 %v4168, %v4851
      %v5449 = vadd.f32 %v4169, %v4856
      %v5450 = vadd.f32 %v4170, %v4856
      %v5451 = vadd.f32 %v4171, %v4861
      %v5452 = vadd.f32 %v4172, %v4861
      %v5453 = vadd.f32 %v4173, %v4866
      %v5454 = vadd.f32 %v4174, %v4866
      %v5455 = vadd.f32 %v4175, %v4871
      %v5456 = vadd.f32 %v4176, %v4871
      %v5457 = vadd.f32 %v4177, %v4876
      %v5458 = vadd.f32 %v4178, %v4876
      %v5459 = vadd.f32 %v4179, %v4881
      %v5460 = vadd.f32 %v4180, %v4881
      %v5461 = vadd.f32 %v4181, %v4886
      %v5462 = vadd.f32 %v4182, %v4886
      %v5463 = vadd.f32 %v4183, %v4891
      %v5464 = vadd.f32 %v4184, %v4891
      %v5465 = vadd.f32 %v4185, %v4896
      %v5466 = vadd.f32 %v4186, %v4896
      %v5467 = vadd.f32 %v4187, %v4901
      %v5468 = vadd.f32 %v4188, %v4901
      %v5469 = vadd.f32 %v4189, %v4906
      %v5470 = vadd.f32 %v4190, %v4906
      %v5471 = vadd.f32 %v4191, %v4911
      %v5472 = vadd.f32 %v4192, %v4911
      %v5473 = vadd.f32 %v4193, %v4916
      %v5474 = vadd.f32 %v4194, %v4916
      %v5475 = vadd.f32 %v4195, %v4921
      %v5476 = vadd.f32 %v4196, %v4921
      %v5477 = vadd.f32 %v4197, %v4926
      %v5478 = vadd.f32 %v4198, %v4926
      %v5479 = vadd.f32 %v4199, %v4931
      %v5480 = vadd.f32 %v4200, %v4931
      %v5481 = vadd.f32 %v4201, %v4936
      %v5482 = vadd.f32 %v4202, %v4936
      %v5483 = vadd.f32 %v4203, %v4941
      %v5484 = vadd.f32 %v4204, %v4941
      %v5485 = vadd.f32 %v4205, %v4946
      %v5486 = vadd.f32 %v4206, %v4946
      %v5487 = vadd.f32 %v4207, %v4951
      %v5488 = vadd.f32 %v4208, %v4951
      %v5489 = vadd.f32 %v4209, %v4956
      %v5490 = vadd.f32 %v4210, %v4956
      %v5491 = vadd.f32 %v4211, %v4961
      %v5492 = vadd.f32 %v4212, %v4961
      %v5493 = vadd.f32 %v4213, %v4966
      %v5494 = vadd.f32 %v4214, %v4966
      %v5495 = vadd.f32 %v4215, %v4971
      %v5496 = vadd.f32 %v4216, %v4971
      %v5497 = vadd.f32 %v4217, %v4976
      %v5498 = vadd.f32 %v4218, %v4976
      %v5499 = vadd.f32 %v4219, %v4981
      %v5500 = vadd.f32 %v4220, %v4981
      %v5501 = vadd.f32 %v4221, %v4986
      %v5502 = vadd.f32 %v4222, %v4986
      %v5503 = vadd.f32 %v4223, %v4991
      %v5504 = vadd.f32 %v4224, %v4991
      %v5505 = vadd.f32 %v4225, %v4996
      %v5506 = vadd.f32 %v4226, %v4996
      %v5507 = vadd.f32 %v4227, %v5001
      %v5508 = vadd.f32 %v4228, %v5001
      %v5509 = vadd.f32 %v4229, %v5006
      %v5510 = vadd.f32 %v4230, %v5006
      %v5511 = vadd.f32 %v4231, %v5011
      %v5512 = vadd.f32 %v4232, %v5011
      %v5513 = vadd.f32 %v4233, %v5016
      %v5514 = vadd.f32 %v4234, %v5016
      %v5515 = vadd.f32 %v4235, %v5021
      %v5516 = vadd.f32 %v4236, %v5021
      %v5517 = vadd.f32 %v4237, %v5026
      %v5518 = vadd.f32 %v4238, %v5026
      %v5519 = vadd.f32 %v4239, %v5031
      %v5520 = vadd.f32 %v4240, %v5031
      %v5521 = vadd.f32 %v4241, %v5036
      %v5522 = vadd.f32 %v4242, %v5036
      %v5523 = vadd.f32 %v4243, %v5041
      %v5524 = vadd.f32 %v4244, %v5041
      %v5525 = vadd.f32 %v4245, %v5046
      %v5526 = vadd.f32 %v4246, %v5046
      %v5527 = vadd.f32 %v4247, %v5051
      %v5528 = vadd.f32 %v4248, %v5051
      %v5529 = vadd.f32 %v4249, %v5056
      %v5530 = vadd.f32 %v4250, %v5056
      %v5531 = vadd.f32 %v4251, %v5061
      %v5532 = vadd.f32 %v4252, %v5061
      %v5533 = vadd.f32 %v4253, %v5066
      %v5534 = vadd.f32 %v4254, %v5066
      %v5535 = vadd.f32 %v4255, %v5071
      %v5536 = vadd.f32 %v4256, %v5071
      %v5537 = vadd.f32 %v4257, %v5076
      %v5538 = vadd.f32 %v4258, %v5076
      %v5539 = vadd.f32 %v4259, %v5081
      %v5540 = vadd.f32 %v4260, %v5081
      %v5541 = vadd.f32 %v4261, %v5086
      %v5542 = vadd.f32 %v4262, %v5086
      %v5543 = vadd.f32 %v4263, %v5091
      %v5544 = vadd.f32 %v4264, %v5091
      %v5545 = vadd.f32 %v4265, %v5096
      %v5546 = vadd.f32 %v4266, %v5096
      %v5547 = vadd.f32 %v4267, %v5101
      %v5548 = vadd.f32 %v4268, %v5101
      %v5549 = vadd.f32 %v4269, %v5106
      %v5550 = vadd.f32 %v4270, %v5106
      %v5551 = vadd.f32 %v4271, %v5111
      %v5552 = vadd.f32 %v4272, %v5111
      %v5553 = vadd.f32 %v4273, %v5116
      %v5554 = vadd.f32 %v4274, %v5116
      %v5555 = vadd.f32 %v4275, %v5121
      %v5556 = vadd.f32 %v4276, %v5121
      %v5557 = vadd.f32 %v4277, %v5126
      %v5558 = vadd.f32 %v4278, %v5126
      %v5559 = vadd.f32 %v4279, %v5131
      %v5560 = vadd.f32 %v4280, %v5131
      %v5561 = vadd.f32 %v4281, %v5136
      %v5562 = vadd.f32 %v4282, %v5136
      %v5563 = vadd.f32 %v4283, %v5141
      %v5564 = vadd.f32 %v4284, %v5141
      %v5565 = vadd.f32 %v4285, %v5146
      %v5566 = vadd.f32 %v4286, %v5146
      %v5567 = vadd.f32 %v4287, %v5151
      %v5568 = vadd.f32 %v4288, %v5151
      %v5569 = vadd.f32 %v4289, %v5156
      %v5570 = vadd.f32 %v4290, %v5156
      %v5571 = vadd.f32 %v4291, %v5161
      %v5572 = vadd.f32 %v4292, %v5161
      %v5573 = vadd.f32 %v4293, %v5166
      %v5574 = vadd.f32 %v4294, %v5166
      %v5575 = vadd.f32 %v4295, %v5171
      %v5576 = vadd.f32 %v4296, %v5171
      %v5577 = vadd.f32 %v4297, %v5176
      %v5578 = vadd.f32 %v4298, %v5176
      %v5579 = vadd.f32 %v4299, %v5181
      %v5580 = vadd.f32 %v4300, %v5181
      %v5581 = vadd.f32 %v4301, %v5186
      %v5582 = vadd.f32 %v4302, %v5186
      %v5583 = vadd.f32 %v4303, %v5191
      %v5584 = vadd.f32 %v4304, %v5191
      %v5585 = vadd.f32 %v4305, %v5196
      %v5586 = vadd.f32 %v4306, %v5196
      %v5587 = vadd.f32 %v4307, %v5201
      %v5588 = vadd.f32 %v4308, %v5201
      %v5589 = vadd.f32 %v4309, %v5206
      %v5590 = vadd.f32 %v4310, %v5206
      %v5591 = vadd.f32 %v4311, %v5211
      %v5592 = vadd.f32 %v4312, %v5211
      %v5593 = vadd.f32 %v4313, %v5216
      %v5594 = vadd.f32 %v4314, %v5216
      %v5595 = vadd.f32 %v4315, %v5221
      %v5596 = vadd.f32 %v4316, %v5221
      %v5597 = vadd.f32 %v4317, %v5226
      %v5598 = vadd.f32 %v4318, %v5226
      %v5599 = vadd.f32 %v4319, %v5231
      %v5600 = vadd.f32 %v4320, %v5231
      %v5601 = vadd.f32 %v4321, %v5236
      %v5602 = vadd.f32 %v4322, %v5236
      %v5603 = vadd.f32 %v4323, %v5241
      %v5604 = vadd.f32 %v4324, %v5241
      %v5605 = vadd.f32 %v4325, %v5246
      %v5606 = vadd.f32 %v4326, %v5246
      %v5607 = vadd.f32 %v4327, %v5251
      %v5608 = vadd.f32 %v4328, %v5251
      %v5609 = vadd.f32 %v4329, %v5256
      %v5610 = vadd.f32 %v4330, %v5256
      %v5611 = vadd.f32 %v4331, %v5261
      %v5612 = vadd.f32 %v4332, %v5261
      %v5613 = vadd.f32 %v4333, %v5266
      %v5614 = vadd.f32 %v4334, %v5266
      %v5615 = vadd.f32 %v4335, %v5271
      %v5616 = vadd.f32 %v4336, %v5271
      %v5617 = vadd.f32 %v4337, %v5276
      %v5618 = vadd.f32 %v4338, %v5276
      %v5619 = vadd.f32 %v4339, %v5281
      %v5620 = vadd.f32 %v4340, %v5281
      %v5621 = vadd.f32 %v4341, %v5286
      %v5622 = vadd.f32 %v4342, %v5286
      %v5623 = vadd.f32 %v4343, %v5291
      %v5624 = vadd.f32 %v4344, %v5291
      %v5625 = vadd.f32 %v4345, %v5296
      %v5626 = vadd.f32 %v4346, %v5296
      %v5627 = vadd.f32 %v4347, %v5301
      %v5628 = vadd.f32 %v4348, %v5301
      %v5629 = vadd.f32 %v4349, %v5306
      %v5630 = vadd.f32 %v4350, %v5306
      %v5631 = vadd.f32 %v4351, %v5311
      %v5632 = vadd.f32 %v4352, %v5311
      %v5633 = vmax.f32 %v5313, 0.0
      %v5634 = vmax.f32 %v5314, 0.0
      %v5635 = vmax.f32 %v5315, 0.0
      %v5636 = vmax.f32 %v5316, 0.0
      %v5637 = vmax.f32 %v5317, 0.0
      %v5638 = vmax.f32 %v5318, 0.0
      %v5639 = vmax.f32 %v5319, 0.0
      %v5640 = vmax.f32 %v5320, 0.0
      %v5641 = vmax.f32 %v5321, 0.0
      %v5642 = vmax.f32 %v5322, 0.0
      %v5643 = vmax.f32 %v5323, 0.0
      %v5644 = vmax.f32 %v5324, 0.0
      %v5645 = vmax.f32 %v5325, 0.0
      %v5646 = vmax.f32 %v5326, 0.0
      %v5647 = vmax.f32 %v5327, 0.0
      %v5648 = vmax.f32 %v5328, 0.0
      %v5649 = vmax.f32 %v5329, 0.0
      %v5650 = vmax.f32 %v5330, 0.0
      %v5651 = vmax.f32 %v5331, 0.0
      %v5652 = vmax.f32 %v5332, 0.0
      %v5653 = vmax.f32 %v5333, 0.0
      %v5654 = vmax.f32 %v5334, 0.0
      %v5655 = vmax.f32 %v5335, 0.0
      %v5656 = vmax.f32 %v5336, 0.0
      %v5657 = vmax.f32 %v5337, 0.0
      %v5658 = vmax.f32 %v5338, 0.0
      %v5659 = vmax.f32 %v5339, 0.0
      %v5660 = vmax.f32 %v5340, 0.0
      %v5661 = vmax.f32 %v5341, 0.0
      %v5662 = vmax.f32 %v5342, 0.0
      %v5663 = vmax.f32 %v5343, 0.0
      %v5664 = vmax.f32 %v5344, 0.0
      %v5665 = vmax.f32 %v5345, 0.0
      %v5666 = vmax.f32 %v5346, 0.0
      %v5667 = vmax.f32 %v5347, 0.0
      %v5668 = vmax.f32 %v5348, 0.0
      %v5669 = vmax.f32 %v5349, 0.0
      %v5670 = vmax.f32 %v5350, 0.0
      %v5671 = vmax.f32 %v5351, 0.0
      %v5672 = vmax.f32 %v5352, 0.0
      %v5673 = vmax.f32 %v5353, 0.0
      %v5674 = vmax.f32 %v5354, 0.0
      %v5675 = vmax.f32 %v5355, 0.0
      %v5676 = vmax.f32 %v5356, 0.0
      %v5677 = vmax.f32 %v5357, 0.0
      %v5678 = vmax.f32 %v5358, 0.0
      %v5679 = vmax.f32 %v5359, 0.0
      %v5680 = vmax.f32 %v5360, 0.0
      %v5681 = vmax.f32 %v5361, 0.0
      %v5682 = vmax.f32 %v5362, 0.0
      %v5683 = vmax.f32 %v5363, 0.0
      %v5684 = vmax.f32 %v5364, 0.0
      %v5685 = vmax.f32 %v5365, 0.0
      %v5686 = vmax.f32 %v5366, 0.0
      %v5687 = vmax.f32 %v5367, 0.0
      %v5688 = vmax.f32 %v5368, 0.0
      %v5689 = vmax.f32 %v5369, 0.0
      %v5690 = vmax.f32 %v5370, 0.0
      %v5691 = vmax.f32 %v5371, 0.0
      %v5692 = vmax.f32 %v5372, 0.0
      %v5693 = vmax.f32 %v5373, 0.0
      %v5694 = vmax.f32 %v5374, 0.0
      %v5695 = vmax.f32 %v5375, 0.0
      %v5696 = vmax.f32 %v5376, 0.0
      %v5697 = vmax.f32 %v5377, 0.0
      %v5698 = vmax.f32 %v5378, 0.0
      %v5699 = vmax.f32 %v5379, 0.0
      %v5700 = vmax.f32 %v5380, 0.0
      %v5701 = vmax.f32 %v5381, 0.0
      %v5702 = vmax.f32 %v5382, 0.0
      %v5703 = vmax.f32 %v5383, 0.0
      %v5704 = vmax.f32 %v5384, 0.0
      %v5705 = vmax.f32 %v5385, 0.0
      %v5706 = vmax.f32 %v5386, 0.0
      %v5707 = vmax.f32 %v5387, 0.0
      %v5708 = vmax.f32 %v5388, 0.0
      %v5709 = vmax.f32 %v5389, 0.0
      %v5710 = vmax.f32 %v5390, 0.0
      %v5711 = vmax.f32 %v5391, 0.0
      %v5712 = vmax.f32 %v5392, 0.0
      %v5713 = vmax.f32 %v5393, 0.0
      %v5714 = vmax.f32 %v5394, 0.0
      %v5715 = vmax.f32 %v5395, 0.0
      %v5716 = vmax.f32 %v5396, 0.0
      %v5717 = vmax.f32 %v5397, 0.0
      %v5718 = vmax.f32 %v5398, 0.0
      %v5719 = vmax.f32 %v5399, 0.0
      %v5720 = vmax.f32 %v5400, 0.0
      %v5721 = vmax.f32 %v5401, 0.0
      %v5722 = vmax.f32 %v5402, 0.0
      %v5723 = vmax.f32 %v5403, 0.0
      %v5724 = vmax.f32 %v5404, 0.0
      %v5725 = vmax.f32 %v5405, 0.0
      %v5726 = vmax.f32 %v5406, 0.0
      %v5727 = vmax.f32 %v5407, 0.0
      %v5728 = vmax.f32 %v5408, 0.0
      %v5729 = vmax.f32 %v5409, 0.0
      %v5730 = vmax.f32 %v5410, 0.0
      %v5731 = vmax.f32 %v5411, 0.0
      %v5732 = vmax.f32 %v5412, 0.0
      %v5733 = vmax.f32 %v5413, 0.0
      %v5734 = vmax.f32 %v5414, 0.0
      %v5735 = vmax.f32 %v5415, 0.0
      %v5736 = vmax.f32 %v5416, 0.0
      %v5737 = vmax.f32 %v5417, 0.0
      %v5738 = vmax.f32 %v5418, 0.0
      %v5739 = vmax.f32 %v5419, 0.0
      %v5740 = vmax.f32 %v5420, 0.0
      %v5741 = vmax.f32 %v5421, 0.0
      %v5742 = vmax.f32 %v5422, 0.0
      %v5743 = vmax.f32 %v5423, 0.0
      %v5744 = vmax.f32 %v5424, 0.0
      %v5745 = vmax.f32 %v5425, 0.0
      %v5746 = vmax.f32 %v5426, 0.0
      %v5747 = vmax.f32 %v5427, 0.0
      %v5748 = vmax.f32 %v5428, 0.0
      %v5749 = vmax.f32 %v5429, 0.0
      %v5750 = vmax.f32 %v5430, 0.0
      %v5751 = vmax.f32 %v5431, 0.0
      %v5752 = vmax.f32 %v5432, 0.0
      %v5753 = vmax.f32 %v5433, 0.0
      %v5754 = vmax.f32 %v5434, 0.0
      %v5755 = vmax.f32 %v5435, 0.0
      %v5756 = vmax.f32 %v5436, 0.0
      %v5757 = vmax.f32 %v5437, 0.0
      %v5758 = vmax.f32 %v5438, 0.0
      %v5759 = vmax.f32 %v5439, 0.0
      %v5760 = vmax.f32 %v5440, 0.0
      %v5761 = vmax.f32 %v5441, 0.0
      %v5762 = vmax.f32 %v5442, 0.0
      %v5763 = vmax.f32 %v5443, 0.0
      %v5764 = vmax.f32 %v5444, 0.0
      %v5765 = vmax.f32 %v5445, 0.0
      %v5766 = vmax.f32 %v5446, 0.0
      %v5767 = vmax.f32 %v5447, 0.0
      %v5768 = vmax.f32 %v5448, 0.0
      %v5769 = vmax.f32 %v5449, 0.0
      %v5770 = vmax.f32 %v5450, 0.0
      %v5771 = vmax.f32 %v5451, 0.0
      %v5772 = vmax.f32 %v5452, 0.0
      %v5773 = vmax.f32 %v5453, 0.0
      %v5774 = vmax.f32 %v5454, 0.0
      %v5775 = vmax.f32 %v5455, 0.0
      %v5776 = vmax.f32 %v5456, 0.0
      %v5777 = vmax.f32 %v5457, 0.0
      %v5778 = vmax.f32 %v5458, 0.0
      %v5779 = vmax.f32 %v5459, 0.0
      %v5780 = vmax.f32 %v5460, 0.0
      %v5781 = vmax.f32 %v5461, 0.0
      %v5782 = vmax.f32 %v5462, 0.0
      %v5783 = vmax.f32 %v5463, 0.0
      %v5784 = vmax.f32 %v5464, 0.0
      %v5785 = vmax.f32 %v5465, 0.0
      %v5786 = vmax.f32 %v5466, 0.0
      %v5787 = vmax.f32 %v5467, 0.0
      %v5788 = vmax.f32 %v5468, 0.0
      %v5789 = vmax.f32 %v5469, 0.0
      %v5790 = vmax.f32 %v5470, 0.0
      %v5791 = vmax.f32 %v5471, 0.0
      %v5792 = vmax.f32 %v5472, 0.0
      %v5793 = vmax.f32 %v5473, 0.0
      %v5794 = vmax.f32 %v5474, 0.0
      %v5795 = vmax.f32 %v5475, 0.0
      %v5796 = vmax.f32 %v5476, 0.0
      %v5797 = vmax.f32 %v5477, 0.0
      %v5798 = vmax.f32 %v5478, 0.0
      %v5799 = vmax.f32 %v5479, 0.0
      %v5800 = vmax.f32 %v5480, 0.0
      %v5801 = vmax.f32 %v5481, 0.0
      %v5802 = vmax.f32 %v5482, 0.0
      %v5803 = vmax.f32 %v5483, 0.0
      %v5804 = vmax.f32 %v5484, 0.0
      %v5805 = vmax.f32 %v5485, 0.0
      %v5806 = vmax.f32 %v5486, 0.0
      %v5807 = vmax.f32 %v5487, 0.0
      %v5808 = vmax.f32 %v5488, 0.0
      %v5809 = vmax.f32 %v5489, 0.0
      %v5810 = vmax.f32 %v5490, 0.0
      %v5811 = vmax.f32 %v5491, 0.0
      %v5812 = vmax.f32 %v5492, 0.0
      %v5813 = vmax.f32 %v5493, 0.0
      %v5814 = vmax.f32 %v5494, 0.0
      %v5815 = vmax.f32 %v5495, 0.0
      %v5816 = vmax.f32 %v5496, 0.0
      %v5817 = vmax.f32 %v5497, 0.0
      %v5818 = vmax.f32 %v5498, 0.0
      %v5819 = vmax.f32 %v5499, 0.0
      %v5820 = vmax.f32 %v5500, 0.0
      %v5821 = vmax.f32 %v5501, 0.0
      %v5822 = vmax.f32 %v5502, 0.0
      %v5823 = vmax.f32 %v5503, 0.0
      %v5824 = vmax.f32 %v5504, 0.0
      %v5825 = vmax.f32 %v5505, 0.0
      %v5826 = vmax.f32 %v5506, 0.0
      %v5827 = vmax.f32 %v5507, 0.0
      %v5828 = vmax.f32 %v5508, 0.0
      %v5829 = vmax.f32 %v5509, 0.0
      %v5830 = vmax.f32 %v5510, 0.0
      %v5831 = vmax.f32 %v5511, 0.0
      %v5832 = vmax.f32 %v5512, 0.0
      %v5833 = vmax.f32 %v5513, 0.0
      %v5834 = vmax.f32 %v5514, 0.0
      %v5835 = vmax.f32 %v5515, 0.0
      %v5836 = vmax.f32 %v5516, 0.0
      %v5837 = vmax.f32 %v5517, 0.0
      %v5838 = vmax.f32 %v5518, 0.0
      %v5839 = vmax.f32 %v5519, 0.0
      %v5840 = vmax.f32 %v5520, 0.0
      %v5841 = vmax.f32 %v5521, 0.0
      %v5842 = vmax.f32 %v5522, 0.0
      %v5843 = vmax.f32 %v5523, 0.0
      %v5844 = vmax.f32 %v5524, 0.0
      %v5845 = vmax.f32 %v5525, 0.0
      %v5846 = vmax.f32 %v5526, 0.0
      %v5847 = vmax.f32 %v5527, 0.0
      %v5848 = vmax.f32 %v5528, 0.0
      %v5849 = vmax.f32 %v5529, 0.0
      %v5850 = vmax.f32 %v5530, 0.0
      %v5851 = vmax.f32 %v5531, 0.0
      %v5852 = vmax.f32 %v5532, 0.0
      %v5853 = vmax.f32 %v5533, 0.0
      %v5854 = vmax.f32 %v5534, 0.0
      %v5855 = vmax.f32 %v5535, 0.0
      %v5856 = vmax.f32 %v5536, 0.0
      %v5857 = vmax.f32 %v5537, 0.0
      %v5858 = vmax.f32 %v5538, 0.0
      %v5859 = vmax.f32 %v5539, 0.0
      %v5860 = vmax.f32 %v5540, 0.0
      %v5861 = vmax.f32 %v5541, 0.0
      %v5862 = vmax.f32 %v5542, 0.0
      %v5863 = vmax.f32 %v5543, 0.0
      %v5864 = vmax.f32 %v5544, 0.0
      %v5865 = vmax.f32 %v5545, 0.0
      %v5866 = vmax.f32 %v5546, 0.0
      %v5867 = vmax.f32 %v5547, 0.0
      %v5868 = vmax.f32 %v5548, 0.0
      %v5869 = vmax.f32 %v5549, 0.0
      %v5870 = vmax.f32 %v5550, 0.0
      %v5871 = vmax.f32 %v5551, 0.0
      %v5872 = vmax.f32 %v5552, 0.0
      %v5873 = vmax.f32 %v5553, 0.0
      %v5874 = vmax.f32 %v5554, 0.0
      %v5875 = vmax.f32 %v5555, 0.0
      %v5876 = vmax.f32 %v5556, 0.0
      %v5877 = vmax.f32 %v5557, 0.0
      %v5878 = vmax.f32 %v5558, 0.0
      %v5879 = vmax.f32 %v5559, 0.0
      %v5880 = vmax.f32 %v5560, 0.0
      %v5881 = vmax.f32 %v5561, 0.0
      %v5882 = vmax.f32 %v5562, 0.0
      %v5883 = vmax.f32 %v5563, 0.0
      %v5884 = vmax.f32 %v5564, 0.0
      %v5885 = vmax.f32 %v5565, 0.0
      %v5886 = vmax.f32 %v5566, 0.0
      %v5887 = vmax.f32 %v5567, 0.0
      %v5888 = vmax.f32 %v5568, 0.0
      %v5889 = vmax.f32 %v5569, 0.0
      %v5890 = vmax.f32 %v5570, 0.0
      %v5891 = vmax.f32 %v5571, 0.0
      %v5892 = vmax.f32 %v5572, 0.0
      %v5893 = vmax.f32 %v5573, 0.0
      %v5894 = vmax.f32 %v5574, 0.0
      %v5895 = vmax.f32 %v5575, 0.0
      %v5896 = vmax.f32 %v5576, 0.0
      %v5897 = vmax.f32 %v5577, 0.0
      %v5898 = vmax.f32 %v5578, 0.0
      %v5899 = vmax.f32 %v5579, 0.0
      %v5900 = vmax.f32 %v5580, 0.0
      %v5901 = vmax.f32 %v5581, 0.0
      %v5902 = vmax.f32 %v5582, 0.0
      %v5903 = vmax.f32 %v5583, 0.0
      %v5904 = vmax.f32 %v5584, 0.0
      %v5905 = vmax.f32 %v5585, 0.0
      %v5906 = vmax.f32 %v5586, 0.0
      %v5907 = vmax.f32 %v5587, 0.0
      %v5908 = vmax.f32 %v5588, 0.0
      %v5909 = vmax.f32 %v5589, 0.0
      %v5910 = vmax.f32 %v5590, 0.0
      %v5911 = vmax.f32 %v5591, 0.0
      %v5912 = vmax.f32 %v5592, 0.0
      %v5913 = vmax.f32 %v5593, 0.0
      %v5914 = vmax.f32 %v5594, 0.0
      %v5915 = vmax.f32 %v5595, 0.0
      %v5916 = vmax.f32 %v5596, 0.0
      %v5917 = vmax.f32 %v5597, 0.0
      %v5918 = vmax.f32 %v5598, 0.0
      %v5919 = vmax.f32 %v5599, 0.0
      %v5920 = vmax.f32 %v5600, 0.0
      %v5921 = vmax.f32 %v5601, 0.0
      %v5922 = vmax.f32 %v5602, 0.0
      %v5923 = vmax.f32 %v5603, 0.0
      %v5924 = vmax.f32 %v5604, 0.0
      %v5925 = vmax.f32 %v5605, 0.0
      %v5926 = vmax.f32 %v5606, 0.0
      %v5927 = vmax.f32 %v5607, 0.0
      %v5928 = vmax.f32 %v5608, 0.0
      %v5929 = vmax.f32 %v5609, 0.0
      %v5930 = vmax.f32 %v5610, 0.0
      %v5931 = vmax.f32 %v5611, 0.0
      %v5932 = vmax.f32 %v5612, 0.0
      %v5933 = vmax.f32 %v5613, 0.0
      %v5934 = vmax.f32 %v5614, 0.0
      %v5935 = vmax.f32 %v5615, 0.0
      %v5936 = vmax.f32 %v5616, 0.0
      %v5937 = vmax.f32 %v5617, 0.0
      %v5938 = vmax.f32 %v5618, 0.0
      %v5939 = vmax.f32 %v5619, 0.0
      %v5940 = vmax.f32 %v5620, 0.0
      %v5941 = vmax.f32 %v5621, 0.0
      %v5942 = vmax.f32 %v5622, 0.0
      %v5943 = vmax.f32 %v5623, 0.0
      %v5944 = vmax.f32 %v5624, 0.0
      %v5945 = vmax.f32 %v5625, 0.0
      %v5946 = vmax.f32 %v5626, 0.0
      %v5947 = vmax.f32 %v5627, 0.0
      %v5948 = vmax.f32 %v5628, 0.0
      %v5949 = vmax.f32 %v5629, 0.0
      %v5950 = vmax.f32 %v5630, 0.0
      %v5951 = vmax.f32 %v5631, 0.0
      %v5952 = vmax.f32 %v5632, 0.0
      %v5953 = vld [vmem:[#allocation2] sm:$0xff]
      %v5954 = vld [vmem:[#allocation2 + $0x8] sm:$0xff]
      %v5955 = vld [vmem:[#allocation2 + $0x10] sm:$0xff]
      %v5956 = vld [vmem:[#allocation2 + $0x18] sm:$0xff]
      %v5957 = vld [vmem:[#allocation2 + $0x20] sm:$0xff]
      %v5958 = vld [vmem:[#allocation2 + $0x28] sm:$0xff]
      %v5959 = vld [vmem:[#allocation2 + $0x30] sm:$0xff]
      %v5960 = vld [vmem:[#allocation2 + $0x38] sm:$0xff]
      %v5961 = vld [vmem:[#allocation2 + $0x40] sm:$0xff]
      %v5962 = vld [vmem:[#allocation2 + $0x48] sm:$0xff]
      %v5963 = vld [vmem:[#allocation2 + $0x50] sm:$0xff]
      %v5964 = vld [vmem:[#allocation2 + $0x58] sm:$0xff]
      %v5965 = vld [vmem:[#allocation2 + $0x60] sm:$0xff]
      %v5966 = vld [vmem:[#allocation2 + $0x68] sm:$0xff]
      %v5967 = vld [vmem:[#allocation2 + $0x70] sm:$0xff]
      %v5968 = vld [vmem:[#allocation2 + $0x78] sm:$0xff]
      %v5969 = vld [vmem:[#allocation2 + $0x80] sm:$0xff]
      %v5970 = vld [vmem:[#allocation2 + $0x88] sm:$0xff]
      %v5971 = vld [vmem:[#allocation2 + $0x90] sm:$0xff]
      %v5972 = vld [vmem:[#allocation2 + $0x98] sm:$0xff]
      %v5973 = vld [vmem:[#allocation2 + $0xa0] sm:$0xff]
      %v5974 = vld [vmem:[#allocation2 + $0xa8] sm:$0xff]
      %v5975 = vld [vmem:[#allocation2 + $0xb0] sm:$0xff]
      %v5976 = vld [vmem:[#allocation2 + $0xb8] sm:$0xff]
      %v5977 = vld [vmem:[#allocation2 + $0xc0] sm:$0xff]
      %v5978 = vld [vmem:[#allocation2 + $0xc8] sm:$0xff]
      %v5979 = vld [vmem:[#allocation2 + $0xd0] sm:$0xff]
      %v5980 = vld [vmem:[#allocation2 + $0xd8] sm:$0xff]
      %v5981 = vld [vmem:[#allocation2 + $0xe0] sm:$0xff]
      %v5982 = vld [vmem:[#allocation2 + $0xe8] sm:$0xff]
      %v5983 = vld [vmem:[#allocation2 + $0xf0] sm:$0xff]
      %v5984 = vld [vmem:[#allocation2 + $0xf8] sm:$0xff]
      %v5985 = vld [vmem:[#allocation2 + $0x100] sm:$0xff]
      %v5986 = vld [vmem:[#allocation2 + $0x108] sm:$0xff]
      %v5987 = vld [vmem:[#allocation2 + $0x110] sm:$0xff]
      %v5988 = vld [vmem:[#allocation2 + $0x118] sm:$0xff]
      %v5989 = vld [vmem:[#allocation2 + $0x120] sm:$0xff]
      %v5990 = vld [vmem:[#allocation2 + $0x128] sm:$0xff]
      %v5991 = vld [vmem:[#allocation2 + $0x130] sm:$0xff]
      %v5992 = vld [vmem:[#allocation2 + $0x138] sm:$0xff]
      %v5993 = vld [vmem:[#allocation2 + $0x140] sm:$0xff]
      %v5994 = vld [vmem:[#allocation2 + $0x148] sm:$0xff]
      %v5995 = vld [vmem:[#allocation2 + $0x150] sm:$0xff]
      %v5996 = vld [vmem:[#allocation2 + $0x158] sm:$0xff]
      %v5997 = vld [vmem:[#allocation2 + $0x160] sm:$0xff]
      %v5998 = vld [vmem:[#allocation2 + $0x168] sm:$0xff]
      %v5999 = vld [vmem:[#allocation2 + $0x170] sm:$0xff]
      %v6000 = vld [vmem:[#allocation2 + $0x178] sm:$0xff]
      %v6001 = vld [vmem:[#allocation2 + $0x180] sm:$0xff]
      %v6002 = vld [vmem:[#allocation2 + $0x188] sm:$0xff]
      %v6003 = vld [vmem:[#allocation2 + $0x190] sm:$0xff]
      %v6004 = vld [vmem:[#allocation2 + $0x198] sm:$0xff]
      %v6005 = vld [vmem:[#allocation2 + $0x1a0] sm:$0xff]
      %v6006 = vld [vmem:[#allocation2 + $0x1a8] sm:$0xff]
      %v6007 = vld [vmem:[#allocation2 + $0x1b0] sm:$0xff]
      %v6008 = vld [vmem:[#allocation2 + $0x1b8] sm:$0xff]
      %v6009 = vld [vmem:[#allocation2 + $0x1c0] sm:$0xff]
      %v6010 = vld [vmem:[#allocation2 + $0x1c8] sm:$0xff]
      %v6011 = vld [vmem:[#allocation2 + $0x1d0] sm:$0xff]
      %v6012 = vld [vmem:[#allocation2 + $0x1d8] sm:$0xff]
      %v6013 = vld [vmem:[#allocation2 + $0x1e0] sm:$0xff]
      %v6014 = vld [vmem:[#allocation2 + $0x1e8] sm:$0xff]
      %v6015 = vld [vmem:[#allocation2 + $0x1f0] sm:$0xff]
      %v6016 = vld [vmem:[#allocation2 + $0x1f8] sm:$0xff]
      %v6017 = vld [vmem:[#allocation2 + $0x200] sm:$0xff]
      %v6018 = vld [vmem:[#allocation2 + $0x208] sm:$0xff]
      %v6019 = vld [vmem:[#allocation2 + $0x210] sm:$0xff]
      %v6020 = vld [vmem:[#allocation2 + $0x218] sm:$0xff]
      %v6021 = vld [vmem:[#allocation2 + $0x220] sm:$0xff]
      %v6022 = vld [vmem:[#allocation2 + $0x228] sm:$0xff]
      %v6023 = vld [vmem:[#allocation2 + $0x230] sm:$0xff]
      %v6024 = vld [vmem:[#allocation2 + $0x238] sm:$0xff]
      %v6025 = vld [vmem:[#allocation2 + $0x240] sm:$0xff]
      %v6026 = vld [vmem:[#allocation2 + $0x248] sm:$0xff]
      %v6027 = vld [vmem:[#allocation2 + $0x250] sm:$0xff]
      %v6028 = vld [vmem:[#allocation2 + $0x258] sm:$0xff]
      %v6029 = vld [vmem:[#allocation2 + $0x260] sm:$0xff]
      %v6030 = vld [vmem:[#allocation2 + $0x268] sm:$0xff]
      %v6031 = vld [vmem:[#allocation2 + $0x270] sm:$0xff]
      %v6032 = vld [vmem:[#allocation2 + $0x278] sm:$0xff]
      %v6033 = vld [vmem:[#allocation2 + $0x280] sm:$0xff]
      %v6034 = vld [vmem:[#allocation2 + $0x288] sm:$0xff]
      %v6035 = vld [vmem:[#allocation2 + $0x290] sm:$0xff]
      %v6036 = vld [vmem:[#allocation2 + $0x298] sm:$0xff]
      %v6037 = vld [vmem:[#allocation2 + $0x2a0] sm:$0xff]
      %v6038 = vld [vmem:[#allocation2 + $0x2a8] sm:$0xff]
      %v6039 = vld [vmem:[#allocation2 + $0x2b0] sm:$0xff]
      %v6040 = vld [vmem:[#allocation2 + $0x2b8] sm:$0xff]
      %v6041 = vld [vmem:[#allocation2 + $0x2c0] sm:$0xff]
      %v6042 = vld [vmem:[#allocation2 + $0x2c8] sm:$0xff]
      %v6043 = vld [vmem:[#allocation2 + $0x2d0] sm:$0xff]
      %v6044 = vld [vmem:[#allocation2 + $0x2d8] sm:$0xff]
      %v6045 = vld [vmem:[#allocation2 + $0x2e0] sm:$0xff]
      %v6046 = vld [vmem:[#allocation2 + $0x2e8] sm:$0xff]
      %v6047 = vld [vmem:[#allocation2 + $0x2f0] sm:$0xff]
      %v6048 = vld [vmem:[#allocation2 + $0x2f8] sm:$0xff]
      %v6049 = vld [vmem:[#allocation2 + $0x300] sm:$0xff]
      %v6050 = vld [vmem:[#allocation2 + $0x308] sm:$0xff]
      %v6051 = vld [vmem:[#allocation2 + $0x310] sm:$0xff]
      %v6052 = vld [vmem:[#allocation2 + $0x318] sm:$0xff]
      %v6053 = vld [vmem:[#allocation2 + $0x320] sm:$0xff]
      %v6054 = vld [vmem:[#allocation2 + $0x328] sm:$0xff]
      %v6055 = vld [vmem:[#allocation2 + $0x330] sm:$0xff]
      %v6056 = vld [vmem:[#allocation2 + $0x338] sm:$0xff]
      %v6057 = vld [vmem:[#allocation2 + $0x340] sm:$0xff]
      %v6058 = vld [vmem:[#allocation2 + $0x348] sm:$0xff]
      %v6059 = vld [vmem:[#allocation2 + $0x350] sm:$0xff]
      %v6060 = vld [vmem:[#allocation2 + $0x358] sm:$0xff]
      %v6061 = vld [vmem:[#allocation2 + $0x360] sm:$0xff]
      %v6062 = vld [vmem:[#allocation2 + $0x368] sm:$0xff]
      %v6063 = vld [vmem:[#allocation2 + $0x370] sm:$0xff]
      %v6064 = vld [vmem:[#allocation2 + $0x378] sm:$0xff]
      %v6065 = vld [vmem:[#allocation2 + $0x380] sm:$0xff]
      %v6066 = vld [vmem:[#allocation2 + $0x388] sm:$0xff]
      %v6067 = vld [vmem:[#allocation2 + $0x390] sm:$0xff]
      %v6068 = vld [vmem:[#allocation2 + $0x398] sm:$0xff]
      %v6069 = vld [vmem:[#allocation2 + $0x3a0] sm:$0xff]
      %v6070 = vld [vmem:[#allocation2 + $0x3a8] sm:$0xff]
      %v6071 = vld [vmem:[#allocation2 + $0x3b0] sm:$0xff]
      %v6072 = vld [vmem:[#allocation2 + $0x3b8] sm:$0xff]
      %v6073 = vld [vmem:[#allocation2 + $0x3c0] sm:$0xff]
      %v6074 = vld [vmem:[#allocation2 + $0x3c8] sm:$0xff]
      %v6075 = vld [vmem:[#allocation2 + $0x3d0] sm:$0xff]
      %v6076 = vld [vmem:[#allocation2 + $0x3d8] sm:$0xff]
      %v6077 = vld [vmem:[#allocation2 + $0x3e0] sm:$0xff]
      %v6078 = vld [vmem:[#allocation2 + $0x3e8] sm:$0xff]
      %v6079 = vld [vmem:[#allocation2 + $0x3f0] sm:$0xff]
      %v6080 = vld [vmem:[#allocation2 + $0x3f8] sm:$0xff]
      %v6081 = vld [vmem:[#allocation2 + $0x400] sm:$0xff]
      %v6082 = vld [vmem:[#allocation2 + $0x408] sm:$0xff]
      %v6083 = vld [vmem:[#allocation2 + $0x410] sm:$0xff]
      %v6084 = vld [vmem:[#allocation2 + $0x418] sm:$0xff]
      %v6085 = vld [vmem:[#allocation2 + $0x420] sm:$0xff]
      %v6086 = vld [vmem:[#allocation2 + $0x428] sm:$0xff]
      %v6087 = vld [vmem:[#allocation2 + $0x430] sm:$0xff]
      %v6088 = vld [vmem:[#allocation2 + $0x438] sm:$0xff]
      %v6089 = vld [vmem:[#allocation2 + $0x440] sm:$0xff]
      %v6090 = vld [vmem:[#allocation2 + $0x448] sm:$0xff]
      %v6091 = vld [vmem:[#allocation2 + $0x450] sm:$0xff]
      %v6092 = vld [vmem:[#allocation2 + $0x458] sm:$0xff]
      %v6093 = vld [vmem:[#allocation2 + $0x460] sm:$0xff]
      %v6094 = vld [vmem:[#allocation2 + $0x468] sm:$0xff]
      %v6095 = vld [vmem:[#allocation2 + $0x470] sm:$0xff]
      %v6096 = vld [vmem:[#allocation2 + $0x478] sm:$0xff]
      %v6097 = vld [vmem:[#allocation2 + $0x480] sm:$0xff]
      %v6098 = vld [vmem:[#allocation2 + $0x488] sm:$0xff]
      %v6099 = vld [vmem:[#allocation2 + $0x490] sm:$0xff]
      %v6100 = vld [vmem:[#allocation2 + $0x498] sm:$0xff]
      %v6101 = vld [vmem:[#allocation2 + $0x4a0] sm:$0xff]
      %v6102 = vld [vmem:[#allocation2 + $0x4a8] sm:$0xff]
      %v6103 = vld [vmem:[#allocation2 + $0x4b0] sm:$0xff]
      %v6104 = vld [vmem:[#allocation2 + $0x4b8] sm:$0xff]
      %v6105 = vld [vmem:[#allocation2 + $0x4c0] sm:$0xff]
      %v6106 = vld [vmem:[#allocation2 + $0x4c8] sm:$0xff]
      %v6107 = vld [vmem:[#allocation2 + $0x4d0] sm:$0xff]
      %v6108 = vld [vmem:[#allocation2 + $0x4d8] sm:$0xff]
      %v6109 = vld [vmem:[#allocation2 + $0x4e0] sm:$0xff]
      %v6110 = vld [vmem:[#allocation2 + $0x4e8] sm:$0xff]
      %v6111 = vld [vmem:[#allocation2 + $0x4f0] sm:$0xff]
      %v6112 = vld [vmem:[#allocation2 + $0x4f8] sm:$0xff]
      %v6113 = vadd.f32 %v5633, %v5634
      %6114 = vadd.xlane.f32.xlu0 %v6113
      %v6115 = vpop.xlane.xlu0 %6114
      %v6116 = vadd.f32 %v5635, %v5636
      %6117 = vadd.xlane.f32.xlu0 %v6116
      %v6118 = vpop.xlane.xlu0 %6117
      %v6119 = vadd.f32 %v5637, %v5638
      %6120 = vadd.xlane.f32.xlu0 %v6119
      %v6121 = vpop.xlane.xlu0 %6120
      %v6122 = vadd.f32 %v5639, %v5640
      %6123 = vadd.xlane.f32.xlu0 %v6122
      %v6124 = vpop.xlane.xlu0 %6123
      %v6125 = vadd.f32 %v5641, %v5642
      %6126 = vadd.xlane.f32.xlu0 %v6125
      %v6127 = vpop.xlane.xlu0 %6126
      %v6128 = vadd.f32 %v5643, %v5644
      %6129 = vadd.xlane.f32.xlu0 %v6128
      %v6130 = vpop.xlane.xlu0 %6129
      %v6131 = vadd.f32 %v5645, %v5646
      %6132 = vadd.xlane.f32.xlu0 %v6131
      %v6133 = vpop.xlane.xlu0 %6132
      %v6134 = vadd.f32 %v5647, %v5648
      %6135 = vadd.xlane.f32.xlu0 %v6134
      %v6136 = vpop.xlane.xlu0 %6135
      %v6137 = vadd.f32 %v5649, %v5650
      %6138 = vadd.xlane.f32.xlu0 %v6137
      %v6139 = vpop.xlane.xlu0 %6138
      %v6140 = vadd.f32 %v5651, %v5652
      %6141 = vadd.xlane.f32.xlu0 %v6140
      %v6142 = vpop.xlane.xlu0 %6141
      %v6143 = vadd.f32 %v5653, %v5654
      %6144 = vadd.xlane.f32.xlu0 %v6143
      %v6145 = vpop.xlane.xlu0 %6144
      %v6146 = vadd.f32 %v5655, %v5656
      %6147 = vadd.xlane.f32.xlu0 %v6146
      %v6148 = vpop.xlane.xlu0 %6147
      %v6149 = vadd.f32 %v5657, %v5658
      %6150 = vadd.xlane.f32.xlu0 %v6149
      %v6151 = vpop.xlane.xlu0 %6150
      %v6152 = vadd.f32 %v5659, %v5660
      %6153 = vadd.xlane.f32.xlu0 %v6152
      %v6154 = vpop.xlane.xlu0 %6153
      %v6155 = vadd.f32 %v5661, %v5662
      %6156 = vadd.xlane.f32.xlu0 %v6155
      %v6157 = vpop.xlane.xlu0 %6156
      %v6158 = vadd.f32 %v5663, %v5664
      %6159 = vadd.xlane.f32.xlu0 %v6158
      %v6160 = vpop.xlane.xlu0 %6159
      %v6161 = vadd.f32 %v5665, %v5666
      %6162 = vadd.xlane.f32.xlu0 %v6161
      %v6163 = vpop.xlane.xlu0 %6162
      %v6164 = vadd.f32 %v5667, %v5668
      %6165 = vadd.xlane.f32.xlu0 %v6164
      %v6166 = vpop.xlane.xlu0 %6165
      %v6167 = vadd.f32 %v5669, %v5670
      %6168 = vadd.xlane.f32.xlu0 %v6167
      %v6169 = vpop.xlane.xlu0 %6168
      %v6170 = vadd.f32 %v5671, %v5672
      %6171 = vadd.xlane.f32.xlu0 %v6170
      %v6172 = vpop.xlane.xlu0 %6171
      %v6173 = vadd.f32 %v5673, %v5674
      %6174 = vadd.xlane.f32.xlu0 %v6173
      %v6175 = vpop.xlane.xlu0 %6174
      %v6176 = vadd.f32 %v5675, %v5676
      %6177 = vadd.xlane.f32.xlu0 %v6176
      %v6178 = vpop.xlane.xlu0 %6177
      %v6179 = vadd.f32 %v5677, %v5678
      %6180 = vadd.xlane.f32.xlu0 %v6179
      %v6181 = vpop.xlane.xlu0 %6180
      %v6182 = vadd.f32 %v5679, %v5680
      %6183 = vadd.xlane.f32.xlu0 %v6182
      %v6184 = vpop.xlane.xlu0 %6183
      %v6185 = vadd.f32 %v5681, %v5682
      %6186 = vadd.xlane.f32.xlu0 %v6185
      %v6187 = vpop.xlane.xlu0 %6186
      %v6188 = vadd.f32 %v5683, %v5684
      %6189 = vadd.xlane.f32.xlu0 %v6188
      %v6190 = vpop.xlane.xlu0 %6189
      %v6191 = vadd.f32 %v5685, %v5686
      %6192 = vadd.xlane.f32.xlu0 %v6191
      %v6193 = vpop.xlane.xlu0 %6192
      %v6194 = vadd.f32 %v5687, %v5688
      %6195 = vadd.xlane.f32.xlu0 %v6194
      %v6196 = vpop.xlane.xlu0 %6195
      %v6197 = vadd.f32 %v5689, %v5690
      %6198 = vadd.xlane.f32.xlu0 %v6197
      %v6199 = vpop.xlane.xlu0 %6198
      %v6200 = vadd.f32 %v5691, %v5692
      %6201 = vadd.xlane.f32.xlu0 %v6200
      %v6202 = vpop.xlane.xlu0 %6201
      %v6203 = vadd.f32 %v5693, %v5694
      %6204 = vadd.xlane.f32.xlu0 %v6203
      %v6205 = vpop.xlane.xlu0 %6204
      %v6206 = vadd.f32 %v5695, %v5696
      %6207 = vadd.xlane.f32.xlu0 %v6206
      %v6208 = vpop.xlane.xlu0 %6207
      %v6209 = vadd.f32 %v5697, %v5698
      %6210 = vadd.xlane.f32.xlu0 %v6209
      %v6211 = vpop.xlane.xlu0 %6210
      %v6212 = vadd.f32 %v5699, %v5700
      %6213 = vadd.xlane.f32.xlu0 %v6212
      %v6214 = vpop.xlane.xlu0 %6213
      %v6215 = vadd.f32 %v5701, %v5702
      %6216 = vadd.xlane.f32.xlu0 %v6215
      %v6217 = vpop.xlane.xlu0 %6216
      %v6218 = vadd.f32 %v5703, %v5704
      %6219 = vadd.xlane.f32.xlu0 %v6218
      %v6220 = vpop.xlane.xlu0 %6219
      %v6221 = vadd.f32 %v5705, %v5706
      %6222 = vadd.xlane.f32.xlu0 %v6221
      %v6223 = vpop.xlane.xlu0 %6222
      %v6224 = vadd.f32 %v5707, %v5708
      %6225 = vadd.xlane.f32.xlu0 %v6224
      %v6226 = vpop.xlane.xlu0 %6225
      %v6227 = vadd.f32 %v5709, %v5710
      %6228 = vadd.xlane.f32.xlu0 %v6227
      %v6229 = vpop.xlane.xlu0 %6228
      %v6230 = vadd.f32 %v5711, %v5712
      %6231 = vadd.xlane.f32.xlu0 %v6230
      %v6232 = vpop.xlane.xlu0 %6231
      %v6233 = vadd.f32 %v5713, %v5714
      %6234 = vadd.xlane.f32.xlu0 %v6233
      %v6235 = vpop.xlane.xlu0 %6234
      %v6236 = vadd.f32 %v5715, %v5716
      %6237 = vadd.xlane.f32.xlu0 %v6236
      %v6238 = vpop.xlane.xlu0 %6237
      %v6239 = vadd.f32 %v5717, %v5718
      %6240 = vadd.xlane.f32.xlu0 %v6239
      %v6241 = vpop.xlane.xlu0 %6240
      %v6242 = vadd.f32 %v5719, %v5720
      %6243 = vadd.xlane.f32.xlu0 %v6242
      %v6244 = vpop.xlane.xlu0 %6243
      %v6245 = vadd.f32 %v5721, %v5722
      %6246 = vadd.xlane.f32.xlu0 %v6245
      %v6247 = vpop.xlane.xlu0 %6246
      %v6248 = vadd.f32 %v5723, %v5724
      %6249 = vadd.xlane.f32.xlu0 %v6248
      %v6250 = vpop.xlane.xlu0 %6249
      %v6251 = vadd.f32 %v5725, %v5726
      %6252 = vadd.xlane.f32.xlu0 %v6251
      %v6253 = vpop.xlane.xlu0 %6252
      %v6254 = vadd.f32 %v5727, %v5728
      %6255 = vadd.xlane.f32.xlu0 %v6254
      %v6256 = vpop.xlane.xlu0 %6255
      %v6257 = vadd.f32 %v5729, %v5730
      %6258 = vadd.xlane.f32.xlu0 %v6257
      %v6259 = vpop.xlane.xlu0 %6258
      %v6260 = vadd.f32 %v5731, %v5732
      %6261 = vadd.xlane.f32.xlu0 %v6260
      %v6262 = vpop.xlane.xlu0 %6261
      %v6263 = vadd.f32 %v5733, %v5734
      %6264 = vadd.xlane.f32.xlu0 %v6263
      %v6265 = vpop.xlane.xlu0 %6264
      %v6266 = vadd.f32 %v5735, %v5736
      %6267 = vadd.xlane.f32.xlu0 %v6266
      %v6268 = vpop.xlane.xlu0 %6267
      %v6269 = vadd.f32 %v5737, %v5738
      %6270 = vadd.xlane.f32.xlu0 %v6269
      %v6271 = vpop.xlane.xlu0 %6270
      %v6272 = vadd.f32 %v5739, %v5740
      %6273 = vadd.xlane.f32.xlu0 %v6272
      %v6274 = vpop.xlane.xlu0 %6273
      %v6275 = vadd.f32 %v5741, %v5742
      %6276 = vadd.xlane.f32.xlu0 %v6275
      %v6277 = vpop.xlane.xlu0 %6276
      %v6278 = vadd.f32 %v5743, %v5744
      %6279 = vadd.xlane.f32.xlu0 %v6278
      %v6280 = vpop.xlane.xlu0 %6279
      %v6281 = vadd.f32 %v5745, %v5746
      %6282 = vadd.xlane.f32.xlu0 %v6281
      %v6283 = vpop.xlane.xlu0 %6282
      %v6284 = vadd.f32 %v5747, %v5748
      %6285 = vadd.xlane.f32.xlu0 %v6284
      %v6286 = vpop.xlane.xlu0 %6285
      %v6287 = vadd.f32 %v5749, %v5750
      %6288 = vadd.xlane.f32.xlu0 %v6287
      %v6289 = vpop.xlane.xlu0 %6288
      %v6290 = vadd.f32 %v5751, %v5752
      %6291 = vadd.xlane.f32.xlu0 %v6290
      %v6292 = vpop.xlane.xlu0 %6291
      %v6293 = vadd.f32 %v5753, %v5754
      %6294 = vadd.xlane.f32.xlu0 %v6293
      %v6295 = vpop.xlane.xlu0 %6294
      %v6296 = vadd.f32 %v5755, %v5756
      %6297 = vadd.xlane.f32.xlu0 %v6296
      %v6298 = vpop.xlane.xlu0 %6297
      %v6299 = vadd.f32 %v5757, %v5758
      %6300 = vadd.xlane.f32.xlu0 %v6299
      %v6301 = vpop.xlane.xlu0 %6300
      %v6302 = vadd.f32 %v5759, %v5760
      %6303 = vadd.xlane.f32.xlu0 %v6302
      %v6304 = vpop.xlane.xlu0 %6303
      %v6305 = vadd.f32 %v5761, %v5762
      %6306 = vadd.xlane.f32.xlu0 %v6305
      %v6307 = vpop.xlane.xlu0 %6306
      %v6308 = vadd.f32 %v5763, %v5764
      %6309 = vadd.xlane.f32.xlu0 %v6308
      %v6310 = vpop.xlane.xlu0 %6309
      %v6311 = vadd.f32 %v5765, %v5766
      %6312 = vadd.xlane.f32.xlu0 %v6311
      %v6313 = vpop.xlane.xlu0 %6312
      %v6314 = vadd.f32 %v5767, %v5768
      %6315 = vadd.xlane.f32.xlu0 %v6314
      %v6316 = vpop.xlane.xlu0 %6315
      %v6317 = vadd.f32 %v5769, %v5770
      %6318 = vadd.xlane.f32.xlu0 %v6317
      %v6319 = vpop.xlane.xlu0 %6318
      %v6320 = vadd.f32 %v5771, %v5772
      %6321 = vadd.xlane.f32.xlu0 %v6320
      %v6322 = vpop.xlane.xlu0 %6321
      %v6323 = vadd.f32 %v5773, %v5774
      %6324 = vadd.xlane.f32.xlu0 %v6323
      %v6325 = vpop.xlane.xlu0 %6324
      %v6326 = vadd.f32 %v5775, %v5776
      %6327 = vadd.xlane.f32.xlu0 %v6326
      %v6328 = vpop.xlane.xlu0 %6327
      %v6329 = vadd.f32 %v5777, %v5778
      %6330 = vadd.xlane.f32.xlu0 %v6329
      %v6331 = vpop.xlane.xlu0 %6330
      %v6332 = vadd.f32 %v5779, %v5780
      %6333 = vadd.xlane.f32.xlu0 %v6332
      %v6334 = vpop.xlane.xlu0 %6333
      %v6335 = vadd.f32 %v5781, %v5782
      %6336 = vadd.xlane.f32.xlu0 %v6335
      %v6337 = vpop.xlane.xlu0 %6336
      %v6338 = vadd.f32 %v5783, %v5784
      %6339 = vadd.xlane.f32.xlu0 %v6338
      %v6340 = vpop.xlane.xlu0 %6339
      %v6341 = vadd.f32 %v5785, %v5786
      %6342 = vadd.xlane.f32.xlu0 %v6341
      %v6343 = vpop.xlane.xlu0 %6342
      %v6344 = vadd.f32 %v5787, %v5788
      %6345 = vadd.xlane.f32.xlu0 %v6344
      %v6346 = vpop.xlane.xlu0 %6345
      %v6347 = vadd.f32 %v5789, %v5790
      %6348 = vadd.xlane.f32.xlu0 %v6347
      %v6349 = vpop.xlane.xlu0 %6348
      %v6350 = vadd.f32 %v5791, %v5792
      %6351 = vadd.xlane.f32.xlu0 %v6350
      %v6352 = vpop.xlane.xlu0 %6351
      %v6353 = vadd.f32 %v5793, %v5794
      %6354 = vadd.xlane.f32.xlu0 %v6353
      %v6355 = vpop.xlane.xlu0 %6354
      %v6356 = vadd.f32 %v5795, %v5796
      %6357 = vadd.xlane.f32.xlu0 %v6356
      %v6358 = vpop.xlane.xlu0 %6357
      %v6359 = vadd.f32 %v5797, %v5798
      %6360 = vadd.xlane.f32.xlu0 %v6359
      %v6361 = vpop.xlane.xlu0 %6360
      %v6362 = vadd.f32 %v5799, %v5800
      %6363 = vadd.xlane.f32.xlu0 %v6362
      %v6364 = vpop.xlane.xlu0 %6363
      %v6365 = vadd.f32 %v5801, %v5802
      %6366 = vadd.xlane.f32.xlu0 %v6365
      %v6367 = vpop.xlane.xlu0 %6366
      %v6368 = vadd.f32 %v5803, %v5804
      %6369 = vadd.xlane.f32.xlu0 %v6368
      %v6370 = vpop.xlane.xlu0 %6369
      %v6371 = vadd.f32 %v5805, %v5806
      %6372 = vadd.xlane.f32.xlu0 %v6371
      %v6373 = vpop.xlane.xlu0 %6372
      %v6374 = vadd.f32 %v5807, %v5808
      %6375 = vadd.xlane.f32.xlu0 %v6374
      %v6376 = vpop.xlane.xlu0 %6375
      %v6377 = vadd.f32 %v5809, %v5810
      %6378 = vadd.xlane.f32.xlu0 %v6377
      %v6379 = vpop.xlane.xlu0 %6378
      %v6380 = vadd.f32 %v5811, %v5812
      %6381 = vadd.xlane.f32.xlu0 %v6380
      %v6382 = vpop.xlane.xlu0 %6381
      %v6383 = vadd.f32 %v5813, %v5814
      %6384 = vadd.xlane.f32.xlu0 %v6383
      %v6385 = vpop.xlane.xlu0 %6384
      %v6386 = vadd.f32 %v5815, %v5816
      %6387 = vadd.xlane.f32.xlu0 %v6386
      %v6388 = vpop.xlane.xlu0 %6387
      %v6389 = vadd.f32 %v5817, %v5818
      %6390 = vadd.xlane.f32.xlu0 %v6389
      %v6391 = vpop.xlane.xlu0 %6390
      %v6392 = vadd.f32 %v5819, %v5820
      %6393 = vadd.xlane.f32.xlu0 %v6392
      %v6394 = vpop.xlane.xlu0 %6393
      %v6395 = vadd.f32 %v5821, %v5822
      %6396 = vadd.xlane.f32.xlu0 %v6395
      %v6397 = vpop.xlane.xlu0 %6396
      %v6398 = vadd.f32 %v5823, %v5824
      %6399 = vadd.xlane.f32.xlu0 %v6398
      %v6400 = vpop.xlane.xlu0 %6399
      %v6401 = vadd.f32 %v5825, %v5826
      %6402 = vadd.xlane.f32.xlu0 %v6401
      %v6403 = vpop.xlane.xlu0 %6402
      %v6404 = vadd.f32 %v5827, %v5828
      %6405 = vadd.xlane.f32.xlu0 %v6404
      %v6406 = vpop.xlane.xlu0 %6405
      %v6407 = vadd.f32 %v5829, %v5830
      %6408 = vadd.xlane.f32.xlu0 %v6407
      %v6409 = vpop.xlane.xlu0 %6408
      %v6410 = vadd.f32 %v5831, %v5832
      %6411 = vadd.xlane.f32.xlu0 %v6410
      %v6412 = vpop.xlane.xlu0 %6411
      %v6413 = vadd.f32 %v5833, %v5834
      %6414 = vadd.xlane.f32.xlu0 %v6413
      %v6415 = vpop.xlane.xlu0 %6414
      %v6416 = vadd.f32 %v5835, %v5836
      %6417 = vadd.xlane.f32.xlu0 %v6416
      %v6418 = vpop.xlane.xlu0 %6417
      %v6419 = vadd.f32 %v5837, %v5838
      %6420 = vadd.xlane.f32.xlu0 %v6419
      %v6421 = vpop.xlane.xlu0 %6420
      %v6422 = vadd.f32 %v5839, %v5840
      %6423 = vadd.xlane.f32.xlu0 %v6422
      %v6424 = vpop.xlane.xlu0 %6423
      %v6425 = vadd.f32 %v5841, %v5842
      %6426 = vadd.xlane.f32.xlu0 %v6425
      %v6427 = vpop.xlane.xlu0 %6426
      %v6428 = vadd.f32 %v5843, %v5844
      %6429 = vadd.xlane.f32.xlu0 %v6428
      %v6430 = vpop.xlane.xlu0 %6429
      %v6431 = vadd.f32 %v5845, %v5846
      %6432 = vadd.xlane.f32.xlu0 %v6431
      %v6433 = vpop.xlane.xlu0 %6432
      %v6434 = vadd.f32 %v5847, %v5848
      %6435 = vadd.xlane.f32.xlu0 %v6434
      %v6436 = vpop.xlane.xlu0 %6435
      %v6437 = vadd.f32 %v5849, %v5850
      %6438 = vadd.xlane.f32.xlu0 %v6437
      %v6439 = vpop.xlane.xlu0 %6438
      %v6440 = vadd.f32 %v5851, %v5852
      %6441 = vadd.xlane.f32.xlu0 %v6440
      %v6442 = vpop.xlane.xlu0 %6441
      %v6443 = vadd.f32 %v5853, %v5854
      %6444 = vadd.xlane.f32.xlu0 %v6443
      %v6445 = vpop.xlane.xlu0 %6444
      %v6446 = vadd.f32 %v5855, %v5856
      %6447 = vadd.xlane.f32.xlu0 %v6446
      %v6448 = vpop.xlane.xlu0 %6447
      %v6449 = vadd.f32 %v5857, %v5858
      %6450 = vadd.xlane.f32.xlu0 %v6449
      %v6451 = vpop.xlane.xlu0 %6450
      %v6452 = vadd.f32 %v5859, %v5860
      %6453 = vadd.xlane.f32.xlu0 %v6452
      %v6454 = vpop.xlane.xlu0 %6453
      %v6455 = vadd.f32 %v5861, %v5862
      %6456 = vadd.xlane.f32.xlu0 %v6455
      %v6457 = vpop.xlane.xlu0 %6456
      %v6458 = vadd.f32 %v5863, %v5864
      %6459 = vadd.xlane.f32.xlu0 %v6458
      %v6460 = vpop.xlane.xlu0 %6459
      %v6461 = vadd.f32 %v5865, %v5866
      %6462 = vadd.xlane.f32.xlu0 %v6461
      %v6463 = vpop.xlane.xlu0 %6462
      %v6464 = vadd.f32 %v5867, %v5868
      %6465 = vadd.xlane.f32.xlu0 %v6464
      %v6466 = vpop.xlane.xlu0 %6465
      %v6467 = vadd.f32 %v5869, %v5870
      %6468 = vadd.xlane.f32.xlu0 %v6467
      %v6469 = vpop.xlane.xlu0 %6468
      %v6470 = vadd.f32 %v5871, %v5872
      %6471 = vadd.xlane.f32.xlu0 %v6470
      %v6472 = vpop.xlane.xlu0 %6471
      %v6473 = vadd.f32 %v5873, %v5874
      %6474 = vadd.xlane.f32.xlu0 %v6473
      %v6475 = vpop.xlane.xlu0 %6474
      %v6476 = vadd.f32 %v5875, %v5876
      %6477 = vadd.xlane.f32.xlu0 %v6476
      %v6478 = vpop.xlane.xlu0 %6477
      %v6479 = vadd.f32 %v5877, %v5878
      %6480 = vadd.xlane.f32.xlu0 %v6479
      %v6481 = vpop.xlane.xlu0 %6480
      %v6482 = vadd.f32 %v5879, %v5880
      %6483 = vadd.xlane.f32.xlu0 %v6482
      %v6484 = vpop.xlane.xlu0 %6483
      %v6485 = vadd.f32 %v5881, %v5882
      %6486 = vadd.xlane.f32.xlu0 %v6485
      %v6487 = vpop.xlane.xlu0 %6486
      %v6488 = vadd.f32 %v5883, %v5884
      %6489 = vadd.xlane.f32.xlu0 %v6488
      %v6490 = vpop.xlane.xlu0 %6489
      %v6491 = vadd.f32 %v5885, %v5886
      %6492 = vadd.xlane.f32.xlu0 %v6491
      %v6493 = vpop.xlane.xlu0 %6492
      %v6494 = vadd.f32 %v5887, %v5888
      %6495 = vadd.xlane.f32.xlu0 %v6494
      %v6496 = vpop.xlane.xlu0 %6495
      %v6497 = vadd.f32 %v5889, %v5890
      %6498 = vadd.xlane.f32.xlu0 %v6497
      %v6499 = vpop.xlane.xlu0 %6498
      %v6500 = vadd.f32 %v5891, %v5892
      %6501 = vadd.xlane.f32.xlu0 %v6500
      %v6502 = vpop.xlane.xlu0 %6501
      %v6503 = vadd.f32 %v5893, %v5894
      %6504 = vadd.xlane.f32.xlu0 %v6503
      %v6505 = vpop.xlane.xlu0 %6504
      %v6506 = vadd.f32 %v5895, %v5896
      %6507 = vadd.xlane.f32.xlu0 %v6506
      %v6508 = vpop.xlane.xlu0 %6507
      %v6509 = vadd.f32 %v5897, %v5898
      %6510 = vadd.xlane.f32.xlu0 %v6509
      %v6511 = vpop.xlane.xlu0 %6510
      %v6512 = vadd.f32 %v5899, %v5900
      %6513 = vadd.xlane.f32.xlu0 %v6512
      %v6514 = vpop.xlane.xlu0 %6513
      %v6515 = vadd.f32 %v5901, %v5902
      %6516 = vadd.xlane.f32.xlu0 %v6515
      %v6517 = vpop.xlane.xlu0 %6516
      %v6518 = vadd.f32 %v5903, %v5904
      %6519 = vadd.xlane.f32.xlu0 %v6518
      %v6520 = vpop.xlane.xlu0 %6519
      %v6521 = vadd.f32 %v5905, %v5906
      %6522 = vadd.xlane.f32.xlu0 %v6521
      %v6523 = vpop.xlane.xlu0 %6522
      %v6524 = vadd.f32 %v5907, %v5908
      %6525 = vadd.xlane.f32.xlu0 %v6524
      %v6526 = vpop.xlane.xlu0 %6525
      %v6527 = vadd.f32 %v5909, %v5910
      %6528 = vadd.xlane.f32.xlu0 %v6527
      %v6529 = vpop.xlane.xlu0 %6528
      %v6530 = vadd.f32 %v5911, %v5912
      %6531 = vadd.xlane.f32.xlu0 %v6530
      %v6532 = vpop.xlane.xlu0 %6531
      %v6533 = vadd.f32 %v5913, %v5914
      %6534 = vadd.xlane.f32.xlu0 %v6533
      %v6535 = vpop.xlane.xlu0 %6534
      %v6536 = vadd.f32 %v5915, %v5916
      %6537 = vadd.xlane.f32.xlu0 %v6536
      %v6538 = vpop.xlane.xlu0 %6537
      %v6539 = vadd.f32 %v5917, %v5918
      %6540 = vadd.xlane.f32.xlu0 %v6539
      %v6541 = vpop.xlane.xlu0 %6540
      %v6542 = vadd.f32 %v5919, %v5920
      %6543 = vadd.xlane.f32.xlu0 %v6542
      %v6544 = vpop.xlane.xlu0 %6543
      %v6545 = vadd.f32 %v5921, %v5922
      %6546 = vadd.xlane.f32.xlu0 %v6545
      %v6547 = vpop.xlane.xlu0 %6546
      %v6548 = vadd.f32 %v5923, %v5924
      %6549 = vadd.xlane.f32.xlu0 %v6548
      %v6550 = vpop.xlane.xlu0 %6549
      %v6551 = vadd.f32 %v5925, %v5926
      %6552 = vadd.xlane.f32.xlu0 %v6551
      %v6553 = vpop.xlane.xlu0 %6552
      %v6554 = vadd.f32 %v5927, %v5928
      %6555 = vadd.xlane.f32.xlu0 %v6554
      %v6556 = vpop.xlane.xlu0 %6555
      %v6557 = vadd.f32 %v5929, %v5930
      %6558 = vadd.xlane.f32.xlu0 %v6557
      %v6559 = vpop.xlane.xlu0 %6558
      %v6560 = vadd.f32 %v5931, %v5932
      %6561 = vadd.xlane.f32.xlu0 %v6560
      %v6562 = vpop.xlane.xlu0 %6561
      %v6563 = vadd.f32 %v5933, %v5934
      %6564 = vadd.xlane.f32.xlu0 %v6563
      %v6565 = vpop.xlane.xlu0 %6564
      %v6566 = vadd.f32 %v5935, %v5936
      %6567 = vadd.xlane.f32.xlu0 %v6566
      %v6568 = vpop.xlane.xlu0 %6567
      %v6569 = vadd.f32 %v5937, %v5938
      %6570 = vadd.xlane.f32.xlu0 %v6569
      %v6571 = vpop.xlane.xlu0 %6570
      %v6572 = vadd.f32 %v5939, %v5940
      %6573 = vadd.xlane.f32.xlu0 %v6572
      %v6574 = vpop.xlane.xlu0 %6573
      %v6575 = vadd.f32 %v5941, %v5942
      %6576 = vadd.xlane.f32.xlu0 %v6575
      %v6577 = vpop.xlane.xlu0 %6576
      %v6578 = vadd.f32 %v5943, %v5944
      %6579 = vadd.xlane.f32.xlu0 %v6578
      %v6580 = vpop.xlane.xlu0 %6579
      %v6581 = vadd.f32 %v5945, %v5946
      %6582 = vadd.xlane.f32.xlu0 %v6581
      %v6583 = vpop.xlane.xlu0 %6582
      %v6584 = vadd.f32 %v5947, %v5948
      %6585 = vadd.xlane.f32.xlu0 %v6584
      %v6586 = vpop.xlane.xlu0 %6585
      %v6587 = vadd.f32 %v5949, %v5950
      %6588 = vadd.xlane.f32.xlu0 %v6587
      %v6589 = vpop.xlane.xlu0 %6588
      %v6590 = vadd.f32 %v5951, %v5952
      %6591 = vadd.xlane.f32.xlu0 %v6590
      %v6592 = vpop.xlane.xlu0 %6591
      %v6593 = vadd.f32 %v5953, %v6115
      %v6594 = vadd.f32 %v5954, %v6118
      %v6595 = vadd.f32 %v5955, %v6121
      %v6596 = vadd.f32 %v5956, %v6124
      %v6597 = vadd.f32 %v5957, %v6127
      %v6598 = vadd.f32 %v5958, %v6130
      %v6599 = vadd.f32 %v5959, %v6133
      %v6600 = vadd.f32 %v5960, %v6136
      %v6601 = vadd.f32 %v5961, %v6139
      %v6602 = vadd.f32 %v5962, %v6142
      %v6603 = vadd.f32 %v5963, %v6145
      %v6604 = vadd.f32 %v5964, %v6148
      %v6605 = vadd.f32 %v5965, %v6151
      %v6606 = vadd.f32 %v5966, %v6154
      %v6607 = vadd.f32 %v5967, %v6157
      %v6608 = vadd.f32 %v5968, %v6160
      %v6609 = vadd.f32 %v5969, %v6163
      %v6610 = vadd.f32 %v5970, %v6166
      %v6611 = vadd.f32 %v5971, %v6169
      %v6612 = vadd.f32 %v5972, %v6172
      %v6613 = vadd.f32 %v5973, %v6175
      %v6614 = vadd.f32 %v5974, %v6178
      %v6615 = vadd.f32 %v5975, %v6181
      %v6616 = vadd.f32 %v5976, %v6184
      %v6617 = vadd.f32 %v5977, %v6187
      %v6618 = vadd.f32 %v5978, %v6190
      %v6619 = vadd.f32 %v5979, %v6193
      %v6620 = vadd.f32 %v5980, %v6196
      %v6621 = vadd.f32 %v5981, %v6199
      %v6622 = vadd.f32 %v5982, %v6202
      %v6623 = vadd.f32 %v5983, %v6205
      %v6624 = vadd.f32 %v5984, %v6208
      %v6625 = vadd.f32 %v5985, %v6211
      %v6626 = vadd.f32 %v5986, %v6214
      %v6627 = vadd.f32 %v5987, %v6217
      %v6628 = vadd.f32 %v5988, %v6220
      %v6629 = vadd.f32 %v5989, %v6223
      %v6630 = vadd.f32 %v5990, %v6226
      %v6631 = vadd.f32 %v5991, %v6229
      %v6632 = vadd.f32 %v5992, %v6232
      %v6633 = vadd.f32 %v5993, %v6235
      %v6634 = vadd.f32 %v5994, %v6238
      %v6635 = vadd.f32 %v5995, %v6241
      %v6636 = vadd.f32 %v5996, %v6244
      %v6637 = vadd.f32 %v5997, %v6247
      %v6638 = vadd.f32 %v5998, %v6250
      %v6639 = vadd.f32 %v5999, %v6253
      %v6640 = vadd.f32 %v6000, %v6256
      %v6641 = vadd.f32 %v6001, %v6259
      %v6642 = vadd.f32 %v6002, %v6262
      %v6643 = vadd.f32 %v6003, %v6265
      %v6644 = vadd.f32 %v6004, %v6268
      %v6645 = vadd.f32 %v6005, %v6271
      %v6646 = vadd.f32 %v6006, %v6274
      %v6647 = vadd.f32 %v6007, %v6277
      %v6648 = vadd.f32 %v6008, %v6280
      %v6649 = vadd.f32 %v6009, %v6283
      %v6650 = vadd.f32 %v6010, %v6286
      %v6651 = vadd.f32 %v6011, %v6289
      %v6652 = vadd.f32 %v6012, %v6292
      %v6653 = vadd.f32 %v6013, %v6295
      %v6654 = vadd.f32 %v6014, %v6298
      %v6655 = vadd.f32 %v6015, %v6301
      %v6656 = vadd.f32 %v6016, %v6304
      %v6657 = vadd.f32 %v6017, %v6307
      %v6658 = vadd.f32 %v6018, %v6310
      %v6659 = vadd.f32 %v6019, %v6313
      %v6660 = vadd.f32 %v6020, %v6316
      %v6661 = vadd.f32 %v6021, %v6319
      %v6662 = vadd.f32 %v6022, %v6322
      %v6663 = vadd.f32 %v6023, %v6325
      %v6664 = vadd.f32 %v6024, %v6328
      %v6665 = vadd.f32 %v6025, %v6331
      %v6666 = vadd.f32 %v6026, %v6334
      %v6667 = vadd.f32 %v6027, %v6337
      %v6668 = vadd.f32 %v6028, %v6340
      %v6669 = vadd.f32 %v6029, %v6343
      %v6670 = vadd.f32 %v6030, %v6346
      %v6671 = vadd.f32 %v6031, %v6349
      %v6672 = vadd.f32 %v6032, %v6352
      %v6673 = vadd.f32 %v6033, %v6355
      %v6674 = vadd.f32 %v6034, %v6358
      %v6675 = vadd.f32 %v6035, %v6361
      %v6676 = vadd.f32 %v6036, %v6364
      %v6677 = vadd.f32 %v6037, %v6367
      %v6678 = vadd.f32 %v6038, %v6370
      %v6679 = vadd.f32 %v6039, %v6373
      %v6680 = vadd.f32 %v6040, %v6376
      %v6681 = vadd.f32 %v6041, %v6379
      %v6682 = vadd.f32 %v6042, %v6382
      %v6683 = vadd.f32 %v6043, %v6385
      %v6684 = vadd.f32 %v6044, %v6388
      %v6685 = vadd.f32 %v6045, %v6391
      %v6686 = vadd.f32 %v6046, %v6394
      %v6687 = vadd.f32 %v6047, %v6397
      %v6688 = vadd.f32 %v6048, %v6400
      %v6689 = vadd.f32 %v6049, %v6403
      %v6690 = vadd.f32 %v6050, %v6406
      %v6691 = vadd.f32 %v6051, %v6409
      %v6692 = vadd.f32 %v6052, %v6412
      %v6693 = vadd.f32 %v6053, %v6415
      %v6694 = vadd.f32 %v6054, %v6418
      %v6695 = vadd.f32 %v6055, %v6421
      %v6696 = vadd.f32 %v6056, %v6424
      %v6697 = vadd.f32 %v6057, %v6427
      %v6698 = vadd.f32 %v6058, %v6430
      %v6699 = vadd.f32 %v6059, %v6433
      %v6700 = vadd.f32 %v6060, %v6436
      %v6701 = vadd.f32 %v6061, %v6439
      %v6702 = vadd.f32 %v6062, %v6442
      %v6703 = vadd.f32 %v6063, %v6445
      %v6704 = vadd.f32 %v6064, %v6448
      %v6705 = vadd.f32 %v6065, %v6451
      %v6706 = vadd.f32 %v6066, %v6454
      %v6707 = vadd.f32 %v6067, %v6457
      %v6708 = vadd.f32 %v6068, %v6460
      %v6709 = vadd.f32 %v6069, %v6463
      %v6710 = vadd.f32 %v6070, %v6466
      %v6711 = vadd.f32 %v6071, %v6469
      %v6712 = vadd.f32 %v6072, %v6472
      %v6713 = vadd.f32 %v6073, %v6475
      %v6714 = vadd.f32 %v6074, %v6478
      %v6715 = vadd.f32 %v6075, %v6481
      %v6716 = vadd.f32 %v6076, %v6484
      %v6717 = vadd.f32 %v6077, %v6487
      %v6718 = vadd.f32 %v6078, %v6490
      %v6719 = vadd.f32 %v6079, %v6493
      %v6720 = vadd.f32 %v6080, %v6496
      %v6721 = vadd.f32 %v6081, %v6499
      %v6722 = vadd.f32 %v6082, %v6502
      %v6723 = vadd.f32 %v6083, %v6505
      %v6724 = vadd.f32 %v6084, %v6508
      %v6725 = vadd.f32 %v6085, %v6511
      %v6726 = vadd.f32 %v6086, %v6514
      %v6727 = vadd.f32 %v6087, %v6517
      %v6728 = vadd.f32 %v6088, %v6520
      %v6729 = vadd.f32 %v6089, %v6523
      %v6730 = vadd.f32 %v6090, %v6526
      %v6731 = vadd.f32 %v6091, %v6529
      %v6732 = vadd.f32 %v6092, %v6532
      %v6733 = vadd.f32 %v6093, %v6535
      %v6734 = vadd.f32 %v6094, %v6538
      %v6735 = vadd.f32 %v6095, %v6541
      %v6736 = vadd.f32 %v6096, %v6544
      %v6737 = vadd.f32 %v6097, %v6547
      %v6738 = vadd.f32 %v6098, %v6550
      %v6739 = vadd.f32 %v6099, %v6553
      %v6740 = vadd.f32 %v6100, %v6556
      %v6741 = vadd.f32 %v6101, %v6559
      %v6742 = vadd.f32 %v6102, %v6562
      %v6743 = vadd.f32 %v6103, %v6565
      %v6744 = vadd.f32 %v6104, %v6568
      %v6745 = vadd.f32 %v6105, %v6571
      %v6746 = vadd.f32 %v6106, %v6574
      %v6747 = vadd.f32 %v6107, %v6577
      %v6748 = vadd.f32 %v6108, %v6580
      %v6749 = vadd.f32 %v6109, %v6583
      %v6750 = vadd.f32 %v6110, %v6586
      %v6751 = vadd.f32 %v6111, %v6589
      %v6752 = vadd.f32 %v6112, %v6592
      %vm6753 = vcmask 7168
      %6754 = vst.msk [vmem:[#allocation2] sm:$0xff] %vm6753, %v6593
      %6755 = vst.msk [vmem:[#allocation2 + $0x8] sm:$0xff] %vm6753, %v6594
      %6756 = vst.msk [vmem:[#allocation2 + $0x10] sm:$0xff] %vm6753, %v6595
      %6757 = vst.msk [vmem:[#allocation2 + $0x18] sm:$0xff] %vm6753, %v6596
      %6758 = vst.msk [vmem:[#allocation2 + $0x20] sm:$0xff] %vm6753, %v6597
      %6759 = vst.msk [vmem:[#allocation2 + $0x28] sm:$0xff] %vm6753, %v6598
      %6760 = vst.msk [vmem:[#allocation2 + $0x30] sm:$0xff] %vm6753, %v6599
      %6761 = vst.msk [vmem:[#allocation2 + $0x38] sm:$0xff] %vm6753, %v6600
      %6762 = vst.msk [vmem:[#allocation2 + $0x40] sm:$0xff] %vm6753, %v6601
      %6763 = vst.msk [vmem:[#allocation2 + $0x48] sm:$0xff] %vm6753, %v6602
      %6764 = vst.msk [vmem:[#allocation2 + $0x50] sm:$0xff] %vm6753, %v6603
      %6765 = vst.msk [vmem:[#allocation2 + $0x58] sm:$0xff] %vm6753, %v6604
      %6766 = vst.msk [vmem:[#allocation2 + $0x60] sm:$0xff] %vm6753, %v6605
      %6767 = vst.msk [vmem:[#allocation2 + $0x68] sm:$0xff] %vm6753, %v6606
      %6768 = vst.msk [vmem:[#allocation2 + $0x70] sm:$0xff] %vm6753, %v6607
      %6769 = vst.msk [vmem:[#allocation2 + $0x78] sm:$0xff] %vm6753, %v6608
      %6770 = vst.msk [vmem:[#allocation2 + $0x80] sm:$0xff] %vm6753, %v6609
      %6771 = vst.msk [vmem:[#allocation2 + $0x88] sm:$0xff] %vm6753, %v6610
      %6772 = vst.msk [vmem:[#allocation2 + $0x90] sm:$0xff] %vm6753, %v6611
      %6773 = vst.msk [vmem:[#allocation2 + $0x98] sm:$0xff] %vm6753, %v6612
      %6774 = vst.msk [vmem:[#allocation2 + $0xa0] sm:$0xff] %vm6753, %v6613
      %6775 = vst.msk [vmem:[#allocation2 + $0xa8] sm:$0xff] %vm6753, %v6614
      %6776 = vst.msk [vmem:[#allocation2 + $0xb0] sm:$0xff] %vm6753, %v6615
      %6777 = vst.msk [vmem:[#allocation2 + $0xb8] sm:$0xff] %vm6753, %v6616
      %6778 = vst.msk [vmem:[#allocation2 + $0xc0] sm:$0xff] %vm6753, %v6617
      %6779 = vst.msk [vmem:[#allocation2 + $0xc8] sm:$0xff] %vm6753, %v6618
      %6780 = vst.msk [vmem:[#allocation2 + $0xd0] sm:$0xff] %vm6753, %v6619
      %6781 = vst.msk [vmem:[#allocation2 + $0xd8] sm:$0xff] %vm6753, %v6620
      %6782 = vst.msk [vmem:[#allocation2 + $0xe0] sm:$0xff] %vm6753, %v6621
      %6783 = vst.msk [vmem:[#allocation2 + $0xe8] sm:$0xff] %vm6753, %v6622
      %6784 = vst.msk [vmem:[#allocation2 + $0xf0] sm:$0xff] %vm6753, %v6623
      %6785 = vst.msk [vmem:[#allocation2 + $0xf8] sm:$0xff] %vm6753, %v6624
      %6786 = vst.msk [vmem:[#allocation2 + $0x100] sm:$0xff] %vm6753, %v6625
      %6787 = vst.msk [vmem:[#allocation2 + $0x108] sm:$0xff] %vm6753, %v6626
      %6788 = vst.msk [vmem:[#allocation2 + $0x110] sm:$0xff] %vm6753, %v6627
      %6789 = vst.msk [vmem:[#allocation2 + $0x118] sm:$0xff] %vm6753, %v6628
      %6790 = vst.msk [vmem:[#allocation2 + $0x120] sm:$0xff] %vm6753, %v6629
      %6791 = vst.msk [vmem:[#allocation2 + $0x128] sm:$0xff] %vm6753, %v6630
      %6792 = vst.msk [vmem:[#allocation2 + $0x130] sm:$0xff] %vm6753, %v6631
      %6793 = vst.msk [vmem:[#allocation2 + $0x138] sm:$0xff] %vm6753, %v6632
      %6794 = vst.msk [vmem:[#allocation2 + $0x140] sm:$0xff] %vm6753, %v6633
      %6795 = vst.msk [vmem:[#allocation2 + $0x148] sm:$0xff] %vm6753, %v6634
      %6796 = vst.msk [vmem:[#allocation2 + $0x150] sm:$0xff] %vm6753, %v6635
      %6797 = vst.msk [vmem:[#allocation2 + $0x158] sm:$0xff] %vm6753, %v6636
      %6798 = vst.msk [vmem:[#allocation2 + $0x160] sm:$0xff] %vm6753, %v6637
      %6799 = vst.msk [vmem:[#allocation2 + $0x168] sm:$0xff] %vm6753, %v6638
      %6800 = vst.msk [vmem:[#allocation2 + $0x170] sm:$0xff] %vm6753, %v6639
      %6801 = vst.msk [vmem:[#allocation2 + $0x178] sm:$0xff] %vm6753, %v6640
      %6802 = vst.msk [vmem:[#allocation2 + $0x180] sm:$0xff] %vm6753, %v6641
      %6803 = vst.msk [vmem:[#allocation2 + $0x188] sm:$0xff] %vm6753, %v6642
      %6804 = vst.msk [vmem:[#allocation2 + $0x190] sm:$0xff] %vm6753, %v6643
      %6805 = vst.msk [vmem:[#allocation2 + $0x198] sm:$0xff] %vm6753, %v6644
      %6806 = vst.msk [vmem:[#allocation2 + $0x1a0] sm:$0xff] %vm6753, %v6645
      %6807 = vst.msk [vmem:[#allocation2 + $0x1a8] sm:$0xff] %vm6753, %v6646
      %6808 = vst.msk [vmem:[#allocation2 + $0x1b0] sm:$0xff] %vm6753, %v6647
      %6809 = vst.msk [vmem:[#allocation2 + $0x1b8] sm:$0xff] %vm6753, %v6648
      %6810 = vst.msk [vmem:[#allocation2 + $0x1c0] sm:$0xff] %vm6753, %v6649
      %6811 = vst.msk [vmem:[#allocation2 + $0x1c8] sm:$0xff] %vm6753, %v6650
      %6812 = vst.msk [vmem:[#allocation2 + $0x1d0] sm:$0xff] %vm6753, %v6651
      %6813 = vst.msk [vmem:[#allocation2 + $0x1d8] sm:$0xff] %vm6753, %v6652
      %6814 = vst.msk [vmem:[#allocation2 + $0x1e0] sm:$0xff] %vm6753, %v6653
      %6815 = vst.msk [vmem:[#allocation2 + $0x1e8] sm:$0xff] %vm6753, %v6654
      %6816 = vst.msk [vmem:[#allocation2 + $0x1f0] sm:$0xff] %vm6753, %v6655
      %6817 = vst.msk [vmem:[#allocation2 + $0x1f8] sm:$0xff] %vm6753, %v6656
      %6818 = vst.msk [vmem:[#allocation2 + $0x200] sm:$0xff] %vm6753, %v6657
      %6819 = vst.msk [vmem:[#allocation2 + $0x208] sm:$0xff] %vm6753, %v6658
      %6820 = vst.msk [vmem:[#allocation2 + $0x210] sm:$0xff] %vm6753, %v6659
      %6821 = vst.msk [vmem:[#allocation2 + $0x218] sm:$0xff] %vm6753, %v6660
      %6822 = vst.msk [vmem:[#allocation2 + $0x220] sm:$0xff] %vm6753, %v6661
      %6823 = vst.msk [vmem:[#allocation2 + $0x228] sm:$0xff] %vm6753, %v6662
      %6824 = vst.msk [vmem:[#allocation2 + $0x230] sm:$0xff] %vm6753, %v6663
      %6825 = vst.msk [vmem:[#allocation2 + $0x238] sm:$0xff] %vm6753, %v6664
      %6826 = vst.msk [vmem:[#allocation2 + $0x240] sm:$0xff] %vm6753, %v6665
      %6827 = vst.msk [vmem:[#allocation2 + $0x248] sm:$0xff] %vm6753, %v6666
      %6828 = vst.msk [vmem:[#allocation2 + $0x250] sm:$0xff] %vm6753, %v6667
      %6829 = vst.msk [vmem:[#allocation2 + $0x258] sm:$0xff] %vm6753, %v6668
      %6830 = vst.msk [vmem:[#allocation2 + $0x260] sm:$0xff] %vm6753, %v6669
      %6831 = vst.msk [vmem:[#allocation2 + $0x268] sm:$0xff] %vm6753, %v6670
      %6832 = vst.msk [vmem:[#allocation2 + $0x270] sm:$0xff] %vm6753, %v6671
      %6833 = vst.msk [vmem:[#allocation2 + $0x278] sm:$0xff] %vm6753, %v6672
      %6834 = vst.msk [vmem:[#allocation2 + $0x280] sm:$0xff] %vm6753, %v6673
      %6835 = vst.msk [vmem:[#allocation2 + $0x288] sm:$0xff] %vm6753, %v6674
      %6836 = vst.msk [vmem:[#allocation2 + $0x290] sm:$0xff] %vm6753, %v6675
      %6837 = vst.msk [vmem:[#allocation2 + $0x298] sm:$0xff] %vm6753, %v6676
      %6838 = vst.msk [vmem:[#allocation2 + $0x2a0] sm:$0xff] %vm6753, %v6677
      %6839 = vst.msk [vmem:[#allocation2 + $0x2a8] sm:$0xff] %vm6753, %v6678
      %6840 = vst.msk [vmem:[#allocation2 + $0x2b0] sm:$0xff] %vm6753, %v6679
      %6841 = vst.msk [vmem:[#allocation2 + $0x2b8] sm:$0xff] %vm6753, %v6680
      %6842 = vst.msk [vmem:[#allocation2 + $0x2c0] sm:$0xff] %vm6753, %v6681
      %6843 = vst.msk [vmem:[#allocation2 + $0x2c8] sm:$0xff] %vm6753, %v6682
      %6844 = vst.msk [vmem:[#allocation2 + $0x2d0] sm:$0xff] %vm6753, %v6683
      %6845 = vst.msk [vmem:[#allocation2 + $0x2d8] sm:$0xff] %vm6753, %v6684
      %6846 = vst.msk [vmem:[#allocation2 + $0x2e0] sm:$0xff] %vm6753, %v6685
      %6847 = vst.msk [vmem:[#allocation2 + $0x2e8] sm:$0xff] %vm6753, %v6686
      %6848 = vst.msk [vmem:[#allocation2 + $0x2f0] sm:$0xff] %vm6753, %v6687
      %6849 = vst.msk [vmem:[#allocation2 + $0x2f8] sm:$0xff] %vm6753, %v6688
      %6850 = vst.msk [vmem:[#allocation2 + $0x300] sm:$0xff] %vm6753, %v6689
      %6851 = vst.msk [vmem:[#allocation2 + $0x308] sm:$0xff] %vm6753, %v6690
      %6852 = vst.msk [vmem:[#allocation2 + $0x310] sm:$0xff] %vm6753, %v6691
      %6853 = vst.msk [vmem:[#allocation2 + $0x318] sm:$0xff] %vm6753, %v6692
      %6854 = vst.msk [vmem:[#allocation2 + $0x320] sm:$0xff] %vm6753, %v6693
      %6855 = vst.msk [vmem:[#allocation2 + $0x328] sm:$0xff] %vm6753, %v6694
      %6856 = vst.msk [vmem:[#allocation2 + $0x330] sm:$0xff] %vm6753, %v6695
      %6857 = vst.msk [vmem:[#allocation2 + $0x338] sm:$0xff] %vm6753, %v6696
      %6858 = vst.msk [vmem:[#allocation2 + $0x340] sm:$0xff] %vm6753, %v6697
      %6859 = vst.msk [vmem:[#allocation2 + $0x348] sm:$0xff] %vm6753, %v6698
      %6860 = vst.msk [vmem:[#allocation2 + $0x350] sm:$0xff] %vm6753, %v6699
      %6861 = vst.msk [vmem:[#allocation2 + $0x358] sm:$0xff] %vm6753, %v6700
      %6862 = vst.msk [vmem:[#allocation2 + $0x360] sm:$0xff] %vm6753, %v6701
      %6863 = vst.msk [vmem:[#allocation2 + $0x368] sm:$0xff] %vm6753, %v6702
      %6864 = vst.msk [vmem:[#allocation2 + $0x370] sm:$0xff] %vm6753, %v6703
      %6865 = vst.msk [vmem:[#allocation2 + $0x378] sm:$0xff] %vm6753, %v6704
      %6866 = vst.msk [vmem:[#allocation2 + $0x380] sm:$0xff] %vm6753, %v6705
      %6867 = vst.msk [vmem:[#allocation2 + $0x388] sm:$0xff] %vm6753, %v6706
      %6868 = vst.msk [vmem:[#allocation2 + $0x390] sm:$0xff] %vm6753, %v6707
      %6869 = vst.msk [vmem:[#allocation2 + $0x398] sm:$0xff] %vm6753, %v6708
      %6870 = vst.msk [vmem:[#allocation2 + $0x3a0] sm:$0xff] %vm6753, %v6709
      %6871 = vst.msk [vmem:[#allocation2 + $0x3a8] sm:$0xff] %vm6753, %v6710
      %6872 = vst.msk [vmem:[#allocation2 + $0x3b0] sm:$0xff] %vm6753, %v6711
      %6873 = vst.msk [vmem:[#allocation2 + $0x3b8] sm:$0xff] %vm6753, %v6712
      %6874 = vst.msk [vmem:[#allocation2 + $0x3c0] sm:$0xff] %vm6753, %v6713
      %6875 = vst.msk [vmem:[#allocation2 + $0x3c8] sm:$0xff] %vm6753, %v6714
      %6876 = vst.msk [vmem:[#allocation2 + $0x3d0] sm:$0xff] %vm6753, %v6715
      %6877 = vst.msk [vmem:[#allocation2 + $0x3d8] sm:$0xff] %vm6753, %v6716
      %6878 = vst.msk [vmem:[#allocation2 + $0x3e0] sm:$0xff] %vm6753, %v6717
      %6879 = vst.msk [vmem:[#allocation2 + $0x3e8] sm:$0xff] %vm6753, %v6718
      %6880 = vst.msk [vmem:[#allocation2 + $0x3f0] sm:$0xff] %vm6753, %v6719
      %6881 = vst.msk [vmem:[#allocation2 + $0x3f8] sm:$0xff] %vm6753, %v6720
      %6882 = vst.msk [vmem:[#allocation2 + $0x400] sm:$0xff] %vm6753, %v6721
      %6883 = vst.msk [vmem:[#allocation2 + $0x408] sm:$0xff] %vm6753, %v6722
      %6884 = vst.msk [vmem:[#allocation2 + $0x410] sm:$0xff] %vm6753, %v6723
      %6885 = vst.msk [vmem:[#allocation2 + $0x418] sm:$0xff] %vm6753, %v6724
      %6886 = vst.msk [vmem:[#allocation2 + $0x420] sm:$0xff] %vm6753, %v6725
      %6887 = vst.msk [vmem:[#allocation2 + $0x428] sm:$0xff] %vm6753, %v6726
      %6888 = vst.msk [vmem:[#allocation2 + $0x430] sm:$0xff] %vm6753, %v6727
      %6889 = vst.msk [vmem:[#allocation2 + $0x438] sm:$0xff] %vm6753, %v6728
      %6890 = vst.msk [vmem:[#allocation2 + $0x440] sm:$0xff] %vm6753, %v6729
      %6891 = vst.msk [vmem:[#allocation2 + $0x448] sm:$0xff] %vm6753, %v6730
      %6892 = vst.msk [vmem:[#allocation2 + $0x450] sm:$0xff] %vm6753, %v6731
      %6893 = vst.msk [vmem:[#allocation2 + $0x458] sm:$0xff] %vm6753, %v6732
      %6894 = vst.msk [vmem:[#allocation2 + $0x460] sm:$0xff] %vm6753, %v6733
      %6895 = vst.msk [vmem:[#allocation2 + $0x468] sm:$0xff] %vm6753, %v6734
      %6896 = vst.msk [vmem:[#allocation2 + $0x470] sm:$0xff] %vm6753, %v6735
      %6897 = vst.msk [vmem:[#allocation2 + $0x478] sm:$0xff] %vm6753, %v6736
      %6898 = vst.msk [vmem:[#allocation2 + $0x480] sm:$0xff] %vm6753, %v6737
      %6899 = vst.msk [vmem:[#allocation2 + $0x488] sm:$0xff] %vm6753, %v6738
      %6900 = vst.msk [vmem:[#allocation2 + $0x490] sm:$0xff] %vm6753, %v6739
      %6901 = vst.msk [vmem:[#allocation2 + $0x498] sm:$0xff] %vm6753, %v6740
      %6902 = vst.msk [vmem:[#allocation2 + $0x4a0] sm:$0xff] %vm6753, %v6741
      %6903 = vst.msk [vmem:[#allocation2 + $0x4a8] sm:$0xff] %vm6753, %v6742
      %6904 = vst.msk [vmem:[#allocation2 + $0x4b0] sm:$0xff] %vm6753, %v6743
      %6905 = vst.msk [vmem:[#allocation2 + $0x4b8] sm:$0xff] %vm6753, %v6744
      %6906 = vst.msk [vmem:[#allocation2 + $0x4c0] sm:$0xff] %vm6753, %v6745
      %6907 = vst.msk [vmem:[#allocation2 + $0x4c8] sm:$0xff] %vm6753, %v6746
      %6908 = vst.msk [vmem:[#allocation2 + $0x4d0] sm:$0xff] %vm6753, %v6747
      %6909 = vst.msk [vmem:[#allocation2 + $0x4d8] sm:$0xff] %vm6753, %v6748
      %6910 = vst.msk [vmem:[#allocation2 + $0x4e0] sm:$0xff] %vm6753, %v6749
      %6911 = vst.msk [vmem:[#allocation2 + $0x4e8] sm:$0xff] %vm6753, %v6750
      %6912 = vst.msk [vmem:[#allocation2 + $0x4f0] sm:$0xff] %vm6753, %v6751
      %6913 = vst.msk [vmem:[#allocation2 + $0x4f8] sm:$0xff] %vm6753, %v6752
      // Predicated region
      $region45: #{rgbd_forward.3} parent=39 // pred_check
        %p6914 = pneg %p291
      $region46: #{rgbd_forward.3} parent=39 // pred_check_branch
        %6916 = sbr.rel (%p6914) target = $region48
      $region47: #{rgbd_forward.3} parent=39 // pred_region
        %v6917 = vld [vmem:[#allocation2] sm:$0xff]
        %v6918 = vld [vmem:[#allocation2 + $0x8] sm:$0xff]
        %v6919 = vld [vmem:[#allocation2 + $0x10] sm:$0xff]
        %v6920 = vld [vmem:[#allocation2 + $0x18] sm:$0xff]
        %v6921 = vld [vmem:[#allocation2 + $0x20] sm:$0xff]
        %v6922 = vld [vmem:[#allocation2 + $0x28] sm:$0xff]
        %v6923 = vld [vmem:[#allocation2 + $0x30] sm:$0xff]
        %v6924 = vld [vmem:[#allocation2 + $0x38] sm:$0xff]
        %v6925 = vld [vmem:[#allocation2 + $0x40] sm:$0xff]
        %v6926 = vld [vmem:[#allocation2 + $0x48] sm:$0xff]
        %v6927 = vld [vmem:[#allocation2 + $0x50] sm:$0xff]
        %v6928 = vld [vmem:[#allocation2 + $0x58] sm:$0xff]
        %v6929 = vld [vmem:[#allocation2 + $0x60] sm:$0xff]
        %v6930 = vld [vmem:[#allocation2 + $0x68] sm:$0xff]
        %v6931 = vld [vmem:[#allocation2 + $0x70] sm:$0xff]
        %v6932 = vld [vmem:[#allocation2 + $0x78] sm:$0xff]
        %v6933 = vld [vmem:[#allocation2 + $0x80] sm:$0xff]
        %v6934 = vld [vmem:[#allocation2 + $0x88] sm:$0xff]
        %v6935 = vld [vmem:[#allocation2 + $0x90] sm:$0xff]
        %v6936 = vld [vmem:[#allocation2 + $0x98] sm:$0xff]
        %v6937 = vld [vmem:[#allocation2 + $0xa0] sm:$0xff]
        %v6938 = vld [vmem:[#allocation2 + $0xa8] sm:$0xff]
        %v6939 = vld [vmem:[#allocation2 + $0xb0] sm:$0xff]
        %v6940 = vld [vmem:[#allocation2 + $0xb8] sm:$0xff]
        %v6941 = vld [vmem:[#allocation2 + $0xc0] sm:$0xff]
        %v6942 = vld [vmem:[#allocation2 + $0xc8] sm:$0xff]
        %v6943 = vld [vmem:[#allocation2 + $0xd0] sm:$0xff]
        %v6944 = vld [vmem:[#allocation2 + $0xd8] sm:$0xff]
        %v6945 = vld [vmem:[#allocation2 + $0xe0] sm:$0xff]
        %v6946 = vld [vmem:[#allocation2 + $0xe8] sm:$0xff]
        %v6947 = vld [vmem:[#allocation2 + $0xf0] sm:$0xff]
        %v6948 = vld [vmem:[#allocation2 + $0xf8] sm:$0xff]
        %v6949 = vld [vmem:[#allocation2 + $0x100] sm:$0xff]
        %v6950 = vld [vmem:[#allocation2 + $0x108] sm:$0xff]
        %v6951 = vld [vmem:[#allocation2 + $0x110] sm:$0xff]
        %v6952 = vld [vmem:[#allocation2 + $0x118] sm:$0xff]
        %v6953 = vld [vmem:[#allocation2 + $0x120] sm:$0xff]
        %v6954 = vld [vmem:[#allocation2 + $0x128] sm:$0xff]
        %v6955 = vld [vmem:[#allocation2 + $0x130] sm:$0xff]
        %v6956 = vld [vmem:[#allocation2 + $0x138] sm:$0xff]
        %v6957 = vld [vmem:[#allocation2 + $0x140] sm:$0xff]
        %v6958 = vld [vmem:[#allocation2 + $0x148] sm:$0xff]
        %v6959 = vld [vmem:[#allocation2 + $0x150] sm:$0xff]
        %v6960 = vld [vmem:[#allocation2 + $0x158] sm:$0xff]
        %v6961 = vld [vmem:[#allocation2 + $0x160] sm:$0xff]
        %v6962 = vld [vmem:[#allocation2 + $0x168] sm:$0xff]
        %v6963 = vld [vmem:[#allocation2 + $0x170] sm:$0xff]
        %v6964 = vld [vmem:[#allocation2 + $0x178] sm:$0xff]
        %v6965 = vld [vmem:[#allocation2 + $0x180] sm:$0xff]
        %v6966 = vld [vmem:[#allocation2 + $0x188] sm:$0xff]
        %v6967 = vld [vmem:[#allocation2 + $0x190] sm:$0xff]
        %v6968 = vld [vmem:[#allocation2 + $0x198] sm:$0xff]
        %v6969 = vld [vmem:[#allocation2 + $0x1a0] sm:$0xff]
        %v6970 = vld [vmem:[#allocation2 + $0x1a8] sm:$0xff]
        %v6971 = vld [vmem:[#allocation2 + $0x1b0] sm:$0xff]
        %v6972 = vld [vmem:[#allocation2 + $0x1b8] sm:$0xff]
        %v6973 = vld [vmem:[#allocation2 + $0x1c0] sm:$0xff]
        %v6974 = vld [vmem:[#allocation2 + $0x1c8] sm:$0xff]
        %v6975 = vld [vmem:[#allocation2 + $0x1d0] sm:$0xff]
        %v6976 = vld [vmem:[#allocation2 + $0x1d8] sm:$0xff]
        %v6977 = vld [vmem:[#allocation2 + $0x1e0] sm:$0xff]
        %v6978 = vld [vmem:[#allocation2 + $0x1e8] sm:$0xff]
        %v6979 = vld [vmem:[#allocation2 + $0x1f0] sm:$0xff]
        %v6980 = vld [vmem:[#allocation2 + $0x1f8] sm:$0xff]
        %v6981 = vld [vmem:[#allocation2 + $0x200] sm:$0xff]
        %v6982 = vld [vmem:[#allocation2 + $0x208] sm:$0xff]
        %v6983 = vld [vmem:[#allocation2 + $0x210] sm:$0xff]
        %v6984 = vld [vmem:[#allocation2 + $0x218] sm:$0xff]
        %v6985 = vld [vmem:[#allocation2 + $0x220] sm:$0xff]
        %v6986 = vld [vmem:[#allocation2 + $0x228] sm:$0xff]
        %v6987 = vld [vmem:[#allocation2 + $0x230] sm:$0xff]
        %v6988 = vld [vmem:[#allocation2 + $0x238] sm:$0xff]
        %v6989 = vld [vmem:[#allocation2 + $0x240] sm:$0xff]
        %v6990 = vld [vmem:[#allocation2 + $0x248] sm:$0xff]
        %v6991 = vld [vmem:[#allocation2 + $0x250] sm:$0xff]
        %v6992 = vld [vmem:[#allocation2 + $0x258] sm:$0xff]
        %v6993 = vld [vmem:[#allocation2 + $0x260] sm:$0xff]
        %v6994 = vld [vmem:[#allocation2 + $0x268] sm:$0xff]
        %v6995 = vld [vmem:[#allocation2 + $0x270] sm:$0xff]
        %v6996 = vld [vmem:[#allocation2 + $0x278] sm:$0xff]
        %v6997 = vld [vmem:[#allocation2 + $0x280] sm:$0xff]
        %v6998 = vld [vmem:[#allocation2 + $0x288] sm:$0xff]
        %v6999 = vld [vmem:[#allocation2 + $0x290] sm:$0xff]
        %v7000 = vld [vmem:[#allocation2 + $0x298] sm:$0xff]
        %v7001 = vld [vmem:[#allocation2 + $0x2a0] sm:$0xff]
        %v7002 = vld [vmem:[#allocation2 + $0x2a8] sm:$0xff]
        %v7003 = vld [vmem:[#allocation2 + $0x2b0] sm:$0xff]
        %v7004 = vld [vmem:[#allocation2 + $0x2b8] sm:$0xff]
        %v7005 = vld [vmem:[#allocation2 + $0x2c0] sm:$0xff]
        %v7006 = vld [vmem:[#allocation2 + $0x2c8] sm:$0xff]
        %v7007 = vld [vmem:[#allocation2 + $0x2d0] sm:$0xff]
        %v7008 = vld [vmem:[#allocation2 + $0x2d8] sm:$0xff]
        %v7009 = vld [vmem:[#allocation2 + $0x2e0] sm:$0xff]
        %v7010 = vld [vmem:[#allocation2 + $0x2e8] sm:$0xff]
        %v7011 = vld [vmem:[#allocation2 + $0x2f0] sm:$0xff]
        %v7012 = vld [vmem:[#allocation2 + $0x2f8] sm:$0xff]
        %v7013 = vld [vmem:[#allocation2 + $0x300] sm:$0xff]
        %v7014 = vld [vmem:[#allocation2 + $0x308] sm:$0xff]
        %v7015 = vld [vmem:[#allocation2 + $0x310] sm:$0xff]
        %v7016 = vld [vmem:[#allocation2 + $0x318] sm:$0xff]
        %v7017 = vld [vmem:[#allocation2 + $0x320] sm:$0xff]
        %v7018 = vld [vmem:[#allocation2 + $0x328] sm:$0xff]
        %v7019 = vld [vmem:[#allocation2 + $0x330] sm:$0xff]
        %v7020 = vld [vmem:[#allocation2 + $0x338] sm:$0xff]
        %v7021 = vld [vmem:[#allocation2 + $0x340] sm:$0xff]
        %v7022 = vld [vmem:[#allocation2 + $0x348] sm:$0xff]
        %v7023 = vld [vmem:[#allocation2 + $0x350] sm:$0xff]
        %v7024 = vld [vmem:[#allocation2 + $0x358] sm:$0xff]
        %v7025 = vld [vmem:[#allocation2 + $0x360] sm:$0xff]
        %v7026 = vld [vmem:[#allocation2 + $0x368] sm:$0xff]
        %v7027 = vld [vmem:[#allocation2 + $0x370] sm:$0xff]
        %v7028 = vld [vmem:[#allocation2 + $0x378] sm:$0xff]
        %v7029 = vld [vmem:[#allocation2 + $0x380] sm:$0xff]
        %v7030 = vld [vmem:[#allocation2 + $0x388] sm:$0xff]
        %v7031 = vld [vmem:[#allocation2 + $0x390] sm:$0xff]
        %v7032 = vld [vmem:[#allocation2 + $0x398] sm:$0xff]
        %v7033 = vld [vmem:[#allocation2 + $0x3a0] sm:$0xff]
        %v7034 = vld [vmem:[#allocation2 + $0x3a8] sm:$0xff]
        %v7035 = vld [vmem:[#allocation2 + $0x3b0] sm:$0xff]
        %v7036 = vld [vmem:[#allocation2 + $0x3b8] sm:$0xff]
        %v7037 = vld [vmem:[#allocation2 + $0x3c0] sm:$0xff]
        %v7038 = vld [vmem:[#allocation2 + $0x3c8] sm:$0xff]
        %v7039 = vld [vmem:[#allocation2 + $0x3d0] sm:$0xff]
        %v7040 = vld [vmem:[#allocation2 + $0x3d8] sm:$0xff]
        %v7041 = vld [vmem:[#allocation2 + $0x3e0] sm:$0xff]
        %v7042 = vld [vmem:[#allocation2 + $0x3e8] sm:$0xff]
        %v7043 = vld [vmem:[#allocation2 + $0x3f0] sm:$0xff]
        %v7044 = vld [vmem:[#allocation2 + $0x3f8] sm:$0xff]
        %v7045 = vld [vmem:[#allocation2 + $0x400] sm:$0xff]
        %v7046 = vld [vmem:[#allocation2 + $0x408] sm:$0xff]
        %v7047 = vld [vmem:[#allocation2 + $0x410] sm:$0xff]
        %v7048 = vld [vmem:[#allocation2 + $0x418] sm:$0xff]
        %v7049 = vld [vmem:[#allocation2 + $0x420] sm:$0xff]
        %v7050 = vld [vmem:[#allocation2 + $0x428] sm:$0xff]
        %v7051 = vld [vmem:[#allocation2 + $0x430] sm:$0xff]
        %v7052 = vld [vmem:[#allocation2 + $0x438] sm:$0xff]
        %v7053 = vld [vmem:[#allocation2 + $0x440] sm:$0xff]
        %v7054 = vld [vmem:[#allocation2 + $0x448] sm:$0xff]
        %v7055 = vld [vmem:[#allocation2 + $0x450] sm:$0xff]
        %v7056 = vld [vmem:[#allocation2 + $0x458] sm:$0xff]
        %v7057 = vld [vmem:[#allocation2 + $0x460] sm:$0xff]
        %v7058 = vld [vmem:[#allocation2 + $0x468] sm:$0xff]
        %v7059 = vld [vmem:[#allocation2 + $0x470] sm:$0xff]
        %v7060 = vld [vmem:[#allocation2 + $0x478] sm:$0xff]
        %v7061 = vld [vmem:[#allocation2 + $0x480] sm:$0xff]
        %v7062 = vld [vmem:[#allocation2 + $0x488] sm:$0xff]
        %v7063 = vld [vmem:[#allocation2 + $0x490] sm:$0xff]
        %v7064 = vld [vmem:[#allocation2 + $0x498] sm:$0xff]
        %v7065 = vld [vmem:[#allocation2 + $0x4a0] sm:$0xff]
        %v7066 = vld [vmem:[#allocation2 + $0x4a8] sm:$0xff]
        %v7067 = vld [vmem:[#allocation2 + $0x4b0] sm:$0xff]
        %v7068 = vld [vmem:[#allocation2 + $0x4b8] sm:$0xff]
        %v7069 = vld [vmem:[#allocation2 + $0x4c0] sm:$0xff]
        %v7070 = vld [vmem:[#allocation2 + $0x4c8] sm:$0xff]
        %v7071 = vld [vmem:[#allocation2 + $0x4d0] sm:$0xff]
        %v7072 = vld [vmem:[#allocation2 + $0x4d8] sm:$0xff]
        %v7073 = vld [vmem:[#allocation2 + $0x4e0] sm:$0xff]
        %v7074 = vld [vmem:[#allocation2 + $0x4e8] sm:$0xff]
        %v7075 = vld [vmem:[#allocation2 + $0x4f0] sm:$0xff]
        %v7076 = vld [vmem:[#allocation2 + $0x4f8] sm:$0xff]
        %v7077 = vmul.f32 %v6917, 0.00390625
        %v7078 = vmul.f32 %v6918, 0.00390625
        %v7079 = vmul.f32 %v6919, 0.00390625
        %v7080 = vmul.f32 %v6920, 0.00390625
        %v7081 = vmul.f32 %v6921, 0.00390625
        %v7082 = vmul.f32 %v6922, 0.00390625
        %v7083 = vmul.f32 %v6923, 0.00390625
        %v7084 = vmul.f32 %v6924, 0.00390625
        %v7085 = vmul.f32 %v6925, 0.00390625
        %v7086 = vmul.f32 %v6926, 0.00390625
        %v7087 = vmul.f32 %v6927, 0.00390625
        %v7088 = vmul.f32 %v6928, 0.00390625
        %v7089 = vmul.f32 %v6929, 0.00390625
        %v7090 = vmul.f32 %v6930, 0.00390625
        %v7091 = vmul.f32 %v6931, 0.00390625
        %v7092 = vmul.f32 %v6932, 0.00390625
        %v7093 = vmul.f32 %v6933, 0.00390625
        %v7094 = vmul.f32 %v6934, 0.00390625
        %v7095 = vmul.f32 %v6935, 0.00390625
        %v7096 = vmul.f32 %v6936, 0.00390625
        %v7097 = vmul.f32 %v6937, 0.00390625
        %v7098 = vmul.f32 %v6938, 0.00390625
        %v7099 = vmul.f32 %v6939, 0.00390625
        %v7100 = vmul.f32 %v6940, 0.00390625
        %v7101 = vmul.f32 %v6941, 0.00390625
        %v7102 = vmul.f32 %v6942, 0.00390625
        %v7103 = vmul.f32 %v6943, 0.00390625
        %v7104 = vmul.f32 %v6944, 0.00390625
        %v7105 = vmul.f32 %v6945, 0.00390625
        %v7106 = vmul.f32 %v6946, 0.00390625
        %v7107 = vmul.f32 %v6947, 0.00390625
        %v7108 = vmul.f32 %v6948, 0.00390625
        %v7109 = vmul.f32 %v6949, 0.00390625
        %v7110 = vmul.f32 %v6950, 0.00390625
        %v7111 = vmul.f32 %v6951, 0.00390625
        %v7112 = vmul.f32 %v6952, 0.00390625
        %v7113 = vmul.f32 %v6953, 0.00390625
        %v7114 = vmul.f32 %v6954, 0.00390625
        %v7115 = vmul.f32 %v6955, 0.00390625
        %v7116 = vmul.f32 %v6956, 0.00390625
        %v7117 = vmul.f32 %v6957, 0.00390625
        %v7118 = vmul.f32 %v6958, 0.00390625
        %v7119 = vmul.f32 %v6959, 0.00390625
        %v7120 = vmul.f32 %v6960, 0.00390625
        %v7121 = vmul.f32 %v6961, 0.00390625
        %v7122 = vmul.f32 %v6962, 0.00390625
        %v7123 = vmul.f32 %v6963, 0.00390625
        %v7124 = vmul.f32 %v6964, 0.00390625
        %v7125 = vmul.f32 %v6965, 0.00390625
        %v7126 = vmul.f32 %v6966, 0.00390625
        %v7127 = vmul.f32 %v6967, 0.00390625
        %v7128 = vmul.f32 %v6968, 0.00390625
        %v7129 = vmul.f32 %v6969, 0.00390625
        %v7130 = vmul.f32 %v6970, 0.00390625
        %v7131 = vmul.f32 %v6971, 0.00390625
        %v7132 = vmul.f32 %v6972, 0.00390625
        %v7133 = vmul.f32 %v6973, 0.00390625
        %v7134 = vmul.f32 %v6974, 0.00390625
        %v7135 = vmul.f32 %v6975, 0.00390625
        %v7136 = vmul.f32 %v6976, 0.00390625
        %v7137 = vmul.f32 %v6977, 0.00390625
        %v7138 = vmul.f32 %v6978, 0.00390625
        %v7139 = vmul.f32 %v6979, 0.00390625
        %v7140 = vmul.f32 %v6980, 0.00390625
        %v7141 = vmul.f32 %v6981, 0.00390625
        %v7142 = vmul.f32 %v6982, 0.00390625
        %v7143 = vmul.f32 %v6983, 0.00390625
        %v7144 = vmul.f32 %v6984, 0.00390625
        %v7145 = vmul.f32 %v6985, 0.00390625
        %v7146 = vmul.f32 %v6986, 0.00390625
        %v7147 = vmul.f32 %v6987, 0.00390625
        %v7148 = vmul.f32 %v6988, 0.00390625
        %v7149 = vmul.f32 %v6989, 0.00390625
        %v7150 = vmul.f32 %v6990, 0.00390625
        %v7151 = vmul.f32 %v6991, 0.00390625
        %v7152 = vmul.f32 %v6992, 0.00390625
        %v7153 = vmul.f32 %v6993, 0.00390625
        %v7154 = vmul.f32 %v6994, 0.00390625
        %v7155 = vmul.f32 %v6995, 0.00390625
        %v7156 = vmul.f32 %v6996, 0.00390625
        %v7157 = vmul.f32 %v6997, 0.00390625
        %v7158 = vmul.f32 %v6998, 0.00390625
        %v7159 = vmul.f32 %v6999, 0.00390625
        %v7160 = vmul.f32 %v7000, 0.00390625
        %v7161 = vmul.f32 %v7001, 0.00390625
        %v7162 = vmul.f32 %v7002, 0.00390625
        %v7163 = vmul.f32 %v7003, 0.00390625
        %v7164 = vmul.f32 %v7004, 0.00390625
        %v7165 = vmul.f32 %v7005, 0.00390625
        %v7166 = vmul.f32 %v7006, 0.00390625
        %v7167 = vmul.f32 %v7007, 0.00390625
        %v7168 = vmul.f32 %v7008, 0.00390625
        %v7169 = vmul.f32 %v7009, 0.00390625
        %v7170 = vmul.f32 %v7010, 0.00390625
        %v7171 = vmul.f32 %v7011, 0.00390625
        %v7172 = vmul.f32 %v7012, 0.00390625
        %v7173 = vmul.f32 %v7013, 0.00390625
        %v7174 = vmul.f32 %v7014, 0.00390625
        %v7175 = vmul.f32 %v7015, 0.00390625
        %v7176 = vmul.f32 %v7016, 0.00390625
        %v7177 = vmul.f32 %v7017, 0.00390625
        %v7178 = vmul.f32 %v7018, 0.00390625
        %v7179 = vmul.f32 %v7019, 0.00390625
        %v7180 = vmul.f32 %v7020, 0.00390625
        %v7181 = vmul.f32 %v7021, 0.00390625
        %v7182 = vmul.f32 %v7022, 0.00390625
        %v7183 = vmul.f32 %v7023, 0.00390625
        %v7184 = vmul.f32 %v7024, 0.00390625
        %v7185 = vmul.f32 %v7025, 0.00390625
        %v7186 = vmul.f32 %v7026, 0.00390625
        %v7187 = vmul.f32 %v7027, 0.00390625
        %v7188 = vmul.f32 %v7028, 0.00390625
        %v7189 = vmul.f32 %v7029, 0.00390625
        %v7190 = vmul.f32 %v7030, 0.00390625
        %v7191 = vmul.f32 %v7031, 0.00390625
        %v7192 = vmul.f32 %v7032, 0.00390625
        %v7193 = vmul.f32 %v7033, 0.00390625
        %v7194 = vmul.f32 %v7034, 0.00390625
        %v7195 = vmul.f32 %v7035, 0.00390625
        %v7196 = vmul.f32 %v7036, 0.00390625
        %v7197 = vmul.f32 %v7037, 0.00390625
        %v7198 = vmul.f32 %v7038, 0.00390625
        %v7199 = vmul.f32 %v7039, 0.00390625
        %v7200 = vmul.f32 %v7040, 0.00390625
        %v7201 = vmul.f32 %v7041, 0.00390625
        %v7202 = vmul.f32 %v7042, 0.00390625
        %v7203 = vmul.f32 %v7043, 0.00390625
        %v7204 = vmul.f32 %v7044, 0.00390625
        %v7205 = vmul.f32 %v7045, 0.00390625
        %v7206 = vmul.f32 %v7046, 0.00390625
        %v7207 = vmul.f32 %v7047, 0.00390625
        %v7208 = vmul.f32 %v7048, 0.00390625
        %v7209 = vmul.f32 %v7049, 0.00390625
        %v7210 = vmul.f32 %v7050, 0.00390625
        %v7211 = vmul.f32 %v7051, 0.00390625
        %v7212 = vmul.f32 %v7052, 0.00390625
        %v7213 = vmul.f32 %v7053, 0.00390625
        %v7214 = vmul.f32 %v7054, 0.00390625
        %v7215 = vmul.f32 %v7055, 0.00390625
        %v7216 = vmul.f32 %v7056, 0.00390625
        %v7217 = vmul.f32 %v7057, 0.00390625
        %v7218 = vmul.f32 %v7058, 0.00390625
        %v7219 = vmul.f32 %v7059, 0.00390625
        %v7220 = vmul.f32 %v7060, 0.00390625
        %v7221 = vmul.f32 %v7061, 0.00390625
        %v7222 = vmul.f32 %v7062, 0.00390625
        %v7223 = vmul.f32 %v7063, 0.00390625
        %v7224 = vmul.f32 %v7064, 0.00390625
        %v7225 = vmul.f32 %v7065, 0.00390625
        %v7226 = vmul.f32 %v7066, 0.00390625
        %v7227 = vmul.f32 %v7067, 0.00390625
        %v7228 = vmul.f32 %v7068, 0.00390625
        %v7229 = vmul.f32 %v7069, 0.00390625
        %v7230 = vmul.f32 %v7070, 0.00390625
        %v7231 = vmul.f32 %v7071, 0.00390625
        %v7232 = vmul.f32 %v7072, 0.00390625
        %v7233 = vmul.f32 %v7073, 0.00390625
        %v7234 = vmul.f32 %v7074, 0.00390625
        %v7235 = vmul.f32 %v7075, 0.00390625
        %v7236 = vmul.f32 %v7076, 0.00390625
        %7237 = vst.msk [vmem:[%s287] sm:$0xff] %vm6753, %v7077
        %7238 = vst.msk [vmem:[%s287 + $0x8] sm:$0xff] %vm6753, %v7078
        %7239 = vst.msk [vmem:[%s287 + $0x10] sm:$0xff] %vm6753, %v7079
        %7240 = vst.msk [vmem:[%s287 + $0x18] sm:$0xff] %vm6753, %v7080
        %7241 = vst.msk [vmem:[%s287 + $0x20] sm:$0xff] %vm6753, %v7081
        %7242 = vst.msk [vmem:[%s287 + $0x28] sm:$0xff] %vm6753, %v7082
        %7243 = vst.msk [vmem:[%s287 + $0x30] sm:$0xff] %vm6753, %v7083
        %7244 = vst.msk [vmem:[%s287 + $0x38] sm:$0xff] %vm6753, %v7084
        %7245 = vst.msk [vmem:[%s287 + $0x40] sm:$0xff] %vm6753, %v7085
        %7246 = vst.msk [vmem:[%s287 + $0x48] sm:$0xff] %vm6753, %v7086
        %7247 = vst.msk [vmem:[%s287 + $0x50] sm:$0xff] %vm6753, %v7087
        %7248 = vst.msk [vmem:[%s287 + $0x58] sm:$0xff] %vm6753, %v7088
        %7249 = vst.msk [vmem:[%s287 + $0x60] sm:$0xff] %vm6753, %v7089
        %7250 = vst.msk [vmem:[%s287 + $0x68] sm:$0xff] %vm6753, %v7090
        %7251 = vst.msk [vmem:[%s287 + $0x70] sm:$0xff] %vm6753, %v7091
        %7252 = vst.msk [vmem:[%s287 + $0x78] sm:$0xff] %vm6753, %v7092
        %7253 = vst.msk [vmem:[%s287 + $0x80] sm:$0xff] %vm6753, %v7093
        %7254 = vst.msk [vmem:[%s287 + $0x88] sm:$0xff] %vm6753, %v7094
        %7255 = vst.msk [vmem:[%s287 + $0x90] sm:$0xff] %vm6753, %v7095
        %7256 = vst.msk [vmem:[%s287 + $0x98] sm:$0xff] %vm6753, %v7096
        %7257 = vst.msk [vmem:[%s287 + $0xa0] sm:$0xff] %vm6753, %v7097
        %7258 = vst.msk [vmem:[%s287 + $0xa8] sm:$0xff] %vm6753, %v7098
        %7259 = vst.msk [vmem:[%s287 + $0xb0] sm:$0xff] %vm6753, %v7099
        %7260 = vst.msk [vmem:[%s287 + $0xb8] sm:$0xff] %vm6753, %v7100
        %7261 = vst.msk [vmem:[%s287 + $0xc0] sm:$0xff] %vm6753, %v7101
        %7262 = vst.msk [vmem:[%s287 + $0xc8] sm:$0xff] %vm6753, %v7102
        %7263 = vst.msk [vmem:[%s287 + $0xd0] sm:$0xff] %vm6753, %v7103
        %7264 = vst.msk [vmem:[%s287 + $0xd8] sm:$0xff] %vm6753, %v7104
        %7265 = vst.msk [vmem:[%s287 + $0xe0] sm:$0xff] %vm6753, %v7105
        %7266 = vst.msk [vmem:[%s287 + $0xe8] sm:$0xff] %vm6753, %v7106
        %7267 = vst.msk [vmem:[%s287 + $0xf0] sm:$0xff] %vm6753, %v7107
        %7268 = vst.msk [vmem:[%s287 + $0xf8] sm:$0xff] %vm6753, %v7108
        %7269 = vst.msk [vmem:[%s287 + $0x100] sm:$0xff] %vm6753, %v7109
        %7270 = vst.msk [vmem:[%s287 + $0x108] sm:$0xff] %vm6753, %v7110
        %7271 = vst.msk [vmem:[%s287 + $0x110] sm:$0xff] %vm6753, %v7111
        %7272 = vst.msk [vmem:[%s287 + $0x118] sm:$0xff] %vm6753, %v7112
        %7273 = vst.msk [vmem:[%s287 + $0x120] sm:$0xff] %vm6753, %v7113
        %7274 = vst.msk [vmem:[%s287 + $0x128] sm:$0xff] %vm6753, %v7114
        %7275 = vst.msk [vmem:[%s287 + $0x130] sm:$0xff] %vm6753, %v7115
        %7276 = vst.msk [vmem:[%s287 + $0x138] sm:$0xff] %vm6753, %v7116
        %7277 = vst.msk [vmem:[%s287 + $0x140] sm:$0xff] %vm6753, %v7117
        %7278 = vst.msk [vmem:[%s287 + $0x148] sm:$0xff] %vm6753, %v7118
        %7279 = vst.msk [vmem:[%s287 + $0x150] sm:$0xff] %vm6753, %v7119
        %7280 = vst.msk [vmem:[%s287 + $0x158] sm:$0xff] %vm6753, %v7120
        %7281 = vst.msk [vmem:[%s287 + $0x160] sm:$0xff] %vm6753, %v7121
        %7282 = vst.msk [vmem:[%s287 + $0x168] sm:$0xff] %vm6753, %v7122
        %7283 = vst.msk [vmem:[%s287 + $0x170] sm:$0xff] %vm6753, %v7123
        %7284 = vst.msk [vmem:[%s287 + $0x178] sm:$0xff] %vm6753, %v7124
        %7285 = vst.msk [vmem:[%s287 + $0x180] sm:$0xff] %vm6753, %v7125
        %7286 = vst.msk [vmem:[%s287 + $0x188] sm:$0xff] %vm6753, %v7126
        %7287 = vst.msk [vmem:[%s287 + $0x190] sm:$0xff] %vm6753, %v7127
        %7288 = vst.msk [vmem:[%s287 + $0x198] sm:$0xff] %vm6753, %v7128
        %7289 = vst.msk [vmem:[%s287 + $0x1a0] sm:$0xff] %vm6753, %v7129
        %7290 = vst.msk [vmem:[%s287 + $0x1a8] sm:$0xff] %vm6753, %v7130
        %7291 = vst.msk [vmem:[%s287 + $0x1b0] sm:$0xff] %vm6753, %v7131
        %7292 = vst.msk [vmem:[%s287 + $0x1b8] sm:$0xff] %vm6753, %v7132
        %7293 = vst.msk [vmem:[%s287 + $0x1c0] sm:$0xff] %vm6753, %v7133
        %7294 = vst.msk [vmem:[%s287 + $0x1c8] sm:$0xff] %vm6753, %v7134
        %7295 = vst.msk [vmem:[%s287 + $0x1d0] sm:$0xff] %vm6753, %v7135
        %7296 = vst.msk [vmem:[%s287 + $0x1d8] sm:$0xff] %vm6753, %v7136
        %7297 = vst.msk [vmem:[%s287 + $0x1e0] sm:$0xff] %vm6753, %v7137
        %7298 = vst.msk [vmem:[%s287 + $0x1e8] sm:$0xff] %vm6753, %v7138
        %7299 = vst.msk [vmem:[%s287 + $0x1f0] sm:$0xff] %vm6753, %v7139
        %7300 = vst.msk [vmem:[%s287 + $0x1f8] sm:$0xff] %vm6753, %v7140
        %7301 = vst.msk [vmem:[%s287 + $0x200] sm:$0xff] %vm6753, %v7141
        %7302 = vst.msk [vmem:[%s287 + $0x208] sm:$0xff] %vm6753, %v7142
        %7303 = vst.msk [vmem:[%s287 + $0x210] sm:$0xff] %vm6753, %v7143
        %7304 = vst.msk [vmem:[%s287 + $0x218] sm:$0xff] %vm6753, %v7144
        %7305 = vst.msk [vmem:[%s287 + $0x220] sm:$0xff] %vm6753, %v7145
        %7306 = vst.msk [vmem:[%s287 + $0x228] sm:$0xff] %vm6753, %v7146
        %7307 = vst.msk [vmem:[%s287 + $0x230] sm:$0xff] %vm6753, %v7147
        %7308 = vst.msk [vmem:[%s287 + $0x238] sm:$0xff] %vm6753, %v7148
        %7309 = vst.msk [vmem:[%s287 + $0x240] sm:$0xff] %vm6753, %v7149
        %7310 = vst.msk [vmem:[%s287 + $0x248] sm:$0xff] %vm6753, %v7150
        %7311 = vst.msk [vmem:[%s287 + $0x250] sm:$0xff] %vm6753, %v7151
        %7312 = vst.msk [vmem:[%s287 + $0x258] sm:$0xff] %vm6753, %v7152
        %7313 = vst.msk [vmem:[%s287 + $0x260] sm:$0xff] %vm6753, %v7153
        %7314 = vst.msk [vmem:[%s287 + $0x268] sm:$0xff] %vm6753, %v7154
        %7315 = vst.msk [vmem:[%s287 + $0x270] sm:$0xff] %vm6753, %v7155
        %7316 = vst.msk [vmem:[%s287 + $0x278] sm:$0xff] %vm6753, %v7156
        %7317 = vst.msk [vmem:[%s287 + $0x280] sm:$0xff] %vm6753, %v7157
        %7318 = vst.msk [vmem:[%s287 + $0x288] sm:$0xff] %vm6753, %v7158
        %7319 = vst.msk [vmem:[%s287 + $0x290] sm:$0xff] %vm6753, %v7159
        %7320 = vst.msk [vmem:[%s287 + $0x298] sm:$0xff] %vm6753, %v7160
        %7321 = vst.msk [vmem:[%s287 + $0x2a0] sm:$0xff] %vm6753, %v7161
        %7322 = vst.msk [vmem:[%s287 + $0x2a8] sm:$0xff] %vm6753, %v7162
        %7323 = vst.msk [vmem:[%s287 + $0x2b0] sm:$0xff] %vm6753, %v7163
        %7324 = vst.msk [vmem:[%s287 + $0x2b8] sm:$0xff] %vm6753, %v7164
        %7325 = vst.msk [vmem:[%s287 + $0x2c0] sm:$0xff] %vm6753, %v7165
        %7326 = vst.msk [vmem:[%s287 + $0x2c8] sm:$0xff] %vm6753, %v7166
        %7327 = vst.msk [vmem:[%s287 + $0x2d0] sm:$0xff] %vm6753, %v7167
        %7328 = vst.msk [vmem:[%s287 + $0x2d8] sm:$0xff] %vm6753, %v7168
        %7329 = vst.msk [vmem:[%s287 + $0x2e0] sm:$0xff] %vm6753, %v7169
        %7330 = vst.msk [vmem:[%s287 + $0x2e8] sm:$0xff] %vm6753, %v7170
        %7331 = vst.msk [vmem:[%s287 + $0x2f0] sm:$0xff] %vm6753, %v7171
        %7332 = vst.msk [vmem:[%s287 + $0x2f8] sm:$0xff] %vm6753, %v7172
        %7333 = vst.msk [vmem:[%s287 + $0x300] sm:$0xff] %vm6753, %v7173
        %7334 = vst.msk [vmem:[%s287 + $0x308] sm:$0xff] %vm6753, %v7174
        %7335 = vst.msk [vmem:[%s287 + $0x310] sm:$0xff] %vm6753, %v7175
        %7336 = vst.msk [vmem:[%s287 + $0x318] sm:$0xff] %vm6753, %v7176
        %7337 = vst.msk [vmem:[%s287 + $0x320] sm:$0xff] %vm6753, %v7177
        %7338 = vst.msk [vmem:[%s287 + $0x328] sm:$0xff] %vm6753, %v7178
        %7339 = vst.msk [vmem:[%s287 + $0x330] sm:$0xff] %vm6753, %v7179
        %7340 = vst.msk [vmem:[%s287 + $0x338] sm:$0xff] %vm6753, %v7180
        %7341 = vst.msk [vmem:[%s287 + $0x340] sm:$0xff] %vm6753, %v7181
        %7342 = vst.msk [vmem:[%s287 + $0x348] sm:$0xff] %vm6753, %v7182
        %7343 = vst.msk [vmem:[%s287 + $0x350] sm:$0xff] %vm6753, %v7183
        %7344 = vst.msk [vmem:[%s287 + $0x358] sm:$0xff] %vm6753, %v7184
        %7345 = vst.msk [vmem:[%s287 + $0x360] sm:$0xff] %vm6753, %v7185
        %7346 = vst.msk [vmem:[%s287 + $0x368] sm:$0xff] %vm6753, %v7186
        %7347 = vst.msk [vmem:[%s287 + $0x370] sm:$0xff] %vm6753, %v7187
        %7348 = vst.msk [vmem:[%s287 + $0x378] sm:$0xff] %vm6753, %v7188
        %7349 = vst.msk [vmem:[%s287 + $0x380] sm:$0xff] %vm6753, %v7189
        %7350 = vst.msk [vmem:[%s287 + $0x388] sm:$0xff] %vm6753, %v7190
        %7351 = vst.msk [vmem:[%s287 + $0x390] sm:$0xff] %vm6753, %v7191
        %7352 = vst.msk [vmem:[%s287 + $0x398] sm:$0xff] %vm6753, %v7192
        %7353 = vst.msk [vmem:[%s287 + $0x3a0] sm:$0xff] %vm6753, %v7193
        %7354 = vst.msk [vmem:[%s287 + $0x3a8] sm:$0xff] %vm6753, %v7194
        %7355 = vst.msk [vmem:[%s287 + $0x3b0] sm:$0xff] %vm6753, %v7195
        %7356 = vst.msk [vmem:[%s287 + $0x3b8] sm:$0xff] %vm6753, %v7196
        %7357 = vst.msk [vmem:[%s287 + $0x3c0] sm:$0xff] %vm6753, %v7197
        %7358 = vst.msk [vmem:[%s287 + $0x3c8] sm:$0xff] %vm6753, %v7198
        %7359 = vst.msk [vmem:[%s287 + $0x3d0] sm:$0xff] %vm6753, %v7199
        %7360 = vst.msk [vmem:[%s287 + $0x3d8] sm:$0xff] %vm6753, %v7200
        %7361 = vst.msk [vmem:[%s287 + $0x3e0] sm:$0xff] %vm6753, %v7201
        %7362 = vst.msk [vmem:[%s287 + $0x3e8] sm:$0xff] %vm6753, %v7202
        %7363 = vst.msk [vmem:[%s287 + $0x3f0] sm:$0xff] %vm6753, %v7203
        %7364 = vst.msk [vmem:[%s287 + $0x3f8] sm:$0xff] %vm6753, %v7204
        %7365 = vst.msk [vmem:[%s287 + $0x400] sm:$0xff] %vm6753, %v7205
        %7366 = vst.msk [vmem:[%s287 + $0x408] sm:$0xff] %vm6753, %v7206
        %7367 = vst.msk [vmem:[%s287 + $0x410] sm:$0xff] %vm6753, %v7207
        %7368 = vst.msk [vmem:[%s287 + $0x418] sm:$0xff] %vm6753, %v7208
        %7369 = vst.msk [vmem:[%s287 + $0x420] sm:$0xff] %vm6753, %v7209
        %7370 = vst.msk [vmem:[%s287 + $0x428] sm:$0xff] %vm6753, %v7210
        %7371 = vst.msk [vmem:[%s287 + $0x430] sm:$0xff] %vm6753, %v7211
        %7372 = vst.msk [vmem:[%s287 + $0x438] sm:$0xff] %vm6753, %v7212
        %7373 = vst.msk [vmem:[%s287 + $0x440] sm:$0xff] %vm6753, %v7213
        %7374 = vst.msk [vmem:[%s287 + $0x448] sm:$0xff] %vm6753, %v7214
        %7375 = vst.msk [vmem:[%s287 + $0x450] sm:$0xff] %vm6753, %v7215
        %7376 = vst.msk [vmem:[%s287 + $0x458] sm:$0xff] %vm6753, %v7216
        %7377 = vst.msk [vmem:[%s287 + $0x460] sm:$0xff] %vm6753, %v7217
        %7378 = vst.msk [vmem:[%s287 + $0x468] sm:$0xff] %vm6753, %v7218
        %7379 = vst.msk [vmem:[%s287 + $0x470] sm:$0xff] %vm6753, %v7219
        %7380 = vst.msk [vmem:[%s287 + $0x478] sm:$0xff] %vm6753, %v7220
        %7381 = vst.msk [vmem:[%s287 + $0x480] sm:$0xff] %vm6753, %v7221
        %7382 = vst.msk [vmem:[%s287 + $0x488] sm:$0xff] %vm6753, %v7222
        %7383 = vst.msk [vmem:[%s287 + $0x490] sm:$0xff] %vm6753, %v7223
        %7384 = vst.msk [vmem:[%s287 + $0x498] sm:$0xff] %vm6753, %v7224
        %7385 = vst.msk [vmem:[%s287 + $0x4a0] sm:$0xff] %vm6753, %v7225
        %7386 = vst.msk [vmem:[%s287 + $0x4a8] sm:$0xff] %vm6753, %v7226
        %7387 = vst.msk [vmem:[%s287 + $0x4b0] sm:$0xff] %vm6753, %v7227
        %7388 = vst.msk [vmem:[%s287 + $0x4b8] sm:$0xff] %vm6753, %v7228
        %7389 = vst.msk [vmem:[%s287 + $0x4c0] sm:$0xff] %vm6753, %v7229
        %7390 = vst.msk [vmem:[%s287 + $0x4c8] sm:$0xff] %vm6753, %v7230
        %7391 = vst.msk [vmem:[%s287 + $0x4d0] sm:$0xff] %vm6753, %v7231
        %7392 = vst.msk [vmem:[%s287 + $0x4d8] sm:$0xff] %vm6753, %v7232
        %7393 = vst.msk [vmem:[%s287 + $0x4e0] sm:$0xff] %vm6753, %v7233
        %7394 = vst.msk [vmem:[%s287 + $0x4e8] sm:$0xff] %vm6753, %v7234
        %7395 = vst.msk [vmem:[%s287 + $0x4f0] sm:$0xff] %vm6753, %v7235
        %7396 = vst.msk [vmem:[%s287 + $0x4f8] sm:$0xff] %vm6753, %v7236
        %v7397 = vld [vmem:[%s3] sm:$0xff]
        %v7398 = vld [vmem:[%s3 + $0x8] sm:$0xff]
        %v7399 = vld [vmem:[%s3 + $0x10] sm:$0xff]
        %v7400 = vld [vmem:[%s3 + $0x18] sm:$0xff]
        %v7401 = vld [vmem:[%s3 + $0x20] sm:$0xff]
        %v7402 = vld [vmem:[%s3 + $0x28] sm:$0xff]
        %v7403 = vld [vmem:[%s3 + $0x30] sm:$0xff]
        %v7404 = vld [vmem:[%s3 + $0x38] sm:$0xff]
        %v7405 = vld [vmem:[%s3 + $0x40] sm:$0xff]
        %v7406 = vld [vmem:[%s3 + $0x48] sm:$0xff]
        %v7407 = vld [vmem:[%s3 + $0x50] sm:$0xff]
        %v7408 = vld [vmem:[%s3 + $0x58] sm:$0xff]
        %v7409 = vld [vmem:[%s3 + $0x60] sm:$0xff]
        %v7410 = vld [vmem:[%s3 + $0x68] sm:$0xff]
        %v7411 = vld [vmem:[%s3 + $0x70] sm:$0xff]
        %v7412 = vld [vmem:[%s3 + $0x78] sm:$0xff]
        %v7413 = vld [vmem:[%s3 + $0x80] sm:$0xff]
        %v7414 = vld [vmem:[%s3 + $0x88] sm:$0xff]
        %v7415 = vld [vmem:[%s3 + $0x90] sm:$0xff]
        %v7416 = vld [vmem:[%s3 + $0x98] sm:$0xff]
        %v7417 = vld [vmem:[%s3 + $0xa0] sm:$0xff]
        %v7418 = vld [vmem:[%s3 + $0xa8] sm:$0xff]
        %v7419 = vld [vmem:[%s3 + $0xb0] sm:$0xff]
        %v7420 = vld [vmem:[%s3 + $0xb8] sm:$0xff]
        %v7421 = vld [vmem:[%s3 + $0xc0] sm:$0xff]
        %v7422 = vld [vmem:[%s3 + $0xc8] sm:$0xff]
        %v7423 = vld [vmem:[%s3 + $0xd0] sm:$0xff]
        %v7424 = vld [vmem:[%s3 + $0xd8] sm:$0xff]
        %v7425 = vld [vmem:[%s3 + $0xe0] sm:$0xff]
        %v7426 = vld [vmem:[%s3 + $0xe8] sm:$0xff]
        %v7427 = vld [vmem:[%s3 + $0xf0] sm:$0xff]
        %v7428 = vld [vmem:[%s3 + $0xf8] sm:$0xff]
        %v7429 = vld [vmem:[%s3 + $0x100] sm:$0xff]
        %v7430 = vld [vmem:[%s3 + $0x108] sm:$0xff]
        %v7431 = vld [vmem:[%s3 + $0x110] sm:$0xff]
        %v7432 = vld [vmem:[%s3 + $0x118] sm:$0xff]
        %v7433 = vld [vmem:[%s3 + $0x120] sm:$0xff]
        %v7434 = vld [vmem:[%s3 + $0x128] sm:$0xff]
        %v7435 = vld [vmem:[%s3 + $0x130] sm:$0xff]
        %v7436 = vld [vmem:[%s3 + $0x138] sm:$0xff]
        %v7437 = vld [vmem:[%s3 + $0x140] sm:$0xff]
        %v7438 = vld [vmem:[%s3 + $0x148] sm:$0xff]
        %v7439 = vld [vmem:[%s3 + $0x150] sm:$0xff]
        %v7440 = vld [vmem:[%s3 + $0x158] sm:$0xff]
        %v7441 = vld [vmem:[%s3 + $0x160] sm:$0xff]
        %v7442 = vld [vmem:[%s3 + $0x168] sm:$0xff]
        %v7443 = vld [vmem:[%s3 + $0x170] sm:$0xff]
        %v7444 = vld [vmem:[%s3 + $0x178] sm:$0xff]
        %v7445 = vld [vmem:[%s3 + $0x180] sm:$0xff]
        %v7446 = vld [vmem:[%s3 + $0x188] sm:$0xff]
        %v7447 = vld [vmem:[%s3 + $0x190] sm:$0xff]
        %v7448 = vld [vmem:[%s3 + $0x198] sm:$0xff]
        %v7449 = vld [vmem:[%s3 + $0x1a0] sm:$0xff]
        %v7450 = vld [vmem:[%s3 + $0x1a8] sm:$0xff]
        %v7451 = vld [vmem:[%s3 + $0x1b0] sm:$0xff]
        %v7452 = vld [vmem:[%s3 + $0x1b8] sm:$0xff]
        %v7453 = vld [vmem:[%s3 + $0x1c0] sm:$0xff]
        %v7454 = vld [vmem:[%s3 + $0x1c8] sm:$0xff]
        %v7455 = vld [vmem:[%s3 + $0x1d0] sm:$0xff]
        %v7456 = vld [vmem:[%s3 + $0x1d8] sm:$0xff]
        %v7457 = vld [vmem:[%s3 + $0x1e0] sm:$0xff]
        %v7458 = vld [vmem:[%s3 + $0x1e8] sm:$0xff]
        %v7459 = vld [vmem:[%s3 + $0x1f0] sm:$0xff]
        %v7460 = vld [vmem:[%s3 + $0x1f8] sm:$0xff]
        %v7461 = vld [vmem:[%s3 + $0x200] sm:$0xff]
        %v7462 = vld [vmem:[%s3 + $0x208] sm:$0xff]
        %v7463 = vld [vmem:[%s3 + $0x210] sm:$0xff]
        %v7464 = vld [vmem:[%s3 + $0x218] sm:$0xff]
        %v7465 = vld [vmem:[%s3 + $0x220] sm:$0xff]
        %v7466 = vld [vmem:[%s3 + $0x228] sm:$0xff]
        %v7467 = vld [vmem:[%s3 + $0x230] sm:$0xff]
        %v7468 = vld [vmem:[%s3 + $0x238] sm:$0xff]
        %v7469 = vld [vmem:[%s3 + $0x240] sm:$0xff]
        %v7470 = vld [vmem:[%s3 + $0x248] sm:$0xff]
        %v7471 = vld [vmem:[%s3 + $0x250] sm:$0xff]
        %v7472 = vld [vmem:[%s3 + $0x258] sm:$0xff]
        %v7473 = vld [vmem:[%s3 + $0x260] sm:$0xff]
        %v7474 = vld [vmem:[%s3 + $0x268] sm:$0xff]
        %v7475 = vld [vmem:[%s3 + $0x270] sm:$0xff]
        %v7476 = vld [vmem:[%s3 + $0x278] sm:$0xff]
        %v7477 = vld [vmem:[%s3 + $0x280] sm:$0xff]
        %v7478 = vld [vmem:[%s3 + $0x288] sm:$0xff]
        %v7479 = vld [vmem:[%s3 + $0x290] sm:$0xff]
        %v7480 = vld [vmem:[%s3 + $0x298] sm:$0xff]
        %v7481 = vld [vmem:[%s3 + $0x2a0] sm:$0xff]
        %v7482 = vld [vmem:[%s3 + $0x2a8] sm:$0xff]
        %v7483 = vld [vmem:[%s3 + $0x2b0] sm:$0xff]
        %v7484 = vld [vmem:[%s3 + $0x2b8] sm:$0xff]
        %v7485 = vld [vmem:[%s3 + $0x2c0] sm:$0xff]
        %v7486 = vld [vmem:[%s3 + $0x2c8] sm:$0xff]
        %v7487 = vld [vmem:[%s3 + $0x2d0] sm:$0xff]
        %v7488 = vld [vmem:[%s3 + $0x2d8] sm:$0xff]
        %v7489 = vld [vmem:[%s3 + $0x2e0] sm:$0xff]
        %v7490 = vld [vmem:[%s3 + $0x2e8] sm:$0xff]
        %v7491 = vld [vmem:[%s3 + $0x2f0] sm:$0xff]
        %v7492 = vld [vmem:[%s3 + $0x2f8] sm:$0xff]
        %v7493 = vld [vmem:[%s3 + $0x300] sm:$0xff]
        %v7494 = vld [vmem:[%s3 + $0x308] sm:$0xff]
        %v7495 = vld [vmem:[%s3 + $0x310] sm:$0xff]
        %v7496 = vld [vmem:[%s3 + $0x318] sm:$0xff]
        %v7497 = vld [vmem:[%s3 + $0x320] sm:$0xff]
        %v7498 = vld [vmem:[%s3 + $0x328] sm:$0xff]
        %v7499 = vld [vmem:[%s3 + $0x330] sm:$0xff]
        %v7500 = vld [vmem:[%s3 + $0x338] sm:$0xff]
        %v7501 = vld [vmem:[%s3 + $0x340] sm:$0xff]
        %v7502 = vld [vmem:[%s3 + $0x348] sm:$0xff]
        %v7503 = vld [vmem:[%s3 + $0x350] sm:$0xff]
        %v7504 = vld [vmem:[%s3 + $0x358] sm:$0xff]
        %v7505 = vld [vmem:[%s3 + $0x360] sm:$0xff]
        %v7506 = vld [vmem:[%s3 + $0x368] sm:$0xff]
        %v7507 = vld [vmem:[%s3 + $0x370] sm:$0xff]
        %v7508 = vld [vmem:[%s3 + $0x378] sm:$0xff]
        %v7509 = vld [vmem:[%s3 + $0x380] sm:$0xff]
        %v7510 = vld [vmem:[%s3 + $0x388] sm:$0xff]
        %v7511 = vld [vmem:[%s3 + $0x390] sm:$0xff]
        %v7512 = vld [vmem:[%s3 + $0x398] sm:$0xff]
        %v7513 = vld [vmem:[%s3 + $0x3a0] sm:$0xff]
        %v7514 = vld [vmem:[%s3 + $0x3a8] sm:$0xff]
        %v7515 = vld [vmem:[%s3 + $0x3b0] sm:$0xff]
        %v7516 = vld [vmem:[%s3 + $0x3b8] sm:$0xff]
        %v7517 = vld [vmem:[%s3 + $0x3c0] sm:$0xff]
        %v7518 = vld [vmem:[%s3 + $0x3c8] sm:$0xff]
        %v7519 = vld [vmem:[%s3 + $0x3d0] sm:$0xff]
        %v7520 = vld [vmem:[%s3 + $0x3d8] sm:$0xff]
        %v7521 = vld [vmem:[%s3 + $0x3e0] sm:$0xff]
        %v7522 = vld [vmem:[%s3 + $0x3e8] sm:$0xff]
        %v7523 = vld [vmem:[%s3 + $0x3f0] sm:$0xff]
        %v7524 = vld [vmem:[%s3 + $0x3f8] sm:$0xff]
        %v7525 = vld [vmem:[%s3 + $0x400] sm:$0xff]
        %v7526 = vld [vmem:[%s3 + $0x408] sm:$0xff]
        %v7527 = vld [vmem:[%s3 + $0x410] sm:$0xff]
        %v7528 = vld [vmem:[%s3 + $0x418] sm:$0xff]
        %v7529 = vld [vmem:[%s3 + $0x420] sm:$0xff]
        %v7530 = vld [vmem:[%s3 + $0x428] sm:$0xff]
        %v7531 = vld [vmem:[%s3 + $0x430] sm:$0xff]
        %v7532 = vld [vmem:[%s3 + $0x438] sm:$0xff]
        %v7533 = vld [vmem:[%s3 + $0x440] sm:$0xff]
        %v7534 = vld [vmem:[%s3 + $0x448] sm:$0xff]
        %v7535 = vld [vmem:[%s3 + $0x450] sm:$0xff]
        %v7536 = vld [vmem:[%s3 + $0x458] sm:$0xff]
        %v7537 = vld [vmem:[%s3 + $0x460] sm:$0xff]
        %v7538 = vld [vmem:[%s3 + $0x468] sm:$0xff]
        %v7539 = vld [vmem:[%s3 + $0x470] sm:$0xff]
        %v7540 = vld [vmem:[%s3 + $0x478] sm:$0xff]
        %v7541 = vld [vmem:[%s3 + $0x480] sm:$0xff]
        %v7542 = vld [vmem:[%s3 + $0x488] sm:$0xff]
        %v7543 = vld [vmem:[%s3 + $0x490] sm:$0xff]
        %v7544 = vld [vmem:[%s3 + $0x498] sm:$0xff]
        %v7545 = vld [vmem:[%s3 + $0x4a0] sm:$0xff]
        %v7546 = vld [vmem:[%s3 + $0x4a8] sm:$0xff]
        %v7547 = vld [vmem:[%s3 + $0x4b0] sm:$0xff]
        %v7548 = vld [vmem:[%s3 + $0x4b8] sm:$0xff]
        %v7549 = vld [vmem:[%s3 + $0x4c0] sm:$0xff]
        %v7550 = vld [vmem:[%s3 + $0x4c8] sm:$0xff]
        %v7551 = vld [vmem:[%s3 + $0x4d0] sm:$0xff]
        %v7552 = vld [vmem:[%s3 + $0x4d8] sm:$0xff]
        %v7553 = vld [vmem:[%s3 + $0x4e0] sm:$0xff]
        %v7554 = vld [vmem:[%s3 + $0x4e8] sm:$0xff]
        %v7555 = vld [vmem:[%s3 + $0x4f0] sm:$0xff]
        %v7556 = vld [vmem:[%s3 + $0x4f8] sm:$0xff]
        %v7557 = vmul.f32 %v7077, %v7397
        %v7558 = vmul.f32 %v7078, %v7398
        %v7559 = vmul.f32 %v7079, %v7399
        %v7560 = vmul.f32 %v7080, %v7400
        %v7561 = vmul.f32 %v7081, %v7401
        %v7562 = vmul.f32 %v7082, %v7402
        %v7563 = vmul.f32 %v7083, %v7403
        %v7564 = vmul.f32 %v7084, %v7404
        %v7565 = vmul.f32 %v7085, %v7405
        %v7566 = vmul.f32 %v7086, %v7406
        %v7567 = vmul.f32 %v7087, %v7407
        %v7568 = vmul.f32 %v7088, %v7408
        %v7569 = vmul.f32 %v7089, %v7409
        %v7570 = vmul.f32 %v7090, %v7410
        %v7571 = vmul.f32 %v7091, %v7411
        %v7572 = vmul.f32 %v7092, %v7412
        %v7573 = vmul.f32 %v7093, %v7413
        %v7574 = vmul.f32 %v7094, %v7414
        %v7575 = vmul.f32 %v7095, %v7415
        %v7576 = vmul.f32 %v7096, %v7416
        %v7577 = vmul.f32 %v7097, %v7417
        %v7578 = vmul.f32 %v7098, %v7418
        %v7579 = vmul.f32 %v7099, %v7419
        %v7580 = vmul.f32 %v7100, %v7420
        %v7581 = vmul.f32 %v7101, %v7421
        %v7582 = vmul.f32 %v7102, %v7422
        %v7583 = vmul.f32 %v7103, %v7423
        %v7584 = vmul.f32 %v7104, %v7424
        %v7585 = vmul.f32 %v7105, %v7425
        %v7586 = vmul.f32 %v7106, %v7426
        %v7587 = vmul.f32 %v7107, %v7427
        %v7588 = vmul.f32 %v7108, %v7428
        %v7589 = vmul.f32 %v7109, %v7429
        %v7590 = vmul.f32 %v7110, %v7430
        %v7591 = vmul.f32 %v7111, %v7431
        %v7592 = vmul.f32 %v7112, %v7432
        %v7593 = vmul.f32 %v7113, %v7433
        %v7594 = vmul.f32 %v7114, %v7434
        %v7595 = vmul.f32 %v7115, %v7435
        %v7596 = vmul.f32 %v7116, %v7436
        %v7597 = vmul.f32 %v7117, %v7437
        %v7598 = vmul.f32 %v7118, %v7438
        %v7599 = vmul.f32 %v7119, %v7439
        %v7600 = vmul.f32 %v7120, %v7440
        %v7601 = vmul.f32 %v7121, %v7441
        %v7602 = vmul.f32 %v7122, %v7442
        %v7603 = vmul.f32 %v7123, %v7443
        %v7604 = vmul.f32 %v7124, %v7444
        %v7605 = vmul.f32 %v7125, %v7445
        %v7606 = vmul.f32 %v7126, %v7446
        %v7607 = vmul.f32 %v7127, %v7447
        %v7608 = vmul.f32 %v7128, %v7448
        %v7609 = vmul.f32 %v7129, %v7449
        %v7610 = vmul.f32 %v7130, %v7450
        %v7611 = vmul.f32 %v7131, %v7451
        %v7612 = vmul.f32 %v7132, %v7452
        %v7613 = vmul.f32 %v7133, %v7453
        %v7614 = vmul.f32 %v7134, %v7454
        %v7615 = vmul.f32 %v7135, %v7455
        %v7616 = vmul.f32 %v7136, %v7456
        %v7617 = vmul.f32 %v7137, %v7457
        %v7618 = vmul.f32 %v7138, %v7458
        %v7619 = vmul.f32 %v7139, %v7459
        %v7620 = vmul.f32 %v7140, %v7460
        %v7621 = vmul.f32 %v7141, %v7461
        %v7622 = vmul.f32 %v7142, %v7462
        %v7623 = vmul.f32 %v7143, %v7463
        %v7624 = vmul.f32 %v7144, %v7464
        %v7625 = vmul.f32 %v7145, %v7465
        %v7626 = vmul.f32 %v7146, %v7466
        %v7627 = vmul.f32 %v7147, %v7467
        %v7628 = vmul.f32 %v7148, %v7468
        %v7629 = vmul.f32 %v7149, %v7469
        %v7630 = vmul.f32 %v7150, %v7470
        %v7631 = vmul.f32 %v7151, %v7471
        %v7632 = vmul.f32 %v7152, %v7472
        %v7633 = vmul.f32 %v7153, %v7473
        %v7634 = vmul.f32 %v7154, %v7474
        %v7635 = vmul.f32 %v7155, %v7475
        %v7636 = vmul.f32 %v7156, %v7476
        %v7637 = vmul.f32 %v7157, %v7477
        %v7638 = vmul.f32 %v7158, %v7478
        %v7639 = vmul.f32 %v7159, %v7479
        %v7640 = vmul.f32 %v7160, %v7480
        %v7641 = vmul.f32 %v7161, %v7481
        %v7642 = vmul.f32 %v7162, %v7482
        %v7643 = vmul.f32 %v7163, %v7483
        %v7644 = vmul.f32 %v7164, %v7484
        %v7645 = vmul.f32 %v7165, %v7485
        %v7646 = vmul.f32 %v7166, %v7486
        %v7647 = vmul.f32 %v7167, %v7487
        %v7648 = vmul.f32 %v7168, %v7488
        %v7649 = vmul.f32 %v7169, %v7489
        %v7650 = vmul.f32 %v7170, %v7490
        %v7651 = vmul.f32 %v7171, %v7491
        %v7652 = vmul.f32 %v7172, %v7492
        %v7653 = vmul.f32 %v7173, %v7493
        %v7654 = vmul.f32 %v7174, %v7494
        %v7655 = vmul.f32 %v7175, %v7495
        %v7656 = vmul.f32 %v7176, %v7496
        %v7657 = vmul.f32 %v7177, %v7497
        %v7658 = vmul.f32 %v7178, %v7498
        %v7659 = vmul.f32 %v7179, %v7499
        %v7660 = vmul.f32 %v7180, %v7500
        %v7661 = vmul.f32 %v7181, %v7501
        %v7662 = vmul.f32 %v7182, %v7502
        %v7663 = vmul.f32 %v7183, %v7503
        %v7664 = vmul.f32 %v7184, %v7504
        %v7665 = vmul.f32 %v7185, %v7505
        %v7666 = vmul.f32 %v7186, %v7506
        %v7667 = vmul.f32 %v7187, %v7507
        %v7668 = vmul.f32 %v7188, %v7508
        %v7669 = vmul.f32 %v7189, %v7509
        %v7670 = vmul.f32 %v7190, %v7510
        %v7671 = vmul.f32 %v7191, %v7511
        %v7672 = vmul.f32 %v7192, %v7512
        %v7673 = vmul.f32 %v7193, %v7513
        %v7674 = vmul.f32 %v7194, %v7514
        %v7675 = vmul.f32 %v7195, %v7515
        %v7676 = vmul.f32 %v7196, %v7516
        %v7677 = vmul.f32 %v7197, %v7517
        %v7678 = vmul.f32 %v7198, %v7518
        %v7679 = vmul.f32 %v7199, %v7519
        %v7680 = vmul.f32 %v7200, %v7520
        %v7681 = vmul.f32 %v7201, %v7521
        %v7682 = vmul.f32 %v7202, %v7522
        %v7683 = vmul.f32 %v7203, %v7523
        %v7684 = vmul.f32 %v7204, %v7524
        %v7685 = vmul.f32 %v7205, %v7525
        %v7686 = vmul.f32 %v7206, %v7526
        %v7687 = vmul.f32 %v7207, %v7527
        %v7688 = vmul.f32 %v7208, %v7528
        %v7689 = vmul.f32 %v7209, %v7529
        %v7690 = vmul.f32 %v7210, %v7530
        %v7691 = vmul.f32 %v7211, %v7531
        %v7692 = vmul.f32 %v7212, %v7532
        %v7693 = vmul.f32 %v7213, %v7533
        %v7694 = vmul.f32 %v7214, %v7534
        %v7695 = vmul.f32 %v7215, %v7535
        %v7696 = vmul.f32 %v7216, %v7536
        %v7697 = vmul.f32 %v7217, %v7537
        %v7698 = vmul.f32 %v7218, %v7538
        %v7699 = vmul.f32 %v7219, %v7539
        %v7700 = vmul.f32 %v7220, %v7540
        %v7701 = vmul.f32 %v7221, %v7541
        %v7702 = vmul.f32 %v7222, %v7542
        %v7703 = vmul.f32 %v7223, %v7543
        %v7704 = vmul.f32 %v7224, %v7544
        %v7705 = vmul.f32 %v7225, %v7545
        %v7706 = vmul.f32 %v7226, %v7546
        %v7707 = vmul.f32 %v7227, %v7547
        %v7708 = vmul.f32 %v7228, %v7548
        %v7709 = vmul.f32 %v7229, %v7549
        %v7710 = vmul.f32 %v7230, %v7550
        %v7711 = vmul.f32 %v7231, %v7551
        %v7712 = vmul.f32 %v7232, %v7552
        %v7713 = vmul.f32 %v7233, %v7553
        %v7714 = vmul.f32 %v7234, %v7554
        %v7715 = vmul.f32 %v7235, %v7555
        %v7716 = vmul.f32 %v7236, %v7556
        %v7717 = vsel %vm6753, %v7557, 0.0
        %v7718 = vsel %vm6753, %v7558, 0.0
        %v7719 = vadd.f32 %v7717, %v7718
        %v7720 = vsel %vm6753, %v7559, 0.0
        %v7721 = vadd.f32 %v7719, %v7720
        %v7722 = vsel %vm6753, %v7560, 0.0
        %v7723 = vadd.f32 %v7721, %v7722
        %v7724 = vsel %vm6753, %v7561, 0.0
        %v7725 = vadd.f32 %v7723, %v7724
        %v7726 = vsel %vm6753, %v7562, 0.0
        %v7727 = vadd.f32 %v7725, %v7726
        %v7728 = vsel %vm6753, %v7563, 0.0
        %v7729 = vadd.f32 %v7727, %v7728
        %v7730 = vsel %vm6753, %v7564, 0.0
        %v7731 = vadd.f32 %v7729, %v7730
        %v7732 = vsel %vm6753, %v7565, 0.0
        %v7733 = vadd.f32 %v7731, %v7732
        %v7734 = vsel %vm6753, %v7566, 0.0
        %v7735 = vadd.f32 %v7733, %v7734
        %v7736 = vsel %vm6753, %v7567, 0.0
        %v7737 = vadd.f32 %v7735, %v7736
        %v7738 = vsel %vm6753, %v7568, 0.0
        %v7739 = vadd.f32 %v7737, %v7738
        %v7740 = vsel %vm6753, %v7569, 0.0
        %v7741 = vadd.f32 %v7739, %v7740
        %v7742 = vsel %vm6753, %v7570, 0.0
        %v7743 = vadd.f32 %v7741, %v7742
        %v7744 = vsel %vm6753, %v7571, 0.0
        %v7745 = vadd.f32 %v7743, %v7744
        %v7746 = vsel %vm6753, %v7572, 0.0
        %v7747 = vadd.f32 %v7745, %v7746
        %v7748 = vsel %vm6753, %v7573, 0.0
        %v7749 = vadd.f32 %v7747, %v7748
        %v7750 = vsel %vm6753, %v7574, 0.0
        %v7751 = vadd.f32 %v7749, %v7750
        %v7752 = vsel %vm6753, %v7575, 0.0
        %v7753 = vadd.f32 %v7751, %v7752
        %v7754 = vsel %vm6753, %v7576, 0.0
        %v7755 = vadd.f32 %v7753, %v7754
        %v7756 = vsel %vm6753, %v7577, 0.0
        %v7757 = vadd.f32 %v7755, %v7756
        %v7758 = vsel %vm6753, %v7578, 0.0
        %v7759 = vadd.f32 %v7757, %v7758
        %v7760 = vsel %vm6753, %v7579, 0.0
        %v7761 = vadd.f32 %v7759, %v7760
        %v7762 = vsel %vm6753, %v7580, 0.0
        %v7763 = vadd.f32 %v7761, %v7762
        %v7764 = vsel %vm6753, %v7581, 0.0
        %v7765 = vadd.f32 %v7763, %v7764
        %v7766 = vsel %vm6753, %v7582, 0.0
        %v7767 = vadd.f32 %v7765, %v7766
        %v7768 = vsel %vm6753, %v7583, 0.0
        %v7769 = vadd.f32 %v7767, %v7768
        %v7770 = vsel %vm6753, %v7584, 0.0
        %v7771 = vadd.f32 %v7769, %v7770
        %v7772 = vsel %vm6753, %v7585, 0.0
        %v7773 = vadd.f32 %v7771, %v7772
        %v7774 = vsel %vm6753, %v7586, 0.0
        %v7775 = vadd.f32 %v7773, %v7774
        %v7776 = vsel %vm6753, %v7587, 0.0
        %v7777 = vadd.f32 %v7775, %v7776
        %v7778 = vsel %vm6753, %v7588, 0.0
        %v7779 = vadd.f32 %v7777, %v7778
        %v7780 = vsel %vm6753, %v7589, 0.0
        %v7781 = vadd.f32 %v7779, %v7780
        %v7782 = vsel %vm6753, %v7590, 0.0
        %v7783 = vadd.f32 %v7781, %v7782
        %v7784 = vsel %vm6753, %v7591, 0.0
        %v7785 = vadd.f32 %v7783, %v7784
        %v7786 = vsel %vm6753, %v7592, 0.0
        %v7787 = vadd.f32 %v7785, %v7786
        %v7788 = vsel %vm6753, %v7593, 0.0
        %v7789 = vadd.f32 %v7787, %v7788
        %v7790 = vsel %vm6753, %v7594, 0.0
        %v7791 = vadd.f32 %v7789, %v7790
        %v7792 = vsel %vm6753, %v7595, 0.0
        %v7793 = vadd.f32 %v7791, %v7792
        %v7794 = vsel %vm6753, %v7596, 0.0
        %v7795 = vadd.f32 %v7793, %v7794
        %v7796 = vsel %vm6753, %v7597, 0.0
        %v7797 = vadd.f32 %v7795, %v7796
        %v7798 = vsel %vm6753, %v7598, 0.0
        %v7799 = vadd.f32 %v7797, %v7798
        %v7800 = vsel %vm6753, %v7599, 0.0
        %v7801 = vadd.f32 %v7799, %v7800
        %v7802 = vsel %vm6753, %v7600, 0.0
        %v7803 = vadd.f32 %v7801, %v7802
        %v7804 = vsel %vm6753, %v7601, 0.0
        %v7805 = vadd.f32 %v7803, %v7804
        %v7806 = vsel %vm6753, %v7602, 0.0
        %v7807 = vadd.f32 %v7805, %v7806
        %v7808 = vsel %vm6753, %v7603, 0.0
        %v7809 = vadd.f32 %v7807, %v7808
        %v7810 = vsel %vm6753, %v7604, 0.0
        %v7811 = vadd.f32 %v7809, %v7810
        %v7812 = vsel %vm6753, %v7605, 0.0
        %v7813 = vadd.f32 %v7811, %v7812
        %v7814 = vsel %vm6753, %v7606, 0.0
        %v7815 = vadd.f32 %v7813, %v7814
        %v7816 = vsel %vm6753, %v7607, 0.0
        %v7817 = vadd.f32 %v7815, %v7816
        %v7818 = vsel %vm6753, %v7608, 0.0
        %v7819 = vadd.f32 %v7817, %v7818
        %v7820 = vsel %vm6753, %v7609, 0.0
        %v7821 = vadd.f32 %v7819, %v7820
        %v7822 = vsel %vm6753, %v7610, 0.0
        %v7823 = vadd.f32 %v7821, %v7822
        %v7824 = vsel %vm6753, %v7611, 0.0
        %v7825 = vadd.f32 %v7823, %v7824
        %v7826 = vsel %vm6753, %v7612, 0.0
        %v7827 = vadd.f32 %v7825, %v7826
        %v7828 = vsel %vm6753, %v7613, 0.0
        %v7829 = vadd.f32 %v7827, %v7828
        %v7830 = vsel %vm6753, %v7614, 0.0
        %v7831 = vadd.f32 %v7829, %v7830
        %v7832 = vsel %vm6753, %v7615, 0.0
        %v7833 = vadd.f32 %v7831, %v7832
        %v7834 = vsel %vm6753, %v7616, 0.0
        %v7835 = vadd.f32 %v7833, %v7834
        %v7836 = vsel %vm6753, %v7617, 0.0
        %v7837 = vadd.f32 %v7835, %v7836
        %v7838 = vsel %vm6753, %v7618, 0.0
        %v7839 = vadd.f32 %v7837, %v7838
        %v7840 = vsel %vm6753, %v7619, 0.0
        %v7841 = vadd.f32 %v7839, %v7840
        %v7842 = vsel %vm6753, %v7620, 0.0
        %v7843 = vadd.f32 %v7841, %v7842
        %v7844 = vsel %vm6753, %v7621, 0.0
        %v7845 = vadd.f32 %v7843, %v7844
        %v7846 = vsel %vm6753, %v7622, 0.0
        %v7847 = vadd.f32 %v7845, %v7846
        %v7848 = vsel %vm6753, %v7623, 0.0
        %v7849 = vadd.f32 %v7847, %v7848
        %v7850 = vsel %vm6753, %v7624, 0.0
        %v7851 = vadd.f32 %v7849, %v7850
        %v7852 = vsel %vm6753, %v7625, 0.0
        %v7853 = vadd.f32 %v7851, %v7852
        %v7854 = vsel %vm6753, %v7626, 0.0
        %v7855 = vadd.f32 %v7853, %v7854
        %v7856 = vsel %vm6753, %v7627, 0.0
        %v7857 = vadd.f32 %v7855, %v7856
        %v7858 = vsel %vm6753, %v7628, 0.0
        %v7859 = vadd.f32 %v7857, %v7858
        %v7860 = vsel %vm6753, %v7629, 0.0
        %v7861 = vadd.f32 %v7859, %v7860
        %v7862 = vsel %vm6753, %v7630, 0.0
        %v7863 = vadd.f32 %v7861, %v7862
        %v7864 = vsel %vm6753, %v7631, 0.0
        %v7865 = vadd.f32 %v7863, %v7864
        %v7866 = vsel %vm6753, %v7632, 0.0
        %v7867 = vadd.f32 %v7865, %v7866
        %v7868 = vsel %vm6753, %v7633, 0.0
        %v7869 = vadd.f32 %v7867, %v7868
        %v7870 = vsel %vm6753, %v7634, 0.0
        %v7871 = vadd.f32 %v7869, %v7870
        %v7872 = vsel %vm6753, %v7635, 0.0
        %v7873 = vadd.f32 %v7871, %v7872
        %v7874 = vsel %vm6753, %v7636, 0.0
        %v7875 = vadd.f32 %v7873, %v7874
        %v7876 = vsel %vm6753, %v7637, 0.0
        %v7877 = vadd.f32 %v7875, %v7876
        %v7878 = vsel %vm6753, %v7638, 0.0
        %v7879 = vadd.f32 %v7877, %v7878
        %v7880 = vsel %vm6753, %v7639, 0.0
        %v7881 = vadd.f32 %v7879, %v7880
        %v7882 = vsel %vm6753, %v7640, 0.0
        %v7883 = vadd.f32 %v7881, %v7882
        %v7884 = vsel %vm6753, %v7641, 0.0
        %v7885 = vadd.f32 %v7883, %v7884
        %v7886 = vsel %vm6753, %v7642, 0.0
        %v7887 = vadd.f32 %v7885, %v7886
        %v7888 = vsel %vm6753, %v7643, 0.0
        %v7889 = vadd.f32 %v7887, %v7888
        %v7890 = vsel %vm6753, %v7644, 0.0
        %v7891 = vadd.f32 %v7889, %v7890
        %v7892 = vsel %vm6753, %v7645, 0.0
        %v7893 = vadd.f32 %v7891, %v7892
        %v7894 = vsel %vm6753, %v7646, 0.0
        %v7895 = vadd.f32 %v7893, %v7894
        %v7896 = vsel %vm6753, %v7647, 0.0
        %v7897 = vadd.f32 %v7895, %v7896
        %v7898 = vsel %vm6753, %v7648, 0.0
        %v7899 = vadd.f32 %v7897, %v7898
        %v7900 = vsel %vm6753, %v7649, 0.0
        %v7901 = vadd.f32 %v7899, %v7900
        %v7902 = vsel %vm6753, %v7650, 0.0
        %v7903 = vadd.f32 %v7901, %v7902
        %v7904 = vsel %vm6753, %v7651, 0.0
        %v7905 = vadd.f32 %v7903, %v7904
        %v7906 = vsel %vm6753, %v7652, 0.0
        %v7907 = vadd.f32 %v7905, %v7906
        %v7908 = vsel %vm6753, %v7653, 0.0
        %v7909 = vadd.f32 %v7907, %v7908
        %v7910 = vsel %vm6753, %v7654, 0.0
        %v7911 = vadd.f32 %v7909, %v7910
        %v7912 = vsel %vm6753, %v7655, 0.0
        %v7913 = vadd.f32 %v7911, %v7912
        %v7914 = vsel %vm6753, %v7656, 0.0
        %v7915 = vadd.f32 %v7913, %v7914
        %v7916 = vsel %vm6753, %v7657, 0.0
        %v7917 = vadd.f32 %v7915, %v7916
        %v7918 = vsel %vm6753, %v7658, 0.0
        %v7919 = vadd.f32 %v7917, %v7918
        %v7920 = vsel %vm6753, %v7659, 0.0
        %v7921 = vadd.f32 %v7919, %v7920
        %v7922 = vsel %vm6753, %v7660, 0.0
        %v7923 = vadd.f32 %v7921, %v7922
        %v7924 = vsel %vm6753, %v7661, 0.0
        %v7925 = vadd.f32 %v7923, %v7924
        %v7926 = vsel %vm6753, %v7662, 0.0
        %v7927 = vadd.f32 %v7925, %v7926
        %v7928 = vsel %vm6753, %v7663, 0.0
        %v7929 = vadd.f32 %v7927, %v7928
        %v7930 = vsel %vm6753, %v7664, 0.0
        %v7931 = vadd.f32 %v7929, %v7930
        %v7932 = vsel %vm6753, %v7665, 0.0
        %v7933 = vadd.f32 %v7931, %v7932
        %v7934 = vsel %vm6753, %v7666, 0.0
        %v7935 = vadd.f32 %v7933, %v7934
        %v7936 = vsel %vm6753, %v7667, 0.0
        %v7937 = vadd.f32 %v7935, %v7936
        %v7938 = vsel %vm6753, %v7668, 0.0
        %v7939 = vadd.f32 %v7937, %v7938
        %v7940 = vsel %vm6753, %v7669, 0.0
        %v7941 = vadd.f32 %v7939, %v7940
        %v7942 = vsel %vm6753, %v7670, 0.0
        %v7943 = vadd.f32 %v7941, %v7942
        %v7944 = vsel %vm6753, %v7671, 0.0
        %v7945 = vadd.f32 %v7943, %v7944
        %v7946 = vsel %vm6753, %v7672, 0.0
        %v7947 = vadd.f32 %v7945, %v7946
        %v7948 = vsel %vm6753, %v7673, 0.0
        %v7949 = vadd.f32 %v7947, %v7948
        %v7950 = vsel %vm6753, %v7674, 0.0
        %v7951 = vadd.f32 %v7949, %v7950
        %v7952 = vsel %vm6753, %v7675, 0.0
        %v7953 = vadd.f32 %v7951, %v7952
        %v7954 = vsel %vm6753, %v7676, 0.0
        %v7955 = vadd.f32 %v7953, %v7954
        %v7956 = vsel %vm6753, %v7677, 0.0
        %v7957 = vadd.f32 %v7955, %v7956
        %v7958 = vsel %vm6753, %v7678, 0.0
        %v7959 = vadd.f32 %v7957, %v7958
        %v7960 = vsel %vm6753, %v7679, 0.0
        %v7961 = vadd.f32 %v7959, %v7960
        %v7962 = vsel %vm6753, %v7680, 0.0
        %v7963 = vadd.f32 %v7961, %v7962
        %v7964 = vsel %vm6753, %v7681, 0.0
        %v7965 = vadd.f32 %v7963, %v7964
        %v7966 = vsel %vm6753, %v7682, 0.0
        %v7967 = vadd.f32 %v7965, %v7966
        %v7968 = vsel %vm6753, %v7683, 0.0
        %v7969 = vadd.f32 %v7967, %v7968
        %v7970 = vsel %vm6753, %v7684, 0.0
        %v7971 = vadd.f32 %v7969, %v7970
        %v7972 = vsel %vm6753, %v7685, 0.0
        %v7973 = vadd.f32 %v7971, %v7972
        %v7974 = vsel %vm6753, %v7686, 0.0
        %v7975 = vadd.f32 %v7973, %v7974
        %v7976 = vsel %vm6753, %v7687, 0.0
        %v7977 = vadd.f32 %v7975, %v7976
        %v7978 = vsel %vm6753, %v7688, 0.0
        %v7979 = vadd.f32 %v7977, %v7978
        %v7980 = vsel %vm6753, %v7689, 0.0
        %v7981 = vadd.f32 %v7979, %v7980
        %v7982 = vsel %vm6753, %v7690, 0.0
        %v7983 = vadd.f32 %v7981, %v7982
        %v7984 = vsel %vm6753, %v7691, 0.0
        %v7985 = vadd.f32 %v7983, %v7984
        %v7986 = vsel %vm6753, %v7692, 0.0
        %v7987 = vadd.f32 %v7985, %v7986
        %v7988 = vsel %vm6753, %v7693, 0.0
        %v7989 = vadd.f32 %v7987, %v7988
        %v7990 = vsel %vm6753, %v7694, 0.0
        %v7991 = vadd.f32 %v7989, %v7990
        %v7992 = vsel %vm6753, %v7695, 0.0
        %v7993 = vadd.f32 %v7991, %v7992
        %v7994 = vsel %vm6753, %v7696, 0.0
        %v7995 = vadd.f32 %v7993, %v7994
        %v7996 = vsel %vm6753, %v7697, 0.0
        %v7997 = vadd.f32 %v7995, %v7996
        %v7998 = vsel %vm6753, %v7698, 0.0
        %v7999 = vadd.f32 %v7997, %v7998
        %v8000 = vsel %vm6753, %v7699, 0.0
        %v8001 = vadd.f32 %v7999, %v8000
        %v8002 = vsel %vm6753, %v7700, 0.0
        %v8003 = vadd.f32 %v8001, %v8002
        %v8004 = vsel %vm6753, %v7701, 0.0
        %v8005 = vadd.f32 %v8003, %v8004
        %v8006 = vsel %vm6753, %v7702, 0.0
        %v8007 = vadd.f32 %v8005, %v8006
        %v8008 = vsel %vm6753, %v7703, 0.0
        %v8009 = vadd.f32 %v8007, %v8008
        %v8010 = vsel %vm6753, %v7704, 0.0
        %v8011 = vadd.f32 %v8009, %v8010
        %v8012 = vsel %vm6753, %v7705, 0.0
        %v8013 = vadd.f32 %v8011, %v8012
        %v8014 = vsel %vm6753, %v7706, 0.0
        %v8015 = vadd.f32 %v8013, %v8014
        %v8016 = vsel %vm6753, %v7707, 0.0
        %v8017 = vadd.f32 %v8015, %v8016
        %v8018 = vsel %vm6753, %v7708, 0.0
        %v8019 = vadd.f32 %v8017, %v8018
        %v8020 = vsel %vm6753, %v7709, 0.0
        %v8021 = vadd.f32 %v8019, %v8020
        %v8022 = vsel %vm6753, %v7710, 0.0
        %v8023 = vadd.f32 %v8021, %v8022
        %v8024 = vsel %vm6753, %v7711, 0.0
        %v8025 = vadd.f32 %v8023, %v8024
        %v8026 = vsel %vm6753, %v7712, 0.0
        %v8027 = vadd.f32 %v8025, %v8026
        %v8028 = vsel %vm6753, %v7713, 0.0
        %v8029 = vadd.f32 %v8027, %v8028
        %v8030 = vsel %vm6753, %v7714, 0.0
        %v8031 = vadd.f32 %v8029, %v8030
        %v8032 = vsel %vm6753, %v7715, 0.0
        %v8033 = vadd.f32 %v8031, %v8032
        %v8034 = vsel %vm6753, %v7716, 0.0
        %v8035 = vadd.f32 %v8033, %v8034
        %v8036 = vrot.slane %v8035, 4
        %v8037 = vadd.f32 %v8035, %v8036
        %v8038 = vrot.slane %v8037, 2
        %v8039 = vadd.f32 %v8037, %v8038
        %v8040 = vrot.slane %v8039, 1
        %v8041 = vadd.f32 %v8039, %v8040
        %v8042 = vld [vmem:[#allocation3] sm:$0x1]
        %v8043 = vadd.f32 %v8041, %v8042
        %v8044 = vmul.f32 %v8043, 0.5
        %v8045 = vtanh.pop %v8044
        %v8046 = vadd.f32 %v8045, 1.0
        %v8047 = vmul.f32 %v8046, 0.5
        %vm8048 = vcmask 0
        %8049 = vst.msk [vmem:[%s290] sm:$0x1] %vm8048, %v8047
      $region48: #{rgbd_forward.3} parent=39 // pred_fallthru
        _
      %p8050 = scmp.lt.s32.totalorder %s24, 1
      %s8051 = scalar_select %p8050, %s24, 1
      %s8052 = smul.addr %s8051, 160
      %s8053 = smul.addr %s8052, 8
      %s8054 = scalar_lea.vmem %s5, %s8053
      %p8055 = scmp.lt.s32.totalorder %s24, 1
      %s8056 = scalar_select %p8055, %s24, 1
      %s8057 = scalar_lea.vmem %s6, %s8056
      // Predicated region
      $region49: #{rgbd_forward.3} parent=39 // pred_check
        %p8058 = pneg %p162
      $region50: #{rgbd_forward.3} parent=39 // pred_check_branch
        %8060 = sbr.rel (%p8058) target = $region52
      $region51: #{rgbd_forward.3} parent=39 // pred_region
        _
      $region52: #{rgbd_forward.3} parent=39 // pred_fallthru
        _
      // Predicated region
      $region53: #{rgbd_forward.3} parent=39 // pred_check
        %p8061 = pneg %p188
      $region54: #{rgbd_forward.3} parent=39 // pred_check_branch
        %8063 = sbr.rel (%p8061) target = $region56
      $region55: #{rgbd_forward.3} parent=39 // pred_region
        _
      $region56: #{rgbd_forward.3} parent=39 // pred_fallthru
        _
    $region40: #{rgbd_forward.3} parent=5 // pred_fallthru
      _
    %p8064 = scmp.le.s32.totalorder 2, %s15
    // Predicated region
    $region57: #{rgbd_forward.3} parent=5 // pred_check
      %p8065 = pneg %p8064
    $region58: #{rgbd_forward.3} parent=5 // pred_check_branch
      %8067 = sbr.rel (%p8065) target = $region60
    $region59: #{rgbd_forward.3} parent=5 // pred_region
      %s8068 = ssub.s32 %s15, 2
      // Predicated region
      $region61: #{rgbd_forward.3} parent=59 // pred_check
        %p8069 = pneg %p168
      $region62: #{rgbd_forward.3} parent=59 // pred_check_branch
        %8071 = sbr.rel (%p8069) target = $region64
      $region63: #{rgbd_forward.3} parent=59 // pred_region
        %p8072 = scmp.lt.s32.totalorder %s26, 1
        %s8073 = scalar_select %p8072, %s26, 1
        %s8074 = smul.addr %s8073, 160
        %s8075 = smul.addr %s8074, 8
        %s8076 = scalar_lea.vmem %s5, %s8075
      $region64: #{rgbd_forward.3} parent=59 // pred_fallthru
        _
      // Predicated region
      $region65: #{rgbd_forward.3} parent=59 // pred_check
        %p8077 = pneg %p194
      $region66: #{rgbd_forward.3} parent=59 // pred_check_branch
        %8079 = sbr.rel (%p8077) target = $region68
      $region67: #{rgbd_forward.3} parent=59 // pred_region
        %p8080 = scmp.lt.s32.totalorder %s26, 1
        %s8081 = scalar_select %p8080, %s26, 1
        %s8082 = scalar_lea.vmem %s6, %s8081
      $region68: #{rgbd_forward.3} parent=59 // pred_fallthru
        _
    $region60: #{rgbd_forward.3} parent=5 // pred_fallthru
      _
  $region6: #{rgbd_forward.3} parent=0 // loop_footer
    %s19 = sadd.s32 1, %s15
  $region7: #{rgbd_forward.3} parent=0 // loop_footer_branch
    %14 = sbr.rel target = $region3
  $region8: #{rgbd_forward.3} parent=0 // loop_exit
    _

</llo_original>
